<compile_context>
chip_gen: v5e
topology: v5e:2x2
jax: 0.10.0
libtpu: 0.0.40
codegen_flags: <defaults>
</compile_context>

<pallas_src>
import functools

import jax
import jax.numpy as jnp
from jax.experimental import pallas as pl
from jax.experimental.pallas import tpu as pltpu


# ---------------------------------------------------------------------------
# Conv 3x3, padding=1, stride=1, fused bias + ReLU  (im2col -> one MXU matmul)
# ---------------------------------------------------------------------------
def _conv3x3_relu_kernel(x_ref, w_ref, b_ref, o_ref):
    # x_ref: (B, H, W, Cin)  f32 input tile (B images per grid step, unpadded)
    # w_ref: (9*Cin, Cout)   bf16 weights, rows ordered (ky, kx, cin)
    # b_ref: (1, Cout)       f32
    # o_ref: (B, H, W, Cout) f32 conv output, post-ReLU
    B, H, W, Cin = x_ref.shape
    Cout = o_ref.shape[-1]

    x = x_ref[...].astype(jnp.bfloat16)

    # Build the 1-pixel zero halo in VMEM (no HBM padded copy).
    zrow = jnp.zeros((B, 1, W, Cin), jnp.bfloat16)
    xp = jnp.concatenate([zrow, x, zrow], axis=1)          # (B, H+2, W, Cin)
    zcol = jnp.zeros((B, H + 2, 1, Cin), jnp.bfloat16)
    xp = jnp.concatenate([zcol, xp, zcol], axis=2)         # (B, H+2, W+2, Cin)

    # im2col: 9 shifted taps concatenated on the channel (lane) dim.
    # Tap order (ky, kx, cin) matches the weight reshape.
    taps = [xp[:, ky:ky + H, kx:kx + W, :]
            for ky in range(3) for kx in range(3)]
    patches = jnp.concatenate(taps, axis=-1)               # (B, H, W, 9*Cin)
    patches = patches.reshape(B * H * W, 9 * Cin)

    acc = jnp.dot(patches, w_ref[...], preferred_element_type=jnp.float32)
    acc = jnp.maximum(acc + b_ref[...], 0.0)               # fused bias + ReLU
    o_ref[...] = acc.reshape(B, H, W, Cout).astype(o_ref.dtype)


def _pick_block_n(n, cap=8):
    for b in range(min(n, cap), 0, -1):
        if n % b == 0:
            return b
    return 1


def conv3x3_relu(x_nhwc, w2, b, *, block_n=None):
    """x_nhwc: (N,H,W,Cin) f32; w2: (9*Cin,Cout) bf16; b: (1,Cout) f32."""
    N, H, W, Cin = x_nhwc.shape
    Cout = w2.shape[1]
    assert w2.shape[0] == 9 * Cin
    if block_n is None:
        block_n = _pick_block_n(N)
    grid = (N // block_n,)
    return pl.pallas_call(
        _conv3x3_relu_kernel,
        out_shape=jax.ShapeDtypeStruct((N, H, W, Cout), jnp.float32),
        grid=grid,
        in_specs=[
            pl.BlockSpec((block_n, H, W, Cin), lambda n: (n, 0, 0, 0)),
            pl.BlockSpec((9 * Cin, Cout), lambda n: (0, 0)),
            pl.BlockSpec((1, Cout), lambda n: (0, 0)),
        ],
        out_specs=pl.BlockSpec((block_n, H, W, Cout), lambda n: (n, 0, 0, 0)),
        compiler_params=pltpu.CompilerParams(
            dimension_semantics=("parallel",),          # v7x: shard over 2 TCs
            vmem_limit_bytes=32 * 1024 * 1024),
    )(x_nhwc, w2, b)


# ---------------------------------------------------------------------------
# Linear: y = x @ W + b  (bf16 weights, f32 accumulation, optional fused ReLU)
# ---------------------------------------------------------------------------
def _linear_kernel(x_ref, w_ref, b_ref, o_ref, *, apply_relu):
    y = jnp.dot(x_ref[...].astype(jnp.bfloat16), w_ref[...],
                preferred_element_type=jnp.float32)
    y = y + b_ref[...]
    if apply_relu:
        y = jnp.maximum(y, 0.0)
    o_ref[...] = y.astype(o_ref.dtype)


def linear(x, w, b, apply_relu=False):
    N = x.shape[0]
    M = w.shape[1]
    return pl.pallas_call(
        functools.partial(_linear_kernel, apply_relu=apply_relu),
        out_shape=jax.ShapeDtypeStruct((N, M), jnp.float32),
        compiler_params=pltpu.CompilerParams(
            vmem_limit_bytes=32 * 1024 * 1024),
    )(x, w, b)


# ---------------------------------------------------------------------------
# Glue ops
# ---------------------------------------------------------------------------
def maxpool2(h):
    # 2x2 max pool, stride 2 (NHWC), done in XLA glue (see TODO above).
    N, H, W, C = h.shape
    return h.reshape(N, H // 2, 2, W // 2, 2, C).max(axis=(2, 4))


# ---------------------------------------------------------------------------
# Parameters: initialized in the *torch* layouts, then prepared for the kernels
# ---------------------------------------------------------------------------
def init_params(key, ncha, size, taskcla):
    smid = (size // 2) // 2

    def conv_init(k, cin, cout):                  # torch Conv2d: (Cout,Cin,3,3)
        kw, kb = jax.random.split(k)
        w = jax.random.normal(kw, (cout, cin, 3, 3), jnp.float32) / jnp.sqrt(cin * 9.0)
        b = jax.random.normal(kb, (cout,), jnp.float32) * 0.01
        return w, b

    def lin_init(k, din, dout):                   # torch Linear: (out, in)
        kw, kb = jax.random.split(k)
        w = jax.random.normal(kw, (dout, din), jnp.float32) / jnp.sqrt(float(din))
        b = jax.random.normal(kb, (dout,), jnp.float32) * 0.01
        return w, b

    ks = jax.random.split(key, 5 + len(taskcla))
    p = {}
    p["c1_w"], p["c1_b"] = conv_init(ks[0], ncha, 32)
    p["c2_w"], p["c2_b"] = conv_init(ks[1], 32, 32)
    p["c3_w"], p["c3_b"] = conv_init(ks[2], 32, 64)
    p["c4_w"], p["c4_b"] = conv_init(ks[3], 64, 64)
    p["fc1_w"], p["fc1_b"] = lin_init(ks[4], 64 * smid * smid, 512)
    p["last_w"], p["last_b"] = {}, {}
    for idx, (t, n) in enumerate(taskcla):
        w, b = lin_init(ks[5 + idx], 512, n)
        p["last_w"][t] = w
        p["last_b"][t] = b
    return p


def prepare_params(p, taskcla, smid):
    """Torch-layout params -> kernel-layout params (bf16 weights, fused heads,
    fc1 rows permuted so the kernel consumes the NHWC-flattened activation)."""
    q = {}
    for name in ("c1", "c2", "c3", "c4"):
        w = p[f"{name}_w"]                                   # (Cout, Cin, 3, 3)
        cout, cin = w.shape[0], w.shape[1]
        w = jnp.transpose(w, (2, 3, 1, 0)).reshape(9 * cin, cout)   # (ky,kx,cin)
        q[f"{name}_w"] = w.astype(jnp.bfloat16)
        q[f"{name}_b"] = p[f"{name}_b"].reshape(1, cout)
    # fc1: torch flattens NCHW (c,y,x); permute rows to NHWC (y,x,c) order once.
    w = p["fc1_w"].T                                         # (64*smid*smid, 512)
    w = w.reshape(64, smid, smid, 512)
    w = jnp.transpose(w, (1, 2, 0, 3)).reshape(64 * smid * smid, 512)
    q["fc1_w"] = w.astype(jnp.bfloat16)
    q["fc1_b"] = p["fc1_b"].reshape(1, 512)
    # Fuse all task heads into one linear.
    q["heads_w"] = jnp.concatenate(
        [p["last_w"][t].T for t, _ in taskcla], axis=1).astype(jnp.bfloat16)
    q["heads_b"] = jnp.concatenate(
        [p["last_b"][t] for t, _ in taskcla]).reshape(1, -1)
    return q


# ---------------------------------------------------------------------------
# Forward (matches Net.forward; dropout = identity at inference)
# ---------------------------------------------------------------------------
def forward(params_k, x_nchw, taskcla):
    x = jnp.transpose(x_nchw, (0, 2, 3, 1))                  # NCHW -> NHWC
    h = conv3x3_relu(x, params_k["c1_w"], params_k["c1_b"])  # relu(c1(x))
    h = conv3x3_relu(h, params_k["c2_w"], params_k["c2_b"])  # relu(c2(h))
    h = maxpool2(h)                                          # maxpool; drop1=id
    h = conv3x3_relu(h, params_k["c3_w"], params_k["c3_b"])  # relu(c3(h))
    h = conv3x3_relu(h, params_k["c4_w"], params_k["c4_b"])  # relu(c4(h))
    h = maxpool2(h)                                          # maxpool; drop2=id
    N = x_nchw.shape[0]
    h = h.reshape(N, -1)          # NHWC flatten; fc1_w rows were pre-permuted
    h = linear(h, params_k["fc1_w"], params_k["fc1_b"], apply_relu=True)  # drop2=id
    y_all = linear(h, params_k["heads_w"], params_k["heads_b"], apply_relu=False)
    ys, off = [], 0
    for _, n in taskcla:
        ys.append(y_all[:, off:off + n])
        off += n
    return ys


if __name__ == "__main__":
    key = jax.random.PRNGKey(0)
    N, ncha, size = 2, 4, 16
    taskcla = [(0, 10), (1, 5)]
    smid = (size // 2) // 2

    k_in, k_par = jax.random.split(key)
    x_nchw = jax.random.normal(k_in, (N, ncha, size, size), jnp.float32)
    params = init_params(k_par, ncha, size, taskcla)
    kparams = prepare_params(params, taskcla, smid)

    fwd = jax.jit(functools.partial(forward, taskcla=taskcla))
    ys = fwd(kparams, x_nchw)
    ys = [jax.block_until_ready(y) for y in ys]

    assert ys[0].shape == (N, 10) and ys[1].shape == (N, 5)
    print("KERNEL_OK")
</pallas_src>

<mosaic_0001>
module attributes {stable_mosaic.version = 11 : i64} {
  func.func @_conv3x3_relu_kernel(%arg0: i32, %arg1: memref<2x16x16x4xf32, #tpu.memory_space<vmem>>, %arg2: memref<36x32xbf16, #tpu.memory_space<vmem>>, %arg3: memref<1x32xf32, #tpu.memory_space<vmem>>, %arg4: memref<2x16x16x32xf32, #tpu.memory_space<vmem>>) attributes {dimension_semantics = [#tpu.dimension_semantics<parallel>], iteration_bounds = array<i64: 1>, scalar_prefetch = 0 : i64, scratch_operands = 0 : i64, tpu.core_type = #tpu.core_type<tc>, window_params = [{transform_indices = @transform_0, window_bounds = array<i64: 2, 16, 16, 4>}, {pipeline_mode = #tpu.pipeline_mode<synchronous>, transform_indices = @transform_1, window_bounds = array<i64: 36, 32>}, {pipeline_mode = #tpu.pipeline_mode<synchronous>, transform_indices = @transform_2, window_bounds = array<i64: 1, 32>}, {transform_indices = @transform_3, window_bounds = array<i64: 2, 16, 16, 32>}]} {
    %c0 = arith.constant 0 : index
    %c0_0 = arith.constant 0 : index
    %c0_1 = arith.constant 0 : index
    %c0_2 = arith.constant 0 : index
    %0 = vector.load %arg1[%c0, %c0_0, %c0_1, %c0_2] : memref<2x16x16x4xf32, #tpu.memory_space<vmem>>, vector<2x16x16x4xf32>
    %1 = arith.truncf %0 : vector<2x16x16x4xf32> to vector<2x16x16x4xbf16>
    %cst = arith.constant 0.000000e+00 : bf16
    %2 = vector.broadcast %cst : bf16 to vector<2x1x16x4xbf16>
    %3 = tpu.concatenate %2, %1, %2 in 1 : vector<2x1x16x4xbf16>, vector<2x16x16x4xbf16>, vector<2x1x16x4xbf16> -> vector<2x18x16x4xbf16>
    %cst_3 = arith.constant 0.000000e+00 : bf16
    %4 = vector.broadcast %cst_3 : bf16 to vector<2x18x1x4xbf16>
    %5 = tpu.concatenate %4, %3, %4 in 2 : vector<2x18x1x4xbf16>, vector<2x18x16x4xbf16>, vector<2x18x1x4xbf16> -> vector<2x18x18x4xbf16>
    %6 = vector.extract_strided_slice %5 {offsets = [0, 0, 0, 0], sizes = [2, 16, 16, 4], strides = [1, 1, 1, 1]} : vector<2x18x18x4xbf16> to vector<2x16x16x4xbf16>
    %7 = vector.extract_strided_slice %5 {offsets = [0, 0, 1, 0], sizes = [2, 16, 16, 4], strides = [1, 1, 1, 1]} : vector<2x18x18x4xbf16> to vector<2x16x16x4xbf16>
    %8 = vector.extract_strided_slice %5 {offsets = [0, 0, 2, 0], sizes = [2, 16, 16, 4], strides = [1, 1, 1, 1]} : vector<2x18x18x4xbf16> to vector<2x16x16x4xbf16>
    %9 = vector.extract_strided_slice %5 {offsets = [0, 1, 0, 0], sizes = [2, 16, 16, 4], strides = [1, 1, 1, 1]} : vector<2x18x18x4xbf16> to vector<2x16x16x4xbf16>
    %10 = vector.extract_strided_slice %5 {offsets = [0, 1, 1, 0], sizes = [2, 16, 16, 4], strides = [1, 1, 1, 1]} : vector<2x18x18x4xbf16> to vector<2x16x16x4xbf16>
    %11 = vector.extract_strided_slice %5 {offsets = [0, 1, 2, 0], sizes = [2, 16, 16, 4], strides = [1, 1, 1, 1]} : vector<2x18x18x4xbf16> to vector<2x16x16x4xbf16>
    %12 = vector.extract_strided_slice %5 {offsets = [0, 2, 0, 0], sizes = [2, 16, 16, 4], strides = [1, 1, 1, 1]} : vector<2x18x18x4xbf16> to vector<2x16x16x4xbf16>
    %13 = vector.extract_strided_slice %5 {offsets = [0, 2, 1, 0], sizes = [2, 16, 16, 4], strides = [1, 1, 1, 1]} : vector<2x18x18x4xbf16> to vector<2x16x16x4xbf16>
    %14 = vector.extract_strided_slice %5 {offsets = [0, 2, 2, 0], sizes = [2, 16, 16, 4], strides = [1, 1, 1, 1]} : vector<2x18x18x4xbf16> to vector<2x16x16x4xbf16>
    %15 = tpu.concatenate %6, %7, %8, %9, %10, %11, %12, %13, %14 in 3 : vector<2x16x16x4xbf16>, vector<2x16x16x4xbf16>, vector<2x16x16x4xbf16>, vector<2x16x16x4xbf16>, vector<2x16x16x4xbf16>, vector<2x16x16x4xbf16>, vector<2x16x16x4xbf16>, vector<2x16x16x4xbf16>, vector<2x16x16x4xbf16> -> vector<2x16x16x36xbf16>
    %16 = vector.shape_cast %15 : vector<2x16x16x36xbf16> to vector<512x36xbf16>
    %c0_4 = arith.constant 0 : index
    %c0_5 = arith.constant 0 : index
    %17 = vector.load %arg2[%c0_4, %c0_5] : memref<36x32xbf16, #tpu.memory_space<vmem>>, vector<36x32xbf16>
    %cst_6 = arith.constant dense<0.000000e+00> : vector<512x32xf32>
    %18 = tpu.matmul %16, %17, %cst_6 {dimension_numbers = #tpu.dot_dimension_numbers<[1], [0], [0], [1], [0, 0, 1, 1], [], []>} : vector<512x36xbf16>, vector<36x32xbf16>, vector<512x32xf32> -> vector<512x32xf32>
    %c0_7 = arith.constant 0 : index
    %c0_8 = arith.constant 0 : index
    %19 = vector.load %arg3[%c0_7, %c0_8] : memref<1x32xf32, #tpu.memory_space<vmem>>, vector<1x32xf32>
    %20 = vector.broadcast %19 : vector<1x32xf32> to vector<512x32xf32>
    %21 = arith.addf %18, %20 : vector<512x32xf32>
    %cst_9 = arith.constant 0.000000e+00 : f32
    %22 = vector.broadcast %cst_9 : f32 to vector<512x32xf32>
    %23 = arith.maximumf %21, %22 : vector<512x32xf32>
    %24 = vector.shape_cast %23 : vector<512x32xf32> to vector<2x16x16x32xf32>
    %c0_10 = arith.constant 0 : index
    %c0_11 = arith.constant 0 : index
    %c0_12 = arith.constant 0 : index
    %c0_13 = arith.constant 0 : index
    %25 = vector.load %arg4[%c0_10, %c0_11, %c0_12, %c0_13] : memref<2x16x16x32xf32, #tpu.memory_space<vmem>>, vector<2x16x16x32xf32>
    tpu.vector_store %arg4[%c0_10, %c0_11, %c0_12, %c0_13], %24 {strides = array<i32>} : memref<2x16x16x32xf32, #tpu.memory_space<vmem>>, vector<2x16x16x32xf32>,
    return
  }
  func.func @transform_0(%arg0: i32) -> (i32, i32, i32, i32) {
    %c0_i32 = arith.constant 0 : i32
    %c0_i32_0 = arith.constant 0 : i32
    %c0_i32_1 = arith.constant 0 : i32
    %c0_i32_2 = arith.constant 0 : i32
    return %arg0, %c0_i32, %c0_i32_0, %c0_i32_1 : i32, i32, i32, i32
  }
  func.func @transform_1(%arg0: i32) -> (i32, i32) {
    %c0_i32 = arith.constant 0 : i32
    %c0_i32_0 = arith.constant 0 : i32
    %c0_i32_1 = arith.constant 0 : i32
    return %c0_i32, %c0_i32_0 : i32, i32
  }
  func.func @transform_2(%arg0: i32) -> (i32, i32) {
    %c0_i32 = arith.constant 0 : i32
    %c0_i32_0 = arith.constant 0 : i32
    %c0_i32_1 = arith.constant 0 : i32
    return %c0_i32, %c0_i32_0 : i32, i32
  }
  func.func @transform_3(%arg0: i32) -> (i32, i32, i32, i32) {
    %c0_i32 = arith.constant 0 : i32
    %c0_i32_0 = arith.constant 0 : i32
    %c0_i32_1 = arith.constant 0 : i32
    %c0_i32_2 = arith.constant 0 : i32
    return %arg0, %c0_i32, %c0_i32_0, %c0_i32_1 : i32, i32, i32, i32
  }
}

module attributes {stable_mosaic.version = 11 : i64} {
  func.func @_conv3x3_relu_kernel(%arg0: i32, %arg1: memref<2x16x16x32xf32, #tpu.memory_space<vmem>>, %arg2: memref<288x32xbf16, #tpu.memory_space<vmem>>, %arg3: memref<1x32xf32, #tpu.memory_space<vmem>>, %arg4: memref<2x16x16x32xf32, #tpu.memory_space<vmem>>) attributes {dimension_semantics = [#tpu.dimension_semantics<parallel>], iteration_bounds = array<i64: 1>, scalar_prefetch = 0 : i64, scratch_operands = 0 : i64, tpu.core_type = #tpu.core_type<tc>, window_params = [{transform_indices = @transform_0, window_bounds = array<i64: 2, 16, 16, 32>}, {pipeline_mode = #tpu.pipeline_mode<synchronous>, transform_indices = @transform_1, window_bounds = array<i64: 288, 32>}, {pipeline_mode = #tpu.pipeline_mode<synchronous>, transform_indices = @transform_2, window_bounds = array<i64: 1, 32>}, {transform_indices = @transform_3, window_bounds = array<i64: 2, 16, 16, 32>}]} {
    %c0 = arith.constant 0 : index
    %c0_0 = arith.constant 0 : index
    %c0_1 = arith.constant 0 : index
    %c0_2 = arith.constant 0 : index
    %0 = vector.load %arg1[%c0, %c0_0, %c0_1, %c0_2] : memref<2x16x16x32xf32, #tpu.memory_space<vmem>>, vector<2x16x16x32xf32>
    %1 = arith.truncf %0 : vector<2x16x16x32xf32> to vector<2x16x16x32xbf16>
    %cst = arith.constant 0.000000e+00 : bf16
    %2 = vector.broadcast %cst : bf16 to vector<2x1x16x32xbf16>
    %3 = tpu.concatenate %2, %1, %2 in 1 : vector<2x1x16x32xbf16>, vector<2x16x16x32xbf16>, vector<2x1x16x32xbf16> -> vector<2x18x16x32xbf16>
    %cst_3 = arith.constant 0.000000e+00 : bf16
    %4 = vector.broadcast %cst_3 : bf16 to vector<2x18x1x32xbf16>
    %5 = tpu.concatenate %4, %3, %4 in 2 : vector<2x18x1x32xbf16>, vector<2x18x16x32xbf16>, vector<2x18x1x32xbf16> -> vector<2x18x18x32xbf16>
    %6 = vector.extract_strided_slice %5 {offsets = [0, 0, 0, 0], sizes = [2, 16, 16, 32], strides = [1, 1, 1, 1]} : vector<2x18x18x32xbf16> to vector<2x16x16x32xbf16>
    %7 = vector.extract_strided_slice %5 {offsets = [0, 0, 1, 0], sizes = [2, 16, 16, 32], strides = [1, 1, 1, 1]} : vector<2x18x18x32xbf16> to vector<2x16x16x32xbf16>
    %8 = vector.extract_strided_slice %5 {offsets = [0, 0, 2, 0], sizes = [2, 16, 16, 32], strides = [1, 1, 1, 1]} : vector<2x18x18x32xbf16> to vector<2x16x16x32xbf16>
    %9 = vector.extract_strided_slice %5 {offsets = [0, 1, 0, 0], sizes = [2, 16, 16, 32], strides = [1, 1, 1, 1]} : vector<2x18x18x32xbf16> to vector<2x16x16x32xbf16>
    %10 = vector.extract_strided_slice %5 {offsets = [0, 1, 1, 0], sizes = [2, 16, 16, 32], strides = [1, 1, 1, 1]} : vector<2x18x18x32xbf16> to vector<2x16x16x32xbf16>
    %11 = vector.extract_strided_slice %5 {offsets = [0, 1, 2, 0], sizes = [2, 16, 16, 32], strides = [1, 1, 1, 1]} : vector<2x18x18x32xbf16> to vector<2x16x16x32xbf16>
    %12 = vector.extract_strided_slice %5 {offsets = [0, 2, 0, 0], sizes = [2, 16, 16, 32], strides = [1, 1, 1, 1]} : vector<2x18x18x32xbf16> to vector<2x16x16x32xbf16>
    %13 = vector.extract_strided_slice %5 {offsets = [0, 2, 1, 0], sizes = [2, 16, 16, 32], strides = [1, 1, 1, 1]} : vector<2x18x18x32xbf16> to vector<2x16x16x32xbf16>
    %14 = vector.extract_strided_slice %5 {offsets = [0, 2, 2, 0], sizes = [2, 16, 16, 32], strides = [1, 1, 1, 1]} : vector<2x18x18x32xbf16> to vector<2x16x16x32xbf16>
    %15 = tpu.concatenate %6, %7, %8, %9, %10, %11, %12, %13, %14 in 3 : vector<2x16x16x32xbf16>, vector<2x16x16x32xbf16>, vector<2x16x16x32xbf16>, vector<2x16x16x32xbf16>, vector<2x16x16x32xbf16>, vector<2x16x16x32xbf16>, vector<2x16x16x32xbf16>, vector<2x16x16x32xbf16>, vector<2x16x16x32xbf16> -> vector<2x16x16x288xbf16>
    %16 = vector.shape_cast %15 : vector<2x16x16x288xbf16> to vector<512x288xbf16>
    %c0_4 = arith.constant 0 : index
    %c0_5 = arith.constant 0 : index
    %17 = vector.load %arg2[%c0_4, %c0_5] : memref<288x32xbf16, #tpu.memory_space<vmem>>, vector<288x32xbf16>
    %cst_6 = arith.constant dense<0.000000e+00> : vector<512x32xf32>
    %18 = tpu.matmul %16, %17, %cst_6 {dimension_numbers = #tpu.dot_dimension_numbers<[1], [0], [0], [1], [0, 0, 1, 1], [], []>} : vector<512x288xbf16>, vector<288x32xbf16>, vector<512x32xf32> -> vector<512x32xf32>
    %c0_7 = arith.constant 0 : index
    %c0_8 = arith.constant 0 : index
    %19 = vector.load %arg3[%c0_7, %c0_8] : memref<1x32xf32, #tpu.memory_space<vmem>>, vector<1x32xf32>
    %20 = vector.broadcast %19 : vector<1x32xf32> to vector<512x32xf32>
    %21 = arith.addf %18, %20 : vector<512x32xf32>
    %cst_9 = arith.constant 0.000000e+00 : f32
    %22 = vector.broadcast %cst_9 : f32 to vector<512x32xf32>
    %23 = arith.maximumf %21, %22 : vector<512x32xf32>
    %24 = vector.shape_cast %23 : vector<512x32xf32> to vector<2x16x16x32xf32>
    %c0_10 = arith.constant 0 : index
    %c0_11 = arith.constant 0 : index
    %c0_12 = arith.constant 0 : index
    %c0_13 = arith.constant 0 : index
    %25 = vector.load %arg4[%c0_10, %c0_11, %c0_12, %c0_13] : memref<2x16x16x32xf32, #tpu.memory_space<vmem>>, vector<2x16x16x32xf32>
    tpu.vector_store %arg4[%c0_10, %c0_11, %c0_12, %c0_13], %24 {strides = array<i32>} : memref<2x16x16x32xf32, #tpu.memory_space<vmem>>, vector<2x16x16x32xf32>,
    return
  }
  func.func @transform_0(%arg0: i32) -> (i32, i32, i32, i32) {
    %c0_i32 = arith.constant 0 : i32
    %c0_i32_0 = arith.constant 0 : i32
    %c0_i32_1 = arith.constant 0 : i32
    %c0_i32_2 = arith.constant 0 : i32
    return %arg0, %c0_i32, %c0_i32_0, %c0_i32_1 : i32, i32, i32, i32
  }
  func.func @transform_1(%arg0: i32) -> (i32, i32) {
    %c0_i32 = arith.constant 0 : i32
    %c0_i32_0 = arith.constant 0 : i32
    %c0_i32_1 = arith.constant 0 : i32
    return %c0_i32, %c0_i32_0 : i32, i32
  }
  func.func @transform_2(%arg0: i32) -> (i32, i32) {
    %c0_i32 = arith.constant 0 : i32
    %c0_i32_0 = arith.constant 0 : i32
    %c0_i32_1 = arith.constant 0 : i32
    return %c0_i32, %c0_i32_0 : i32, i32
  }
  func.func @transform_3(%arg0: i32) -> (i32, i32, i32, i32) {
    %c0_i32 = arith.constant 0 : i32
    %c0_i32_0 = arith.constant 0 : i32
    %c0_i32_1 = arith.constant 0 : i32
    %c0_i32_2 = arith.constant 0 : i32
    return %arg0, %c0_i32, %c0_i32_0, %c0_i32_1 : i32, i32, i32, i32
  }
}

module attributes {stable_mosaic.version = 11 : i64} {
  func.func @_conv3x3_relu_kernel(%arg0: i32, %arg1: memref<2x8x8x32xf32, #tpu.memory_space<vmem>>, %arg2: memref<288x64xbf16, #tpu.memory_space<vmem>>, %arg3: memref<1x64xf32, #tpu.memory_space<vmem>>, %arg4: memref<2x8x8x64xf32, #tpu.memory_space<vmem>>) attributes {dimension_semantics = [#tpu.dimension_semantics<parallel>], iteration_bounds = array<i64: 1>, scalar_prefetch = 0 : i64, scratch_operands = 0 : i64, tpu.core_type = #tpu.core_type<tc>, window_params = [{transform_indices = @transform_0, window_bounds = array<i64: 2, 8, 8, 32>}, {pipeline_mode = #tpu.pipeline_mode<synchronous>, transform_indices = @transform_1, window_bounds = array<i64: 288, 64>}, {pipeline_mode = #tpu.pipeline_mode<synchronous>, transform_indices = @transform_2, window_bounds = array<i64: 1, 64>}, {transform_indices = @transform_3, window_bounds = array<i64: 2, 8, 8, 64>}]} {
    %c0 = arith.constant 0 : index
    %c0_0 = arith.constant 0 : index
    %c0_1 = arith.constant 0 : index
    %c0_2 = arith.constant 0 : index
    %0 = vector.load %arg1[%c0, %c0_0, %c0_1, %c0_2] : memref<2x8x8x32xf32, #tpu.memory_space<vmem>>, vector<2x8x8x32xf32>
    %1 = arith.truncf %0 : vector<2x8x8x32xf32> to vector<2x8x8x32xbf16>
    %cst = arith.constant 0.000000e+00 : bf16
    %2 = vector.broadcast %cst : bf16 to vector<2x1x8x32xbf16>
    %3 = tpu.concatenate %2, %1, %2 in 1 : vector<2x1x8x32xbf16>, vector<2x8x8x32xbf16>, vector<2x1x8x32xbf16> -> vector<2x10x8x32xbf16>
    %cst_3 = arith.constant 0.000000e+00 : bf16
    %4 = vector.broadcast %cst_3 : bf16 to vector<2x10x1x32xbf16>
    %5 = tpu.concatenate %4, %3, %4 in 2 : vector<2x10x1x32xbf16>, vector<2x10x8x32xbf16>, vector<2x10x1x32xbf16> -> vector<2x10x10x32xbf16>
    %6 = vector.extract_strided_slice %5 {offsets = [0, 0, 0, 0], sizes = [2, 8, 8, 32], strides = [1, 1, 1, 1]} : vector<2x10x10x32xbf16> to vector<2x8x8x32xbf16>
    %7 = vector.extract_strided_slice %5 {offsets = [0, 0, 1, 0], sizes = [2, 8, 8, 32], strides = [1, 1, 1, 1]} : vector<2x10x10x32xbf16> to vector<2x8x8x32xbf16>
    %8 = vector.extract_strided_slice %5 {offsets = [0, 0, 2, 0], sizes = [2, 8, 8, 32], strides = [1, 1, 1, 1]} : vector<2x10x10x32xbf16> to vector<2x8x8x32xbf16>
    %9 = vector.extract_strided_slice %5 {offsets = [0, 1, 0, 0], sizes = [2, 8, 8, 32], strides = [1, 1, 1, 1]} : vector<2x10x10x32xbf16> to vector<2x8x8x32xbf16>
    %10 = vector.extract_strided_slice %5 {offsets = [0, 1, 1, 0], sizes = [2, 8, 8, 32], strides = [1, 1, 1, 1]} : vector<2x10x10x32xbf16> to vector<2x8x8x32xbf16>
    %11 = vector.extract_strided_slice %5 {offsets = [0, 1, 2, 0], sizes = [2, 8, 8, 32], strides = [1, 1, 1, 1]} : vector<2x10x10x32xbf16> to vector<2x8x8x32xbf16>
    %12 = vector.extract_strided_slice %5 {offsets = [0, 2, 0, 0], sizes = [2, 8, 8, 32], strides = [1, 1, 1, 1]} : vector<2x10x10x32xbf16> to vector<2x8x8x32xbf16>
    %13 = vector.extract_strided_slice %5 {offsets = [0, 2, 1, 0], sizes = [2, 8, 8, 32], strides = [1, 1, 1, 1]} : vector<2x10x10x32xbf16> to vector<2x8x8x32xbf16>
    %14 = vector.extract_strided_slice %5 {offsets = [0, 2, 2, 0], sizes = [2, 8, 8, 32], strides = [1, 1, 1, 1]} : vector<2x10x10x32xbf16> to vector<2x8x8x32xbf16>
    %15 = tpu.concatenate %6, %7, %8, %9, %10, %11, %12, %13, %14 in 3 : vector<2x8x8x32xbf16>, vector<2x8x8x32xbf16>, vector<2x8x8x32xbf16>, vector<2x8x8x32xbf16>, vector<2x8x8x32xbf16>, vector<2x8x8x32xbf16>, vector<2x8x8x32xbf16>, vector<2x8x8x32xbf16>, vector<2x8x8x32xbf16> -> vector<2x8x8x288xbf16>
    %16 = vector.shape_cast %15 : vector<2x8x8x288xbf16> to vector<128x288xbf16>
    %c0_4 = arith.constant 0 : index
    %c0_5 = arith.constant 0 : index
    %17 = vector.load %arg2[%c0_4, %c0_5] : memref<288x64xbf16, #tpu.memory_space<vmem>>, vector<288x64xbf16>
    %cst_6 = arith.constant dense<0.000000e+00> : vector<128x64xf32>
    %18 = tpu.matmul %16, %17, %cst_6 {dimension_numbers = #tpu.dot_dimension_numbers<[1], [0], [0], [1], [0, 0, 1, 1], [], []>} : vector<128x288xbf16>, vector<288x64xbf16>, vector<128x64xf32> -> vector<128x64xf32>
    %c0_7 = arith.constant 0 : index
    %c0_8 = arith.constant 0 : index
    %19 = vector.load %arg3[%c0_7, %c0_8] : memref<1x64xf32, #tpu.memory_space<vmem>>, vector<1x64xf32>
    %20 = vector.broadcast %19 : vector<1x64xf32> to vector<128x64xf32>
    %21 = arith.addf %18, %20 : vector<128x64xf32>
    %cst_9 = arith.constant 0.000000e+00 : f32
    %22 = vector.broadcast %cst_9 : f32 to vector<128x64xf32>
    %23 = arith.maximumf %21, %22 : vector<128x64xf32>
    %24 = vector.shape_cast %23 : vector<128x64xf32> to vector<2x8x8x64xf32>
    %c0_10 = arith.constant 0 : index
    %c0_11 = arith.constant 0 : index
    %c0_12 = arith.constant 0 : index
    %c0_13 = arith.constant 0 : index
    %25 = vector.load %arg4[%c0_10, %c0_11, %c0_12, %c0_13] : memref<2x8x8x64xf32, #tpu.memory_space<vmem>>, vector<2x8x8x64xf32>
    tpu.vector_store %arg4[%c0_10, %c0_11, %c0_12, %c0_13], %24 {strides = array<i32>} : memref<2x8x8x64xf32, #tpu.memory_space<vmem>>, vector<2x8x8x64xf32>,
    return
  }
  func.func @transform_0(%arg0: i32) -> (i32, i32, i32, i32) {
    %c0_i32 = arith.constant 0 : i32
    %c0_i32_0 = arith.constant 0 : i32
    %c0_i32_1 = arith.constant 0 : i32
    %c0_i32_2 = arith.constant 0 : i32
    return %arg0, %c0_i32, %c0_i32_0, %c0_i32_1 : i32, i32, i32, i32
  }
  func.func @transform_1(%arg0: i32) -> (i32, i32) {
    %c0_i32 = arith.constant 0 : i32
    %c0_i32_0 = arith.constant 0 : i32
    %c0_i32_1 = arith.constant 0 : i32
    return %c0_i32, %c0_i32_0 : i32, i32
  }
  func.func @transform_2(%arg0: i32) -> (i32, i32) {
    %c0_i32 = arith.constant 0 : i32
    %c0_i32_0 = arith.constant 0 : i32
    %c0_i32_1 = arith.constant 0 : i32
    return %c0_i32, %c0_i32_0 : i32, i32
  }
  func.func @transform_3(%arg0: i32) -> (i32, i32, i32, i32) {
    %c0_i32 = arith.constant 0 : i32
    %c0_i32_0 = arith.constant 0 : i32
    %c0_i32_1 = arith.constant 0 : i32
    %c0_i32_2 = arith.constant 0 : i32
    return %arg0, %c0_i32, %c0_i32_0, %c0_i32_1 : i32, i32, i32, i32
  }
}

module attributes {stable_mosaic.version = 11 : i64} {
  func.func @_conv3x3_relu_kernel(%arg0: i32, %arg1: memref<2x8x8x64xf32, #tpu.memory_space<vmem>>, %arg2: memref<576x64xbf16, #tpu.memory_space<vmem>>, %arg3: memref<1x64xf32, #tpu.memory_space<vmem>>, %arg4: memref<2x8x8x64xf32, #tpu.memory_space<vmem>>) attributes {dimension_semantics = [#tpu.dimension_semantics<parallel>], iteration_bounds = array<i64: 1>, scalar_prefetch = 0 : i64, scratch_operands = 0 : i64, tpu.core_type = #tpu.core_type<tc>, window_params = [{transform_indices = @transform_0, window_bounds = array<i64: 2, 8, 8, 64>}, {pipeline_mode = #tpu.pipeline_mode<synchronous>, transform_indices = @transform_1, window_bounds = array<i64: 576, 64>}, {pipeline_mode = #tpu.pipeline_mode<synchronous>, transform_indices = @transform_2, window_bounds = array<i64: 1, 64>}, {transform_indices = @transform_3, window_bounds = array<i64: 2, 8, 8, 64>}]} {
    %c0 = arith.constant 0 : index
    %c0_0 = arith.constant 0 : index
    %c0_1 = arith.constant 0 : index
    %c0_2 = arith.constant 0 : index
    %0 = vector.load %arg1[%c0, %c0_0, %c0_1, %c0_2] : memref<2x8x8x64xf32, #tpu.memory_space<vmem>>, vector<2x8x8x64xf32>
    %1 = arith.truncf %0 : vector<2x8x8x64xf32> to vector<2x8x8x64xbf16>
    %cst = arith.constant 0.000000e+00 : bf16
    %2 = vector.broadcast %cst : bf16 to vector<2x1x8x64xbf16>
    %3 = tpu.concatenate %2, %1, %2 in 1 : vector<2x1x8x64xbf16>, vector<2x8x8x64xbf16>, vector<2x1x8x64xbf16> -> vector<2x10x8x64xbf16>
    %cst_3 = arith.constant 0.000000e+00 : bf16
    %4 = vector.broadcast %cst_3 : bf16 to vector<2x10x1x64xbf16>
    %5 = tpu.concatenate %4, %3, %4 in 2 : vector<2x10x1x64xbf16>, vector<2x10x8x64xbf16>, vector<2x10x1x64xbf16> -> vector<2x10x10x64xbf16>
    %6 = vector.extract_strided_slice %5 {offsets = [0, 0, 0, 0], sizes = [2, 8, 8, 64], strides = [1, 1, 1, 1]} : vector<2x10x10x64xbf16> to vector<2x8x8x64xbf16>
    %7 = vector.extract_strided_slice %5 {offsets = [0, 0, 1, 0], sizes = [2, 8, 8, 64], strides = [1, 1, 1, 1]} : vector<2x10x10x64xbf16> to vector<2x8x8x64xbf16>
    %8 = vector.extract_strided_slice %5 {offsets = [0, 0, 2, 0], sizes = [2, 8, 8, 64], strides = [1, 1, 1, 1]} : vector<2x10x10x64xbf16> to vector<2x8x8x64xbf16>
    %9 = vector.extract_strided_slice %5 {offsets = [0, 1, 0, 0], sizes = [2, 8, 8, 64], strides = [1, 1, 1, 1]} : vector<2x10x10x64xbf16> to vector<2x8x8x64xbf16>
    %10 = vector.extract_strided_slice %5 {offsets = [0, 1, 1, 0], sizes = [2, 8, 8, 64], strides = [1, 1, 1, 1]} : vector<2x10x10x64xbf16> to vector<2x8x8x64xbf16>
    %11 = vector.extract_strided_slice %5 {offsets = [0, 1, 2, 0], sizes = [2, 8, 8, 64], strides = [1, 1, 1, 1]} : vector<2x10x10x64xbf16> to vector<2x8x8x64xbf16>
    %12 = vector.extract_strided_slice %5 {offsets = [0, 2, 0, 0], sizes = [2, 8, 8, 64], strides = [1, 1, 1, 1]} : vector<2x10x10x64xbf16> to vector<2x8x8x64xbf16>
    %13 = vector.extract_strided_slice %5 {offsets = [0, 2, 1, 0], sizes = [2, 8, 8, 64], strides = [1, 1, 1, 1]} : vector<2x10x10x64xbf16> to vector<2x8x8x64xbf16>
    %14 = vector.extract_strided_slice %5 {offsets = [0, 2, 2, 0], sizes = [2, 8, 8, 64], strides = [1, 1, 1, 1]} : vector<2x10x10x64xbf16> to vector<2x8x8x64xbf16>
    %15 = tpu.concatenate %6, %7, %8, %9, %10, %11, %12, %13, %14 in 3 : vector<2x8x8x64xbf16>, vector<2x8x8x64xbf16>, vector<2x8x8x64xbf16>, vector<2x8x8x64xbf16>, vector<2x8x8x64xbf16>, vector<2x8x8x64xbf16>, vector<2x8x8x64xbf16>, vector<2x8x8x64xbf16>, vector<2x8x8x64xbf16> -> vector<2x8x8x576xbf16>
    %16 = vector.shape_cast %15 : vector<2x8x8x576xbf16> to vector<128x576xbf16>
    %c0_4 = arith.constant 0 : index
    %c0_5 = arith.constant 0 : index
    %17 = vector.load %arg2[%c0_4, %c0_5] : memref<576x64xbf16, #tpu.memory_space<vmem>>, vector<576x64xbf16>
    %cst_6 = arith.constant dense<0.000000e+00> : vector<128x64xf32>
    %18 = tpu.matmul %16, %17, %cst_6 {dimension_numbers = #tpu.dot_dimension_numbers<[1], [0], [0], [1], [0, 0, 1, 1], [], []>} : vector<128x576xbf16>, vector<576x64xbf16>, vector<128x64xf32> -> vector<128x64xf32>
    %c0_7 = arith.constant 0 : index
    %c0_8 = arith.constant 0 : index
    %19 = vector.load %arg3[%c0_7, %c0_8] : memref<1x64xf32, #tpu.memory_space<vmem>>, vector<1x64xf32>
    %20 = vector.broadcast %19 : vector<1x64xf32> to vector<128x64xf32>
    %21 = arith.addf %18, %20 : vector<128x64xf32>
    %cst_9 = arith.constant 0.000000e+00 : f32
    %22 = vector.broadcast %cst_9 : f32 to vector<128x64xf32>
    %23 = arith.maximumf %21, %22 : vector<128x64xf32>
    %24 = vector.shape_cast %23 : vector<128x64xf32> to vector<2x8x8x64xf32>
    %c0_10 = arith.constant 0 : index
    %c0_11 = arith.constant 0 : index
    %c0_12 = arith.constant 0 : index
    %c0_13 = arith.constant 0 : index
    %25 = vector.load %arg4[%c0_10, %c0_11, %c0_12, %c0_13] : memref<2x8x8x64xf32, #tpu.memory_space<vmem>>, vector<2x8x8x64xf32>
    tpu.vector_store %arg4[%c0_10, %c0_11, %c0_12, %c0_13], %24 {strides = array<i32>} : memref<2x8x8x64xf32, #tpu.memory_space<vmem>>, vector<2x8x8x64xf32>,
    return
  }
  func.func @transform_0(%arg0: i32) -> (i32, i32, i32, i32) {
    %c0_i32 = arith.constant 0 : i32
    %c0_i32_0 = arith.constant 0 : i32
    %c0_i32_1 = arith.constant 0 : i32
    %c0_i32_2 = arith.constant 0 : i32
    return %arg0, %c0_i32, %c0_i32_0, %c0_i32_1 : i32, i32, i32, i32
  }
  func.func @transform_1(%arg0: i32) -> (i32, i32) {
    %c0_i32 = arith.constant 0 : i32
    %c0_i32_0 = arith.constant 0 : i32
    %c0_i32_1 = arith.constant 0 : i32
    return %c0_i32, %c0_i32_0 : i32, i32
  }
  func.func @transform_2(%arg0: i32) -> (i32, i32) {
    %c0_i32 = arith.constant 0 : i32
    %c0_i32_0 = arith.constant 0 : i32
    %c0_i32_1 = arith.constant 0 : i32
    return %c0_i32, %c0_i32_0 : i32, i32
  }
  func.func @transform_3(%arg0: i32) -> (i32, i32, i32, i32) {
    %c0_i32 = arith.constant 0 : i32
    %c0_i32_0 = arith.constant 0 : i32
    %c0_i32_1 = arith.constant 0 : i32
    %c0_i32_2 = arith.constant 0 : i32
    return %arg0, %c0_i32, %c0_i32_0, %c0_i32_1 : i32, i32, i32, i32
  }
}

module attributes {stable_mosaic.version = 11 : i64} {
  func.func @_linear_kernel(%arg0: memref<2x1024xf32, #tpu.memory_space<vmem>>, %arg1: memref<1024x512xbf16, #tpu.memory_space<vmem>>, %arg2: memref<1x512xf32, #tpu.memory_space<vmem>>, %arg3: memref<2x512xf32, #tpu.memory_space<vmem>>) attributes {dimension_semantics = [], scalar_prefetch = 0 : i64, scratch_operands = 0 : i64, tpu.core_type = #tpu.core_type<tc>} {
    %c0 = arith.constant 0 : index
    %c0_0 = arith.constant 0 : index
    %0 = vector.load %arg0[%c0, %c0_0] : memref<2x1024xf32, #tpu.memory_space<vmem>>, vector<2x1024xf32>
    %1 = arith.truncf %0 : vector<2x1024xf32> to vector<2x1024xbf16>
    %c0_1 = arith.constant 0 : index
    %c0_2 = arith.constant 0 : index
    %2 = vector.load %arg1[%c0_1, %c0_2] : memref<1024x512xbf16, #tpu.memory_space<vmem>>, vector<1024x512xbf16>
    %cst = arith.constant dense<0.000000e+00> : vector<2x512xf32>
    %3 = tpu.matmul %1, %2, %cst {dimension_numbers = #tpu.dot_dimension_numbers<[1], [0], [0], [1], [0, 0, 1, 1], [], []>} : vector<2x1024xbf16>, vector<1024x512xbf16>, vector<2x512xf32> -> vector<2x512xf32>
    %c0_3 = arith.constant 0 : index
    %c0_4 = arith.constant 0 : index
    %4 = vector.load %arg2[%c0_3, %c0_4] : memref<1x512xf32, #tpu.memory_space<vmem>>, vector<1x512xf32>
    %5 = vector.broadcast %4 : vector<1x512xf32> to vector<2x512xf32>
    %6 = arith.addf %3, %5 : vector<2x512xf32>
    %cst_5 = arith.constant 0.000000e+00 : f32
    %7 = vector.broadcast %cst_5 : f32 to vector<2x512xf32>
    %8 = arith.maximumf %6, %7 : vector<2x512xf32>
    %c0_6 = arith.constant 0 : index
    %c0_7 = arith.constant 0 : index
    %9 = vector.load %arg3[%c0_6, %c0_7] : memref<2x512xf32, #tpu.memory_space<vmem>>, vector<2x512xf32>
    tpu.vector_store %arg3[%c0_6, %c0_7], %8 {strides = array<i32>} : memref<2x512xf32, #tpu.memory_space<vmem>>, vector<2x512xf32>,
    return
  }
}

module attributes {stable_mosaic.version = 11 : i64} {
  func.func @_linear_kernel(%arg0: memref<2x512xf32, #tpu.memory_space<vmem>>, %arg1: memref<512x15xbf16, #tpu.memory_space<vmem>>, %arg2: memref<1x15xf32, #tpu.memory_space<vmem>>, %arg3: memref<2x15xf32, #tpu.memory_space<vmem>>) attributes {dimension_semantics = [], scalar_prefetch = 0 : i64, scratch_operands = 0 : i64, tpu.core_type = #tpu.core_type<tc>} {
    %c0 = arith.constant 0 : index
    %c0_0 = arith.constant 0 : index
    %0 = vector.load %arg0[%c0, %c0_0] : memref<2x512xf32, #tpu.memory_space<vmem>>, vector<2x512xf32>
    %1 = arith.truncf %0 : vector<2x512xf32> to vector<2x512xbf16>
    %c0_1 = arith.constant 0 : index
    %c0_2 = arith.constant 0 : index
    %2 = vector.load %arg1[%c0_1, %c0_2] : memref<512x15xbf16, #tpu.memory_space<vmem>>, vector<512x15xbf16>
    %cst = arith.constant dense<0.000000e+00> : vector<2x15xf32>
    %3 = tpu.matmul %1, %2, %cst {dimension_numbers = #tpu.dot_dimension_numbers<[1], [0], [0], [1], [0, 0, 1, 1], [], []>} : vector<2x512xbf16>, vector<512x15xbf16>, vector<2x15xf32> -> vector<2x15xf32>
    %c0_3 = arith.constant 0 : index
    %c0_4 = arith.constant 0 : index
    %4 = vector.load %arg2[%c0_3, %c0_4] : memref<1x15xf32, #tpu.memory_space<vmem>>, vector<1x15xf32>
    %5 = vector.broadcast %4 : vector<1x15xf32> to vector<2x15xf32>
    %6 = arith.addf %3, %5 : vector<2x15xf32>
    %c0_5 = arith.constant 0 : index
    %c0_6 = arith.constant 0 : index
    %7 = vector.load %arg3[%c0_5, %c0_6] : memref<2x15xf32, #tpu.memory_space<vmem>>, vector<2x15xf32>
    tpu.vector_store %arg3[%c0_5, %c0_6], %6 {strides = array<i32>} : memref<2x15xf32, #tpu.memory_space<vmem>>, vector<2x15xf32>,
    return
  }
}

</mosaic_0001>

<llo_original>
// kernel: forward.8
$region0: #{forward.8}
  #allocation0 [shape = 'u32[]', space=smem, size = 0x4, offset = 0x4, fixed_abs, tag = 'smem constant byte address 0x4 - core index']
  #allocation1 [shape = 'u32[72,128]{1,0:T(1,128)}', space=vmem, size = 0x9000, scoped, tag = 'internal scratch']
  %s0 = inlined_call_operand.vmem [shape: f32[2,8,8,32], index: 0, kind: input, shape index: {}]
  %s1 = inlined_call_operand.vmem [shape: bf16[288,64], index: 1, kind: input, shape index: {}]
  %s2 = inlined_call_operand.vmem [shape: f32[1,64], index: 2, kind: input, shape index: {}]
  %s3 = inlined_call_operand.vmem [shape: f32[2,8,8,64], index: 3, kind: output, shape index: {}]
  %s4 = sld [smem:[#allocation0]]
  $region22: #{forward.8} parent=0
    _
  %s6 = ssub.s32 1, %s4
  %s7 = scalar_select 0, %s6, %s4
  // Predicated region
  $region2: #{forward.8} parent=0 // pred_check
    _
  $region3: #{forward.8} parent=0 // pred_check_branch
    %9 = sbr.rel (0) target = $region5
  $region4: #{forward.8} parent=0 // pred_region
    _
  $region5: #{forward.8} parent=0 // pred_fallthru
    _
  // Predicated region
  $region6: #{forward.8} parent=0 // pred_check
    _
  $region7: #{forward.8} parent=0 // pred_check_branch
    %11 = sbr.rel (0) target = $region9
  $region8: #{forward.8} parent=0 // pred_region
    _
  $region9: #{forward.8} parent=0 // pred_fallthru
    _
  // Predicated region
  $region10: #{forward.8} parent=0 // pred_check
    _
  $region11: #{forward.8} parent=0 // pred_check_branch
    %13 = sbr.rel (0) target = $region13
  $region12: #{forward.8} parent=0 // pred_region
    _
  $region13: #{forward.8} parent=0 // pred_fallthru
    _
  %v15 = vld [vmem:[%s0] sm:$0xff]
  %v16 = vld [vmem:[%s0 + $0x8] sm:$0xff]
  %v17 = vld [vmem:[%s0 + $0x10] sm:$0xff]
  %v18 = vld [vmem:[%s0 + $0x18] sm:$0xff]
  %v19 = vld [vmem:[%s0 + $0x20] sm:$0xff]
  %v20 = vld [vmem:[%s0 + $0x28] sm:$0xff]
  %v21 = vld [vmem:[%s0 + $0x30] sm:$0xff]
  %v22 = vld [vmem:[%s0 + $0x38] sm:$0xff]
  %v23 = vld [vmem:[%s0 + $0x40] sm:$0xff]
  %v24 = vld [vmem:[%s0 + $0x48] sm:$0xff]
  %v25 = vld [vmem:[%s0 + $0x50] sm:$0xff]
  %v26 = vld [vmem:[%s0 + $0x58] sm:$0xff]
  %v27 = vld [vmem:[%s0 + $0x60] sm:$0xff]
  %v28 = vld [vmem:[%s0 + $0x68] sm:$0xff]
  %v29 = vld [vmem:[%s0 + $0x70] sm:$0xff]
  %v30 = vld [vmem:[%s0 + $0x78] sm:$0xff]
  %v31 = vpack.c.bf16 %v15, %v15
  %v32 = vpack.c.bf16 %v16, %v16
  %v33 = vpack.c.bf16 %v17, %v17
  %v34 = vpack.c.bf16 %v18, %v18
  %v35 = vpack.c.bf16 %v19, %v19
  %v36 = vpack.c.bf16 %v20, %v20
  %v37 = vpack.c.bf16 %v21, %v21
  %v38 = vpack.c.bf16 %v22, %v22
  %v39 = vpack.c.bf16 %v23, %v23
  %v40 = vpack.c.bf16 %v24, %v24
  %v41 = vpack.c.bf16 %v25, %v25
  %v42 = vpack.c.bf16 %v26, %v26
  %v43 = vpack.c.bf16 %v27, %v27
  %v44 = vpack.c.bf16 %v28, %v28
  %v45 = vpack.c.bf16 %v29, %v29
  %v46 = vpack.c.bf16 %v30, %v30
  %v48 = vshrl.u32 0, 16
  %v50 = vrot.slane %v48, 7
  %v51 = vshll.u32 0, 16
  %v53 = vor.u32 %v50, %v51
  %v55 = vshrl.u32 %v31, 16
  %v57 = vrot.slane %v55, 7
  %v58 = vshll.u32 %v31, 16
  %v60 = vor.u32 %v57, %v58
  %v62 = vshrl.u32 %v32, 16
  %v64 = vrot.slane %v62, 7
  %v65 = vshll.u32 %v32, 16
  %v67 = vor.u32 %v64, %v65
  %v69 = vshrl.u32 %v33, 16
  %v71 = vrot.slane %v69, 7
  %v72 = vshll.u32 %v33, 16
  %v74 = vor.u32 %v71, %v72
  %v76 = vshrl.u32 %v34, 16
  %v78 = vrot.slane %v76, 7
  %v79 = vshll.u32 %v34, 16
  %v81 = vor.u32 %v78, %v79
  %v83 = vshrl.u32 %v35, 16
  %v85 = vrot.slane %v83, 7
  %v86 = vshll.u32 %v35, 16
  %v88 = vor.u32 %v85, %v86
  %v90 = vshrl.u32 %v36, 16
  %v92 = vrot.slane %v90, 7
  %v93 = vshll.u32 %v36, 16
  %v95 = vor.u32 %v92, %v93
  %v97 = vshrl.u32 %v37, 16
  %v99 = vrot.slane %v97, 7
  %v100 = vshll.u32 %v37, 16
  %v102 = vor.u32 %v99, %v100
  %v104 = vshrl.u32 %v38, 16
  %v106 = vrot.slane %v104, 7
  %v107 = vshll.u32 %v38, 16
  %v109 = vor.u32 %v106, %v107
  %v111 = vshrl.u32 %v39, 16
  %v113 = vrot.slane %v111, 7
  %v114 = vshll.u32 %v39, 16
  %v116 = vor.u32 %v113, %v114
  %v118 = vshrl.u32 %v40, 16
  %v120 = vrot.slane %v118, 7
  %v121 = vshll.u32 %v40, 16
  %v123 = vor.u32 %v120, %v121
  %v125 = vshrl.u32 %v41, 16
  %v127 = vrot.slane %v125, 7
  %v128 = vshll.u32 %v41, 16
  %v130 = vor.u32 %v127, %v128
  %v132 = vshrl.u32 %v42, 16
  %v134 = vrot.slane %v132, 7
  %v135 = vshll.u32 %v42, 16
  %v137 = vor.u32 %v134, %v135
  %v139 = vshrl.u32 %v43, 16
  %v141 = vrot.slane %v139, 7
  %v142 = vshll.u32 %v43, 16
  %v144 = vor.u32 %v141, %v142
  %v146 = vshrl.u32 %v44, 16
  %v148 = vrot.slane %v146, 7
  %v149 = vshll.u32 %v44, 16
  %v151 = vor.u32 %v148, %v149
  %v153 = vshrl.u32 %v45, 16
  %v155 = vrot.slane %v153, 7
  %v156 = vshll.u32 %v45, 16
  %v158 = vor.u32 %v155, %v156
  %v160 = vshrl.u32 %v46, 16
  %v162 = vrot.slane %v160, 7
  %v163 = vshll.u32 %v46, 16
  %v165 = vor.u32 %v162, %v163
  %vm183 = vcmask 1040384
  %vm184 = vsmask.f32 256
  %vm185 = vmand %vm183, %vm184
  %v186 = vsel %vm185, 0, %v53
  %v187 = vsel %vm185, 0, %v60
  %v188 = vsel %vm185, 0, %v67
  %v189 = vsel %vm185, 0, %v74
  %v190 = vsel %vm185, 0, %v81
  %v191 = vsel %vm185, 0, %v88
  %v192 = vsel %vm185, 0, %v95
  %v193 = vsel %vm185, 0, %v102
  %v194 = vsel %vm185, 0, %v109
  %v195 = vsel %vm185, 0, %v116
  %v196 = vsel %vm185, 0, %v123
  %v197 = vsel %vm185, 0, %v130
  %v198 = vsel %vm185, 0, %v137
  %v199 = vsel %vm185, 0, %v144
  %v200 = vsel %vm185, 0, %v151
  %v201 = vsel %vm185, 0, %v158
  %v202 = vsel %vm185, 0, %v165
  %vm203 = vcmask 1044480
  %vm204 = vsmask.f32 4352
  %vm205 = vmand %vm203, %vm204
  %v206 = vsel %vm205, %v186, 0
  %v207 = vsel %vm205, %v187, 0
  %v208 = vsel %vm205, %v188, 0
  %v209 = vsel %vm205, %v189, 0
  %v210 = vsel %vm205, %v190, 0
  %v211 = vsel %vm205, %v191, 0
  %v212 = vsel %vm205, %v192, 0
  %v213 = vsel %vm205, %v193, 0
  %v214 = vsel %vm205, %v194, 0
  %v215 = vsel %vm205, %v195, 0
  %v216 = vsel %vm205, %v196, 0
  %v217 = vsel %vm205, %v197, 0
  %v218 = vsel %vm205, %v198, 0
  %v219 = vsel %vm205, %v199, 0
  %v220 = vsel %vm205, %v200, 0
  %v221 = vsel %vm205, %v201, 0
  %v222 = vsel %vm205, %v202, 0
  %v224 = vshrl.u32 %v206, 16
  %v226 = vshll.u32 %v206, 16
  %v228 = vrot.slane %v226, 1
  %v229 = vor.u32 %v224, %v228
  %v231 = vshrl.u32 %v207, 16
  %v233 = vshll.u32 %v207, 16
  %v235 = vrot.slane %v233, 1
  %v236 = vor.u32 %v231, %v235
  %v238 = vshrl.u32 %v208, 16
  %v240 = vshll.u32 %v208, 16
  %v242 = vrot.slane %v240, 1
  %v243 = vor.u32 %v238, %v242
  %v245 = vshrl.u32 %v209, 16
  %v247 = vshll.u32 %v209, 16
  %v249 = vrot.slane %v247, 1
  %v250 = vor.u32 %v245, %v249
  %v252 = vshrl.u32 %v210, 16
  %v254 = vshll.u32 %v210, 16
  %v256 = vrot.slane %v254, 1
  %v257 = vor.u32 %v252, %v256
  %v259 = vshrl.u32 %v211, 16
  %v261 = vshll.u32 %v211, 16
  %v263 = vrot.slane %v261, 1
  %v264 = vor.u32 %v259, %v263
  %v266 = vshrl.u32 %v212, 16
  %v268 = vshll.u32 %v212, 16
  %v270 = vrot.slane %v268, 1
  %v271 = vor.u32 %v266, %v270
  %v273 = vshrl.u32 %v213, 16
  %v275 = vshll.u32 %v213, 16
  %v277 = vrot.slane %v275, 1
  %v278 = vor.u32 %v273, %v277
  %v280 = vshrl.u32 %v215, 16
  %v282 = vshll.u32 %v215, 16
  %v284 = vrot.slane %v282, 1
  %v285 = vor.u32 %v280, %v284
  %v287 = vshrl.u32 %v216, 16
  %v289 = vshll.u32 %v216, 16
  %v291 = vrot.slane %v289, 1
  %v292 = vor.u32 %v287, %v291
  %v294 = vshrl.u32 %v217, 16
  %v296 = vshll.u32 %v217, 16
  %v298 = vrot.slane %v296, 1
  %v299 = vor.u32 %v294, %v298
  %v301 = vshrl.u32 %v218, 16
  %v303 = vshll.u32 %v218, 16
  %v305 = vrot.slane %v303, 1
  %v306 = vor.u32 %v301, %v305
  %v308 = vshrl.u32 %v219, 16
  %v310 = vshll.u32 %v219, 16
  %v312 = vrot.slane %v310, 1
  %v313 = vor.u32 %v308, %v312
  %v315 = vshrl.u32 %v220, 16
  %v317 = vshll.u32 %v220, 16
  %v319 = vrot.slane %v317, 1
  %v320 = vor.u32 %v315, %v319
  %v322 = vshrl.u32 %v221, 16
  %v324 = vshll.u32 %v221, 16
  %v326 = vrot.slane %v324, 1
  %v327 = vor.u32 %v322, %v326
  %328 = vrot.lane.b32.xlu0 %v229, 32
  %v329 = vpop.permute.xlu0 %328
  %330 = vrot.lane.b32.xlu0 %v236, 32
  %v331 = vpop.permute.xlu0 %330
  %332 = vrot.lane.b32.xlu0 %v243, 32
  %v333 = vpop.permute.xlu0 %332
  %334 = vrot.lane.b32.xlu0 %v250, 32
  %v335 = vpop.permute.xlu0 %334
  %336 = vrot.lane.b32.xlu0 %v257, 32
  %v337 = vpop.permute.xlu0 %336
  %338 = vrot.lane.b32.xlu0 %v264, 32
  %v339 = vpop.permute.xlu0 %338
  %340 = vrot.lane.b32.xlu0 %v271, 32
  %v341 = vpop.permute.xlu0 %340
  %342 = vrot.lane.b32.xlu0 %v278, 32
  %v343 = vpop.permute.xlu0 %342
  %344 = vrot.lane.b32.xlu0 %v285, 32
  %v345 = vpop.permute.xlu0 %344
  %346 = vrot.lane.b32.xlu0 %v292, 32
  %v347 = vpop.permute.xlu0 %346
  %348 = vrot.lane.b32.xlu0 %v299, 32
  %v349 = vpop.permute.xlu0 %348
  %350 = vrot.lane.b32.xlu0 %v306, 32
  %v351 = vpop.permute.xlu0 %350
  %352 = vrot.lane.b32.xlu0 %v313, 32
  %v353 = vpop.permute.xlu0 %352
  %354 = vrot.lane.b32.xlu0 %v320, 32
  %v355 = vpop.permute.xlu0 %354
  %356 = vrot.lane.b32.xlu0 %v327, 32
  %v357 = vpop.permute.xlu0 %356
  %v373 = vrot.slane %v206, 1
  %v374 = vrot.slane %v207, 1
  %v375 = vrot.slane %v208, 1
  %v376 = vrot.slane %v209, 1
  %v377 = vrot.slane %v210, 1
  %v378 = vrot.slane %v211, 1
  %v379 = vrot.slane %v212, 1
  %v380 = vrot.slane %v213, 1
  %v381 = vrot.slane %v215, 1
  %v382 = vrot.slane %v216, 1
  %v383 = vrot.slane %v217, 1
  %v384 = vrot.slane %v218, 1
  %v385 = vrot.slane %v219, 1
  %v386 = vrot.slane %v220, 1
  %v387 = vrot.slane %v221, 1
  %388 = vrot.lane.b32.xlu0 %v373, 64
  %v389 = vpop.permute.xlu0 %388
  %390 = vrot.lane.b32.xlu0 %v374, 64
  %v391 = vpop.permute.xlu0 %390
  %392 = vrot.lane.b32.xlu0 %v375, 64
  %v393 = vpop.permute.xlu0 %392
  %394 = vrot.lane.b32.xlu0 %v376, 64
  %v395 = vpop.permute.xlu0 %394
  %396 = vrot.lane.b32.xlu0 %v377, 64
  %v397 = vpop.permute.xlu0 %396
  %398 = vrot.lane.b32.xlu0 %v378, 64
  %v399 = vpop.permute.xlu0 %398
  %400 = vrot.lane.b32.xlu0 %v379, 64
  %v401 = vpop.permute.xlu0 %400
  %402 = vrot.lane.b32.xlu0 %v380, 64
  %v403 = vpop.permute.xlu0 %402
  %404 = vrot.lane.b32.xlu0 %v381, 64
  %v405 = vpop.permute.xlu0 %404
  %406 = vrot.lane.b32.xlu0 %v382, 64
  %v407 = vpop.permute.xlu0 %406
  %408 = vrot.lane.b32.xlu0 %v383, 64
  %v409 = vpop.permute.xlu0 %408
  %410 = vrot.lane.b32.xlu0 %v384, 64
  %v411 = vpop.permute.xlu0 %410
  %412 = vrot.lane.b32.xlu0 %v385, 64
  %v413 = vpop.permute.xlu0 %412
  %414 = vrot.lane.b32.xlu0 %v386, 64
  %v415 = vpop.permute.xlu0 %414
  %416 = vrot.lane.b32.xlu0 %v387, 64
  %v417 = vpop.permute.xlu0 %416
  %420 = vrot.lane.b32.xlu0 %v207, 96
  %v421 = vpop.permute.xlu0 %420
  %422 = vrot.lane.b32.xlu0 %v208, 96
  %v423 = vpop.permute.xlu0 %422
  %424 = vrot.lane.b32.xlu0 %v209, 96
  %v425 = vpop.permute.xlu0 %424
  %426 = vrot.lane.b32.xlu0 %v210, 96
  %v427 = vpop.permute.xlu0 %426
  %428 = vrot.lane.b32.xlu0 %v211, 96
  %v429 = vpop.permute.xlu0 %428
  %430 = vrot.lane.b32.xlu0 %v212, 96
  %v431 = vpop.permute.xlu0 %430
  %432 = vrot.lane.b32.xlu0 %v213, 96
  %v433 = vpop.permute.xlu0 %432
  %434 = vrot.lane.b32.xlu0 %v214, 96
  %v435 = vpop.permute.xlu0 %434
  %436 = vrot.lane.b32.xlu0 %v215, 96
  %v437 = vpop.permute.xlu0 %436
  %438 = vrot.lane.b32.xlu0 %v216, 96
  %v439 = vpop.permute.xlu0 %438
  %440 = vrot.lane.b32.xlu0 %v217, 96
  %v441 = vpop.permute.xlu0 %440
  %442 = vrot.lane.b32.xlu0 %v218, 96
  %v443 = vpop.permute.xlu0 %442
  %444 = vrot.lane.b32.xlu0 %v219, 96
  %v445 = vpop.permute.xlu0 %444
  %446 = vrot.lane.b32.xlu0 %v220, 96
  %v447 = vpop.permute.xlu0 %446
  %448 = vrot.lane.b32.xlu0 %v221, 96
  %v449 = vpop.permute.xlu0 %448
  %450 = vrot.lane.b32.xlu0 %v222, 96
  %v451 = vpop.permute.xlu0 %450
  %v453 = vshrl.u32 %v214, 16
  %v455 = vshll.u32 %v214, 16
  %v457 = vrot.slane %v455, 1
  %v458 = vor.u32 %v453, %v457
  %v460 = vshrl.u32 %v222, 16
  %v462 = vshll.u32 %v222, 16
  %v464 = vrot.slane %v462, 1
  %v465 = vor.u32 %v460, %v464
  %v466 = vrot.slane %v214, 1
  %v467 = vrot.slane %v222, 1
  %468 = vrot.lane.b32.xlu0 %v374, 32
  %v469 = vpop.permute.xlu0 %468
  %470 = vrot.lane.b32.xlu0 %v375, 32
  %v471 = vpop.permute.xlu0 %470
  %472 = vrot.lane.b32.xlu0 %v376, 32
  %v473 = vpop.permute.xlu0 %472
  %474 = vrot.lane.b32.xlu0 %v377, 32
  %v475 = vpop.permute.xlu0 %474
  %476 = vrot.lane.b32.xlu0 %v378, 32
  %v477 = vpop.permute.xlu0 %476
  %478 = vrot.lane.b32.xlu0 %v379, 32
  %v479 = vpop.permute.xlu0 %478
  %480 = vrot.lane.b32.xlu0 %v380, 32
  %v481 = vpop.permute.xlu0 %480
  %482 = vrot.lane.b32.xlu0 %v466, 32
  %v483 = vpop.permute.xlu0 %482
  %484 = vrot.lane.b32.xlu0 %v381, 32
  %v485 = vpop.permute.xlu0 %484
  %486 = vrot.lane.b32.xlu0 %v382, 32
  %v487 = vpop.permute.xlu0 %486
  %488 = vrot.lane.b32.xlu0 %v383, 32
  %v489 = vpop.permute.xlu0 %488
  %490 = vrot.lane.b32.xlu0 %v384, 32
  %v491 = vpop.permute.xlu0 %490
  %492 = vrot.lane.b32.xlu0 %v385, 32
  %v493 = vpop.permute.xlu0 %492
  %494 = vrot.lane.b32.xlu0 %v386, 32
  %v495 = vpop.permute.xlu0 %494
  %496 = vrot.lane.b32.xlu0 %v387, 32
  %v497 = vpop.permute.xlu0 %496
  %498 = vrot.lane.b32.xlu0 %v467, 32
  %v499 = vpop.permute.xlu0 %498
  %500 = vrot.lane.b32.xlu0 %v208, 64
  %v501 = vpop.permute.xlu0 %500
  %502 = vrot.lane.b32.xlu0 %v209, 64
  %v503 = vpop.permute.xlu0 %502
  %504 = vrot.lane.b32.xlu0 %v210, 64
  %v505 = vpop.permute.xlu0 %504
  %506 = vrot.lane.b32.xlu0 %v211, 64
  %v507 = vpop.permute.xlu0 %506
  %508 = vrot.lane.b32.xlu0 %v212, 64
  %v509 = vpop.permute.xlu0 %508
  %510 = vrot.lane.b32.xlu0 %v213, 64
  %v511 = vpop.permute.xlu0 %510
  %512 = vrot.lane.b32.xlu0 %v214, 64
  %v513 = vpop.permute.xlu0 %512
  %514 = vrot.lane.b32.xlu0 %v206, 64
  %v515 = vpop.permute.xlu0 %514
  %516 = vrot.lane.b32.xlu0 %v216, 64
  %v517 = vpop.permute.xlu0 %516
  %518 = vrot.lane.b32.xlu0 %v217, 64
  %v519 = vpop.permute.xlu0 %518
  %520 = vrot.lane.b32.xlu0 %v218, 64
  %v521 = vpop.permute.xlu0 %520
  %522 = vrot.lane.b32.xlu0 %v219, 64
  %v523 = vpop.permute.xlu0 %522
  %524 = vrot.lane.b32.xlu0 %v220, 64
  %v525 = vpop.permute.xlu0 %524
  %526 = vrot.lane.b32.xlu0 %v221, 64
  %v527 = vpop.permute.xlu0 %526
  %528 = vrot.lane.b32.xlu0 %v222, 64
  %v529 = vpop.permute.xlu0 %528
  %530 = vrot.lane.b32.xlu0 %v243, 96
  %v531 = vpop.permute.xlu0 %530
  %532 = vrot.lane.b32.xlu0 %v250, 96
  %v533 = vpop.permute.xlu0 %532
  %534 = vrot.lane.b32.xlu0 %v257, 96
  %v535 = vpop.permute.xlu0 %534
  %536 = vrot.lane.b32.xlu0 %v264, 96
  %v537 = vpop.permute.xlu0 %536
  %538 = vrot.lane.b32.xlu0 %v271, 96
  %v539 = vpop.permute.xlu0 %538
  %540 = vrot.lane.b32.xlu0 %v278, 96
  %v541 = vpop.permute.xlu0 %540
  %542 = vrot.lane.b32.xlu0 %v458, 96
  %v543 = vpop.permute.xlu0 %542
  %544 = vrot.lane.b32.xlu0 %v229, 96
  %v545 = vpop.permute.xlu0 %544
  %546 = vrot.lane.b32.xlu0 %v292, 96
  %v547 = vpop.permute.xlu0 %546
  %548 = vrot.lane.b32.xlu0 %v299, 96
  %v549 = vpop.permute.xlu0 %548
  %550 = vrot.lane.b32.xlu0 %v306, 96
  %v551 = vpop.permute.xlu0 %550
  %552 = vrot.lane.b32.xlu0 %v313, 96
  %v553 = vpop.permute.xlu0 %552
  %554 = vrot.lane.b32.xlu0 %v320, 96
  %v555 = vpop.permute.xlu0 %554
  %556 = vrot.lane.b32.xlu0 %v327, 96
  %v557 = vpop.permute.xlu0 %556
  %558 = vrot.lane.b32.xlu0 %v465, 96
  %v559 = vpop.permute.xlu0 %558
  %vm560 = vcmask 261120
  %v562 = vsel %vm560, %v206, %v329
  %v564 = vsel %vm560, %v207, %v331
  %v566 = vsel %vm560, %v208, %v333
  %v568 = vsel %vm560, %v209, %v335
  %v570 = vsel %vm560, %v210, %v337
  %v572 = vsel %vm560, %v211, %v339
  %v574 = vsel %vm560, %v212, %v341
  %v576 = vsel %vm560, %v213, %v343
  %v578 = vsel %vm560, %v215, %v345
  %v580 = vsel %vm560, %v216, %v347
  %v582 = vsel %vm560, %v217, %v349
  %v584 = vsel %vm560, %v218, %v351
  %v586 = vsel %vm560, %v219, %v353
  %v588 = vsel %vm560, %v220, %v355
  %v590 = vsel %vm560, %v221, %v357
  %vm591 = vcmask 523264
  %v593 = vsel %vm591, %v562, %v389
  %v595 = vsel %vm591, %v564, %v391
  %v597 = vsel %vm591, %v566, %v393
  %v599 = vsel %vm591, %v568, %v395
  %v601 = vsel %vm591, %v570, %v397
  %v603 = vsel %vm591, %v572, %v399
  %v605 = vsel %vm591, %v574, %v401
  %v607 = vsel %vm591, %v576, %v403
  %v609 = vsel %vm591, %v578, %v405
  %v611 = vsel %vm591, %v580, %v407
  %v613 = vsel %vm591, %v582, %v409
  %v615 = vsel %vm591, %v584, %v411
  %v617 = vsel %vm591, %v586, %v413
  %v619 = vsel %vm591, %v588, %v415
  %v621 = vsel %vm591, %v590, %v417
  %vm622 = vcmask 785408
  %v624 = vsel %vm622, %v593, %v421
  %v626 = vsel %vm622, %v595, %v423
  %v628 = vsel %vm622, %v597, %v425
  %v630 = vsel %vm622, %v599, %v427
  %v632 = vsel %vm622, %v601, %v429
  %v634 = vsel %vm622, %v603, %v431
  %v636 = vsel %vm622, %v605, %v433
  %v638 = vsel %vm622, %v607, %v435
  %v640 = vsel %vm622, %v593, %v437
  %v642 = vsel %vm622, %v609, %v439
  %v644 = vsel %vm622, %v611, %v441
  %v646 = vsel %vm622, %v613, %v443
  %v648 = vsel %vm622, %v615, %v445
  %v650 = vsel %vm622, %v617, %v447
  %v652 = vsel %vm622, %v619, %v449
  %v654 = vsel %vm622, %v621, %v451
  %v657 = vsel %vm560, %v236, %v469
  %v660 = vsel %vm560, %v243, %v471
  %v663 = vsel %vm560, %v250, %v473
  %v666 = vsel %vm560, %v257, %v475
  %v669 = vsel %vm560, %v264, %v477
  %v672 = vsel %vm560, %v271, %v479
  %v675 = vsel %vm560, %v278, %v481
  %v678 = vsel %vm560, %v458, %v483
  %v681 = vsel %vm560, %v285, %v485
  %v684 = vsel %vm560, %v292, %v487
  %v687 = vsel %vm560, %v299, %v489
  %v690 = vsel %vm560, %v306, %v491
  %v693 = vsel %vm560, %v313, %v493
  %v696 = vsel %vm560, %v320, %v495
  %v699 = vsel %vm560, %v327, %v497
  %v702 = vsel %vm560, %v465, %v499
  %v704 = vsel %vm591, %v657, %v501
  %v706 = vsel %vm591, %v660, %v503
  %v708 = vsel %vm591, %v663, %v505
  %v710 = vsel %vm591, %v666, %v507
  %v712 = vsel %vm591, %v669, %v509
  %v714 = vsel %vm591, %v672, %v511
  %v716 = vsel %vm591, %v675, %v513
  %v718 = vsel %vm591, %v678, %v515
  %v720 = vsel %vm591, %v681, %v517
  %v722 = vsel %vm591, %v684, %v519
  %v724 = vsel %vm591, %v687, %v521
  %v726 = vsel %vm591, %v690, %v523
  %v728 = vsel %vm591, %v693, %v525
  %v730 = vsel %vm591, %v696, %v527
  %v732 = vsel %vm591, %v699, %v529
  %v733 = vsel %vm591, %v702, %v515
  %v735 = vsel %vm622, %v704, %v531
  %v737 = vsel %vm622, %v706, %v533
  %v739 = vsel %vm622, %v708, %v535
  %v741 = vsel %vm622, %v710, %v537
  %v743 = vsel %vm622, %v712, %v539
  %v745 = vsel %vm622, %v714, %v541
  %v747 = vsel %vm622, %v716, %v543
  %v749 = vsel %vm622, %v718, %v545
  %v751 = vsel %vm622, %v720, %v547
  %v753 = vsel %vm622, %v722, %v549
  %v755 = vsel %vm622, %v724, %v551
  %v757 = vsel %vm622, %v726, %v553
  %v759 = vsel %vm622, %v728, %v555
  %v761 = vsel %vm622, %v730, %v557
  %v763 = vsel %vm622, %v732, %v559
  %v764 = vsel %vm622, %v733, %v545
  %v797 = vunpack.c.l.b16 %v624
  %v798 = vunpack.c.l.b16 %v735
  %v799 = vunpack.c.l.b16 %v375
  %v800 = vunpack.c.l.b16 %v626
  %v801 = vunpack.c.l.b16 %v737
  %v802 = vunpack.c.l.b16 %v376
  %v803 = vunpack.c.l.b16 %v628
  %v804 = vunpack.c.l.b16 %v739
  %v805 = vunpack.c.l.b16 %v377
  %v806 = vunpack.c.l.b16 %v630
  %v807 = vunpack.c.l.b16 %v741
  %v808 = vunpack.c.l.b16 %v378
  %v809 = vunpack.c.l.b16 %v632
  %v810 = vunpack.c.l.b16 %v743
  %v811 = vunpack.c.l.b16 %v379
  %v812 = vunpack.c.l.b16 %v634
  %v813 = vunpack.c.l.b16 %v745
  %v814 = vunpack.c.l.b16 %v380
  %v815 = vunpack.c.l.b16 %v636
  %v816 = vunpack.c.l.b16 %v747
  %v817 = vunpack.c.l.b16 %v466
  %v818 = vunpack.c.l.b16 %v638
  %v819 = vunpack.c.l.b16 %v749
  %v820 = vunpack.c.l.b16 %v373
  %v821 = vunpack.c.l.b16 %v640
  %v822 = vunpack.c.l.b16 %v751
  %v823 = vunpack.c.l.b16 %v382
  %v824 = vunpack.c.l.b16 %v642
  %v825 = vunpack.c.l.b16 %v753
  %v826 = vunpack.c.l.b16 %v383
  %v827 = vunpack.c.l.b16 %v644
  %v828 = vunpack.c.l.b16 %v755
  %v829 = vunpack.c.l.b16 %v384
  %v830 = vunpack.c.l.b16 %v646
  %v831 = vunpack.c.l.b16 %v757
  %v832 = vunpack.c.l.b16 %v385
  %v833 = vunpack.c.l.b16 %v648
  %v834 = vunpack.c.l.b16 %v759
  %v835 = vunpack.c.l.b16 %v386
  %v836 = vunpack.c.l.b16 %v650
  %v837 = vunpack.c.l.b16 %v761
  %v838 = vunpack.c.l.b16 %v387
  %v839 = vunpack.c.l.b16 %v652
  %v840 = vunpack.c.l.b16 %v763
  %v841 = vunpack.c.l.b16 %v467
  %v842 = vunpack.c.l.b16 %v654
  %v843 = vunpack.c.l.b16 %v764
  %v844 = vld [vmem:[%s1] sm:$0xf]
  %v845 = vld [vmem:[%s1 + $0x4] sm:$0xf]
  %v846 = vld [vmem:[%s1 + $0x8] sm:$0xf]
  %v847 = vld [vmem:[%s1 + $0xc] sm:$0xf]
  %v848 = vld [vmem:[%s1 + $0x10] sm:$0xf]
  %v849 = vld [vmem:[%s1 + $0x14] sm:$0xf]
  %v850 = vld [vmem:[%s1 + $0x18] sm:$0xf]
  %v851 = vld [vmem:[%s1 + $0x1c] sm:$0xf]
  %v852 = vld [vmem:[%s1 + $0x20] sm:$0xf]
  %v853 = vld [vmem:[%s1 + $0x24] sm:$0xf]
  %v854 = vld [vmem:[%s1 + $0x28] sm:$0xf]
  %v855 = vld [vmem:[%s1 + $0x2c] sm:$0xf]
  %v856 = vld [vmem:[%s1 + $0x30] sm:$0xf]
  %v857 = vld [vmem:[%s1 + $0x34] sm:$0xf]
  %v858 = vld [vmem:[%s1 + $0x38] sm:$0xf]
  %v859 = vld [vmem:[%s1 + $0x3c] sm:$0xf]
  %v860 = vld [vmem:[%s1 + $0x40] sm:$0xf]
  %v861 = vld [vmem:[%s1 + $0x44] sm:$0xf]
  %v862 = vld [vmem:[%s1 + $0x48] sm:$0xf]
  %v863 = vld [vmem:[%s1 + $0x4c] sm:$0xf]
  %v864 = vld [vmem:[%s1 + $0x50] sm:$0xf]
  %v865 = vld [vmem:[%s1 + $0x54] sm:$0xf]
  %v866 = vld [vmem:[%s1 + $0x58] sm:$0xf]
  %v867 = vld [vmem:[%s1 + $0x5c] sm:$0xf]
  %v868 = vld [vmem:[%s1 + $0x60] sm:$0xf]
  %v869 = vld [vmem:[%s1 + $0x64] sm:$0xf]
  %v870 = vld [vmem:[%s1 + $0x68] sm:$0xf]
  %v871 = vld [vmem:[%s1 + $0x6c] sm:$0xf]
  %v872 = vld [vmem:[%s1 + $0x70] sm:$0xf]
  %v873 = vld [vmem:[%s1 + $0x74] sm:$0xf]
  %v874 = vld [vmem:[%s1 + $0x78] sm:$0xf]
  %v875 = vld [vmem:[%s1 + $0x7c] sm:$0xf]
  %v876 = vld [vmem:[%s1 + $0x80] sm:$0xf]
  %v877 = vld [vmem:[%s1 + $0x84] sm:$0xf]
  %v878 = vld [vmem:[%s1 + $0x88] sm:$0xf]
  %v879 = vld [vmem:[%s1 + $0x8c] sm:$0xf]
  %v880 = vld [vmem:[%s2] sm:$0x1]
  %v882 = vperm.slane %v880, 0
  %v884 = vpack.c.b16 %v800, %v797
  %v885 = vpack.c.b16 %v801, %v798
  %v886 = vpack.c.b16 %v802, %v799
  %v887 = vpack.c.b16 %v806, %v803
  %v888 = vpack.c.b16 %v807, %v804
  %v889 = vpack.c.b16 %v808, %v805
  %v890 = vpack.c.b16 %v812, %v809
  %v891 = vpack.c.b16 %v813, %v810
  %v892 = vpack.c.b16 %v814, %v811
  %v893 = vpack.c.b16 %v818, %v815
  %v894 = vpack.c.b16 %v819, %v816
  %v895 = vpack.c.b16 %v820, %v817
  %v896 = vpack.c.b16 %v824, %v821
  %v897 = vpack.c.b16 %v825, %v822
  %v898 = vpack.c.b16 %v826, %v823
  %v899 = vpack.c.b16 %v830, %v827
  %v900 = vpack.c.b16 %v831, %v828
  %v901 = vpack.c.b16 %v832, %v829
  %v902 = vpack.c.b16 %v836, %v833
  %v903 = vpack.c.b16 %v837, %v834
  %v904 = vpack.c.b16 %v838, %v835
  %v905 = vpack.c.b16 %v842, %v839
  %v906 = vpack.c.b16 %v843, %v840
  %v907 = vpack.c.b16 %v820, %v841
  %v960 = vunpack.c.l.b16 %v844
  %v961 = vunpack.c.l.b16 %v845
  %v962 = vunpack.c.l.b16 %v846
  %v963 = vunpack.c.l.b16 %v847
  %v964 = vunpack.c.l.b16 %v848
  %v965 = vunpack.c.l.b16 %v849
  %v966 = vunpack.c.l.b16 %v850
  %v967 = vunpack.c.l.b16 %v851
  %v968 = vunpack.c.l.b16 %v852
  %v969 = vunpack.c.l.b16 %v853
  %v970 = vunpack.c.l.b16 %v854
  %v971 = vunpack.c.l.b16 %v855
  %v972 = vunpack.c.l.b16 %v856
  %v973 = vunpack.c.l.b16 %v857
  %v974 = vunpack.c.l.b16 %v858
  %v975 = vunpack.c.l.b16 %v859
  %v976 = vunpack.c.l.b16 %v860
  %v977 = vunpack.c.l.b16 %v861
  %v978 = vunpack.c.l.b16 %v862
  %v979 = vunpack.c.l.b16 %v863
  %v980 = vunpack.c.l.b16 %v864
  %v981 = vunpack.c.l.b16 %v865
  %v982 = vunpack.c.l.b16 %v866
  %v983 = vunpack.c.l.b16 %v867
  %v984 = vunpack.c.l.b16 %v868
  %v985 = vunpack.c.l.b16 %v869
  %v986 = vunpack.c.l.b16 %v870
  %v987 = vunpack.c.l.b16 %v871
  %v988 = vunpack.c.l.b16 %v872
  %v989 = vunpack.c.l.b16 %v873
  %v990 = vunpack.c.l.b16 %v874
  %v991 = vunpack.c.l.b16 %v875
  %v992 = vunpack.c.l.b16 %v876
  %v993 = vunpack.c.l.b16 %v877
  %v994 = vunpack.c.l.b16 %v878
  %v995 = vunpack.c.l.b16 %v879
  %v996 = vpack.c.b16 %v961, %v960
  %v997 = vpack.c.b16 %v963, %v962
  %v998 = vpack.c.b16 %v965, %v964
  %v999 = vpack.c.b16 %v967, %v966
  %v1000 = vpack.c.b16 %v969, %v968
  %v1001 = vpack.c.b16 %v971, %v970
  %v1002 = vpack.c.b16 %v973, %v972
  %v1003 = vpack.c.b16 %v975, %v974
  %v1004 = vpack.c.b16 %v977, %v976
  %v1005 = vpack.c.b16 %v979, %v978
  %v1006 = vpack.c.b16 %v981, %v980
  %v1007 = vpack.c.b16 %v983, %v982
  %v1008 = vpack.c.b16 %v985, %v984
  %v1009 = vpack.c.b16 %v987, %v986
  %v1010 = vpack.c.b16 %v989, %v988
  %v1011 = vpack.c.b16 %v991, %v990
  %v1012 = vpack.c.b16 %v993, %v992
  %v1013 = vpack.c.b16 %v995, %v994
  %v1033 = vsel %vm560, %v886, 0
  %v1036 = vsel %vm560, %v889, 0
  %v1039 = vsel %vm560, %v892, 0
  %v1042 = vsel %vm560, %v895, 0
  %v1045 = vsel %vm560, %v898, 0
  %v1048 = vsel %vm560, %v901, 0
  %v1051 = vsel %vm560, %v904, 0
  %v1054 = vsel %vm560, %v907, 0
  %1056 = vmatpush.bf16.msra.mxu0 %v1003
  %1057 = vmatpush.bf16.msra.mxu0 %v1002
  %1058 = vmatpush.bf16.msra.mxu0 %v1001
  %1059 = vmatpush.bf16.msra.mxu0 %v1000
  %1060 = vmatpush.bf16.msra.mxu0 %v999
  %1061 = vmatpush.bf16.msra.mxu0 %v998
  %1062 = vmatpush.bf16.msra.mxu0 %v997
  %1063 = vmatpush.bf16.msra.mxu0 %v996
  %1064 = vmatmul.bf16.gmra.mxu0 %v884
  %v1065 = vpop.f32.mrf.mxu0
  %v1066 = vadd.f32 %v882, %v1065
  %v1067 = vpop.f32.mrf.mxu0
  %v1068 = vadd.f32 %v882, %v1067
  %1069 = vmatmul.bf16.gmra.mxu0 %v887
  %v1070 = vpop.f32.mrf.mxu0
  %v1071 = vadd.f32 %v882, %v1070
  %v1072 = vpop.f32.mrf.mxu0
  %v1073 = vadd.f32 %v882, %v1072
  %1074 = vmatmul.bf16.gmra.mxu0 %v890
  %v1075 = vpop.f32.mrf.mxu0
  %v1076 = vadd.f32 %v882, %v1075
  %v1077 = vpop.f32.mrf.mxu0
  %v1078 = vadd.f32 %v882, %v1077
  %1079 = vmatmul.bf16.gmra.mxu0 %v893
  %v1080 = vpop.f32.mrf.mxu0
  %v1081 = vadd.f32 %v882, %v1080
  %v1082 = vpop.f32.mrf.mxu0
  %v1083 = vadd.f32 %v882, %v1082
  %1084 = vmatmul.bf16.gmra.mxu0 %v896
  %v1085 = vpop.f32.mrf.mxu0
  %v1086 = vadd.f32 %v882, %v1085
  %v1087 = vpop.f32.mrf.mxu0
  %v1088 = vadd.f32 %v882, %v1087
  %1089 = vmatmul.bf16.gmra.mxu0 %v899
  %v1090 = vpop.f32.mrf.mxu0
  %v1091 = vadd.f32 %v882, %v1090
  %v1092 = vpop.f32.mrf.mxu0
  %v1093 = vadd.f32 %v882, %v1092
  %1094 = vmatmul.bf16.gmra.mxu0 %v902
  %v1095 = vpop.f32.mrf.mxu0
  %v1096 = vadd.f32 %v882, %v1095
  %v1097 = vpop.f32.mrf.mxu0
  %v1098 = vadd.f32 %v882, %v1097
  %1099 = vmatmul.bf16.gmra.mxu0 %v905
  %v1100 = vpop.f32.mrf.mxu0
  %v1101 = vadd.f32 %v882, %v1100
  %v1102 = vpop.f32.mrf.mxu0
  %v1103 = vadd.f32 %v882, %v1102
  %1104 = vdwg.mxu0
  %1105 = vmatpush.bf16.msra.mxu0 %v1011
  %1106 = vmatpush.bf16.msra.mxu0 %v1010
  %1107 = vmatpush.bf16.msra.mxu0 %v1009
  %1108 = vmatpush.bf16.msra.mxu0 %v1008
  %1109 = vmatpush.bf16.msra.mxu0 %v1007
  %1110 = vmatpush.bf16.msra.mxu0 %v1006
  %1111 = vmatpush.bf16.msra.mxu0 %v1005
  %1112 = vmatpush.bf16.msra.mxu0 %v1004
  %1113 = vmatmul.bf16.gmra.mxu0 %v885
  %v1114 = vpop.f32.mrf.mxu0
  %v1115 = vadd.f32 %v1066, %v1114
  %v1116 = vpop.f32.mrf.mxu0
  %v1117 = vadd.f32 %v1068, %v1116
  %1118 = vmatmul.bf16.gmra.mxu0 %v888
  %v1119 = vpop.f32.mrf.mxu0
  %v1120 = vadd.f32 %v1071, %v1119
  %v1121 = vpop.f32.mrf.mxu0
  %v1122 = vadd.f32 %v1073, %v1121
  %1123 = vmatmul.bf16.gmra.mxu0 %v891
  %v1124 = vpop.f32.mrf.mxu0
  %v1125 = vadd.f32 %v1076, %v1124
  %v1126 = vpop.f32.mrf.mxu0
  %v1127 = vadd.f32 %v1078, %v1126
  %1128 = vmatmul.bf16.gmra.mxu0 %v894
  %v1129 = vpop.f32.mrf.mxu0
  %v1130 = vadd.f32 %v1081, %v1129
  %v1131 = vpop.f32.mrf.mxu0
  %v1132 = vadd.f32 %v1083, %v1131
  %1133 = vmatmul.bf16.gmra.mxu0 %v897
  %v1134 = vpop.f32.mrf.mxu0
  %v1135 = vadd.f32 %v1086, %v1134
  %v1136 = vpop.f32.mrf.mxu0
  %v1137 = vadd.f32 %v1088, %v1136
  %1138 = vmatmul.bf16.gmra.mxu0 %v900
  %v1139 = vpop.f32.mrf.mxu0
  %v1140 = vadd.f32 %v1091, %v1139
  %v1141 = vpop.f32.mrf.mxu0
  %v1142 = vadd.f32 %v1093, %v1141
  %1143 = vmatmul.bf16.gmra.mxu0 %v903
  %v1144 = vpop.f32.mrf.mxu0
  %v1145 = vadd.f32 %v1096, %v1144
  %v1146 = vpop.f32.mrf.mxu0
  %v1147 = vadd.f32 %v1098, %v1146
  %1148 = vmatmul.bf16.gmra.mxu0 %v906
  %v1149 = vpop.f32.mrf.mxu0
  %v1150 = vadd.f32 %v1101, %v1149
  %v1151 = vpop.f32.mrf.mxu0
  %v1152 = vadd.f32 %v1103, %v1151
  %1153 = vdwg.mxu0
  %1154 = vmatpush.bf16.msra.mxu0 0
  %1155 = vmatpush.bf16.msra.mxu0 0
  %1156 = vmatpush.bf16.msra.mxu0 0
  %1157 = vmatpush.bf16.msra.mxu0 0
  %1158 = vmatpush.bf16.msra.mxu0 0
  %1159 = vmatpush.bf16.msra.mxu0 0
  %1160 = vmatpush.bf16.msra.mxu0 %v1013
  %1161 = vmatpush.bf16.msra.mxu0 %v1012
  %1162 = vmatmul.bf16.gmra.mxu0 %v1033
  %v1163 = vpop.f32.mrf.mxu0
  %v1164 = vadd.f32 %v1115, %v1163
  %v1165 = vpop.f32.mrf.mxu0
  %v1166 = vadd.f32 %v1117, %v1165
  %1167 = vmatmul.bf16.gmra.mxu0 %v1036
  %v1168 = vpop.f32.mrf.mxu0
  %v1169 = vadd.f32 %v1120, %v1168
  %v1170 = vpop.f32.mrf.mxu0
  %v1171 = vadd.f32 %v1122, %v1170
  %1172 = vmatmul.bf16.gmra.mxu0 %v1039
  %v1173 = vpop.f32.mrf.mxu0
  %v1174 = vadd.f32 %v1125, %v1173
  %v1175 = vpop.f32.mrf.mxu0
  %v1176 = vadd.f32 %v1127, %v1175
  %1177 = vmatmul.bf16.gmra.mxu0 %v1042
  %v1178 = vpop.f32.mrf.mxu0
  %v1179 = vadd.f32 %v1130, %v1178
  %v1180 = vpop.f32.mrf.mxu0
  %v1181 = vadd.f32 %v1132, %v1180
  %1182 = vmatmul.bf16.gmra.mxu0 %v1045
  %v1183 = vpop.f32.mrf.mxu0
  %v1184 = vadd.f32 %v1135, %v1183
  %v1185 = vpop.f32.mrf.mxu0
  %v1186 = vadd.f32 %v1137, %v1185
  %1187 = vmatmul.bf16.gmra.mxu0 %v1048
  %v1188 = vpop.f32.mrf.mxu0
  %v1189 = vadd.f32 %v1140, %v1188
  %v1190 = vpop.f32.mrf.mxu0
  %v1191 = vadd.f32 %v1142, %v1190
  %1192 = vmatmul.bf16.gmra.mxu0 %v1051
  %v1193 = vpop.f32.mrf.mxu0
  %v1194 = vadd.f32 %v1145, %v1193
  %v1195 = vpop.f32.mrf.mxu0
  %v1196 = vadd.f32 %v1147, %v1195
  %1197 = vmatmul.bf16.gmra.mxu0 %v1054
  %v1198 = vpop.f32.mrf.mxu0
  %v1199 = vadd.f32 %v1150, %v1198
  %v1200 = vpop.f32.mrf.mxu0
  %v1201 = vadd.f32 %v1152, %v1200
  %1202 = vdwg.mxu0
  %v1203 = vmax.f32 %v1164, 0.0
  %v1204 = vmax.f32 %v1166, 0.0
  %v1205 = vmax.f32 %v1169, 0.0
  %v1206 = vmax.f32 %v1171, 0.0
  %v1207 = vmax.f32 %v1174, 0.0
  %v1208 = vmax.f32 %v1176, 0.0
  %v1209 = vmax.f32 %v1179, 0.0
  %v1210 = vmax.f32 %v1181, 0.0
  %v1211 = vmax.f32 %v1184, 0.0
  %v1212 = vmax.f32 %v1186, 0.0
  %v1213 = vmax.f32 %v1189, 0.0
  %v1214 = vmax.f32 %v1191, 0.0
  %v1215 = vmax.f32 %v1194, 0.0
  %v1216 = vmax.f32 %v1196, 0.0
  %v1217 = vmax.f32 %v1199, 0.0
  %v1218 = vmax.f32 %v1201, 0.0
  %1219 = vst.msk [vmem:[%s3] sm:$0xff] %vm591, %v1203
  %1220 = vst.msk [vmem:[%s3 + $0x8] sm:$0xff] %vm591, %v1204
  %1221 = vst.msk [vmem:[%s3 + $0x10] sm:$0xff] %vm591, %v1205
  %1222 = vst.msk [vmem:[%s3 + $0x18] sm:$0xff] %vm591, %v1206
  %1223 = vst.msk [vmem:[%s3 + $0x20] sm:$0xff] %vm591, %v1207
  %1224 = vst.msk [vmem:[%s3 + $0x28] sm:$0xff] %vm591, %v1208
  %1225 = vst.msk [vmem:[%s3 + $0x30] sm:$0xff] %vm591, %v1209
  %1226 = vst.msk [vmem:[%s3 + $0x38] sm:$0xff] %vm591, %v1210
  %1227 = vst.msk [vmem:[%s3 + $0x40] sm:$0xff] %vm591, %v1211
  %1228 = vst.msk [vmem:[%s3 + $0x48] sm:$0xff] %vm591, %v1212
  %1229 = vst.msk [vmem:[%s3 + $0x50] sm:$0xff] %vm591, %v1213
  %1230 = vst.msk [vmem:[%s3 + $0x58] sm:$0xff] %vm591, %v1214
  %1231 = vst.msk [vmem:[%s3 + $0x60] sm:$0xff] %vm591, %v1215
  %1232 = vst.msk [vmem:[%s3 + $0x68] sm:$0xff] %vm591, %v1216
  %1233 = vst.msk [vmem:[%s3 + $0x70] sm:$0xff] %vm591, %v1217
  %1234 = vst.msk [vmem:[%s3 + $0x78] sm:$0xff] %vm591, %v1218
  // Predicated region
  $region14: #{forward.8} parent=0 // pred_check
    _
  $region15: #{forward.8} parent=0 // pred_check_branch
    %1236 = sbr.rel (0) target = $region17
  $region16: #{forward.8} parent=0 // pred_region
    _
  $region17: #{forward.8} parent=0 // pred_fallthru
    _
  // Predicated region
  $region18: #{forward.8} parent=0 // pred_check
    _
  $region19: #{forward.8} parent=0 // pred_check_branch
    %1238 = sbr.rel (0) target = $region21
  $region20: #{forward.8} parent=0 // pred_region
    _
  $region21: #{forward.8} parent=0 // pred_fallthru
    _

// kernel: forward.6
$region0: #{forward.6}
  #allocation0 [shape = 'u32[]', space=smem, size = 0x4, offset = 0x4, fixed_abs, tag = 'smem constant byte address 0x4 - core index']
  #allocation1 [shape = 'u32[72,128]{1,0:T(1,128)}', space=vmem, size = 0x9000, scoped, tag = 'internal scratch']
  %s0 = inlined_call_operand.vmem [shape: f32[2,16,16,4], index: 0, kind: input, shape index: {}]
  %s1 = inlined_call_operand.vmem [shape: bf16[36,32], index: 1, kind: input, shape index: {}]
  %s2 = inlined_call_operand.vmem [shape: f32[1,32], index: 2, kind: input, shape index: {}]
  %s3 = inlined_call_operand.vmem [shape: f32[2,16,16,32], index: 3, kind: output, shape index: {}]
  %s4 = sld [smem:[#allocation0]]
  $region22: #{forward.6} parent=0
    _
  %s6 = ssub.s32 1, %s4
  %s7 = scalar_select 0, %s6, %s4
  // Predicated region
  $region2: #{forward.6} parent=0 // pred_check
    _
  $region3: #{forward.6} parent=0 // pred_check_branch
    %9 = sbr.rel (0) target = $region5
  $region4: #{forward.6} parent=0 // pred_region
    _
  $region5: #{forward.6} parent=0 // pred_fallthru
    _
  // Predicated region
  $region6: #{forward.6} parent=0 // pred_check
    _
  $region7: #{forward.6} parent=0 // pred_check_branch
    %11 = sbr.rel (0) target = $region9
  $region8: #{forward.6} parent=0 // pred_region
    _
  $region9: #{forward.6} parent=0 // pred_fallthru
    _
  // Predicated region
  $region10: #{forward.6} parent=0 // pred_check
    _
  $region11: #{forward.6} parent=0 // pred_check_branch
    %13 = sbr.rel (0) target = $region13
  $region12: #{forward.6} parent=0 // pred_region
    _
  $region13: #{forward.6} parent=0 // pred_fallthru
    _
  %v15 = vld [vmem:[%s0] sm:$0xff]
  %v16 = vld [vmem:[%s0 + $0x8] sm:$0xff]
  %v17 = vld [vmem:[%s0 + $0x10] sm:$0xff]
  %v18 = vld [vmem:[%s0 + $0x18] sm:$0xff]
  %v19 = vld [vmem:[%s0 + $0x20] sm:$0xff]
  %v20 = vld [vmem:[%s0 + $0x28] sm:$0xff]
  %v21 = vld [vmem:[%s0 + $0x30] sm:$0xff]
  %v22 = vld [vmem:[%s0 + $0x38] sm:$0xff]
  %v23 = vld [vmem:[%s0 + $0x40] sm:$0xff]
  %v24 = vld [vmem:[%s0 + $0x48] sm:$0xff]
  %v25 = vld [vmem:[%s0 + $0x50] sm:$0xff]
  %v26 = vld [vmem:[%s0 + $0x58] sm:$0xff]
  %v27 = vld [vmem:[%s0 + $0x60] sm:$0xff]
  %v28 = vld [vmem:[%s0 + $0x68] sm:$0xff]
  %v29 = vld [vmem:[%s0 + $0x70] sm:$0xff]
  %v30 = vld [vmem:[%s0 + $0x78] sm:$0xff]
  %v31 = vld [vmem:[%s0 + $0x80] sm:$0xff]
  %v32 = vld [vmem:[%s0 + $0x88] sm:$0xff]
  %v33 = vld [vmem:[%s0 + $0x90] sm:$0xff]
  %v34 = vld [vmem:[%s0 + $0x98] sm:$0xff]
  %v35 = vld [vmem:[%s0 + $0xa0] sm:$0xff]
  %v36 = vld [vmem:[%s0 + $0xa8] sm:$0xff]
  %v37 = vld [vmem:[%s0 + $0xb0] sm:$0xff]
  %v38 = vld [vmem:[%s0 + $0xb8] sm:$0xff]
  %v39 = vld [vmem:[%s0 + $0xc0] sm:$0xff]
  %v40 = vld [vmem:[%s0 + $0xc8] sm:$0xff]
  %v41 = vld [vmem:[%s0 + $0xd0] sm:$0xff]
  %v42 = vld [vmem:[%s0 + $0xd8] sm:$0xff]
  %v43 = vld [vmem:[%s0 + $0xe0] sm:$0xff]
  %v44 = vld [vmem:[%s0 + $0xe8] sm:$0xff]
  %v45 = vld [vmem:[%s0 + $0xf0] sm:$0xff]
  %v46 = vld [vmem:[%s0 + $0xf8] sm:$0xff]
  %v47 = vld [vmem:[%s0 + $0x100] sm:$0xff]
  %v48 = vld [vmem:[%s0 + $0x108] sm:$0xff]
  %v49 = vld [vmem:[%s0 + $0x110] sm:$0xff]
  %v50 = vld [vmem:[%s0 + $0x118] sm:$0xff]
  %v51 = vld [vmem:[%s0 + $0x120] sm:$0xff]
  %v52 = vld [vmem:[%s0 + $0x128] sm:$0xff]
  %v53 = vld [vmem:[%s0 + $0x130] sm:$0xff]
  %v54 = vld [vmem:[%s0 + $0x138] sm:$0xff]
  %v55 = vld [vmem:[%s0 + $0x140] sm:$0xff]
  %v56 = vld [vmem:[%s0 + $0x148] sm:$0xff]
  %v57 = vld [vmem:[%s0 + $0x150] sm:$0xff]
  %v58 = vld [vmem:[%s0 + $0x158] sm:$0xff]
  %v59 = vld [vmem:[%s0 + $0x160] sm:$0xff]
  %v60 = vld [vmem:[%s0 + $0x168] sm:$0xff]
  %v61 = vld [vmem:[%s0 + $0x170] sm:$0xff]
  %v62 = vld [vmem:[%s0 + $0x178] sm:$0xff]
  %v63 = vld [vmem:[%s0 + $0x180] sm:$0xff]
  %v64 = vld [vmem:[%s0 + $0x188] sm:$0xff]
  %v65 = vld [vmem:[%s0 + $0x190] sm:$0xff]
  %v66 = vld [vmem:[%s0 + $0x198] sm:$0xff]
  %v67 = vld [vmem:[%s0 + $0x1a0] sm:$0xff]
  %v68 = vld [vmem:[%s0 + $0x1a8] sm:$0xff]
  %v69 = vld [vmem:[%s0 + $0x1b0] sm:$0xff]
  %v70 = vld [vmem:[%s0 + $0x1b8] sm:$0xff]
  %v71 = vld [vmem:[%s0 + $0x1c0] sm:$0xff]
  %v72 = vld [vmem:[%s0 + $0x1c8] sm:$0xff]
  %v73 = vld [vmem:[%s0 + $0x1d0] sm:$0xff]
  %v74 = vld [vmem:[%s0 + $0x1d8] sm:$0xff]
  %v75 = vld [vmem:[%s0 + $0x1e0] sm:$0xff]
  %v76 = vld [vmem:[%s0 + $0x1e8] sm:$0xff]
  %v77 = vld [vmem:[%s0 + $0x1f0] sm:$0xff]
  %v78 = vld [vmem:[%s0 + $0x1f8] sm:$0xff]
  %v79 = vpack.c.bf16 %v15, %v15
  %v80 = vpack.c.bf16 %v16, %v16
  %v81 = vpack.c.bf16 %v17, %v17
  %v82 = vpack.c.bf16 %v18, %v18
  %v83 = vpack.c.bf16 %v19, %v19
  %v84 = vpack.c.bf16 %v20, %v20
  %v85 = vpack.c.bf16 %v21, %v21
  %v86 = vpack.c.bf16 %v22, %v22
  %v87 = vpack.c.bf16 %v23, %v23
  %v88 = vpack.c.bf16 %v24, %v24
  %v89 = vpack.c.bf16 %v25, %v25
  %v90 = vpack.c.bf16 %v26, %v26
  %v91 = vpack.c.bf16 %v27, %v27
  %v92 = vpack.c.bf16 %v28, %v28
  %v93 = vpack.c.bf16 %v29, %v29
  %v94 = vpack.c.bf16 %v30, %v30
  %v95 = vpack.c.bf16 %v31, %v31
  %v96 = vpack.c.bf16 %v32, %v32
  %v97 = vpack.c.bf16 %v33, %v33
  %v98 = vpack.c.bf16 %v34, %v34
  %v99 = vpack.c.bf16 %v35, %v35
  %v100 = vpack.c.bf16 %v36, %v36
  %v101 = vpack.c.bf16 %v37, %v37
  %v102 = vpack.c.bf16 %v38, %v38
  %v103 = vpack.c.bf16 %v39, %v39
  %v104 = vpack.c.bf16 %v40, %v40
  %v105 = vpack.c.bf16 %v41, %v41
  %v106 = vpack.c.bf16 %v42, %v42
  %v107 = vpack.c.bf16 %v43, %v43
  %v108 = vpack.c.bf16 %v44, %v44
  %v109 = vpack.c.bf16 %v45, %v45
  %v110 = vpack.c.bf16 %v46, %v46
  %v111 = vpack.c.bf16 %v47, %v47
  %v112 = vpack.c.bf16 %v48, %v48
  %v113 = vpack.c.bf16 %v49, %v49
  %v114 = vpack.c.bf16 %v50, %v50
  %v115 = vpack.c.bf16 %v51, %v51
  %v116 = vpack.c.bf16 %v52, %v52
  %v117 = vpack.c.bf16 %v53, %v53
  %v118 = vpack.c.bf16 %v54, %v54
  %v119 = vpack.c.bf16 %v55, %v55
  %v120 = vpack.c.bf16 %v56, %v56
  %v121 = vpack.c.bf16 %v57, %v57
  %v122 = vpack.c.bf16 %v58, %v58
  %v123 = vpack.c.bf16 %v59, %v59
  %v124 = vpack.c.bf16 %v60, %v60
  %v125 = vpack.c.bf16 %v61, %v61
  %v126 = vpack.c.bf16 %v62, %v62
  %v127 = vpack.c.bf16 %v63, %v63
  %v128 = vpack.c.bf16 %v64, %v64
  %v129 = vpack.c.bf16 %v65, %v65
  %v130 = vpack.c.bf16 %v66, %v66
  %v131 = vpack.c.bf16 %v67, %v67
  %v132 = vpack.c.bf16 %v68, %v68
  %v133 = vpack.c.bf16 %v69, %v69
  %v134 = vpack.c.bf16 %v70, %v70
  %v135 = vpack.c.bf16 %v71, %v71
  %v136 = vpack.c.bf16 %v72, %v72
  %v137 = vpack.c.bf16 %v73, %v73
  %v138 = vpack.c.bf16 %v74, %v74
  %v139 = vpack.c.bf16 %v75, %v75
  %v140 = vpack.c.bf16 %v76, %v76
  %v141 = vpack.c.bf16 %v77, %v77
  %v142 = vpack.c.bf16 %v78, %v78
  %v207 = vunpack.c.l.b16 %v79
  %v208 = vunpack.c.l.b16 %v80
  %v209 = vunpack.c.l.b16 %v81
  %v210 = vunpack.c.l.b16 %v82
  %v211 = vunpack.c.l.b16 %v83
  %v212 = vunpack.c.l.b16 %v84
  %v213 = vunpack.c.l.b16 %v85
  %v214 = vunpack.c.l.b16 %v86
  %v215 = vunpack.c.l.b16 %v87
  %v216 = vunpack.c.l.b16 %v88
  %v217 = vunpack.c.l.b16 %v89
  %v218 = vunpack.c.l.b16 %v90
  %v219 = vunpack.c.l.b16 %v91
  %v220 = vunpack.c.l.b16 %v92
  %v221 = vunpack.c.l.b16 %v93
  %v222 = vunpack.c.l.b16 %v94
  %v223 = vunpack.c.l.b16 %v95
  %v224 = vunpack.c.l.b16 %v96
  %v225 = vunpack.c.l.b16 %v97
  %v226 = vunpack.c.l.b16 %v98
  %v227 = vunpack.c.l.b16 %v99
  %v228 = vunpack.c.l.b16 %v100
  %v229 = vunpack.c.l.b16 %v101
  %v230 = vunpack.c.l.b16 %v102
  %v231 = vunpack.c.l.b16 %v103
  %v232 = vunpack.c.l.b16 %v104
  %v233 = vunpack.c.l.b16 %v105
  %v234 = vunpack.c.l.b16 %v106
  %v235 = vunpack.c.l.b16 %v107
  %v236 = vunpack.c.l.b16 %v108
  %v237 = vunpack.c.l.b16 %v109
  %v238 = vunpack.c.l.b16 %v110
  %v239 = vunpack.c.l.b16 %v111
  %v240 = vunpack.c.l.b16 %v112
  %v241 = vunpack.c.l.b16 %v113
  %v242 = vunpack.c.l.b16 %v114
  %v243 = vunpack.c.l.b16 %v115
  %v244 = vunpack.c.l.b16 %v116
  %v245 = vunpack.c.l.b16 %v117
  %v246 = vunpack.c.l.b16 %v118
  %v247 = vunpack.c.l.b16 %v119
  %v248 = vunpack.c.l.b16 %v120
  %v249 = vunpack.c.l.b16 %v121
  %v250 = vunpack.c.l.b16 %v122
  %v251 = vunpack.c.l.b16 %v123
  %v252 = vunpack.c.l.b16 %v124
  %v253 = vunpack.c.l.b16 %v125
  %v254 = vunpack.c.l.b16 %v126
  %v255 = vunpack.c.l.b16 %v127
  %v256 = vunpack.c.l.b16 %v128
  %v257 = vunpack.c.l.b16 %v129
  %v258 = vunpack.c.l.b16 %v130
  %v259 = vunpack.c.l.b16 %v131
  %v260 = vunpack.c.l.b16 %v132
  %v261 = vunpack.c.l.b16 %v133
  %v262 = vunpack.c.l.b16 %v134
  %v263 = vunpack.c.l.b16 %v135
  %v264 = vunpack.c.l.b16 %v136
  %v265 = vunpack.c.l.b16 %v137
  %v266 = vunpack.c.l.b16 %v138
  %v267 = vunpack.c.l.b16 %v139
  %v268 = vunpack.c.l.b16 %v140
  %v269 = vunpack.c.l.b16 %v141
  %v270 = vunpack.c.l.b16 %v142
  %v271 = vpack.c.b16 %v208, %v207
  %v272 = vpack.c.b16 %v210, %v209
  %v273 = vpack.c.b16 %v212, %v211
  %v274 = vpack.c.b16 %v214, %v213
  %v275 = vpack.c.b16 %v216, %v215
  %v276 = vpack.c.b16 %v218, %v217
  %v277 = vpack.c.b16 %v220, %v219
  %v278 = vpack.c.b16 %v222, %v221
  %v279 = vpack.c.b16 %v224, %v223
  %v280 = vpack.c.b16 %v226, %v225
  %v281 = vpack.c.b16 %v228, %v227
  %v282 = vpack.c.b16 %v230, %v229
  %v283 = vpack.c.b16 %v232, %v231
  %v284 = vpack.c.b16 %v234, %v233
  %v285 = vpack.c.b16 %v236, %v235
  %v286 = vpack.c.b16 %v238, %v237
  %v287 = vpack.c.b16 %v240, %v239
  %v288 = vpack.c.b16 %v242, %v241
  %v289 = vpack.c.b16 %v244, %v243
  %v290 = vpack.c.b16 %v246, %v245
  %v291 = vpack.c.b16 %v248, %v247
  %v292 = vpack.c.b16 %v250, %v249
  %v293 = vpack.c.b16 %v252, %v251
  %v294 = vpack.c.b16 %v254, %v253
  %v295 = vpack.c.b16 %v256, %v255
  %v296 = vpack.c.b16 %v258, %v257
  %v297 = vpack.c.b16 %v260, %v259
  %v298 = vpack.c.b16 %v262, %v261
  %v299 = vpack.c.b16 %v264, %v263
  %v300 = vpack.c.b16 %v266, %v265
  %v301 = vpack.c.b16 %v268, %v267
  %v302 = vpack.c.b16 %v270, %v269
  %v304 = vshrl.u32 0, 16
  %v306 = vrot.slane %v304, 7
  %v307 = vshll.u32 0, 16
  %v309 = vor.u32 %v306, %v307
  %v311 = vshrl.u32 %v271, 16
  %v313 = vrot.slane %v311, 7
  %v314 = vshll.u32 %v271, 16
  %v316 = vor.u32 %v313, %v314
  %v318 = vshrl.u32 %v272, 16
  %v320 = vrot.slane %v318, 7
  %v321 = vshll.u32 %v272, 16
  %v323 = vor.u32 %v320, %v321
  %v325 = vshrl.u32 %v273, 16
  %v327 = vrot.slane %v325, 7
  %v328 = vshll.u32 %v273, 16
  %v330 = vor.u32 %v327, %v328
  %v332 = vshrl.u32 %v274, 16
  %v334 = vrot.slane %v332, 7
  %v335 = vshll.u32 %v274, 16
  %v337 = vor.u32 %v334, %v335
  %v339 = vshrl.u32 %v275, 16
  %v341 = vrot.slane %v339, 7
  %v342 = vshll.u32 %v275, 16
  %v344 = vor.u32 %v341, %v342
  %v346 = vshrl.u32 %v276, 16
  %v348 = vrot.slane %v346, 7
  %v349 = vshll.u32 %v276, 16
  %v351 = vor.u32 %v348, %v349
  %v353 = vshrl.u32 %v277, 16
  %v355 = vrot.slane %v353, 7
  %v356 = vshll.u32 %v277, 16
  %v358 = vor.u32 %v355, %v356
  %v360 = vshrl.u32 %v278, 16
  %v362 = vrot.slane %v360, 7
  %v363 = vshll.u32 %v278, 16
  %v365 = vor.u32 %v362, %v363
  %v367 = vshrl.u32 %v279, 16
  %v369 = vrot.slane %v367, 7
  %v370 = vshll.u32 %v279, 16
  %v372 = vor.u32 %v369, %v370
  %v374 = vshrl.u32 %v280, 16
  %v376 = vrot.slane %v374, 7
  %v377 = vshll.u32 %v280, 16
  %v379 = vor.u32 %v376, %v377
  %v381 = vshrl.u32 %v281, 16
  %v383 = vrot.slane %v381, 7
  %v384 = vshll.u32 %v281, 16
  %v386 = vor.u32 %v383, %v384
  %v388 = vshrl.u32 %v282, 16
  %v390 = vrot.slane %v388, 7
  %v391 = vshll.u32 %v282, 16
  %v393 = vor.u32 %v390, %v391
  %v395 = vshrl.u32 %v283, 16
  %v397 = vrot.slane %v395, 7
  %v398 = vshll.u32 %v283, 16
  %v400 = vor.u32 %v397, %v398
  %v402 = vshrl.u32 %v284, 16
  %v404 = vrot.slane %v402, 7
  %v405 = vshll.u32 %v284, 16
  %v407 = vor.u32 %v404, %v405
  %v409 = vshrl.u32 %v285, 16
  %v411 = vrot.slane %v409, 7
  %v412 = vshll.u32 %v285, 16
  %v414 = vor.u32 %v411, %v412
  %v416 = vshrl.u32 %v286, 16
  %v418 = vrot.slane %v416, 7
  %v419 = vshll.u32 %v286, 16
  %v421 = vor.u32 %v418, %v419
  %v423 = vshrl.u32 %v287, 16
  %v425 = vrot.slane %v423, 7
  %v426 = vshll.u32 %v287, 16
  %v428 = vor.u32 %v425, %v426
  %v430 = vshrl.u32 %v288, 16
  %v432 = vrot.slane %v430, 7
  %v433 = vshll.u32 %v288, 16
  %v435 = vor.u32 %v432, %v433
  %v437 = vshrl.u32 %v289, 16
  %v439 = vrot.slane %v437, 7
  %v440 = vshll.u32 %v289, 16
  %v442 = vor.u32 %v439, %v440
  %v444 = vshrl.u32 %v290, 16
  %v446 = vrot.slane %v444, 7
  %v447 = vshll.u32 %v290, 16
  %v449 = vor.u32 %v446, %v447
  %v451 = vshrl.u32 %v291, 16
  %v453 = vrot.slane %v451, 7
  %v454 = vshll.u32 %v291, 16
  %v456 = vor.u32 %v453, %v454
  %v458 = vshrl.u32 %v292, 16
  %v460 = vrot.slane %v458, 7
  %v461 = vshll.u32 %v292, 16
  %v463 = vor.u32 %v460, %v461
  %v465 = vshrl.u32 %v293, 16
  %v467 = vrot.slane %v465, 7
  %v468 = vshll.u32 %v293, 16
  %v470 = vor.u32 %v467, %v468
  %v472 = vshrl.u32 %v294, 16
  %v474 = vrot.slane %v472, 7
  %v475 = vshll.u32 %v294, 16
  %v477 = vor.u32 %v474, %v475
  %v479 = vshrl.u32 %v295, 16
  %v481 = vrot.slane %v479, 7
  %v482 = vshll.u32 %v295, 16
  %v484 = vor.u32 %v481, %v482
  %v486 = vshrl.u32 %v296, 16
  %v488 = vrot.slane %v486, 7
  %v489 = vshll.u32 %v296, 16
  %v491 = vor.u32 %v488, %v489
  %v493 = vshrl.u32 %v297, 16
  %v495 = vrot.slane %v493, 7
  %v496 = vshll.u32 %v297, 16
  %v498 = vor.u32 %v495, %v496
  %v500 = vshrl.u32 %v298, 16
  %v502 = vrot.slane %v500, 7
  %v503 = vshll.u32 %v298, 16
  %v505 = vor.u32 %v502, %v503
  %v507 = vshrl.u32 %v299, 16
  %v509 = vrot.slane %v507, 7
  %v510 = vshll.u32 %v299, 16
  %v512 = vor.u32 %v509, %v510
  %v514 = vshrl.u32 %v300, 16
  %v516 = vrot.slane %v514, 7
  %v517 = vshll.u32 %v300, 16
  %v519 = vor.u32 %v516, %v517
  %v521 = vshrl.u32 %v301, 16
  %v523 = vrot.slane %v521, 7
  %v524 = vshll.u32 %v301, 16
  %v526 = vor.u32 %v523, %v524
  %v528 = vshrl.u32 %v302, 16
  %v530 = vrot.slane %v528, 7
  %v531 = vshll.u32 %v302, 16
  %v533 = vor.u32 %v530, %v531
  %vm600 = vcmask 1040384
  %vm601 = vsmask.f32 256
  %vm602 = vmand %vm600, %vm601
  %v603 = vsel %vm602, 0, %v309
  %v604 = vsel %vm602, 0, %v316
  %v605 = vsel %vm602, 0, %v323
  %v606 = vsel %vm602, 0, %v330
  %v607 = vsel %vm602, 0, %v337
  %v608 = vsel %vm602, 0, %v344
  %v609 = vsel %vm602, 0, %v351
  %v610 = vsel %vm602, 0, %v358
  %v611 = vsel %vm602, 0, %v365
  %v612 = vsel %vm602, 0, %v372
  %v613 = vsel %vm602, 0, %v379
  %v614 = vsel %vm602, 0, %v386
  %v615 = vsel %vm602, 0, %v393
  %v616 = vsel %vm602, 0, %v400
  %v617 = vsel %vm602, 0, %v407
  %v618 = vsel %vm602, 0, %v414
  %v619 = vsel %vm602, 0, %v421
  %v620 = vsel %vm602, 0, %v428
  %v621 = vsel %vm602, 0, %v435
  %v622 = vsel %vm602, 0, %v442
  %v623 = vsel %vm602, 0, %v449
  %v624 = vsel %vm602, 0, %v456
  %v625 = vsel %vm602, 0, %v463
  %v626 = vsel %vm602, 0, %v470
  %v627 = vsel %vm602, 0, %v477
  %v628 = vsel %vm602, 0, %v484
  %v629 = vsel %vm602, 0, %v491
  %v630 = vsel %vm602, 0, %v498
  %v631 = vsel %vm602, 0, %v505
  %v632 = vsel %vm602, 0, %v512
  %v633 = vsel %vm602, 0, %v519
  %v634 = vsel %vm602, 0, %v526
  %v635 = vsel %vm602, 0, %v533
  %v636 = vsel %vm602, %v306, 0
  %v637 = vsel %vm602, %v313, 0
  %v638 = vsel %vm602, %v320, 0
  %v639 = vsel %vm602, %v327, 0
  %v640 = vsel %vm602, %v334, 0
  %v641 = vsel %vm602, %v341, 0
  %v642 = vsel %vm602, %v348, 0
  %v643 = vsel %vm602, %v355, 0
  %v644 = vsel %vm602, %v362, 0
  %v645 = vsel %vm602, %v369, 0
  %v646 = vsel %vm602, %v376, 0
  %v647 = vsel %vm602, %v383, 0
  %v648 = vsel %vm602, %v390, 0
  %v649 = vsel %vm602, %v397, 0
  %v650 = vsel %vm602, %v404, 0
  %v651 = vsel %vm602, %v411, 0
  %v652 = vsel %vm602, %v418, 0
  %v653 = vsel %vm602, %v425, 0
  %v654 = vsel %vm602, %v432, 0
  %v655 = vsel %vm602, %v439, 0
  %v656 = vsel %vm602, %v446, 0
  %v657 = vsel %vm602, %v453, 0
  %v658 = vsel %vm602, %v460, 0
  %v659 = vsel %vm602, %v467, 0
  %v660 = vsel %vm602, %v474, 0
  %v661 = vsel %vm602, %v481, 0
  %v662 = vsel %vm602, %v488, 0
  %v663 = vsel %vm602, %v495, 0
  %v664 = vsel %vm602, %v502, 0
  %v665 = vsel %vm602, %v509, 0
  %v666 = vsel %vm602, %v516, 0
  %v667 = vsel %vm602, %v523, 0
  %v668 = vsel %vm602, %v530, 0
  %vm669 = vsmask.f32 7424
  %v671 = vshrl.u32 %v603, 16
  %v673 = vshll.u32 %v603, 16
  %v675 = vrot.slane %v673, 1
  %v676 = vor.u32 %v671, %v675
  %v678 = vshll.u32 %v636, 16
  %v680 = vrot.slane %v678, 1
  %v681 = vsel %vm669, %v676, %v680
  %v683 = vshrl.u32 %v604, 16
  %v685 = vshll.u32 %v604, 16
  %v687 = vrot.slane %v685, 1
  %v688 = vor.u32 %v683, %v687
  %v690 = vshll.u32 %v637, 16
  %v692 = vrot.slane %v690, 1
  %v693 = vsel %vm669, %v688, %v692
  %v695 = vshrl.u32 %v605, 16
  %v697 = vshll.u32 %v605, 16
  %v699 = vrot.slane %v697, 1
  %v700 = vor.u32 %v695, %v699
  %v702 = vshll.u32 %v638, 16
  %v704 = vrot.slane %v702, 1
  %v705 = vsel %vm669, %v700, %v704
  %v707 = vshrl.u32 %v606, 16
  %v709 = vshll.u32 %v606, 16
  %v711 = vrot.slane %v709, 1
  %v712 = vor.u32 %v707, %v711
  %v714 = vshll.u32 %v639, 16
  %v716 = vrot.slane %v714, 1
  %v717 = vsel %vm669, %v712, %v716
  %v719 = vshrl.u32 %v607, 16
  %v721 = vshll.u32 %v607, 16
  %v723 = vrot.slane %v721, 1
  %v724 = vor.u32 %v719, %v723
  %v726 = vshll.u32 %v640, 16
  %v728 = vrot.slane %v726, 1
  %v729 = vsel %vm669, %v724, %v728
  %v731 = vshrl.u32 %v608, 16
  %v733 = vshll.u32 %v608, 16
  %v735 = vrot.slane %v733, 1
  %v736 = vor.u32 %v731, %v735
  %v738 = vshll.u32 %v641, 16
  %v740 = vrot.slane %v738, 1
  %v741 = vsel %vm669, %v736, %v740
  %v743 = vshrl.u32 %v609, 16
  %v745 = vshll.u32 %v609, 16
  %v747 = vrot.slane %v745, 1
  %v748 = vor.u32 %v743, %v747
  %v750 = vshll.u32 %v642, 16
  %v752 = vrot.slane %v750, 1
  %v753 = vsel %vm669, %v748, %v752
  %v755 = vshrl.u32 %v610, 16
  %v757 = vshll.u32 %v610, 16
  %v759 = vrot.slane %v757, 1
  %v760 = vor.u32 %v755, %v759
  %v762 = vshll.u32 %v643, 16
  %v764 = vrot.slane %v762, 1
  %v765 = vsel %vm669, %v760, %v764
  %v767 = vshrl.u32 %v611, 16
  %v769 = vshll.u32 %v611, 16
  %v771 = vrot.slane %v769, 1
  %v772 = vor.u32 %v767, %v771
  %v774 = vshll.u32 %v644, 16
  %v776 = vrot.slane %v774, 1
  %v777 = vsel %vm669, %v772, %v776
  %v779 = vshrl.u32 %v612, 16
  %v781 = vshll.u32 %v612, 16
  %v783 = vrot.slane %v781, 1
  %v784 = vor.u32 %v779, %v783
  %v786 = vshll.u32 %v645, 16
  %v788 = vrot.slane %v786, 1
  %v789 = vsel %vm669, %v784, %v788
  %v791 = vshrl.u32 %v613, 16
  %v793 = vshll.u32 %v613, 16
  %v795 = vrot.slane %v793, 1
  %v796 = vor.u32 %v791, %v795
  %v798 = vshll.u32 %v646, 16
  %v800 = vrot.slane %v798, 1
  %v801 = vsel %vm669, %v796, %v800
  %v803 = vshrl.u32 %v614, 16
  %v805 = vshll.u32 %v614, 16
  %v807 = vrot.slane %v805, 1
  %v808 = vor.u32 %v803, %v807
  %v810 = vshll.u32 %v647, 16
  %v812 = vrot.slane %v810, 1
  %v813 = vsel %vm669, %v808, %v812
  %v815 = vshrl.u32 %v615, 16
  %v817 = vshll.u32 %v615, 16
  %v819 = vrot.slane %v817, 1
  %v820 = vor.u32 %v815, %v819
  %v822 = vshll.u32 %v648, 16
  %v824 = vrot.slane %v822, 1
  %v825 = vsel %vm669, %v820, %v824
  %v827 = vshrl.u32 %v616, 16
  %v829 = vshll.u32 %v616, 16
  %v831 = vrot.slane %v829, 1
  %v832 = vor.u32 %v827, %v831
  %v834 = vshll.u32 %v649, 16
  %v836 = vrot.slane %v834, 1
  %v837 = vsel %vm669, %v832, %v836
  %v839 = vshrl.u32 %v617, 16
  %v841 = vshll.u32 %v617, 16
  %v843 = vrot.slane %v841, 1
  %v844 = vor.u32 %v839, %v843
  %v846 = vshll.u32 %v650, 16
  %v848 = vrot.slane %v846, 1
  %v849 = vsel %vm669, %v844, %v848
  %v851 = vshrl.u32 %v618, 16
  %v853 = vshll.u32 %v618, 16
  %v855 = vrot.slane %v853, 1
  %v856 = vor.u32 %v851, %v855
  %v858 = vshll.u32 %v651, 16
  %v860 = vrot.slane %v858, 1
  %v861 = vsel %vm669, %v856, %v860
  %v863 = vshrl.u32 %v620, 16
  %v865 = vshll.u32 %v620, 16
  %v867 = vrot.slane %v865, 1
  %v868 = vor.u32 %v863, %v867
  %v870 = vshll.u32 %v653, 16
  %v872 = vrot.slane %v870, 1
  %v873 = vsel %vm669, %v868, %v872
  %v875 = vshrl.u32 %v621, 16
  %v877 = vshll.u32 %v621, 16
  %v879 = vrot.slane %v877, 1
  %v880 = vor.u32 %v875, %v879
  %v882 = vshll.u32 %v654, 16
  %v884 = vrot.slane %v882, 1
  %v885 = vsel %vm669, %v880, %v884
  %v887 = vshrl.u32 %v622, 16
  %v889 = vshll.u32 %v622, 16
  %v891 = vrot.slane %v889, 1
  %v892 = vor.u32 %v887, %v891
  %v894 = vshll.u32 %v655, 16
  %v896 = vrot.slane %v894, 1
  %v897 = vsel %vm669, %v892, %v896
  %v899 = vshrl.u32 %v623, 16
  %v901 = vshll.u32 %v623, 16
  %v903 = vrot.slane %v901, 1
  %v904 = vor.u32 %v899, %v903
  %v906 = vshll.u32 %v656, 16
  %v908 = vrot.slane %v906, 1
  %v909 = vsel %vm669, %v904, %v908
  %v911 = vshrl.u32 %v624, 16
  %v913 = vshll.u32 %v624, 16
  %v915 = vrot.slane %v913, 1
  %v916 = vor.u32 %v911, %v915
  %v918 = vshll.u32 %v657, 16
  %v920 = vrot.slane %v918, 1
  %v921 = vsel %vm669, %v916, %v920
  %v923 = vshrl.u32 %v625, 16
  %v925 = vshll.u32 %v625, 16
  %v927 = vrot.slane %v925, 1
  %v928 = vor.u32 %v923, %v927
  %v930 = vshll.u32 %v658, 16
  %v932 = vrot.slane %v930, 1
  %v933 = vsel %vm669, %v928, %v932
  %v935 = vshrl.u32 %v626, 16
  %v937 = vshll.u32 %v626, 16
  %v939 = vrot.slane %v937, 1
  %v940 = vor.u32 %v935, %v939
  %v942 = vshll.u32 %v659, 16
  %v944 = vrot.slane %v942, 1
  %v945 = vsel %vm669, %v940, %v944
  %v947 = vshrl.u32 %v627, 16
  %v949 = vshll.u32 %v627, 16
  %v951 = vrot.slane %v949, 1
  %v952 = vor.u32 %v947, %v951
  %v954 = vshll.u32 %v660, 16
  %v956 = vrot.slane %v954, 1
  %v957 = vsel %vm669, %v952, %v956
  %v959 = vshrl.u32 %v628, 16
  %v961 = vshll.u32 %v628, 16
  %v963 = vrot.slane %v961, 1
  %v964 = vor.u32 %v959, %v963
  %v966 = vshll.u32 %v661, 16
  %v968 = vrot.slane %v966, 1
  %v969 = vsel %vm669, %v964, %v968
  %v971 = vshrl.u32 %v629, 16
  %v973 = vshll.u32 %v629, 16
  %v975 = vrot.slane %v973, 1
  %v976 = vor.u32 %v971, %v975
  %v978 = vshll.u32 %v662, 16
  %v980 = vrot.slane %v978, 1
  %v981 = vsel %vm669, %v976, %v980
  %v983 = vshrl.u32 %v630, 16
  %v985 = vshll.u32 %v630, 16
  %v987 = vrot.slane %v985, 1
  %v988 = vor.u32 %v983, %v987
  %v990 = vshll.u32 %v663, 16
  %v992 = vrot.slane %v990, 1
  %v993 = vsel %vm669, %v988, %v992
  %v995 = vshrl.u32 %v631, 16
  %v997 = vshll.u32 %v631, 16
  %v999 = vrot.slane %v997, 1
  %v1000 = vor.u32 %v995, %v999
  %v1002 = vshll.u32 %v664, 16
  %v1004 = vrot.slane %v1002, 1
  %v1005 = vsel %vm669, %v1000, %v1004
  %v1007 = vshrl.u32 %v632, 16
  %v1009 = vshll.u32 %v632, 16
  %v1011 = vrot.slane %v1009, 1
  %v1012 = vor.u32 %v1007, %v1011
  %v1014 = vshll.u32 %v665, 16
  %v1016 = vrot.slane %v1014, 1
  %v1017 = vsel %vm669, %v1012, %v1016
  %v1019 = vshrl.u32 %v633, 16
  %v1021 = vshll.u32 %v633, 16
  %v1023 = vrot.slane %v1021, 1
  %v1024 = vor.u32 %v1019, %v1023
  %v1026 = vshll.u32 %v666, 16
  %v1028 = vrot.slane %v1026, 1
  %v1029 = vsel %vm669, %v1024, %v1028
  %v1031 = vshrl.u32 %v634, 16
  %v1033 = vshll.u32 %v634, 16
  %v1035 = vrot.slane %v1033, 1
  %v1036 = vor.u32 %v1031, %v1035
  %v1038 = vshll.u32 %v667, 16
  %v1040 = vrot.slane %v1038, 1
  %v1041 = vsel %vm669, %v1036, %v1040
  %1042 = vrot.lane.b32.xlu0 %v681, 4
  %v1043 = vpop.permute.xlu0 %1042
  %1044 = vrot.lane.b32.xlu0 %v693, 4
  %v1045 = vpop.permute.xlu0 %1044
  %1046 = vrot.lane.b32.xlu0 %v705, 4
  %v1047 = vpop.permute.xlu0 %1046
  %1048 = vrot.lane.b32.xlu0 %v717, 4
  %v1049 = vpop.permute.xlu0 %1048
  %1050 = vrot.lane.b32.xlu0 %v729, 4
  %v1051 = vpop.permute.xlu0 %1050
  %1052 = vrot.lane.b32.xlu0 %v741, 4
  %v1053 = vpop.permute.xlu0 %1052
  %1054 = vrot.lane.b32.xlu0 %v753, 4
  %v1055 = vpop.permute.xlu0 %1054
  %1056 = vrot.lane.b32.xlu0 %v765, 4
  %v1057 = vpop.permute.xlu0 %1056
  %1058 = vrot.lane.b32.xlu0 %v777, 4
  %v1059 = vpop.permute.xlu0 %1058
  %1060 = vrot.lane.b32.xlu0 %v789, 4
  %v1061 = vpop.permute.xlu0 %1060
  %1062 = vrot.lane.b32.xlu0 %v801, 4
  %v1063 = vpop.permute.xlu0 %1062
  %1064 = vrot.lane.b32.xlu0 %v813, 4
  %v1065 = vpop.permute.xlu0 %1064
  %1066 = vrot.lane.b32.xlu0 %v825, 4
  %v1067 = vpop.permute.xlu0 %1066
  %1068 = vrot.lane.b32.xlu0 %v837, 4
  %v1069 = vpop.permute.xlu0 %1068
  %1070 = vrot.lane.b32.xlu0 %v849, 4
  %v1071 = vpop.permute.xlu0 %1070
  %1072 = vrot.lane.b32.xlu0 %v861, 4
  %v1073 = vpop.permute.xlu0 %1072
  %1074 = vrot.lane.b32.xlu0 %v873, 4
  %v1075 = vpop.permute.xlu0 %1074
  %1076 = vrot.lane.b32.xlu0 %v885, 4
  %v1077 = vpop.permute.xlu0 %1076
  %1078 = vrot.lane.b32.xlu0 %v897, 4
  %v1079 = vpop.permute.xlu0 %1078
  %1080 = vrot.lane.b32.xlu0 %v909, 4
  %v1081 = vpop.permute.xlu0 %1080
  %1082 = vrot.lane.b32.xlu0 %v921, 4
  %v1083 = vpop.permute.xlu0 %1082
  %1084 = vrot.lane.b32.xlu0 %v933, 4
  %v1085 = vpop.permute.xlu0 %1084
  %1086 = vrot.lane.b32.xlu0 %v945, 4
  %v1087 = vpop.permute.xlu0 %1086
  %1088 = vrot.lane.b32.xlu0 %v957, 4
  %v1089 = vpop.permute.xlu0 %1088
  %1090 = vrot.lane.b32.xlu0 %v969, 4
  %v1091 = vpop.permute.xlu0 %1090
  %1092 = vrot.lane.b32.xlu0 %v981, 4
  %v1093 = vpop.permute.xlu0 %1092
  %1094 = vrot.lane.b32.xlu0 %v993, 4
  %v1095 = vpop.permute.xlu0 %1094
  %1096 = vrot.lane.b32.xlu0 %v1005, 4
  %v1097 = vpop.permute.xlu0 %1096
  %1098 = vrot.lane.b32.xlu0 %v1017, 4
  %v1099 = vpop.permute.xlu0 %1098
  %1100 = vrot.lane.b32.xlu0 %v1029, 4
  %v1101 = vpop.permute.xlu0 %1100
  %1102 = vrot.lane.b32.xlu0 %v1041, 4
  %v1103 = vpop.permute.xlu0 %1102
  %vm1166 = vcmask 1046528
  %v1167 = vrot.slane %v603, 1
  %v1168 = vrot.slane %v636, 1
  %v1169 = vsel %vm1166, %v1167, %v1168
  %v1170 = vrot.slane %v604, 1
  %v1171 = vrot.slane %v637, 1
  %v1172 = vsel %vm1166, %v1170, %v1171
  %v1173 = vrot.slane %v605, 1
  %v1174 = vrot.slane %v638, 1
  %v1175 = vsel %vm1166, %v1173, %v1174
  %v1176 = vrot.slane %v606, 1
  %v1177 = vrot.slane %v639, 1
  %v1178 = vsel %vm1166, %v1176, %v1177
  %v1179 = vrot.slane %v607, 1
  %v1180 = vrot.slane %v640, 1
  %v1181 = vsel %vm1166, %v1179, %v1180
  %v1182 = vrot.slane %v608, 1
  %v1183 = vrot.slane %v641, 1
  %v1184 = vsel %vm1166, %v1182, %v1183
  %v1185 = vrot.slane %v609, 1
  %v1186 = vrot.slane %v642, 1
  %v1187 = vsel %vm1166, %v1185, %v1186
  %v1188 = vrot.slane %v610, 1
  %v1189 = vrot.slane %v643, 1
  %v1190 = vsel %vm1166, %v1188, %v1189
  %v1191 = vrot.slane %v611, 1
  %v1192 = vrot.slane %v644, 1
  %v1193 = vsel %vm1166, %v1191, %v1192
  %v1194 = vrot.slane %v612, 1
  %v1195 = vrot.slane %v645, 1
  %v1196 = vsel %vm1166, %v1194, %v1195
  %v1197 = vrot.slane %v613, 1
  %v1198 = vrot.slane %v646, 1
  %v1199 = vsel %vm1166, %v1197, %v1198
  %v1200 = vrot.slane %v614, 1
  %v1201 = vrot.slane %v647, 1
  %v1202 = vsel %vm1166, %v1200, %v1201
  %v1203 = vrot.slane %v615, 1
  %v1204 = vrot.slane %v648, 1
  %v1205 = vsel %vm1166, %v1203, %v1204
  %v1206 = vrot.slane %v616, 1
  %v1207 = vrot.slane %v649, 1
  %v1208 = vsel %vm1166, %v1206, %v1207
  %v1209 = vrot.slane %v617, 1
  %v1210 = vrot.slane %v650, 1
  %v1211 = vsel %vm1166, %v1209, %v1210
  %v1212 = vrot.slane %v618, 1
  %v1213 = vrot.slane %v651, 1
  %v1214 = vsel %vm1166, %v1212, %v1213
  %v1215 = vrot.slane %v620, 1
  %v1216 = vrot.slane %v653, 1
  %v1217 = vsel %vm1166, %v1215, %v1216
  %v1218 = vrot.slane %v621, 1
  %v1219 = vrot.slane %v654, 1
  %v1220 = vsel %vm1166, %v1218, %v1219
  %v1221 = vrot.slane %v622, 1
  %v1222 = vrot.slane %v655, 1
  %v1223 = vsel %vm1166, %v1221, %v1222
  %v1224 = vrot.slane %v623, 1
  %v1225 = vrot.slane %v656, 1
  %v1226 = vsel %vm1166, %v1224, %v1225
  %v1227 = vrot.slane %v624, 1
  %v1228 = vrot.slane %v657, 1
  %v1229 = vsel %vm1166, %v1227, %v1228
  %v1230 = vrot.slane %v625, 1
  %v1231 = vrot.slane %v658, 1
  %v1232 = vsel %vm1166, %v1230, %v1231
  %v1233 = vrot.slane %v626, 1
  %v1234 = vrot.slane %v659, 1
  %v1235 = vsel %vm1166, %v1233, %v1234
  %v1236 = vrot.slane %v627, 1
  %v1237 = vrot.slane %v660, 1
  %v1238 = vsel %vm1166, %v1236, %v1237
  %v1239 = vrot.slane %v628, 1
  %v1240 = vrot.slane %v661, 1
  %v1241 = vsel %vm1166, %v1239, %v1240
  %v1242 = vrot.slane %v629, 1
  %v1243 = vrot.slane %v662, 1
  %v1244 = vsel %vm1166, %v1242, %v1243
  %v1245 = vrot.slane %v630, 1
  %v1246 = vrot.slane %v663, 1
  %v1247 = vsel %vm1166, %v1245, %v1246
  %v1248 = vrot.slane %v631, 1
  %v1249 = vrot.slane %v664, 1
  %v1250 = vsel %vm1166, %v1248, %v1249
  %v1251 = vrot.slane %v632, 1
  %v1252 = vrot.slane %v665, 1
  %v1253 = vsel %vm1166, %v1251, %v1252
  %v1254 = vrot.slane %v633, 1
  %v1255 = vrot.slane %v666, 1
  %v1256 = vsel %vm1166, %v1254, %v1255
  %v1257 = vrot.slane %v634, 1
  %v1258 = vrot.slane %v667, 1
  %v1259 = vsel %vm1166, %v1257, %v1258
  %1260 = vrot.lane.b32.xlu0 %v1169, 8
  %v1261 = vpop.permute.xlu0 %1260
  %1262 = vrot.lane.b32.xlu0 %v1172, 8
  %v1263 = vpop.permute.xlu0 %1262
  %1264 = vrot.lane.b32.xlu0 %v1175, 8
  %v1265 = vpop.permute.xlu0 %1264
  %1266 = vrot.lane.b32.xlu0 %v1178, 8
  %v1267 = vpop.permute.xlu0 %1266
  %1268 = vrot.lane.b32.xlu0 %v1181, 8
  %v1269 = vpop.permute.xlu0 %1268
  %1270 = vrot.lane.b32.xlu0 %v1184, 8
  %v1271 = vpop.permute.xlu0 %1270
  %1272 = vrot.lane.b32.xlu0 %v1187, 8
  %v1273 = vpop.permute.xlu0 %1272
  %1274 = vrot.lane.b32.xlu0 %v1190, 8
  %v1275 = vpop.permute.xlu0 %1274
  %1276 = vrot.lane.b32.xlu0 %v1193, 8
  %v1277 = vpop.permute.xlu0 %1276
  %1278 = vrot.lane.b32.xlu0 %v1196, 8
  %v1279 = vpop.permute.xlu0 %1278
  %1280 = vrot.lane.b32.xlu0 %v1199, 8
  %v1281 = vpop.permute.xlu0 %1280
  %1282 = vrot.lane.b32.xlu0 %v1202, 8
  %v1283 = vpop.permute.xlu0 %1282
  %1284 = vrot.lane.b32.xlu0 %v1205, 8
  %v1285 = vpop.permute.xlu0 %1284
  %1286 = vrot.lane.b32.xlu0 %v1208, 8
  %v1287 = vpop.permute.xlu0 %1286
  %1288 = vrot.lane.b32.xlu0 %v1211, 8
  %v1289 = vpop.permute.xlu0 %1288
  %1290 = vrot.lane.b32.xlu0 %v1214, 8
  %v1291 = vpop.permute.xlu0 %1290
  %1292 = vrot.lane.b32.xlu0 %v1217, 8
  %v1293 = vpop.permute.xlu0 %1292
  %1294 = vrot.lane.b32.xlu0 %v1220, 8
  %v1295 = vpop.permute.xlu0 %1294
  %1296 = vrot.lane.b32.xlu0 %v1223, 8
  %v1297 = vpop.permute.xlu0 %1296
  %1298 = vrot.lane.b32.xlu0 %v1226, 8
  %v1299 = vpop.permute.xlu0 %1298
  %1300 = vrot.lane.b32.xlu0 %v1229, 8
  %v1301 = vpop.permute.xlu0 %1300
  %1302 = vrot.lane.b32.xlu0 %v1232, 8
  %v1303 = vpop.permute.xlu0 %1302
  %1304 = vrot.lane.b32.xlu0 %v1235, 8
  %v1305 = vpop.permute.xlu0 %1304
  %1306 = vrot.lane.b32.xlu0 %v1238, 8
  %v1307 = vpop.permute.xlu0 %1306
  %1308 = vrot.lane.b32.xlu0 %v1241, 8
  %v1309 = vpop.permute.xlu0 %1308
  %1310 = vrot.lane.b32.xlu0 %v1244, 8
  %v1311 = vpop.permute.xlu0 %1310
  %1312 = vrot.lane.b32.xlu0 %v1247, 8
  %v1313 = vpop.permute.xlu0 %1312
  %1314 = vrot.lane.b32.xlu0 %v1250, 8
  %v1315 = vpop.permute.xlu0 %1314
  %1316 = vrot.lane.b32.xlu0 %v1253, 8
  %v1317 = vpop.permute.xlu0 %1316
  %1318 = vrot.lane.b32.xlu0 %v1256, 8
  %v1319 = vpop.permute.xlu0 %1318
  %1320 = vrot.lane.b32.xlu0 %v1259, 8
  %v1321 = vpop.permute.xlu0 %1320
  %1324 = vrot.lane.b32.xlu0 %v604, 12
  %v1325 = vpop.permute.xlu0 %1324
  %1326 = vrot.lane.b32.xlu0 %v605, 12
  %v1327 = vpop.permute.xlu0 %1326
  %1328 = vrot.lane.b32.xlu0 %v606, 12
  %v1329 = vpop.permute.xlu0 %1328
  %1330 = vrot.lane.b32.xlu0 %v607, 12
  %v1331 = vpop.permute.xlu0 %1330
  %1332 = vrot.lane.b32.xlu0 %v608, 12
  %v1333 = vpop.permute.xlu0 %1332
  %1334 = vrot.lane.b32.xlu0 %v609, 12
  %v1335 = vpop.permute.xlu0 %1334
  %1336 = vrot.lane.b32.xlu0 %v610, 12
  %v1337 = vpop.permute.xlu0 %1336
  %1338 = vrot.lane.b32.xlu0 %v611, 12
  %v1339 = vpop.permute.xlu0 %1338
  %1340 = vrot.lane.b32.xlu0 %v612, 12
  %v1341 = vpop.permute.xlu0 %1340
  %1342 = vrot.lane.b32.xlu0 %v613, 12
  %v1343 = vpop.permute.xlu0 %1342
  %1344 = vrot.lane.b32.xlu0 %v614, 12
  %v1345 = vpop.permute.xlu0 %1344
  %1346 = vrot.lane.b32.xlu0 %v615, 12
  %v1347 = vpop.permute.xlu0 %1346
  %1348 = vrot.lane.b32.xlu0 %v616, 12
  %v1349 = vpop.permute.xlu0 %1348
  %1350 = vrot.lane.b32.xlu0 %v617, 12
  %v1351 = vpop.permute.xlu0 %1350
  %1352 = vrot.lane.b32.xlu0 %v618, 12
  %v1353 = vpop.permute.xlu0 %1352
  %1354 = vrot.lane.b32.xlu0 %v619, 12
  %v1355 = vpop.permute.xlu0 %1354
  %1356 = vrot.lane.b32.xlu0 %v620, 12
  %v1357 = vpop.permute.xlu0 %1356
  %1358 = vrot.lane.b32.xlu0 %v621, 12
  %v1359 = vpop.permute.xlu0 %1358
  %1360 = vrot.lane.b32.xlu0 %v622, 12
  %v1361 = vpop.permute.xlu0 %1360
  %1362 = vrot.lane.b32.xlu0 %v623, 12
  %v1363 = vpop.permute.xlu0 %1362
  %1364 = vrot.lane.b32.xlu0 %v624, 12
  %v1365 = vpop.permute.xlu0 %1364
  %1366 = vrot.lane.b32.xlu0 %v625, 12
  %v1367 = vpop.permute.xlu0 %1366
  %1368 = vrot.lane.b32.xlu0 %v626, 12
  %v1369 = vpop.permute.xlu0 %1368
  %1370 = vrot.lane.b32.xlu0 %v627, 12
  %v1371 = vpop.permute.xlu0 %1370
  %1372 = vrot.lane.b32.xlu0 %v628, 12
  %v1373 = vpop.permute.xlu0 %1372
  %1374 = vrot.lane.b32.xlu0 %v629, 12
  %v1375 = vpop.permute.xlu0 %1374
  %1376 = vrot.lane.b32.xlu0 %v630, 12
  %v1377 = vpop.permute.xlu0 %1376
  %1378 = vrot.lane.b32.xlu0 %v631, 12
  %v1379 = vpop.permute.xlu0 %1378
  %1380 = vrot.lane.b32.xlu0 %v632, 12
  %v1381 = vpop.permute.xlu0 %1380
  %1382 = vrot.lane.b32.xlu0 %v633, 12
  %v1383 = vpop.permute.xlu0 %1382
  %1384 = vrot.lane.b32.xlu0 %v634, 12
  %v1385 = vpop.permute.xlu0 %1384
  %1386 = vrot.lane.b32.xlu0 %v635, 12
  %v1387 = vpop.permute.xlu0 %1386
  %v1389 = vshrl.u32 %v619, 16
  %v1391 = vshll.u32 %v619, 16
  %v1393 = vrot.slane %v1391, 1
  %v1394 = vor.u32 %v1389, %v1393
  %v1396 = vshll.u32 %v652, 16
  %v1398 = vrot.slane %v1396, 1
  %v1399 = vsel %vm669, %v1394, %v1398
  %v1401 = vshrl.u32 %v635, 16
  %v1403 = vshll.u32 %v635, 16
  %v1405 = vrot.slane %v1403, 1
  %v1406 = vor.u32 %v1401, %v1405
  %v1408 = vshll.u32 %v668, 16
  %v1410 = vrot.slane %v1408, 1
  %v1411 = vsel %vm669, %v1406, %v1410
  %1412 = vrot.lane.b32.xlu0 %v693, 16
  %v1413 = vpop.permute.xlu0 %1412
  %1414 = vrot.lane.b32.xlu0 %v705, 16
  %v1415 = vpop.permute.xlu0 %1414
  %1416 = vrot.lane.b32.xlu0 %v717, 16
  %v1417 = vpop.permute.xlu0 %1416
  %1418 = vrot.lane.b32.xlu0 %v729, 16
  %v1419 = vpop.permute.xlu0 %1418
  %1420 = vrot.lane.b32.xlu0 %v741, 16
  %v1421 = vpop.permute.xlu0 %1420
  %1422 = vrot.lane.b32.xlu0 %v753, 16
  %v1423 = vpop.permute.xlu0 %1422
  %1424 = vrot.lane.b32.xlu0 %v765, 16
  %v1425 = vpop.permute.xlu0 %1424
  %1426 = vrot.lane.b32.xlu0 %v777, 16
  %v1427 = vpop.permute.xlu0 %1426
  %1428 = vrot.lane.b32.xlu0 %v789, 16
  %v1429 = vpop.permute.xlu0 %1428
  %1430 = vrot.lane.b32.xlu0 %v801, 16
  %v1431 = vpop.permute.xlu0 %1430
  %1432 = vrot.lane.b32.xlu0 %v813, 16
  %v1433 = vpop.permute.xlu0 %1432
  %1434 = vrot.lane.b32.xlu0 %v825, 16
  %v1435 = vpop.permute.xlu0 %1434
  %1436 = vrot.lane.b32.xlu0 %v837, 16
  %v1437 = vpop.permute.xlu0 %1436
  %1438 = vrot.lane.b32.xlu0 %v849, 16
  %v1439 = vpop.permute.xlu0 %1438
  %1440 = vrot.lane.b32.xlu0 %v861, 16
  %v1441 = vpop.permute.xlu0 %1440
  %1442 = vrot.lane.b32.xlu0 %v1399, 16
  %v1443 = vpop.permute.xlu0 %1442
  %1444 = vrot.lane.b32.xlu0 %v873, 16
  %v1445 = vpop.permute.xlu0 %1444
  %1446 = vrot.lane.b32.xlu0 %v885, 16
  %v1447 = vpop.permute.xlu0 %1446
  %1448 = vrot.lane.b32.xlu0 %v897, 16
  %v1449 = vpop.permute.xlu0 %1448
  %1450 = vrot.lane.b32.xlu0 %v909, 16
  %v1451 = vpop.permute.xlu0 %1450
  %1452 = vrot.lane.b32.xlu0 %v921, 16
  %v1453 = vpop.permute.xlu0 %1452
  %1454 = vrot.lane.b32.xlu0 %v933, 16
  %v1455 = vpop.permute.xlu0 %1454
  %1456 = vrot.lane.b32.xlu0 %v945, 16
  %v1457 = vpop.permute.xlu0 %1456
  %1458 = vrot.lane.b32.xlu0 %v957, 16
  %v1459 = vpop.permute.xlu0 %1458
  %1460 = vrot.lane.b32.xlu0 %v969, 16
  %v1461 = vpop.permute.xlu0 %1460
  %1462 = vrot.lane.b32.xlu0 %v981, 16
  %v1463 = vpop.permute.xlu0 %1462
  %1464 = vrot.lane.b32.xlu0 %v993, 16
  %v1465 = vpop.permute.xlu0 %1464
  %1466 = vrot.lane.b32.xlu0 %v1005, 16
  %v1467 = vpop.permute.xlu0 %1466
  %1468 = vrot.lane.b32.xlu0 %v1017, 16
  %v1469 = vpop.permute.xlu0 %1468
  %1470 = vrot.lane.b32.xlu0 %v1029, 16
  %v1471 = vpop.permute.xlu0 %1470
  %1472 = vrot.lane.b32.xlu0 %v1041, 16
  %v1473 = vpop.permute.xlu0 %1472
  %1474 = vrot.lane.b32.xlu0 %v1411, 16
  %v1475 = vpop.permute.xlu0 %1474
  %v1478 = vrot.slane %v619, 1
  %v1479 = vrot.slane %v652, 1
  %v1480 = vsel %vm1166, %v1478, %v1479
  %v1481 = vrot.slane %v635, 1
  %v1482 = vrot.slane %v668, 1
  %v1483 = vsel %vm1166, %v1481, %v1482
  %1484 = vrot.lane.b32.xlu0 %v1172, 20
  %v1485 = vpop.permute.xlu0 %1484
  %1486 = vrot.lane.b32.xlu0 %v1175, 20
  %v1487 = vpop.permute.xlu0 %1486
  %1488 = vrot.lane.b32.xlu0 %v1178, 20
  %v1489 = vpop.permute.xlu0 %1488
  %1490 = vrot.lane.b32.xlu0 %v1181, 20
  %v1491 = vpop.permute.xlu0 %1490
  %1492 = vrot.lane.b32.xlu0 %v1184, 20
  %v1493 = vpop.permute.xlu0 %1492
  %1494 = vrot.lane.b32.xlu0 %v1187, 20
  %v1495 = vpop.permute.xlu0 %1494
  %1496 = vrot.lane.b32.xlu0 %v1190, 20
  %v1497 = vpop.permute.xlu0 %1496
  %1498 = vrot.lane.b32.xlu0 %v1193, 20
  %v1499 = vpop.permute.xlu0 %1498
  %1500 = vrot.lane.b32.xlu0 %v1196, 20
  %v1501 = vpop.permute.xlu0 %1500
  %1502 = vrot.lane.b32.xlu0 %v1199, 20
  %v1503 = vpop.permute.xlu0 %1502
  %1504 = vrot.lane.b32.xlu0 %v1202, 20
  %v1505 = vpop.permute.xlu0 %1504
  %1506 = vrot.lane.b32.xlu0 %v1205, 20
  %v1507 = vpop.permute.xlu0 %1506
  %1508 = vrot.lane.b32.xlu0 %v1208, 20
  %v1509 = vpop.permute.xlu0 %1508
  %1510 = vrot.lane.b32.xlu0 %v1211, 20
  %v1511 = vpop.permute.xlu0 %1510
  %1512 = vrot.lane.b32.xlu0 %v1214, 20
  %v1513 = vpop.permute.xlu0 %1512
  %1514 = vrot.lane.b32.xlu0 %v1480, 20
  %v1515 = vpop.permute.xlu0 %1514
  %1516 = vrot.lane.b32.xlu0 %v1217, 20
  %v1517 = vpop.permute.xlu0 %1516
  %1518 = vrot.lane.b32.xlu0 %v1220, 20
  %v1519 = vpop.permute.xlu0 %1518
  %1520 = vrot.lane.b32.xlu0 %v1223, 20
  %v1521 = vpop.permute.xlu0 %1520
  %1522 = vrot.lane.b32.xlu0 %v1226, 20
  %v1523 = vpop.permute.xlu0 %1522
  %1524 = vrot.lane.b32.xlu0 %v1229, 20
  %v1525 = vpop.permute.xlu0 %1524
  %1526 = vrot.lane.b32.xlu0 %v1232, 20
  %v1527 = vpop.permute.xlu0 %1526
  %1528 = vrot.lane.b32.xlu0 %v1235, 20
  %v1529 = vpop.permute.xlu0 %1528
  %1530 = vrot.lane.b32.xlu0 %v1238, 20
  %v1531 = vpop.permute.xlu0 %1530
  %1532 = vrot.lane.b32.xlu0 %v1241, 20
  %v1533 = vpop.permute.xlu0 %1532
  %1534 = vrot.lane.b32.xlu0 %v1244, 20
  %v1535 = vpop.permute.xlu0 %1534
  %1536 = vrot.lane.b32.xlu0 %v1247, 20
  %v1537 = vpop.permute.xlu0 %1536
  %1538 = vrot.lane.b32.xlu0 %v1250, 20
  %v1539 = vpop.permute.xlu0 %1538
  %1540 = vrot.lane.b32.xlu0 %v1253, 20
  %v1541 = vpop.permute.xlu0 %1540
  %1542 = vrot.lane.b32.xlu0 %v1256, 20
  %v1543 = vpop.permute.xlu0 %1542
  %1544 = vrot.lane.b32.xlu0 %v1259, 20
  %v1545 = vpop.permute.xlu0 %1544
  %1546 = vrot.lane.b32.xlu0 %v1483, 20
  %v1547 = vpop.permute.xlu0 %1546
  %1548 = vrot.lane.b32.xlu0 %v605, 24
  %v1549 = vpop.permute.xlu0 %1548
  %1550 = vrot.lane.b32.xlu0 %v606, 24
  %v1551 = vpop.permute.xlu0 %1550
  %1552 = vrot.lane.b32.xlu0 %v607, 24
  %v1553 = vpop.permute.xlu0 %1552
  %1554 = vrot.lane.b32.xlu0 %v608, 24
  %v1555 = vpop.permute.xlu0 %1554
  %1556 = vrot.lane.b32.xlu0 %v609, 24
  %v1557 = vpop.permute.xlu0 %1556
  %1558 = vrot.lane.b32.xlu0 %v610, 24
  %v1559 = vpop.permute.xlu0 %1558
  %1560 = vrot.lane.b32.xlu0 %v611, 24
  %v1561 = vpop.permute.xlu0 %1560
  %1562 = vrot.lane.b32.xlu0 %v612, 24
  %v1563 = vpop.permute.xlu0 %1562
  %1564 = vrot.lane.b32.xlu0 %v613, 24
  %v1565 = vpop.permute.xlu0 %1564
  %1566 = vrot.lane.b32.xlu0 %v614, 24
  %v1567 = vpop.permute.xlu0 %1566
  %1568 = vrot.lane.b32.xlu0 %v615, 24
  %v1569 = vpop.permute.xlu0 %1568
  %1570 = vrot.lane.b32.xlu0 %v616, 24
  %v1571 = vpop.permute.xlu0 %1570
  %1572 = vrot.lane.b32.xlu0 %v617, 24
  %v1573 = vpop.permute.xlu0 %1572
  %1574 = vrot.lane.b32.xlu0 %v618, 24
  %v1575 = vpop.permute.xlu0 %1574
  %1576 = vrot.lane.b32.xlu0 %v619, 24
  %v1577 = vpop.permute.xlu0 %1576
  %1578 = vrot.lane.b32.xlu0 %v603, 24
  %v1579 = vpop.permute.xlu0 %1578
  %1580 = vrot.lane.b32.xlu0 %v621, 24
  %v1581 = vpop.permute.xlu0 %1580
  %1582 = vrot.lane.b32.xlu0 %v622, 24
  %v1583 = vpop.permute.xlu0 %1582
  %1584 = vrot.lane.b32.xlu0 %v623, 24
  %v1585 = vpop.permute.xlu0 %1584
  %1586 = vrot.lane.b32.xlu0 %v624, 24
  %v1587 = vpop.permute.xlu0 %1586
  %1588 = vrot.lane.b32.xlu0 %v625, 24
  %v1589 = vpop.permute.xlu0 %1588
  %1590 = vrot.lane.b32.xlu0 %v626, 24
  %v1591 = vpop.permute.xlu0 %1590
  %1592 = vrot.lane.b32.xlu0 %v627, 24
  %v1593 = vpop.permute.xlu0 %1592
  %1594 = vrot.lane.b32.xlu0 %v628, 24
  %v1595 = vpop.permute.xlu0 %1594
  %1596 = vrot.lane.b32.xlu0 %v629, 24
  %v1597 = vpop.permute.xlu0 %1596
  %1598 = vrot.lane.b32.xlu0 %v630, 24
  %v1599 = vpop.permute.xlu0 %1598
  %1600 = vrot.lane.b32.xlu0 %v631, 24
  %v1601 = vpop.permute.xlu0 %1600
  %1602 = vrot.lane.b32.xlu0 %v632, 24
  %v1603 = vpop.permute.xlu0 %1602
  %1604 = vrot.lane.b32.xlu0 %v633, 24
  %v1605 = vpop.permute.xlu0 %1604
  %1606 = vrot.lane.b32.xlu0 %v634, 24
  %v1607 = vpop.permute.xlu0 %1606
  %1608 = vrot.lane.b32.xlu0 %v635, 24
  %v1609 = vpop.permute.xlu0 %1608
  %1610 = vrot.lane.b32.xlu0 %v705, 28
  %v1611 = vpop.permute.xlu0 %1610
  %1612 = vrot.lane.b32.xlu0 %v717, 28
  %v1613 = vpop.permute.xlu0 %1612
  %1614 = vrot.lane.b32.xlu0 %v729, 28
  %v1615 = vpop.permute.xlu0 %1614
  %1616 = vrot.lane.b32.xlu0 %v741, 28
  %v1617 = vpop.permute.xlu0 %1616
  %1618 = vrot.lane.b32.xlu0 %v753, 28
  %v1619 = vpop.permute.xlu0 %1618
  %1620 = vrot.lane.b32.xlu0 %v765, 28
  %v1621 = vpop.permute.xlu0 %1620
  %1622 = vrot.lane.b32.xlu0 %v777, 28
  %v1623 = vpop.permute.xlu0 %1622
  %1624 = vrot.lane.b32.xlu0 %v789, 28
  %v1625 = vpop.permute.xlu0 %1624
  %1626 = vrot.lane.b32.xlu0 %v801, 28
  %v1627 = vpop.permute.xlu0 %1626
  %1628 = vrot.lane.b32.xlu0 %v813, 28
  %v1629 = vpop.permute.xlu0 %1628
  %1630 = vrot.lane.b32.xlu0 %v825, 28
  %v1631 = vpop.permute.xlu0 %1630
  %1632 = vrot.lane.b32.xlu0 %v837, 28
  %v1633 = vpop.permute.xlu0 %1632
  %1634 = vrot.lane.b32.xlu0 %v849, 28
  %v1635 = vpop.permute.xlu0 %1634
  %1636 = vrot.lane.b32.xlu0 %v861, 28
  %v1637 = vpop.permute.xlu0 %1636
  %1638 = vrot.lane.b32.xlu0 %v1399, 28
  %v1639 = vpop.permute.xlu0 %1638
  %1640 = vrot.lane.b32.xlu0 %v681, 28
  %v1641 = vpop.permute.xlu0 %1640
  %1642 = vrot.lane.b32.xlu0 %v885, 28
  %v1643 = vpop.permute.xlu0 %1642
  %1644 = vrot.lane.b32.xlu0 %v897, 28
  %v1645 = vpop.permute.xlu0 %1644
  %1646 = vrot.lane.b32.xlu0 %v909, 28
  %v1647 = vpop.permute.xlu0 %1646
  %1648 = vrot.lane.b32.xlu0 %v921, 28
  %v1649 = vpop.permute.xlu0 %1648
  %1650 = vrot.lane.b32.xlu0 %v933, 28
  %v1651 = vpop.permute.xlu0 %1650
  %1652 = vrot.lane.b32.xlu0 %v945, 28
  %v1653 = vpop.permute.xlu0 %1652
  %1654 = vrot.lane.b32.xlu0 %v957, 28
  %v1655 = vpop.permute.xlu0 %1654
  %1656 = vrot.lane.b32.xlu0 %v969, 28
  %v1657 = vpop.permute.xlu0 %1656
  %1658 = vrot.lane.b32.xlu0 %v981, 28
  %v1659 = vpop.permute.xlu0 %1658
  %1660 = vrot.lane.b32.xlu0 %v993, 28
  %v1661 = vpop.permute.xlu0 %1660
  %1662 = vrot.lane.b32.xlu0 %v1005, 28
  %v1663 = vpop.permute.xlu0 %1662
  %1664 = vrot.lane.b32.xlu0 %v1017, 28
  %v1665 = vpop.permute.xlu0 %1664
  %1666 = vrot.lane.b32.xlu0 %v1029, 28
  %v1667 = vpop.permute.xlu0 %1666
  %1668 = vrot.lane.b32.xlu0 %v1041, 28
  %v1669 = vpop.permute.xlu0 %1668
  %1670 = vrot.lane.b32.xlu0 %v1411, 28
  %v1671 = vpop.permute.xlu0 %1670
  %1672 = vrot.lane.b32.xlu0 %v1175, 32
  %v1673 = vpop.permute.xlu0 %1672
  %1674 = vrot.lane.b32.xlu0 %v1178, 32
  %v1675 = vpop.permute.xlu0 %1674
  %1676 = vrot.lane.b32.xlu0 %v1181, 32
  %v1677 = vpop.permute.xlu0 %1676
  %1678 = vrot.lane.b32.xlu0 %v1184, 32
  %v1679 = vpop.permute.xlu0 %1678
  %1680 = vrot.lane.b32.xlu0 %v1187, 32
  %v1681 = vpop.permute.xlu0 %1680
  %1682 = vrot.lane.b32.xlu0 %v1190, 32
  %v1683 = vpop.permute.xlu0 %1682
  %1684 = vrot.lane.b32.xlu0 %v1193, 32
  %v1685 = vpop.permute.xlu0 %1684
  %1686 = vrot.lane.b32.xlu0 %v1196, 32
  %v1687 = vpop.permute.xlu0 %1686
  %1688 = vrot.lane.b32.xlu0 %v1199, 32
  %v1689 = vpop.permute.xlu0 %1688
  %1690 = vrot.lane.b32.xlu0 %v1202, 32
  %v1691 = vpop.permute.xlu0 %1690
  %1692 = vrot.lane.b32.xlu0 %v1205, 32
  %v1693 = vpop.permute.xlu0 %1692
  %1694 = vrot.lane.b32.xlu0 %v1208, 32
  %v1695 = vpop.permute.xlu0 %1694
  %1696 = vrot.lane.b32.xlu0 %v1211, 32
  %v1697 = vpop.permute.xlu0 %1696
  %1698 = vrot.lane.b32.xlu0 %v1214, 32
  %v1699 = vpop.permute.xlu0 %1698
  %1700 = vrot.lane.b32.xlu0 %v1480, 32
  %v1701 = vpop.permute.xlu0 %1700
  %1702 = vrot.lane.b32.xlu0 %v1169, 32
  %v1703 = vpop.permute.xlu0 %1702
  %1704 = vrot.lane.b32.xlu0 %v1220, 32
  %v1705 = vpop.permute.xlu0 %1704
  %1706 = vrot.lane.b32.xlu0 %v1223, 32
  %v1707 = vpop.permute.xlu0 %1706
  %1708 = vrot.lane.b32.xlu0 %v1226, 32
  %v1709 = vpop.permute.xlu0 %1708
  %1710 = vrot.lane.b32.xlu0 %v1229, 32
  %v1711 = vpop.permute.xlu0 %1710
  %1712 = vrot.lane.b32.xlu0 %v1232, 32
  %v1713 = vpop.permute.xlu0 %1712
  %1714 = vrot.lane.b32.xlu0 %v1235, 32
  %v1715 = vpop.permute.xlu0 %1714
  %1716 = vrot.lane.b32.xlu0 %v1238, 32
  %v1717 = vpop.permute.xlu0 %1716
  %1718 = vrot.lane.b32.xlu0 %v1241, 32
  %v1719 = vpop.permute.xlu0 %1718
  %1720 = vrot.lane.b32.xlu0 %v1244, 32
  %v1721 = vpop.permute.xlu0 %1720
  %1722 = vrot.lane.b32.xlu0 %v1247, 32
  %v1723 = vpop.permute.xlu0 %1722
  %1724 = vrot.lane.b32.xlu0 %v1250, 32
  %v1725 = vpop.permute.xlu0 %1724
  %1726 = vrot.lane.b32.xlu0 %v1253, 32
  %v1727 = vpop.permute.xlu0 %1726
  %1728 = vrot.lane.b32.xlu0 %v1256, 32
  %v1729 = vpop.permute.xlu0 %1728
  %1730 = vrot.lane.b32.xlu0 %v1259, 32
  %v1731 = vpop.permute.xlu0 %1730
  %1732 = vrot.lane.b32.xlu0 %v1483, 32
  %v1733 = vpop.permute.xlu0 %1732
  %vm1734 = vcmask 31744
  %v1736 = vsel %vm1734, %v603, %v1043
  %v1738 = vsel %vm1734, %v604, %v1045
  %v1740 = vsel %vm1734, %v605, %v1047
  %v1742 = vsel %vm1734, %v606, %v1049
  %v1744 = vsel %vm1734, %v607, %v1051
  %v1746 = vsel %vm1734, %v608, %v1053
  %v1748 = vsel %vm1734, %v609, %v1055
  %v1750 = vsel %vm1734, %v610, %v1057
  %v1752 = vsel %vm1734, %v611, %v1059
  %v1754 = vsel %vm1734, %v612, %v1061
  %v1756 = vsel %vm1734, %v613, %v1063
  %v1758 = vsel %vm1734, %v614, %v1065
  %v1760 = vsel %vm1734, %v615, %v1067
  %v1762 = vsel %vm1734, %v616, %v1069
  %v1764 = vsel %vm1734, %v617, %v1071
  %v1766 = vsel %vm1734, %v618, %v1073
  %v1768 = vsel %vm1734, %v620, %v1075
  %v1770 = vsel %vm1734, %v621, %v1077
  %v1772 = vsel %vm1734, %v622, %v1079
  %v1774 = vsel %vm1734, %v623, %v1081
  %v1776 = vsel %vm1734, %v624, %v1083
  %v1778 = vsel %vm1734, %v625, %v1085
  %v1780 = vsel %vm1734, %v626, %v1087
  %v1782 = vsel %vm1734, %v627, %v1089
  %v1784 = vsel %vm1734, %v628, %v1091
  %v1786 = vsel %vm1734, %v629, %v1093
  %v1788 = vsel %vm1734, %v630, %v1095
  %v1790 = vsel %vm1734, %v631, %v1097
  %v1792 = vsel %vm1734, %v632, %v1099
  %v1794 = vsel %vm1734, %v633, %v1101
  %v1796 = vsel %vm1734, %v634, %v1103
  %vm1797 = vcmask 64512
  %v1799 = vsel %vm1797, %v1736, %v1261
  %v1801 = vsel %vm1797, %v1738, %v1263
  %v1803 = vsel %vm1797, %v1740, %v1265
  %v1805 = vsel %vm1797, %v1742, %v1267
  %v1807 = vsel %vm1797, %v1744, %v1269
  %v1809 = vsel %vm1797, %v1746, %v1271
  %v1811 = vsel %vm1797, %v1748, %v1273
  %v1813 = vsel %vm1797, %v1750, %v1275
  %v1815 = vsel %vm1797, %v1752, %v1277
  %v1817 = vsel %vm1797, %v1754, %v1279
  %v1819 = vsel %vm1797, %v1756, %v1281
  %v1821 = vsel %vm1797, %v1758, %v1283
  %v1823 = vsel %vm1797, %v1760, %v1285
  %v1825 = vsel %vm1797, %v1762, %v1287
  %v1827 = vsel %vm1797, %v1764, %v1289
  %v1829 = vsel %vm1797, %v1766, %v1291
  %v1831 = vsel %vm1797, %v1768, %v1293
  %v1833 = vsel %vm1797, %v1770, %v1295
  %v1835 = vsel %vm1797, %v1772, %v1297
  %v1837 = vsel %vm1797, %v1774, %v1299
  %v1839 = vsel %vm1797, %v1776, %v1301
  %v1841 = vsel %vm1797, %v1778, %v1303
  %v1843 = vsel %vm1797, %v1780, %v1305
  %v1845 = vsel %vm1797, %v1782, %v1307
  %v1847 = vsel %vm1797, %v1784, %v1309
  %v1849 = vsel %vm1797, %v1786, %v1311
  %v1851 = vsel %vm1797, %v1788, %v1313
  %v1853 = vsel %vm1797, %v1790, %v1315
  %v1855 = vsel %vm1797, %v1792, %v1317
  %v1857 = vsel %vm1797, %v1794, %v1319
  %v1859 = vsel %vm1797, %v1796, %v1321
  %vm1860 = vcmask 97280
  %v1862 = vsel %vm1860, %v1799, %v1325
  %v1864 = vsel %vm1860, %v1801, %v1327
  %v1866 = vsel %vm1860, %v1803, %v1329
  %v1868 = vsel %vm1860, %v1805, %v1331
  %v1870 = vsel %vm1860, %v1807, %v1333
  %v1872 = vsel %vm1860, %v1809, %v1335
  %v1874 = vsel %vm1860, %v1811, %v1337
  %v1876 = vsel %vm1860, %v1813, %v1339
  %v1878 = vsel %vm1860, %v1815, %v1341
  %v1880 = vsel %vm1860, %v1817, %v1343
  %v1882 = vsel %vm1860, %v1819, %v1345
  %v1884 = vsel %vm1860, %v1821, %v1347
  %v1886 = vsel %vm1860, %v1823, %v1349
  %v1888 = vsel %vm1860, %v1825, %v1351
  %v1890 = vsel %vm1860, %v1827, %v1353
  %v1892 = vsel %vm1860, %v1829, %v1355
  %v1894 = vsel %vm1860, %v1799, %v1357
  %v1896 = vsel %vm1860, %v1831, %v1359
  %v1898 = vsel %vm1860, %v1833, %v1361
  %v1900 = vsel %vm1860, %v1835, %v1363
  %v1902 = vsel %vm1860, %v1837, %v1365
  %v1904 = vsel %vm1860, %v1839, %v1367
  %v1906 = vsel %vm1860, %v1841, %v1369
  %v1908 = vsel %vm1860, %v1843, %v1371
  %v1910 = vsel %vm1860, %v1845, %v1373
  %v1912 = vsel %vm1860, %v1847, %v1375
  %v1914 = vsel %vm1860, %v1849, %v1377
  %v1916 = vsel %vm1860, %v1851, %v1379
  %v1918 = vsel %vm1860, %v1853, %v1381
  %v1920 = vsel %vm1860, %v1855, %v1383
  %v1922 = vsel %vm1860, %v1857, %v1385
  %v1924 = vsel %vm1860, %v1859, %v1387
  %vm1925 = vcmask 130048
  %v1927 = vsel %vm1925, %v1862, %v1413
  %v1929 = vsel %vm1925, %v1864, %v1415
  %v1931 = vsel %vm1925, %v1866, %v1417
  %v1933 = vsel %vm1925, %v1868, %v1419
  %v1935 = vsel %vm1925, %v1870, %v1421
  %v1937 = vsel %vm1925, %v1872, %v1423
  %v1939 = vsel %vm1925, %v1874, %v1425
  %v1941 = vsel %vm1925, %v1876, %v1427
  %v1943 = vsel %vm1925, %v1878, %v1429
  %v1945 = vsel %vm1925, %v1880, %v1431
  %v1947 = vsel %vm1925, %v1882, %v1433
  %v1949 = vsel %vm1925, %v1884, %v1435
  %v1951 = vsel %vm1925, %v1886, %v1437
  %v1953 = vsel %vm1925, %v1888, %v1439
  %v1955 = vsel %vm1925, %v1890, %v1441
  %v1957 = vsel %vm1925, %v1892, %v1443
  %v1959 = vsel %vm1925, %v1894, %v1445
  %v1961 = vsel %vm1925, %v1896, %v1447
  %v1963 = vsel %vm1925, %v1898, %v1449
  %v1965 = vsel %vm1925, %v1900, %v1451
  %v1967 = vsel %vm1925, %v1902, %v1453
  %v1969 = vsel %vm1925, %v1904, %v1455
  %v1971 = vsel %vm1925, %v1906, %v1457
  %v1973 = vsel %vm1925, %v1908, %v1459
  %v1975 = vsel %vm1925, %v1910, %v1461
  %v1977 = vsel %vm1925, %v1912, %v1463
  %v1979 = vsel %vm1925, %v1914, %v1465
  %v1981 = vsel %vm1925, %v1916, %v1467
  %v1983 = vsel %vm1925, %v1918, %v1469
  %v1985 = vsel %vm1925, %v1920, %v1471
  %v1987 = vsel %vm1925, %v1922, %v1473
  %v1989 = vsel %vm1925, %v1924, %v1475
  %vm1990 = vcmask 162816
  %v1992 = vsel %vm1990, %v1927, %v1485
  %v1994 = vsel %vm1990, %v1929, %v1487
  %v1996 = vsel %vm1990, %v1931, %v1489
  %v1998 = vsel %vm1990, %v1933, %v1491
  %v2000 = vsel %vm1990, %v1935, %v1493
  %v2002 = vsel %vm1990, %v1937, %v1495
  %v2004 = vsel %vm1990, %v1939, %v1497
  %v2006 = vsel %vm1990, %v1941, %v1499
  %v2008 = vsel %vm1990, %v1943, %v1501
  %v2010 = vsel %vm1990, %v1945, %v1503
  %v2012 = vsel %vm1990, %v1947, %v1505
  %v2014 = vsel %vm1990, %v1949, %v1507
  %v2016 = vsel %vm1990, %v1951, %v1509
  %v2018 = vsel %vm1990, %v1953, %v1511
  %v2020 = vsel %vm1990, %v1955, %v1513
  %v2022 = vsel %vm1990, %v1957, %v1515
  %v2024 = vsel %vm1990, %v1959, %v1517
  %v2026 = vsel %vm1990, %v1961, %v1519
  %v2028 = vsel %vm1990, %v1963, %v1521
  %v2030 = vsel %vm1990, %v1965, %v1523
  %v2032 = vsel %vm1990, %v1967, %v1525
  %v2034 = vsel %vm1990, %v1969, %v1527
  %v2036 = vsel %vm1990, %v1971, %v1529
  %v2038 = vsel %vm1990, %v1973, %v1531
  %v2040 = vsel %vm1990, %v1975, %v1533
  %v2042 = vsel %vm1990, %v1977, %v1535
  %v2044 = vsel %vm1990, %v1979, %v1537
  %v2046 = vsel %vm1990, %v1981, %v1539
  %v2048 = vsel %vm1990, %v1983, %v1541
  %v2050 = vsel %vm1990, %v1985, %v1543
  %v2052 = vsel %vm1990, %v1987, %v1545
  %v2054 = vsel %vm1990, %v1989, %v1547
  %vm2055 = vcmask 195584
  %v2057 = vsel %vm2055, %v1992, %v1549
  %v2059 = vsel %vm2055, %v1994, %v1551
  %v2061 = vsel %vm2055, %v1996, %v1553
  %v2063 = vsel %vm2055, %v1998, %v1555
  %v2065 = vsel %vm2055, %v2000, %v1557
  %v2067 = vsel %vm2055, %v2002, %v1559
  %v2069 = vsel %vm2055, %v2004, %v1561
  %v2071 = vsel %vm2055, %v2006, %v1563
  %v2073 = vsel %vm2055, %v2008, %v1565
  %v2075 = vsel %vm2055, %v2010, %v1567
  %v2077 = vsel %vm2055, %v2012, %v1569
  %v2079 = vsel %vm2055, %v2014, %v1571
  %v2081 = vsel %vm2055, %v2016, %v1573
  %v2083 = vsel %vm2055, %v2018, %v1575
  %v2085 = vsel %vm2055, %v2020, %v1577
  %v2087 = vsel %vm2055, %v2022, %v1579
  %v2089 = vsel %vm2055, %v2024, %v1581
  %v2091 = vsel %vm2055, %v2026, %v1583
  %v2093 = vsel %vm2055, %v2028, %v1585
  %v2095 = vsel %vm2055, %v2030, %v1587
  %v2097 = vsel %vm2055, %v2032, %v1589
  %v2099 = vsel %vm2055, %v2034, %v1591
  %v2101 = vsel %vm2055, %v2036, %v1593
  %v2103 = vsel %vm2055, %v2038, %v1595
  %v2105 = vsel %vm2055, %v2040, %v1597
  %v2107 = vsel %vm2055, %v2042, %v1599
  %v2109 = vsel %vm2055, %v2044, %v1601
  %v2111 = vsel %vm2055, %v2046, %v1603
  %v2113 = vsel %vm2055, %v2048, %v1605
  %v2115 = vsel %vm2055, %v2050, %v1607
  %v2117 = vsel %vm2055, %v2052, %v1609
  %v2118 = vsel %vm2055, %v2054, %v1579
  %vm2119 = vcmask 228352
  %v2121 = vsel %vm2119, %v2057, %v1611
  %v2123 = vsel %vm2119, %v2059, %v1613
  %v2125 = vsel %vm2119, %v2061, %v1615
  %v2127 = vsel %vm2119, %v2063, %v1617
  %v2129 = vsel %vm2119, %v2065, %v1619
  %v2131 = vsel %vm2119, %v2067, %v1621
  %v2133 = vsel %vm2119, %v2069, %v1623
  %v2135 = vsel %vm2119, %v2071, %v1625
  %v2137 = vsel %vm2119, %v2073, %v1627
  %v2139 = vsel %vm2119, %v2075, %v1629
  %v2141 = vsel %vm2119, %v2077, %v1631
  %v2143 = vsel %vm2119, %v2079, %v1633
  %v2145 = vsel %vm2119, %v2081, %v1635
  %v2147 = vsel %vm2119, %v2083, %v1637
  %v2149 = vsel %vm2119, %v2085, %v1639
  %v2151 = vsel %vm2119, %v2087, %v1641
  %v2153 = vsel %vm2119, %v2089, %v1643
  %v2155 = vsel %vm2119, %v2091, %v1645
  %v2157 = vsel %vm2119, %v2093, %v1647
  %v2159 = vsel %vm2119, %v2095, %v1649
  %v2161 = vsel %vm2119, %v2097, %v1651
  %v2163 = vsel %vm2119, %v2099, %v1653
  %v2165 = vsel %vm2119, %v2101, %v1655
  %v2167 = vsel %vm2119, %v2103, %v1657
  %v2169 = vsel %vm2119, %v2105, %v1659
  %v2171 = vsel %vm2119, %v2107, %v1661
  %v2173 = vsel %vm2119, %v2109, %v1663
  %v2175 = vsel %vm2119, %v2111, %v1665
  %v2177 = vsel %vm2119, %v2113, %v1667
  %v2179 = vsel %vm2119, %v2115, %v1669
  %v2181 = vsel %vm2119, %v2117, %v1671
  %v2182 = vsel %vm2119, %v2118, %v1641
  %vm2183 = vcmask 261120
  %v2185 = vsel %vm2183, %v2121, %v1673
  %v2187 = vsel %vm2183, %v2123, %v1675
  %v2189 = vsel %vm2183, %v2125, %v1677
  %v2191 = vsel %vm2183, %v2127, %v1679
  %v2193 = vsel %vm2183, %v2129, %v1681
  %v2195 = vsel %vm2183, %v2131, %v1683
  %v2197 = vsel %vm2183, %v2133, %v1685
  %v2199 = vsel %vm2183, %v2135, %v1687
  %v2201 = vsel %vm2183, %v2137, %v1689
  %v2203 = vsel %vm2183, %v2139, %v1691
  %v2205 = vsel %vm2183, %v2141, %v1693
  %v2207 = vsel %vm2183, %v2143, %v1695
  %v2209 = vsel %vm2183, %v2145, %v1697
  %v2211 = vsel %vm2183, %v2147, %v1699
  %v2213 = vsel %vm2183, %v2149, %v1701
  %v2215 = vsel %vm2183, %v2151, %v1703
  %v2217 = vsel %vm2183, %v2153, %v1705
  %v2219 = vsel %vm2183, %v2155, %v1707
  %v2221 = vsel %vm2183, %v2157, %v1709
  %v2223 = vsel %vm2183, %v2159, %v1711
  %v2225 = vsel %vm2183, %v2161, %v1713
  %v2227 = vsel %vm2183, %v2163, %v1715
  %v2229 = vsel %vm2183, %v2165, %v1717
  %v2231 = vsel %vm2183, %v2167, %v1719
  %v2233 = vsel %vm2183, %v2169, %v1721
  %v2235 = vsel %vm2183, %v2171, %v1723
  %v2237 = vsel %vm2183, %v2173, %v1725
  %v2239 = vsel %vm2183, %v2175, %v1727
  %v2241 = vsel %vm2183, %v2177, %v1729
  %v2243 = vsel %vm2183, %v2179, %v1731
  %v2245 = vsel %vm2183, %v2181, %v1733
  %v2246 = vsel %vm2183, %v2182, %v1703
  %v2247 = vld [vmem:[%s1] sm:$0xf]
  %v2248 = vld [vmem:[%s1 + $0x4] sm:$0xf]
  %v2249 = vld [vmem:[%s1 + $0x8] sm:$0xf]
  %v2250 = vld [vmem:[%s1 + $0xc] sm:$0xf]
  %v2251 = vld [vmem:[%s1 + $0x10] sm:$0x3]
  %v2252 = vld [vmem:[%s2] sm:$0x1]
  %v2254 = vperm.slane %v2252, 0
  %v2261 = vunpack.c.l.b16 %v2247
  %v2262 = vunpack.c.l.b16 %v2248
  %v2263 = vunpack.c.l.b16 %v2249
  %v2264 = vunpack.c.l.b16 %v2250
  %v2265 = vunpack.c.l.b16 %v2251
  %v2266 = vpack.c.b16 %v2262, %v2261
  %v2267 = vpack.c.b16 %v2264, %v2263
  %v2268 = vpack.c.b16 %v2265, %v2265
  %vm2271 = vcmask 293888
  %v2272 = vsel %vm2271, %v2185, 0
  %v2274 = vsel %vm2271, %v2187, 0
  %v2276 = vsel %vm2271, %v2189, 0
  %v2278 = vsel %vm2271, %v2191, 0
  %v2280 = vsel %vm2271, %v2193, 0
  %v2282 = vsel %vm2271, %v2195, 0
  %v2284 = vsel %vm2271, %v2197, 0
  %v2286 = vsel %vm2271, %v2199, 0
  %v2288 = vsel %vm2271, %v2201, 0
  %v2290 = vsel %vm2271, %v2203, 0
  %v2292 = vsel %vm2271, %v2205, 0
  %v2294 = vsel %vm2271, %v2207, 0
  %v2296 = vsel %vm2271, %v2209, 0
  %v2298 = vsel %vm2271, %v2211, 0
  %v2300 = vsel %vm2271, %v2213, 0
  %v2302 = vsel %vm2271, %v2215, 0
  %v2304 = vsel %vm2271, %v2217, 0
  %v2306 = vsel %vm2271, %v2219, 0
  %v2308 = vsel %vm2271, %v2221, 0
  %v2310 = vsel %vm2271, %v2223, 0
  %v2312 = vsel %vm2271, %v2225, 0
  %v2314 = vsel %vm2271, %v2227, 0
  %v2316 = vsel %vm2271, %v2229, 0
  %v2318 = vsel %vm2271, %v2231, 0
  %v2320 = vsel %vm2271, %v2233, 0
  %v2322 = vsel %vm2271, %v2235, 0
  %v2324 = vsel %vm2271, %v2237, 0
  %v2326 = vsel %vm2271, %v2239, 0
  %v2328 = vsel %vm2271, %v2241, 0
  %v2330 = vsel %vm2271, %v2243, 0
  %v2332 = vsel %vm2271, %v2245, 0
  %v2334 = vsel %vm2271, %v2246, 0
  %vm2336 = vcmask 1041408
  %v2338 = vsel %vm2336, %v2268, 0
  %2340 = vmatpush.bf16.msra.mxu0 0
  %2341 = vmatpush.bf16.msra.mxu0 0
  %2342 = vmatpush.bf16.msra.mxu0 0
  %2343 = vmatpush.bf16.msra.mxu0 0
  %2344 = vmatpush.bf16.msra.mxu0 0
  %2345 = vmatpush.bf16.msra.mxu0 %v2338
  %2346 = vmatpush.bf16.msra.mxu0 %v2267
  %2347 = vmatpush.bf16.msra.mxu0 %v2266
  %2348 = vmatmul.bf16.gmra.mxu0 %v2272
  %v2349 = vpop.f32.mrf.mxu0
  %v2350 = vadd.f32 %v2254, %v2349
  %v2351 = vpop.f32.mrf.mxu0
  %v2352 = vadd.f32 %v2254, %v2351
  %2353 = vmatmul.bf16.gmra.mxu0 %v2274
  %v2354 = vpop.f32.mrf.mxu0
  %v2355 = vadd.f32 %v2254, %v2354
  %v2356 = vpop.f32.mrf.mxu0
  %v2357 = vadd.f32 %v2254, %v2356
  %2358 = vmatmul.bf16.gmra.mxu0 %v2276
  %v2359 = vpop.f32.mrf.mxu0
  %v2360 = vadd.f32 %v2254, %v2359
  %v2361 = vpop.f32.mrf.mxu0
  %v2362 = vadd.f32 %v2254, %v2361
  %2363 = vmatmul.bf16.gmra.mxu0 %v2278
  %v2364 = vpop.f32.mrf.mxu0
  %v2365 = vadd.f32 %v2254, %v2364
  %v2366 = vpop.f32.mrf.mxu0
  %v2367 = vadd.f32 %v2254, %v2366
  %2368 = vmatmul.bf16.gmra.mxu0 %v2280
  %v2369 = vpop.f32.mrf.mxu0
  %v2370 = vadd.f32 %v2254, %v2369
  %v2371 = vpop.f32.mrf.mxu0
  %v2372 = vadd.f32 %v2254, %v2371
  %2373 = vmatmul.bf16.gmra.mxu0 %v2282
  %v2374 = vpop.f32.mrf.mxu0
  %v2375 = vadd.f32 %v2254, %v2374
  %v2376 = vpop.f32.mrf.mxu0
  %v2377 = vadd.f32 %v2254, %v2376
  %2378 = vmatmul.bf16.gmra.mxu0 %v2284
  %v2379 = vpop.f32.mrf.mxu0
  %v2380 = vadd.f32 %v2254, %v2379
  %v2381 = vpop.f32.mrf.mxu0
  %v2382 = vadd.f32 %v2254, %v2381
  %2383 = vmatmul.bf16.gmra.mxu0 %v2286
  %v2384 = vpop.f32.mrf.mxu0
  %v2385 = vadd.f32 %v2254, %v2384
  %v2386 = vpop.f32.mrf.mxu0
  %v2387 = vadd.f32 %v2254, %v2386
  %2388 = vmatmul.bf16.gmra.mxu0 %v2288
  %v2389 = vpop.f32.mrf.mxu0
  %v2390 = vadd.f32 %v2254, %v2389
  %v2391 = vpop.f32.mrf.mxu0
  %v2392 = vadd.f32 %v2254, %v2391
  %2393 = vmatmul.bf16.gmra.mxu0 %v2290
  %v2394 = vpop.f32.mrf.mxu0
  %v2395 = vadd.f32 %v2254, %v2394
  %v2396 = vpop.f32.mrf.mxu0
  %v2397 = vadd.f32 %v2254, %v2396
  %2398 = vmatmul.bf16.gmra.mxu0 %v2292
  %v2399 = vpop.f32.mrf.mxu0
  %v2400 = vadd.f32 %v2254, %v2399
  %v2401 = vpop.f32.mrf.mxu0
  %v2402 = vadd.f32 %v2254, %v2401
  %2403 = vmatmul.bf16.gmra.mxu0 %v2294
  %v2404 = vpop.f32.mrf.mxu0
  %v2405 = vadd.f32 %v2254, %v2404
  %v2406 = vpop.f32.mrf.mxu0
  %v2407 = vadd.f32 %v2254, %v2406
  %2408 = vmatmul.bf16.gmra.mxu0 %v2296
  %v2409 = vpop.f32.mrf.mxu0
  %v2410 = vadd.f32 %v2254, %v2409
  %v2411 = vpop.f32.mrf.mxu0
  %v2412 = vadd.f32 %v2254, %v2411
  %2413 = vmatmul.bf16.gmra.mxu0 %v2298
  %v2414 = vpop.f32.mrf.mxu0
  %v2415 = vadd.f32 %v2254, %v2414
  %v2416 = vpop.f32.mrf.mxu0
  %v2417 = vadd.f32 %v2254, %v2416
  %2418 = vmatmul.bf16.gmra.mxu0 %v2300
  %v2419 = vpop.f32.mrf.mxu0
  %v2420 = vadd.f32 %v2254, %v2419
  %v2421 = vpop.f32.mrf.mxu0
  %v2422 = vadd.f32 %v2254, %v2421
  %2423 = vmatmul.bf16.gmra.mxu0 %v2302
  %v2424 = vpop.f32.mrf.mxu0
  %v2425 = vadd.f32 %v2254, %v2424
  %v2426 = vpop.f32.mrf.mxu0
  %v2427 = vadd.f32 %v2254, %v2426
  %2428 = vmatmul.bf16.gmra.mxu0 %v2304
  %v2429 = vpop.f32.mrf.mxu0
  %v2430 = vadd.f32 %v2254, %v2429
  %v2431 = vpop.f32.mrf.mxu0
  %v2432 = vadd.f32 %v2254, %v2431
  %2433 = vmatmul.bf16.gmra.mxu0 %v2306
  %v2434 = vpop.f32.mrf.mxu0
  %v2435 = vadd.f32 %v2254, %v2434
  %v2436 = vpop.f32.mrf.mxu0
  %v2437 = vadd.f32 %v2254, %v2436
  %2438 = vmatmul.bf16.gmra.mxu0 %v2308
  %v2439 = vpop.f32.mrf.mxu0
  %v2440 = vadd.f32 %v2254, %v2439
  %v2441 = vpop.f32.mrf.mxu0
  %v2442 = vadd.f32 %v2254, %v2441
  %2443 = vmatmul.bf16.gmra.mxu0 %v2310
  %v2444 = vpop.f32.mrf.mxu0
  %v2445 = vadd.f32 %v2254, %v2444
  %v2446 = vpop.f32.mrf.mxu0
  %v2447 = vadd.f32 %v2254, %v2446
  %2448 = vmatmul.bf16.gmra.mxu0 %v2312
  %v2449 = vpop.f32.mrf.mxu0
  %v2450 = vadd.f32 %v2254, %v2449
  %v2451 = vpop.f32.mrf.mxu0
  %v2452 = vadd.f32 %v2254, %v2451
  %2453 = vmatmul.bf16.gmra.mxu0 %v2314
  %v2454 = vpop.f32.mrf.mxu0
  %v2455 = vadd.f32 %v2254, %v2454
  %v2456 = vpop.f32.mrf.mxu0
  %v2457 = vadd.f32 %v2254, %v2456
  %2458 = vmatmul.bf16.gmra.mxu0 %v2316
  %v2459 = vpop.f32.mrf.mxu0
  %v2460 = vadd.f32 %v2254, %v2459
  %v2461 = vpop.f32.mrf.mxu0
  %v2462 = vadd.f32 %v2254, %v2461
  %2463 = vmatmul.bf16.gmra.mxu0 %v2318
  %v2464 = vpop.f32.mrf.mxu0
  %v2465 = vadd.f32 %v2254, %v2464
  %v2466 = vpop.f32.mrf.mxu0
  %v2467 = vadd.f32 %v2254, %v2466
  %2468 = vmatmul.bf16.gmra.mxu0 %v2320
  %v2469 = vpop.f32.mrf.mxu0
  %v2470 = vadd.f32 %v2254, %v2469
  %v2471 = vpop.f32.mrf.mxu0
  %v2472 = vadd.f32 %v2254, %v2471
  %2473 = vmatmul.bf16.gmra.mxu0 %v2322
  %v2474 = vpop.f32.mrf.mxu0
  %v2475 = vadd.f32 %v2254, %v2474
  %v2476 = vpop.f32.mrf.mxu0
  %v2477 = vadd.f32 %v2254, %v2476
  %2478 = vmatmul.bf16.gmra.mxu0 %v2324
  %v2479 = vpop.f32.mrf.mxu0
  %v2480 = vadd.f32 %v2254, %v2479
  %v2481 = vpop.f32.mrf.mxu0
  %v2482 = vadd.f32 %v2254, %v2481
  %2483 = vmatmul.bf16.gmra.mxu0 %v2326
  %v2484 = vpop.f32.mrf.mxu0
  %v2485 = vadd.f32 %v2254, %v2484
  %v2486 = vpop.f32.mrf.mxu0
  %v2487 = vadd.f32 %v2254, %v2486
  %2488 = vmatmul.bf16.gmra.mxu0 %v2328
  %v2489 = vpop.f32.mrf.mxu0
  %v2490 = vadd.f32 %v2254, %v2489
  %v2491 = vpop.f32.mrf.mxu0
  %v2492 = vadd.f32 %v2254, %v2491
  %2493 = vmatmul.bf16.gmra.mxu0 %v2330
  %v2494 = vpop.f32.mrf.mxu0
  %v2495 = vadd.f32 %v2254, %v2494
  %v2496 = vpop.f32.mrf.mxu0
  %v2497 = vadd.f32 %v2254, %v2496
  %2498 = vmatmul.bf16.gmra.mxu0 %v2332
  %v2499 = vpop.f32.mrf.mxu0
  %v2500 = vadd.f32 %v2254, %v2499
  %v2501 = vpop.f32.mrf.mxu0
  %v2502 = vadd.f32 %v2254, %v2501
  %2503 = vmatmul.bf16.gmra.mxu0 %v2334
  %v2504 = vpop.f32.mrf.mxu0
  %v2505 = vadd.f32 %v2254, %v2504
  %v2506 = vpop.f32.mrf.mxu0
  %v2507 = vadd.f32 %v2254, %v2506
  %2508 = vdwg.mxu0
  %v2509 = vmax.f32 %v2350, 0.0
  %v2510 = vmax.f32 %v2352, 0.0
  %v2511 = vmax.f32 %v2355, 0.0
  %v2512 = vmax.f32 %v2357, 0.0
  %v2513 = vmax.f32 %v2360, 0.0
  %v2514 = vmax.f32 %v2362, 0.0
  %v2515 = vmax.f32 %v2365, 0.0
  %v2516 = vmax.f32 %v2367, 0.0
  %v2517 = vmax.f32 %v2370, 0.0
  %v2518 = vmax.f32 %v2372, 0.0
  %v2519 = vmax.f32 %v2375, 0.0
  %v2520 = vmax.f32 %v2377, 0.0
  %v2521 = vmax.f32 %v2380, 0.0
  %v2522 = vmax.f32 %v2382, 0.0
  %v2523 = vmax.f32 %v2385, 0.0
  %v2524 = vmax.f32 %v2387, 0.0
  %v2525 = vmax.f32 %v2390, 0.0
  %v2526 = vmax.f32 %v2392, 0.0
  %v2527 = vmax.f32 %v2395, 0.0
  %v2528 = vmax.f32 %v2397, 0.0
  %v2529 = vmax.f32 %v2400, 0.0
  %v2530 = vmax.f32 %v2402, 0.0
  %v2531 = vmax.f32 %v2405, 0.0
  %v2532 = vmax.f32 %v2407, 0.0
  %v2533 = vmax.f32 %v2410, 0.0
  %v2534 = vmax.f32 %v2412, 0.0
  %v2535 = vmax.f32 %v2415, 0.0
  %v2536 = vmax.f32 %v2417, 0.0
  %v2537 = vmax.f32 %v2420, 0.0
  %v2538 = vmax.f32 %v2422, 0.0
  %v2539 = vmax.f32 %v2425, 0.0
  %v2540 = vmax.f32 %v2427, 0.0
  %v2541 = vmax.f32 %v2430, 0.0
  %v2542 = vmax.f32 %v2432, 0.0
  %v2543 = vmax.f32 %v2435, 0.0
  %v2544 = vmax.f32 %v2437, 0.0
  %v2545 = vmax.f32 %v2440, 0.0
  %v2546 = vmax.f32 %v2442, 0.0
  %v2547 = vmax.f32 %v2445, 0.0
  %v2548 = vmax.f32 %v2447, 0.0
  %v2549 = vmax.f32 %v2450, 0.0
  %v2550 = vmax.f32 %v2452, 0.0
  %v2551 = vmax.f32 %v2455, 0.0
  %v2552 = vmax.f32 %v2457, 0.0
  %v2553 = vmax.f32 %v2460, 0.0
  %v2554 = vmax.f32 %v2462, 0.0
  %v2555 = vmax.f32 %v2465, 0.0
  %v2556 = vmax.f32 %v2467, 0.0
  %v2557 = vmax.f32 %v2470, 0.0
  %v2558 = vmax.f32 %v2472, 0.0
  %v2559 = vmax.f32 %v2475, 0.0
  %v2560 = vmax.f32 %v2477, 0.0
  %v2561 = vmax.f32 %v2480, 0.0
  %v2562 = vmax.f32 %v2482, 0.0
  %v2563 = vmax.f32 %v2485, 0.0
  %v2564 = vmax.f32 %v2487, 0.0
  %v2565 = vmax.f32 %v2490, 0.0
  %v2566 = vmax.f32 %v2492, 0.0
  %v2567 = vmax.f32 %v2495, 0.0
  %v2568 = vmax.f32 %v2497, 0.0
  %v2569 = vmax.f32 %v2500, 0.0
  %v2570 = vmax.f32 %v2502, 0.0
  %v2571 = vmax.f32 %v2505, 0.0
  %v2572 = vmax.f32 %v2507, 0.0
  %2573 = vst.msk [vmem:[%s3] sm:$0xff] %vm2183, %v2509
  %2574 = vst.msk [vmem:[%s3 + $0x8] sm:$0xff] %vm2183, %v2510
  %2575 = vst.msk [vmem:[%s3 + $0x10] sm:$0xff] %vm2183, %v2511
  %2576 = vst.msk [vmem:[%s3 + $0x18] sm:$0xff] %vm2183, %v2512
  %2577 = vst.msk [vmem:[%s3 + $0x20] sm:$0xff] %vm2183, %v2513
  %2578 = vst.msk [vmem:[%s3 + $0x28] sm:$0xff] %vm2183, %v2514
  %2579 = vst.msk [vmem:[%s3 + $0x30] sm:$0xff] %vm2183, %v2515
  %2580 = vst.msk [vmem:[%s3 + $0x38] sm:$0xff] %vm2183, %v2516
  %2581 = vst.msk [vmem:[%s3 + $0x40] sm:$0xff] %vm2183, %v2517
  %2582 = vst.msk [vmem:[%s3 + $0x48] sm:$0xff] %vm2183, %v2518
  %2583 = vst.msk [vmem:[%s3 + $0x50] sm:$0xff] %vm2183, %v2519
  %2584 = vst.msk [vmem:[%s3 + $0x58] sm:$0xff] %vm2183, %v2520
  %2585 = vst.msk [vmem:[%s3 + $0x60] sm:$0xff] %vm2183, %v2521
  %2586 = vst.msk [vmem:[%s3 + $0x68] sm:$0xff] %vm2183, %v2522
  %2587 = vst.msk [vmem:[%s3 + $0x70] sm:$0xff] %vm2183, %v2523
  %2588 = vst.msk [vmem:[%s3 + $0x78] sm:$0xff] %vm2183, %v2524
  %2589 = vst.msk [vmem:[%s3 + $0x80] sm:$0xff] %vm2183, %v2525
  %2590 = vst.msk [vmem:[%s3 + $0x88] sm:$0xff] %vm2183, %v2526
  %2591 = vst.msk [vmem:[%s3 + $0x90] sm:$0xff] %vm2183, %v2527
  %2592 = vst.msk [vmem:[%s3 + $0x98] sm:$0xff] %vm2183, %v2528
  %2593 = vst.msk [vmem:[%s3 + $0xa0] sm:$0xff] %vm2183, %v2529
  %2594 = vst.msk [vmem:[%s3 + $0xa8] sm:$0xff] %vm2183, %v2530
  %2595 = vst.msk [vmem:[%s3 + $0xb0] sm:$0xff] %vm2183, %v2531
  %2596 = vst.msk [vmem:[%s3 + $0xb8] sm:$0xff] %vm2183, %v2532
  %2597 = vst.msk [vmem:[%s3 + $0xc0] sm:$0xff] %vm2183, %v2533
  %2598 = vst.msk [vmem:[%s3 + $0xc8] sm:$0xff] %vm2183, %v2534
  %2599 = vst.msk [vmem:[%s3 + $0xd0] sm:$0xff] %vm2183, %v2535
  %2600 = vst.msk [vmem:[%s3 + $0xd8] sm:$0xff] %vm2183, %v2536
  %2601 = vst.msk [vmem:[%s3 + $0xe0] sm:$0xff] %vm2183, %v2537
  %2602 = vst.msk [vmem:[%s3 + $0xe8] sm:$0xff] %vm2183, %v2538
  %2603 = vst.msk [vmem:[%s3 + $0xf0] sm:$0xff] %vm2183, %v2539
  %2604 = vst.msk [vmem:[%s3 + $0xf8] sm:$0xff] %vm2183, %v2540
  %2605 = vst.msk [vmem:[%s3 + $0x100] sm:$0xff] %vm2183, %v2541
  %2606 = vst.msk [vmem:[%s3 + $0x108] sm:$0xff] %vm2183, %v2542
  %2607 = vst.msk [vmem:[%s3 + $0x110] sm:$0xff] %vm2183, %v2543
  %2608 = vst.msk [vmem:[%s3 + $0x118] sm:$0xff] %vm2183, %v2544
  %2609 = vst.msk [vmem:[%s3 + $0x120] sm:$0xff] %vm2183, %v2545
  %2610 = vst.msk [vmem:[%s3 + $0x128] sm:$0xff] %vm2183, %v2546
  %2611 = vst.msk [vmem:[%s3 + $0x130] sm:$0xff] %vm2183, %v2547
  %2612 = vst.msk [vmem:[%s3 + $0x138] sm:$0xff] %vm2183, %v2548
  %2613 = vst.msk [vmem:[%s3 + $0x140] sm:$0xff] %vm2183, %v2549
  %2614 = vst.msk [vmem:[%s3 + $0x148] sm:$0xff] %vm2183, %v2550
  %2615 = vst.msk [vmem:[%s3 + $0x150] sm:$0xff] %vm2183, %v2551
  %2616 = vst.msk [vmem:[%s3 + $0x158] sm:$0xff] %vm2183, %v2552
  %2617 = vst.msk [vmem:[%s3 + $0x160] sm:$0xff] %vm2183, %v2553
  %2618 = vst.msk [vmem:[%s3 + $0x168] sm:$0xff] %vm2183, %v2554
  %2619 = vst.msk [vmem:[%s3 + $0x170] sm:$0xff] %vm2183, %v2555
  %2620 = vst.msk [vmem:[%s3 + $0x178] sm:$0xff] %vm2183, %v2556
  %2621 = vst.msk [vmem:[%s3 + $0x180] sm:$0xff] %vm2183, %v2557
  %2622 = vst.msk [vmem:[%s3 + $0x188] sm:$0xff] %vm2183, %v2558
  %2623 = vst.msk [vmem:[%s3 + $0x190] sm:$0xff] %vm2183, %v2559
  %2624 = vst.msk [vmem:[%s3 + $0x198] sm:$0xff] %vm2183, %v2560
  %2625 = vst.msk [vmem:[%s3 + $0x1a0] sm:$0xff] %vm2183, %v2561
  %2626 = vst.msk [vmem:[%s3 + $0x1a8] sm:$0xff] %vm2183, %v2562
  %2627 = vst.msk [vmem:[%s3 + $0x1b0] sm:$0xff] %vm2183, %v2563
  %2628 = vst.msk [vmem:[%s3 + $0x1b8] sm:$0xff] %vm2183, %v2564
  %2629 = vst.msk [vmem:[%s3 + $0x1c0] sm:$0xff] %vm2183, %v2565
  %2630 = vst.msk [vmem:[%s3 + $0x1c8] sm:$0xff] %vm2183, %v2566
  %2631 = vst.msk [vmem:[%s3 + $0x1d0] sm:$0xff] %vm2183, %v2567
  %2632 = vst.msk [vmem:[%s3 + $0x1d8] sm:$0xff] %vm2183, %v2568
  %2633 = vst.msk [vmem:[%s3 + $0x1e0] sm:$0xff] %vm2183, %v2569
  %2634 = vst.msk [vmem:[%s3 + $0x1e8] sm:$0xff] %vm2183, %v2570
  %2635 = vst.msk [vmem:[%s3 + $0x1f0] sm:$0xff] %vm2183, %v2571
  %2636 = vst.msk [vmem:[%s3 + $0x1f8] sm:$0xff] %vm2183, %v2572
  // Predicated region
  $region14: #{forward.6} parent=0 // pred_check
    _
  $region15: #{forward.6} parent=0 // pred_check_branch
    %2638 = sbr.rel (0) target = $region17
  $region16: #{forward.6} parent=0 // pred_region
    _
  $region17: #{forward.6} parent=0 // pred_fallthru
    _
  // Predicated region
  $region18: #{forward.6} parent=0 // pred_check
    _
  $region19: #{forward.6} parent=0 // pred_check_branch
    %2640 = sbr.rel (0) target = $region21
  $region20: #{forward.6} parent=0 // pred_region
    _
  $region21: #{forward.6} parent=0 // pred_fallthru
    _

// kernel: forward.7
$region0: #{forward.7}
  #allocation0 [shape = 'u32[]', space=smem, size = 0x4, offset = 0x4, fixed_abs, tag = 'smem constant byte address 0x4 - core index']
  #allocation1 [shape = 'u32[72,128]{1,0:T(1,128)}', space=vmem, size = 0x9000, scoped, tag = 'internal scratch']
  %s0 = inlined_call_operand.vmem [shape: f32[2,16,16,32], index: 0, kind: input, shape index: {}]
  %s1 = inlined_call_operand.vmem [shape: bf16[288,32], index: 1, kind: input, shape index: {}]
  %s2 = inlined_call_operand.vmem [shape: f32[1,32], index: 2, kind: input, shape index: {}]
  %s3 = inlined_call_operand.vmem [shape: f32[2,16,16,32], index: 3, kind: output, shape index: {}]
  %s4 = sld [smem:[#allocation0]]
  $region22: #{forward.7} parent=0
    _
  %s6 = ssub.s32 1, %s4
  %s7 = scalar_select 0, %s6, %s4
  // Predicated region
  $region2: #{forward.7} parent=0 // pred_check
    _
  $region3: #{forward.7} parent=0 // pred_check_branch
    %9 = sbr.rel (0) target = $region5
  $region4: #{forward.7} parent=0 // pred_region
    _
  $region5: #{forward.7} parent=0 // pred_fallthru
    _
  // Predicated region
  $region6: #{forward.7} parent=0 // pred_check
    _
  $region7: #{forward.7} parent=0 // pred_check_branch
    %11 = sbr.rel (0) target = $region9
  $region8: #{forward.7} parent=0 // pred_region
    _
  $region9: #{forward.7} parent=0 // pred_fallthru
    _
  // Predicated region
  $region10: #{forward.7} parent=0 // pred_check
    _
  $region11: #{forward.7} parent=0 // pred_check_branch
    %13 = sbr.rel (0) target = $region13
  $region12: #{forward.7} parent=0 // pred_region
    _
  $region13: #{forward.7} parent=0 // pred_fallthru
    _
  %v15 = vld [vmem:[%s0] sm:$0xff]
  %v16 = vld [vmem:[%s0 + $0x8] sm:$0xff]
  %v17 = vld [vmem:[%s0 + $0x10] sm:$0xff]
  %v18 = vld [vmem:[%s0 + $0x18] sm:$0xff]
  %v19 = vld [vmem:[%s0 + $0x20] sm:$0xff]
  %v20 = vld [vmem:[%s0 + $0x28] sm:$0xff]
  %v21 = vld [vmem:[%s0 + $0x30] sm:$0xff]
  %v22 = vld [vmem:[%s0 + $0x38] sm:$0xff]
  %v23 = vld [vmem:[%s0 + $0x40] sm:$0xff]
  %v24 = vld [vmem:[%s0 + $0x48] sm:$0xff]
  %v25 = vld [vmem:[%s0 + $0x50] sm:$0xff]
  %v26 = vld [vmem:[%s0 + $0x58] sm:$0xff]
  %v27 = vld [vmem:[%s0 + $0x60] sm:$0xff]
  %v28 = vld [vmem:[%s0 + $0x68] sm:$0xff]
  %v29 = vld [vmem:[%s0 + $0x70] sm:$0xff]
  %v30 = vld [vmem:[%s0 + $0x78] sm:$0xff]
  %v31 = vld [vmem:[%s0 + $0x80] sm:$0xff]
  %v32 = vld [vmem:[%s0 + $0x88] sm:$0xff]
  %v33 = vld [vmem:[%s0 + $0x90] sm:$0xff]
  %v34 = vld [vmem:[%s0 + $0x98] sm:$0xff]
  %v35 = vld [vmem:[%s0 + $0xa0] sm:$0xff]
  %v36 = vld [vmem:[%s0 + $0xa8] sm:$0xff]
  %v37 = vld [vmem:[%s0 + $0xb0] sm:$0xff]
  %v38 = vld [vmem:[%s0 + $0xb8] sm:$0xff]
  %v39 = vld [vmem:[%s0 + $0xc0] sm:$0xff]
  %v40 = vld [vmem:[%s0 + $0xc8] sm:$0xff]
  %v41 = vld [vmem:[%s0 + $0xd0] sm:$0xff]
  %v42 = vld [vmem:[%s0 + $0xd8] sm:$0xff]
  %v43 = vld [vmem:[%s0 + $0xe0] sm:$0xff]
  %v44 = vld [vmem:[%s0 + $0xe8] sm:$0xff]
  %v45 = vld [vmem:[%s0 + $0xf0] sm:$0xff]
  %v46 = vld [vmem:[%s0 + $0xf8] sm:$0xff]
  %v47 = vld [vmem:[%s0 + $0x100] sm:$0xff]
  %v48 = vld [vmem:[%s0 + $0x108] sm:$0xff]
  %v49 = vld [vmem:[%s0 + $0x110] sm:$0xff]
  %v50 = vld [vmem:[%s0 + $0x118] sm:$0xff]
  %v51 = vld [vmem:[%s0 + $0x120] sm:$0xff]
  %v52 = vld [vmem:[%s0 + $0x128] sm:$0xff]
  %v53 = vld [vmem:[%s0 + $0x130] sm:$0xff]
  %v54 = vld [vmem:[%s0 + $0x138] sm:$0xff]
  %v55 = vld [vmem:[%s0 + $0x140] sm:$0xff]
  %v56 = vld [vmem:[%s0 + $0x148] sm:$0xff]
  %v57 = vld [vmem:[%s0 + $0x150] sm:$0xff]
  %v58 = vld [vmem:[%s0 + $0x158] sm:$0xff]
  %v59 = vld [vmem:[%s0 + $0x160] sm:$0xff]
  %v60 = vld [vmem:[%s0 + $0x168] sm:$0xff]
  %v61 = vld [vmem:[%s0 + $0x170] sm:$0xff]
  %v62 = vld [vmem:[%s0 + $0x178] sm:$0xff]
  %v63 = vld [vmem:[%s0 + $0x180] sm:$0xff]
  %v64 = vld [vmem:[%s0 + $0x188] sm:$0xff]
  %v65 = vld [vmem:[%s0 + $0x190] sm:$0xff]
  %v66 = vld [vmem:[%s0 + $0x198] sm:$0xff]
  %v67 = vld [vmem:[%s0 + $0x1a0] sm:$0xff]
  %v68 = vld [vmem:[%s0 + $0x1a8] sm:$0xff]
  %v69 = vld [vmem:[%s0 + $0x1b0] sm:$0xff]
  %v70 = vld [vmem:[%s0 + $0x1b8] sm:$0xff]
  %v71 = vld [vmem:[%s0 + $0x1c0] sm:$0xff]
  %v72 = vld [vmem:[%s0 + $0x1c8] sm:$0xff]
  %v73 = vld [vmem:[%s0 + $0x1d0] sm:$0xff]
  %v74 = vld [vmem:[%s0 + $0x1d8] sm:$0xff]
  %v75 = vld [vmem:[%s0 + $0x1e0] sm:$0xff]
  %v76 = vld [vmem:[%s0 + $0x1e8] sm:$0xff]
  %v77 = vld [vmem:[%s0 + $0x1f0] sm:$0xff]
  %v78 = vld [vmem:[%s0 + $0x1f8] sm:$0xff]
  %v79 = vpack.c.bf16 %v15, %v15
  %v80 = vpack.c.bf16 %v16, %v16
  %v81 = vpack.c.bf16 %v17, %v17
  %v82 = vpack.c.bf16 %v18, %v18
  %v83 = vpack.c.bf16 %v19, %v19
  %v84 = vpack.c.bf16 %v20, %v20
  %v85 = vpack.c.bf16 %v21, %v21
  %v86 = vpack.c.bf16 %v22, %v22
  %v87 = vpack.c.bf16 %v23, %v23
  %v88 = vpack.c.bf16 %v24, %v24
  %v89 = vpack.c.bf16 %v25, %v25
  %v90 = vpack.c.bf16 %v26, %v26
  %v91 = vpack.c.bf16 %v27, %v27
  %v92 = vpack.c.bf16 %v28, %v28
  %v93 = vpack.c.bf16 %v29, %v29
  %v94 = vpack.c.bf16 %v30, %v30
  %v95 = vpack.c.bf16 %v31, %v31
  %v96 = vpack.c.bf16 %v32, %v32
  %v97 = vpack.c.bf16 %v33, %v33
  %v98 = vpack.c.bf16 %v34, %v34
  %v99 = vpack.c.bf16 %v35, %v35
  %v100 = vpack.c.bf16 %v36, %v36
  %v101 = vpack.c.bf16 %v37, %v37
  %v102 = vpack.c.bf16 %v38, %v38
  %v103 = vpack.c.bf16 %v39, %v39
  %v104 = vpack.c.bf16 %v40, %v40
  %v105 = vpack.c.bf16 %v41, %v41
  %v106 = vpack.c.bf16 %v42, %v42
  %v107 = vpack.c.bf16 %v43, %v43
  %v108 = vpack.c.bf16 %v44, %v44
  %v109 = vpack.c.bf16 %v45, %v45
  %v110 = vpack.c.bf16 %v46, %v46
  %v111 = vpack.c.bf16 %v47, %v47
  %v112 = vpack.c.bf16 %v48, %v48
  %v113 = vpack.c.bf16 %v49, %v49
  %v114 = vpack.c.bf16 %v50, %v50
  %v115 = vpack.c.bf16 %v51, %v51
  %v116 = vpack.c.bf16 %v52, %v52
  %v117 = vpack.c.bf16 %v53, %v53
  %v118 = vpack.c.bf16 %v54, %v54
  %v119 = vpack.c.bf16 %v55, %v55
  %v120 = vpack.c.bf16 %v56, %v56
  %v121 = vpack.c.bf16 %v57, %v57
  %v122 = vpack.c.bf16 %v58, %v58
  %v123 = vpack.c.bf16 %v59, %v59
  %v124 = vpack.c.bf16 %v60, %v60
  %v125 = vpack.c.bf16 %v61, %v61
  %v126 = vpack.c.bf16 %v62, %v62
  %v127 = vpack.c.bf16 %v63, %v63
  %v128 = vpack.c.bf16 %v64, %v64
  %v129 = vpack.c.bf16 %v65, %v65
  %v130 = vpack.c.bf16 %v66, %v66
  %v131 = vpack.c.bf16 %v67, %v67
  %v132 = vpack.c.bf16 %v68, %v68
  %v133 = vpack.c.bf16 %v69, %v69
  %v134 = vpack.c.bf16 %v70, %v70
  %v135 = vpack.c.bf16 %v71, %v71
  %v136 = vpack.c.bf16 %v72, %v72
  %v137 = vpack.c.bf16 %v73, %v73
  %v138 = vpack.c.bf16 %v74, %v74
  %v139 = vpack.c.bf16 %v75, %v75
  %v140 = vpack.c.bf16 %v76, %v76
  %v141 = vpack.c.bf16 %v77, %v77
  %v142 = vpack.c.bf16 %v78, %v78
  %v207 = vunpack.c.l.b16 %v79
  %v208 = vunpack.c.l.b16 %v80
  %v209 = vunpack.c.l.b16 %v81
  %v210 = vunpack.c.l.b16 %v82
  %v211 = vunpack.c.l.b16 %v83
  %v212 = vunpack.c.l.b16 %v84
  %v213 = vunpack.c.l.b16 %v85
  %v214 = vunpack.c.l.b16 %v86
  %v215 = vunpack.c.l.b16 %v87
  %v216 = vunpack.c.l.b16 %v88
  %v217 = vunpack.c.l.b16 %v89
  %v218 = vunpack.c.l.b16 %v90
  %v219 = vunpack.c.l.b16 %v91
  %v220 = vunpack.c.l.b16 %v92
  %v221 = vunpack.c.l.b16 %v93
  %v222 = vunpack.c.l.b16 %v94
  %v223 = vunpack.c.l.b16 %v95
  %v224 = vunpack.c.l.b16 %v96
  %v225 = vunpack.c.l.b16 %v97
  %v226 = vunpack.c.l.b16 %v98
  %v227 = vunpack.c.l.b16 %v99
  %v228 = vunpack.c.l.b16 %v100
  %v229 = vunpack.c.l.b16 %v101
  %v230 = vunpack.c.l.b16 %v102
  %v231 = vunpack.c.l.b16 %v103
  %v232 = vunpack.c.l.b16 %v104
  %v233 = vunpack.c.l.b16 %v105
  %v234 = vunpack.c.l.b16 %v106
  %v235 = vunpack.c.l.b16 %v107
  %v236 = vunpack.c.l.b16 %v108
  %v237 = vunpack.c.l.b16 %v109
  %v238 = vunpack.c.l.b16 %v110
  %v239 = vunpack.c.l.b16 %v111
  %v240 = vunpack.c.l.b16 %v112
  %v241 = vunpack.c.l.b16 %v113
  %v242 = vunpack.c.l.b16 %v114
  %v243 = vunpack.c.l.b16 %v115
  %v244 = vunpack.c.l.b16 %v116
  %v245 = vunpack.c.l.b16 %v117
  %v246 = vunpack.c.l.b16 %v118
  %v247 = vunpack.c.l.b16 %v119
  %v248 = vunpack.c.l.b16 %v120
  %v249 = vunpack.c.l.b16 %v121
  %v250 = vunpack.c.l.b16 %v122
  %v251 = vunpack.c.l.b16 %v123
  %v252 = vunpack.c.l.b16 %v124
  %v253 = vunpack.c.l.b16 %v125
  %v254 = vunpack.c.l.b16 %v126
  %v255 = vunpack.c.l.b16 %v127
  %v256 = vunpack.c.l.b16 %v128
  %v257 = vunpack.c.l.b16 %v129
  %v258 = vunpack.c.l.b16 %v130
  %v259 = vunpack.c.l.b16 %v131
  %v260 = vunpack.c.l.b16 %v132
  %v261 = vunpack.c.l.b16 %v133
  %v262 = vunpack.c.l.b16 %v134
  %v263 = vunpack.c.l.b16 %v135
  %v264 = vunpack.c.l.b16 %v136
  %v265 = vunpack.c.l.b16 %v137
  %v266 = vunpack.c.l.b16 %v138
  %v267 = vunpack.c.l.b16 %v139
  %v268 = vunpack.c.l.b16 %v140
  %v269 = vunpack.c.l.b16 %v141
  %v270 = vunpack.c.l.b16 %v142
  %v271 = vpack.c.b16 %v208, %v207
  %v272 = vpack.c.b16 %v210, %v209
  %v273 = vpack.c.b16 %v212, %v211
  %v274 = vpack.c.b16 %v214, %v213
  %v275 = vpack.c.b16 %v216, %v215
  %v276 = vpack.c.b16 %v218, %v217
  %v277 = vpack.c.b16 %v220, %v219
  %v278 = vpack.c.b16 %v222, %v221
  %v279 = vpack.c.b16 %v224, %v223
  %v280 = vpack.c.b16 %v226, %v225
  %v281 = vpack.c.b16 %v228, %v227
  %v282 = vpack.c.b16 %v230, %v229
  %v283 = vpack.c.b16 %v232, %v231
  %v284 = vpack.c.b16 %v234, %v233
  %v285 = vpack.c.b16 %v236, %v235
  %v286 = vpack.c.b16 %v238, %v237
  %v287 = vpack.c.b16 %v240, %v239
  %v288 = vpack.c.b16 %v242, %v241
  %v289 = vpack.c.b16 %v244, %v243
  %v290 = vpack.c.b16 %v246, %v245
  %v291 = vpack.c.b16 %v248, %v247
  %v292 = vpack.c.b16 %v250, %v249
  %v293 = vpack.c.b16 %v252, %v251
  %v294 = vpack.c.b16 %v254, %v253
  %v295 = vpack.c.b16 %v256, %v255
  %v296 = vpack.c.b16 %v258, %v257
  %v297 = vpack.c.b16 %v260, %v259
  %v298 = vpack.c.b16 %v262, %v261
  %v299 = vpack.c.b16 %v264, %v263
  %v300 = vpack.c.b16 %v266, %v265
  %v301 = vpack.c.b16 %v268, %v267
  %v302 = vpack.c.b16 %v270, %v269
  %v304 = vshrl.u32 0, 16
  %v306 = vrot.slane %v304, 7
  %v307 = vshll.u32 0, 16
  %v309 = vor.u32 %v306, %v307
  %v311 = vshrl.u32 %v271, 16
  %v313 = vrot.slane %v311, 7
  %v314 = vshll.u32 %v271, 16
  %v316 = vor.u32 %v313, %v314
  %v318 = vshrl.u32 %v272, 16
  %v320 = vrot.slane %v318, 7
  %v321 = vshll.u32 %v272, 16
  %v323 = vor.u32 %v320, %v321
  %v325 = vshrl.u32 %v273, 16
  %v327 = vrot.slane %v325, 7
  %v328 = vshll.u32 %v273, 16
  %v330 = vor.u32 %v327, %v328
  %v332 = vshrl.u32 %v274, 16
  %v334 = vrot.slane %v332, 7
  %v335 = vshll.u32 %v274, 16
  %v337 = vor.u32 %v334, %v335
  %v339 = vshrl.u32 %v275, 16
  %v341 = vrot.slane %v339, 7
  %v342 = vshll.u32 %v275, 16
  %v344 = vor.u32 %v341, %v342
  %v346 = vshrl.u32 %v276, 16
  %v348 = vrot.slane %v346, 7
  %v349 = vshll.u32 %v276, 16
  %v351 = vor.u32 %v348, %v349
  %v353 = vshrl.u32 %v277, 16
  %v355 = vrot.slane %v353, 7
  %v356 = vshll.u32 %v277, 16
  %v358 = vor.u32 %v355, %v356
  %v360 = vshrl.u32 %v278, 16
  %v362 = vrot.slane %v360, 7
  %v363 = vshll.u32 %v278, 16
  %v365 = vor.u32 %v362, %v363
  %v367 = vshrl.u32 %v279, 16
  %v369 = vrot.slane %v367, 7
  %v370 = vshll.u32 %v279, 16
  %v372 = vor.u32 %v369, %v370
  %v374 = vshrl.u32 %v280, 16
  %v376 = vrot.slane %v374, 7
  %v377 = vshll.u32 %v280, 16
  %v379 = vor.u32 %v376, %v377
  %v381 = vshrl.u32 %v281, 16
  %v383 = vrot.slane %v381, 7
  %v384 = vshll.u32 %v281, 16
  %v386 = vor.u32 %v383, %v384
  %v388 = vshrl.u32 %v282, 16
  %v390 = vrot.slane %v388, 7
  %v391 = vshll.u32 %v282, 16
  %v393 = vor.u32 %v390, %v391
  %v395 = vshrl.u32 %v283, 16
  %v397 = vrot.slane %v395, 7
  %v398 = vshll.u32 %v283, 16
  %v400 = vor.u32 %v397, %v398
  %v402 = vshrl.u32 %v284, 16
  %v404 = vrot.slane %v402, 7
  %v405 = vshll.u32 %v284, 16
  %v407 = vor.u32 %v404, %v405
  %v409 = vshrl.u32 %v285, 16
  %v411 = vrot.slane %v409, 7
  %v412 = vshll.u32 %v285, 16
  %v414 = vor.u32 %v411, %v412
  %v416 = vshrl.u32 %v286, 16
  %v418 = vrot.slane %v416, 7
  %v419 = vshll.u32 %v286, 16
  %v421 = vor.u32 %v418, %v419
  %v423 = vshrl.u32 %v287, 16
  %v425 = vrot.slane %v423, 7
  %v426 = vshll.u32 %v287, 16
  %v428 = vor.u32 %v425, %v426
  %v430 = vshrl.u32 %v288, 16
  %v432 = vrot.slane %v430, 7
  %v433 = vshll.u32 %v288, 16
  %v435 = vor.u32 %v432, %v433
  %v437 = vshrl.u32 %v289, 16
  %v439 = vrot.slane %v437, 7
  %v440 = vshll.u32 %v289, 16
  %v442 = vor.u32 %v439, %v440
  %v444 = vshrl.u32 %v290, 16
  %v446 = vrot.slane %v444, 7
  %v447 = vshll.u32 %v290, 16
  %v449 = vor.u32 %v446, %v447
  %v451 = vshrl.u32 %v291, 16
  %v453 = vrot.slane %v451, 7
  %v454 = vshll.u32 %v291, 16
  %v456 = vor.u32 %v453, %v454
  %v458 = vshrl.u32 %v292, 16
  %v460 = vrot.slane %v458, 7
  %v461 = vshll.u32 %v292, 16
  %v463 = vor.u32 %v460, %v461
  %v465 = vshrl.u32 %v293, 16
  %v467 = vrot.slane %v465, 7
  %v468 = vshll.u32 %v293, 16
  %v470 = vor.u32 %v467, %v468
  %v472 = vshrl.u32 %v294, 16
  %v474 = vrot.slane %v472, 7
  %v475 = vshll.u32 %v294, 16
  %v477 = vor.u32 %v474, %v475
  %v479 = vshrl.u32 %v295, 16
  %v481 = vrot.slane %v479, 7
  %v482 = vshll.u32 %v295, 16
  %v484 = vor.u32 %v481, %v482
  %v486 = vshrl.u32 %v296, 16
  %v488 = vrot.slane %v486, 7
  %v489 = vshll.u32 %v296, 16
  %v491 = vor.u32 %v488, %v489
  %v493 = vshrl.u32 %v297, 16
  %v495 = vrot.slane %v493, 7
  %v496 = vshll.u32 %v297, 16
  %v498 = vor.u32 %v495, %v496
  %v500 = vshrl.u32 %v298, 16
  %v502 = vrot.slane %v500, 7
  %v503 = vshll.u32 %v298, 16
  %v505 = vor.u32 %v502, %v503
  %v507 = vshrl.u32 %v299, 16
  %v509 = vrot.slane %v507, 7
  %v510 = vshll.u32 %v299, 16
  %v512 = vor.u32 %v509, %v510
  %v514 = vshrl.u32 %v300, 16
  %v516 = vrot.slane %v514, 7
  %v517 = vshll.u32 %v300, 16
  %v519 = vor.u32 %v516, %v517
  %v521 = vshrl.u32 %v301, 16
  %v523 = vrot.slane %v521, 7
  %v524 = vshll.u32 %v301, 16
  %v526 = vor.u32 %v523, %v524
  %v528 = vshrl.u32 %v302, 16
  %v530 = vrot.slane %v528, 7
  %v531 = vshll.u32 %v302, 16
  %v533 = vor.u32 %v530, %v531
  %vm600 = vcmask 1040384
  %vm601 = vsmask.f32 256
  %vm602 = vmand %vm600, %vm601
  %v603 = vsel %vm602, 0, %v309
  %v604 = vsel %vm602, 0, %v316
  %v605 = vsel %vm602, 0, %v323
  %v606 = vsel %vm602, 0, %v330
  %v607 = vsel %vm602, 0, %v337
  %v608 = vsel %vm602, 0, %v344
  %v609 = vsel %vm602, 0, %v351
  %v610 = vsel %vm602, 0, %v358
  %v611 = vsel %vm602, 0, %v365
  %v612 = vsel %vm602, 0, %v372
  %v613 = vsel %vm602, 0, %v379
  %v614 = vsel %vm602, 0, %v386
  %v615 = vsel %vm602, 0, %v393
  %v616 = vsel %vm602, 0, %v400
  %v617 = vsel %vm602, 0, %v407
  %v618 = vsel %vm602, 0, %v414
  %v619 = vsel %vm602, 0, %v421
  %v620 = vsel %vm602, 0, %v428
  %v621 = vsel %vm602, 0, %v435
  %v622 = vsel %vm602, 0, %v442
  %v623 = vsel %vm602, 0, %v449
  %v624 = vsel %vm602, 0, %v456
  %v625 = vsel %vm602, 0, %v463
  %v626 = vsel %vm602, 0, %v470
  %v627 = vsel %vm602, 0, %v477
  %v628 = vsel %vm602, 0, %v484
  %v629 = vsel %vm602, 0, %v491
  %v630 = vsel %vm602, 0, %v498
  %v631 = vsel %vm602, 0, %v505
  %v632 = vsel %vm602, 0, %v512
  %v633 = vsel %vm602, 0, %v519
  %v634 = vsel %vm602, 0, %v526
  %v635 = vsel %vm602, 0, %v533
  %v636 = vsel %vm602, %v306, 0
  %v637 = vsel %vm602, %v313, 0
  %v638 = vsel %vm602, %v320, 0
  %v639 = vsel %vm602, %v327, 0
  %v640 = vsel %vm602, %v334, 0
  %v641 = vsel %vm602, %v341, 0
  %v642 = vsel %vm602, %v348, 0
  %v643 = vsel %vm602, %v355, 0
  %v644 = vsel %vm602, %v362, 0
  %v645 = vsel %vm602, %v369, 0
  %v646 = vsel %vm602, %v376, 0
  %v647 = vsel %vm602, %v383, 0
  %v648 = vsel %vm602, %v390, 0
  %v649 = vsel %vm602, %v397, 0
  %v650 = vsel %vm602, %v404, 0
  %v651 = vsel %vm602, %v411, 0
  %v652 = vsel %vm602, %v418, 0
  %v653 = vsel %vm602, %v425, 0
  %v654 = vsel %vm602, %v432, 0
  %v655 = vsel %vm602, %v439, 0
  %v656 = vsel %vm602, %v446, 0
  %v657 = vsel %vm602, %v453, 0
  %v658 = vsel %vm602, %v460, 0
  %v659 = vsel %vm602, %v467, 0
  %v660 = vsel %vm602, %v474, 0
  %v661 = vsel %vm602, %v481, 0
  %v662 = vsel %vm602, %v488, 0
  %v663 = vsel %vm602, %v495, 0
  %v664 = vsel %vm602, %v502, 0
  %v665 = vsel %vm602, %v509, 0
  %v666 = vsel %vm602, %v516, 0
  %v667 = vsel %vm602, %v523, 0
  %v668 = vsel %vm602, %v530, 0
  %vm669 = vsmask.f32 7424
  %v671 = vshrl.u32 %v603, 16
  %v673 = vshll.u32 %v603, 16
  %v675 = vrot.slane %v673, 1
  %v676 = vor.u32 %v671, %v675
  %v678 = vshll.u32 %v636, 16
  %v680 = vrot.slane %v678, 1
  %v681 = vsel %vm669, %v676, %v680
  %v683 = vshrl.u32 %v604, 16
  %v685 = vshll.u32 %v604, 16
  %v687 = vrot.slane %v685, 1
  %v688 = vor.u32 %v683, %v687
  %v690 = vshll.u32 %v637, 16
  %v692 = vrot.slane %v690, 1
  %v693 = vsel %vm669, %v688, %v692
  %v695 = vshrl.u32 %v605, 16
  %v697 = vshll.u32 %v605, 16
  %v699 = vrot.slane %v697, 1
  %v700 = vor.u32 %v695, %v699
  %v702 = vshll.u32 %v638, 16
  %v704 = vrot.slane %v702, 1
  %v705 = vsel %vm669, %v700, %v704
  %v707 = vshrl.u32 %v606, 16
  %v709 = vshll.u32 %v606, 16
  %v711 = vrot.slane %v709, 1
  %v712 = vor.u32 %v707, %v711
  %v714 = vshll.u32 %v639, 16
  %v716 = vrot.slane %v714, 1
  %v717 = vsel %vm669, %v712, %v716
  %v719 = vshrl.u32 %v607, 16
  %v721 = vshll.u32 %v607, 16
  %v723 = vrot.slane %v721, 1
  %v724 = vor.u32 %v719, %v723
  %v726 = vshll.u32 %v640, 16
  %v728 = vrot.slane %v726, 1
  %v729 = vsel %vm669, %v724, %v728
  %v731 = vshrl.u32 %v608, 16
  %v733 = vshll.u32 %v608, 16
  %v735 = vrot.slane %v733, 1
  %v736 = vor.u32 %v731, %v735
  %v738 = vshll.u32 %v641, 16
  %v740 = vrot.slane %v738, 1
  %v741 = vsel %vm669, %v736, %v740
  %v743 = vshrl.u32 %v609, 16
  %v745 = vshll.u32 %v609, 16
  %v747 = vrot.slane %v745, 1
  %v748 = vor.u32 %v743, %v747
  %v750 = vshll.u32 %v642, 16
  %v752 = vrot.slane %v750, 1
  %v753 = vsel %vm669, %v748, %v752
  %v755 = vshrl.u32 %v610, 16
  %v757 = vshll.u32 %v610, 16
  %v759 = vrot.slane %v757, 1
  %v760 = vor.u32 %v755, %v759
  %v762 = vshll.u32 %v643, 16
  %v764 = vrot.slane %v762, 1
  %v765 = vsel %vm669, %v760, %v764
  %v767 = vshrl.u32 %v611, 16
  %v769 = vshll.u32 %v611, 16
  %v771 = vrot.slane %v769, 1
  %v772 = vor.u32 %v767, %v771
  %v774 = vshll.u32 %v644, 16
  %v776 = vrot.slane %v774, 1
  %v777 = vsel %vm669, %v772, %v776
  %v779 = vshrl.u32 %v612, 16
  %v781 = vshll.u32 %v612, 16
  %v783 = vrot.slane %v781, 1
  %v784 = vor.u32 %v779, %v783
  %v786 = vshll.u32 %v645, 16
  %v788 = vrot.slane %v786, 1
  %v789 = vsel %vm669, %v784, %v788
  %v791 = vshrl.u32 %v613, 16
  %v793 = vshll.u32 %v613, 16
  %v795 = vrot.slane %v793, 1
  %v796 = vor.u32 %v791, %v795
  %v798 = vshll.u32 %v646, 16
  %v800 = vrot.slane %v798, 1
  %v801 = vsel %vm669, %v796, %v800
  %v803 = vshrl.u32 %v614, 16
  %v805 = vshll.u32 %v614, 16
  %v807 = vrot.slane %v805, 1
  %v808 = vor.u32 %v803, %v807
  %v810 = vshll.u32 %v647, 16
  %v812 = vrot.slane %v810, 1
  %v813 = vsel %vm669, %v808, %v812
  %v815 = vshrl.u32 %v615, 16
  %v817 = vshll.u32 %v615, 16
  %v819 = vrot.slane %v817, 1
  %v820 = vor.u32 %v815, %v819
  %v822 = vshll.u32 %v648, 16
  %v824 = vrot.slane %v822, 1
  %v825 = vsel %vm669, %v820, %v824
  %v827 = vshrl.u32 %v616, 16
  %v829 = vshll.u32 %v616, 16
  %v831 = vrot.slane %v829, 1
  %v832 = vor.u32 %v827, %v831
  %v834 = vshll.u32 %v649, 16
  %v836 = vrot.slane %v834, 1
  %v837 = vsel %vm669, %v832, %v836
  %v839 = vshrl.u32 %v617, 16
  %v841 = vshll.u32 %v617, 16
  %v843 = vrot.slane %v841, 1
  %v844 = vor.u32 %v839, %v843
  %v846 = vshll.u32 %v650, 16
  %v848 = vrot.slane %v846, 1
  %v849 = vsel %vm669, %v844, %v848
  %v851 = vshrl.u32 %v618, 16
  %v853 = vshll.u32 %v618, 16
  %v855 = vrot.slane %v853, 1
  %v856 = vor.u32 %v851, %v855
  %v858 = vshll.u32 %v651, 16
  %v860 = vrot.slane %v858, 1
  %v861 = vsel %vm669, %v856, %v860
  %v863 = vshrl.u32 %v620, 16
  %v865 = vshll.u32 %v620, 16
  %v867 = vrot.slane %v865, 1
  %v868 = vor.u32 %v863, %v867
  %v870 = vshll.u32 %v653, 16
  %v872 = vrot.slane %v870, 1
  %v873 = vsel %vm669, %v868, %v872
  %v875 = vshrl.u32 %v621, 16
  %v877 = vshll.u32 %v621, 16
  %v879 = vrot.slane %v877, 1
  %v880 = vor.u32 %v875, %v879
  %v882 = vshll.u32 %v654, 16
  %v884 = vrot.slane %v882, 1
  %v885 = vsel %vm669, %v880, %v884
  %v887 = vshrl.u32 %v622, 16
  %v889 = vshll.u32 %v622, 16
  %v891 = vrot.slane %v889, 1
  %v892 = vor.u32 %v887, %v891
  %v894 = vshll.u32 %v655, 16
  %v896 = vrot.slane %v894, 1
  %v897 = vsel %vm669, %v892, %v896
  %v899 = vshrl.u32 %v623, 16
  %v901 = vshll.u32 %v623, 16
  %v903 = vrot.slane %v901, 1
  %v904 = vor.u32 %v899, %v903
  %v906 = vshll.u32 %v656, 16
  %v908 = vrot.slane %v906, 1
  %v909 = vsel %vm669, %v904, %v908
  %v911 = vshrl.u32 %v624, 16
  %v913 = vshll.u32 %v624, 16
  %v915 = vrot.slane %v913, 1
  %v916 = vor.u32 %v911, %v915
  %v918 = vshll.u32 %v657, 16
  %v920 = vrot.slane %v918, 1
  %v921 = vsel %vm669, %v916, %v920
  %v923 = vshrl.u32 %v625, 16
  %v925 = vshll.u32 %v625, 16
  %v927 = vrot.slane %v925, 1
  %v928 = vor.u32 %v923, %v927
  %v930 = vshll.u32 %v658, 16
  %v932 = vrot.slane %v930, 1
  %v933 = vsel %vm669, %v928, %v932
  %v935 = vshrl.u32 %v626, 16
  %v937 = vshll.u32 %v626, 16
  %v939 = vrot.slane %v937, 1
  %v940 = vor.u32 %v935, %v939
  %v942 = vshll.u32 %v659, 16
  %v944 = vrot.slane %v942, 1
  %v945 = vsel %vm669, %v940, %v944
  %v947 = vshrl.u32 %v627, 16
  %v949 = vshll.u32 %v627, 16
  %v951 = vrot.slane %v949, 1
  %v952 = vor.u32 %v947, %v951
  %v954 = vshll.u32 %v660, 16
  %v956 = vrot.slane %v954, 1
  %v957 = vsel %vm669, %v952, %v956
  %v959 = vshrl.u32 %v628, 16
  %v961 = vshll.u32 %v628, 16
  %v963 = vrot.slane %v961, 1
  %v964 = vor.u32 %v959, %v963
  %v966 = vshll.u32 %v661, 16
  %v968 = vrot.slane %v966, 1
  %v969 = vsel %vm669, %v964, %v968
  %v971 = vshrl.u32 %v629, 16
  %v973 = vshll.u32 %v629, 16
  %v975 = vrot.slane %v973, 1
  %v976 = vor.u32 %v971, %v975
  %v978 = vshll.u32 %v662, 16
  %v980 = vrot.slane %v978, 1
  %v981 = vsel %vm669, %v976, %v980
  %v983 = vshrl.u32 %v630, 16
  %v985 = vshll.u32 %v630, 16
  %v987 = vrot.slane %v985, 1
  %v988 = vor.u32 %v983, %v987
  %v990 = vshll.u32 %v663, 16
  %v992 = vrot.slane %v990, 1
  %v993 = vsel %vm669, %v988, %v992
  %v995 = vshrl.u32 %v631, 16
  %v997 = vshll.u32 %v631, 16
  %v999 = vrot.slane %v997, 1
  %v1000 = vor.u32 %v995, %v999
  %v1002 = vshll.u32 %v664, 16
  %v1004 = vrot.slane %v1002, 1
  %v1005 = vsel %vm669, %v1000, %v1004
  %v1007 = vshrl.u32 %v632, 16
  %v1009 = vshll.u32 %v632, 16
  %v1011 = vrot.slane %v1009, 1
  %v1012 = vor.u32 %v1007, %v1011
  %v1014 = vshll.u32 %v665, 16
  %v1016 = vrot.slane %v1014, 1
  %v1017 = vsel %vm669, %v1012, %v1016
  %v1019 = vshrl.u32 %v633, 16
  %v1021 = vshll.u32 %v633, 16
  %v1023 = vrot.slane %v1021, 1
  %v1024 = vor.u32 %v1019, %v1023
  %v1026 = vshll.u32 %v666, 16
  %v1028 = vrot.slane %v1026, 1
  %v1029 = vsel %vm669, %v1024, %v1028
  %v1031 = vshrl.u32 %v634, 16
  %v1033 = vshll.u32 %v634, 16
  %v1035 = vrot.slane %v1033, 1
  %v1036 = vor.u32 %v1031, %v1035
  %v1038 = vshll.u32 %v667, 16
  %v1040 = vrot.slane %v1038, 1
  %v1041 = vsel %vm669, %v1036, %v1040
  %1042 = vrot.lane.b32.xlu0 %v681, 32
  %v1043 = vpop.permute.xlu0 %1042
  %1044 = vrot.lane.b32.xlu0 %v693, 32
  %v1045 = vpop.permute.xlu0 %1044
  %1046 = vrot.lane.b32.xlu0 %v705, 32
  %v1047 = vpop.permute.xlu0 %1046
  %1048 = vrot.lane.b32.xlu0 %v717, 32
  %v1049 = vpop.permute.xlu0 %1048
  %1050 = vrot.lane.b32.xlu0 %v729, 32
  %v1051 = vpop.permute.xlu0 %1050
  %1052 = vrot.lane.b32.xlu0 %v741, 32
  %v1053 = vpop.permute.xlu0 %1052
  %1054 = vrot.lane.b32.xlu0 %v753, 32
  %v1055 = vpop.permute.xlu0 %1054
  %1056 = vrot.lane.b32.xlu0 %v765, 32
  %v1057 = vpop.permute.xlu0 %1056
  %1058 = vrot.lane.b32.xlu0 %v777, 32
  %v1059 = vpop.permute.xlu0 %1058
  %1060 = vrot.lane.b32.xlu0 %v789, 32
  %v1061 = vpop.permute.xlu0 %1060
  %1062 = vrot.lane.b32.xlu0 %v801, 32
  %v1063 = vpop.permute.xlu0 %1062
  %1064 = vrot.lane.b32.xlu0 %v813, 32
  %v1065 = vpop.permute.xlu0 %1064
  %1066 = vrot.lane.b32.xlu0 %v825, 32
  %v1067 = vpop.permute.xlu0 %1066
  %1068 = vrot.lane.b32.xlu0 %v837, 32
  %v1069 = vpop.permute.xlu0 %1068
  %1070 = vrot.lane.b32.xlu0 %v849, 32
  %v1071 = vpop.permute.xlu0 %1070
  %1072 = vrot.lane.b32.xlu0 %v861, 32
  %v1073 = vpop.permute.xlu0 %1072
  %1074 = vrot.lane.b32.xlu0 %v873, 32
  %v1075 = vpop.permute.xlu0 %1074
  %1076 = vrot.lane.b32.xlu0 %v885, 32
  %v1077 = vpop.permute.xlu0 %1076
  %1078 = vrot.lane.b32.xlu0 %v897, 32
  %v1079 = vpop.permute.xlu0 %1078
  %1080 = vrot.lane.b32.xlu0 %v909, 32
  %v1081 = vpop.permute.xlu0 %1080
  %1082 = vrot.lane.b32.xlu0 %v921, 32
  %v1083 = vpop.permute.xlu0 %1082
  %1084 = vrot.lane.b32.xlu0 %v933, 32
  %v1085 = vpop.permute.xlu0 %1084
  %1086 = vrot.lane.b32.xlu0 %v945, 32
  %v1087 = vpop.permute.xlu0 %1086
  %1088 = vrot.lane.b32.xlu0 %v957, 32
  %v1089 = vpop.permute.xlu0 %1088
  %1090 = vrot.lane.b32.xlu0 %v969, 32
  %v1091 = vpop.permute.xlu0 %1090
  %1092 = vrot.lane.b32.xlu0 %v981, 32
  %v1093 = vpop.permute.xlu0 %1092
  %1094 = vrot.lane.b32.xlu0 %v993, 32
  %v1095 = vpop.permute.xlu0 %1094
  %1096 = vrot.lane.b32.xlu0 %v1005, 32
  %v1097 = vpop.permute.xlu0 %1096
  %1098 = vrot.lane.b32.xlu0 %v1017, 32
  %v1099 = vpop.permute.xlu0 %1098
  %1100 = vrot.lane.b32.xlu0 %v1029, 32
  %v1101 = vpop.permute.xlu0 %1100
  %1102 = vrot.lane.b32.xlu0 %v1041, 32
  %v1103 = vpop.permute.xlu0 %1102
  %vm1166 = vcmask 1046528
  %v1167 = vrot.slane %v603, 1
  %v1168 = vrot.slane %v636, 1
  %v1169 = vsel %vm1166, %v1167, %v1168
  %v1170 = vrot.slane %v604, 1
  %v1171 = vrot.slane %v637, 1
  %v1172 = vsel %vm1166, %v1170, %v1171
  %v1173 = vrot.slane %v605, 1
  %v1174 = vrot.slane %v638, 1
  %v1175 = vsel %vm1166, %v1173, %v1174
  %v1176 = vrot.slane %v606, 1
  %v1177 = vrot.slane %v639, 1
  %v1178 = vsel %vm1166, %v1176, %v1177
  %v1179 = vrot.slane %v607, 1
  %v1180 = vrot.slane %v640, 1
  %v1181 = vsel %vm1166, %v1179, %v1180
  %v1182 = vrot.slane %v608, 1
  %v1183 = vrot.slane %v641, 1
  %v1184 = vsel %vm1166, %v1182, %v1183
  %v1185 = vrot.slane %v609, 1
  %v1186 = vrot.slane %v642, 1
  %v1187 = vsel %vm1166, %v1185, %v1186
  %v1188 = vrot.slane %v610, 1
  %v1189 = vrot.slane %v643, 1
  %v1190 = vsel %vm1166, %v1188, %v1189
  %v1191 = vrot.slane %v611, 1
  %v1192 = vrot.slane %v644, 1
  %v1193 = vsel %vm1166, %v1191, %v1192
  %v1194 = vrot.slane %v612, 1
  %v1195 = vrot.slane %v645, 1
  %v1196 = vsel %vm1166, %v1194, %v1195
  %v1197 = vrot.slane %v613, 1
  %v1198 = vrot.slane %v646, 1
  %v1199 = vsel %vm1166, %v1197, %v1198
  %v1200 = vrot.slane %v614, 1
  %v1201 = vrot.slane %v647, 1
  %v1202 = vsel %vm1166, %v1200, %v1201
  %v1203 = vrot.slane %v615, 1
  %v1204 = vrot.slane %v648, 1
  %v1205 = vsel %vm1166, %v1203, %v1204
  %v1206 = vrot.slane %v616, 1
  %v1207 = vrot.slane %v649, 1
  %v1208 = vsel %vm1166, %v1206, %v1207
  %v1209 = vrot.slane %v617, 1
  %v1210 = vrot.slane %v650, 1
  %v1211 = vsel %vm1166, %v1209, %v1210
  %v1212 = vrot.slane %v618, 1
  %v1213 = vrot.slane %v651, 1
  %v1214 = vsel %vm1166, %v1212, %v1213
  %v1215 = vrot.slane %v620, 1
  %v1216 = vrot.slane %v653, 1
  %v1217 = vsel %vm1166, %v1215, %v1216
  %v1218 = vrot.slane %v621, 1
  %v1219 = vrot.slane %v654, 1
  %v1220 = vsel %vm1166, %v1218, %v1219
  %v1221 = vrot.slane %v622, 1
  %v1222 = vrot.slane %v655, 1
  %v1223 = vsel %vm1166, %v1221, %v1222
  %v1224 = vrot.slane %v623, 1
  %v1225 = vrot.slane %v656, 1
  %v1226 = vsel %vm1166, %v1224, %v1225
  %v1227 = vrot.slane %v624, 1
  %v1228 = vrot.slane %v657, 1
  %v1229 = vsel %vm1166, %v1227, %v1228
  %v1230 = vrot.slane %v625, 1
  %v1231 = vrot.slane %v658, 1
  %v1232 = vsel %vm1166, %v1230, %v1231
  %v1233 = vrot.slane %v626, 1
  %v1234 = vrot.slane %v659, 1
  %v1235 = vsel %vm1166, %v1233, %v1234
  %v1236 = vrot.slane %v627, 1
  %v1237 = vrot.slane %v660, 1
  %v1238 = vsel %vm1166, %v1236, %v1237
  %v1239 = vrot.slane %v628, 1
  %v1240 = vrot.slane %v661, 1
  %v1241 = vsel %vm1166, %v1239, %v1240
  %v1242 = vrot.slane %v629, 1
  %v1243 = vrot.slane %v662, 1
  %v1244 = vsel %vm1166, %v1242, %v1243
  %v1245 = vrot.slane %v630, 1
  %v1246 = vrot.slane %v663, 1
  %v1247 = vsel %vm1166, %v1245, %v1246
  %v1248 = vrot.slane %v631, 1
  %v1249 = vrot.slane %v664, 1
  %v1250 = vsel %vm1166, %v1248, %v1249
  %v1251 = vrot.slane %v632, 1
  %v1252 = vrot.slane %v665, 1
  %v1253 = vsel %vm1166, %v1251, %v1252
  %v1254 = vrot.slane %v633, 1
  %v1255 = vrot.slane %v666, 1
  %v1256 = vsel %vm1166, %v1254, %v1255
  %v1257 = vrot.slane %v634, 1
  %v1258 = vrot.slane %v667, 1
  %v1259 = vsel %vm1166, %v1257, %v1258
  %1260 = vrot.lane.b32.xlu0 %v1169, 64
  %v1261 = vpop.permute.xlu0 %1260
  %1262 = vrot.lane.b32.xlu0 %v1172, 64
  %v1263 = vpop.permute.xlu0 %1262
  %1264 = vrot.lane.b32.xlu0 %v1175, 64
  %v1265 = vpop.permute.xlu0 %1264
  %1266 = vrot.lane.b32.xlu0 %v1178, 64
  %v1267 = vpop.permute.xlu0 %1266
  %1268 = vrot.lane.b32.xlu0 %v1181, 64
  %v1269 = vpop.permute.xlu0 %1268
  %1270 = vrot.lane.b32.xlu0 %v1184, 64
  %v1271 = vpop.permute.xlu0 %1270
  %1272 = vrot.lane.b32.xlu0 %v1187, 64
  %v1273 = vpop.permute.xlu0 %1272
  %1274 = vrot.lane.b32.xlu0 %v1190, 64
  %v1275 = vpop.permute.xlu0 %1274
  %1276 = vrot.lane.b32.xlu0 %v1193, 64
  %v1277 = vpop.permute.xlu0 %1276
  %1278 = vrot.lane.b32.xlu0 %v1196, 64
  %v1279 = vpop.permute.xlu0 %1278
  %1280 = vrot.lane.b32.xlu0 %v1199, 64
  %v1281 = vpop.permute.xlu0 %1280
  %1282 = vrot.lane.b32.xlu0 %v1202, 64
  %v1283 = vpop.permute.xlu0 %1282
  %1284 = vrot.lane.b32.xlu0 %v1205, 64
  %v1285 = vpop.permute.xlu0 %1284
  %1286 = vrot.lane.b32.xlu0 %v1208, 64
  %v1287 = vpop.permute.xlu0 %1286
  %1288 = vrot.lane.b32.xlu0 %v1211, 64
  %v1289 = vpop.permute.xlu0 %1288
  %1290 = vrot.lane.b32.xlu0 %v1214, 64
  %v1291 = vpop.permute.xlu0 %1290
  %1292 = vrot.lane.b32.xlu0 %v1217, 64
  %v1293 = vpop.permute.xlu0 %1292
  %1294 = vrot.lane.b32.xlu0 %v1220, 64
  %v1295 = vpop.permute.xlu0 %1294
  %1296 = vrot.lane.b32.xlu0 %v1223, 64
  %v1297 = vpop.permute.xlu0 %1296
  %1298 = vrot.lane.b32.xlu0 %v1226, 64
  %v1299 = vpop.permute.xlu0 %1298
  %1300 = vrot.lane.b32.xlu0 %v1229, 64
  %v1301 = vpop.permute.xlu0 %1300
  %1302 = vrot.lane.b32.xlu0 %v1232, 64
  %v1303 = vpop.permute.xlu0 %1302
  %1304 = vrot.lane.b32.xlu0 %v1235, 64
  %v1305 = vpop.permute.xlu0 %1304
  %1306 = vrot.lane.b32.xlu0 %v1238, 64
  %v1307 = vpop.permute.xlu0 %1306
  %1308 = vrot.lane.b32.xlu0 %v1241, 64
  %v1309 = vpop.permute.xlu0 %1308
  %1310 = vrot.lane.b32.xlu0 %v1244, 64
  %v1311 = vpop.permute.xlu0 %1310
  %1312 = vrot.lane.b32.xlu0 %v1247, 64
  %v1313 = vpop.permute.xlu0 %1312
  %1314 = vrot.lane.b32.xlu0 %v1250, 64
  %v1315 = vpop.permute.xlu0 %1314
  %1316 = vrot.lane.b32.xlu0 %v1253, 64
  %v1317 = vpop.permute.xlu0 %1316
  %1318 = vrot.lane.b32.xlu0 %v1256, 64
  %v1319 = vpop.permute.xlu0 %1318
  %1320 = vrot.lane.b32.xlu0 %v1259, 64
  %v1321 = vpop.permute.xlu0 %1320
  %1324 = vrot.lane.b32.xlu0 %v604, 96
  %v1325 = vpop.permute.xlu0 %1324
  %1326 = vrot.lane.b32.xlu0 %v605, 96
  %v1327 = vpop.permute.xlu0 %1326
  %1328 = vrot.lane.b32.xlu0 %v606, 96
  %v1329 = vpop.permute.xlu0 %1328
  %1330 = vrot.lane.b32.xlu0 %v607, 96
  %v1331 = vpop.permute.xlu0 %1330
  %1332 = vrot.lane.b32.xlu0 %v608, 96
  %v1333 = vpop.permute.xlu0 %1332
  %1334 = vrot.lane.b32.xlu0 %v609, 96
  %v1335 = vpop.permute.xlu0 %1334
  %1336 = vrot.lane.b32.xlu0 %v610, 96
  %v1337 = vpop.permute.xlu0 %1336
  %1338 = vrot.lane.b32.xlu0 %v611, 96
  %v1339 = vpop.permute.xlu0 %1338
  %1340 = vrot.lane.b32.xlu0 %v612, 96
  %v1341 = vpop.permute.xlu0 %1340
  %1342 = vrot.lane.b32.xlu0 %v613, 96
  %v1343 = vpop.permute.xlu0 %1342
  %1344 = vrot.lane.b32.xlu0 %v614, 96
  %v1345 = vpop.permute.xlu0 %1344
  %1346 = vrot.lane.b32.xlu0 %v615, 96
  %v1347 = vpop.permute.xlu0 %1346
  %1348 = vrot.lane.b32.xlu0 %v616, 96
  %v1349 = vpop.permute.xlu0 %1348
  %1350 = vrot.lane.b32.xlu0 %v617, 96
  %v1351 = vpop.permute.xlu0 %1350
  %1352 = vrot.lane.b32.xlu0 %v618, 96
  %v1353 = vpop.permute.xlu0 %1352
  %1354 = vrot.lane.b32.xlu0 %v619, 96
  %v1355 = vpop.permute.xlu0 %1354
  %1356 = vrot.lane.b32.xlu0 %v620, 96
  %v1357 = vpop.permute.xlu0 %1356
  %1358 = vrot.lane.b32.xlu0 %v621, 96
  %v1359 = vpop.permute.xlu0 %1358
  %1360 = vrot.lane.b32.xlu0 %v622, 96
  %v1361 = vpop.permute.xlu0 %1360
  %1362 = vrot.lane.b32.xlu0 %v623, 96
  %v1363 = vpop.permute.xlu0 %1362
  %1364 = vrot.lane.b32.xlu0 %v624, 96
  %v1365 = vpop.permute.xlu0 %1364
  %1366 = vrot.lane.b32.xlu0 %v625, 96
  %v1367 = vpop.permute.xlu0 %1366
  %1368 = vrot.lane.b32.xlu0 %v626, 96
  %v1369 = vpop.permute.xlu0 %1368
  %1370 = vrot.lane.b32.xlu0 %v627, 96
  %v1371 = vpop.permute.xlu0 %1370
  %1372 = vrot.lane.b32.xlu0 %v628, 96
  %v1373 = vpop.permute.xlu0 %1372
  %1374 = vrot.lane.b32.xlu0 %v629, 96
  %v1375 = vpop.permute.xlu0 %1374
  %1376 = vrot.lane.b32.xlu0 %v630, 96
  %v1377 = vpop.permute.xlu0 %1376
  %1378 = vrot.lane.b32.xlu0 %v631, 96
  %v1379 = vpop.permute.xlu0 %1378
  %1380 = vrot.lane.b32.xlu0 %v632, 96
  %v1381 = vpop.permute.xlu0 %1380
  %1382 = vrot.lane.b32.xlu0 %v633, 96
  %v1383 = vpop.permute.xlu0 %1382
  %1384 = vrot.lane.b32.xlu0 %v634, 96
  %v1385 = vpop.permute.xlu0 %1384
  %1386 = vrot.lane.b32.xlu0 %v635, 96
  %v1387 = vpop.permute.xlu0 %1386
  %v1389 = vshrl.u32 %v619, 16
  %v1391 = vshll.u32 %v619, 16
  %v1393 = vrot.slane %v1391, 1
  %v1394 = vor.u32 %v1389, %v1393
  %v1396 = vshll.u32 %v652, 16
  %v1398 = vrot.slane %v1396, 1
  %v1399 = vsel %vm669, %v1394, %v1398
  %v1401 = vshrl.u32 %v635, 16
  %v1403 = vshll.u32 %v635, 16
  %v1405 = vrot.slane %v1403, 1
  %v1406 = vor.u32 %v1401, %v1405
  %v1408 = vshll.u32 %v668, 16
  %v1410 = vrot.slane %v1408, 1
  %v1411 = vsel %vm669, %v1406, %v1410
  %v1414 = vrot.slane %v619, 1
  %v1415 = vrot.slane %v652, 1
  %v1416 = vsel %vm1166, %v1414, %v1415
  %v1417 = vrot.slane %v635, 1
  %v1418 = vrot.slane %v668, 1
  %v1419 = vsel %vm1166, %v1417, %v1418
  %1420 = vrot.lane.b32.xlu0 %v1172, 32
  %v1421 = vpop.permute.xlu0 %1420
  %1422 = vrot.lane.b32.xlu0 %v1175, 32
  %v1423 = vpop.permute.xlu0 %1422
  %1424 = vrot.lane.b32.xlu0 %v1178, 32
  %v1425 = vpop.permute.xlu0 %1424
  %1426 = vrot.lane.b32.xlu0 %v1181, 32
  %v1427 = vpop.permute.xlu0 %1426
  %1428 = vrot.lane.b32.xlu0 %v1184, 32
  %v1429 = vpop.permute.xlu0 %1428
  %1430 = vrot.lane.b32.xlu0 %v1187, 32
  %v1431 = vpop.permute.xlu0 %1430
  %1432 = vrot.lane.b32.xlu0 %v1190, 32
  %v1433 = vpop.permute.xlu0 %1432
  %1434 = vrot.lane.b32.xlu0 %v1193, 32
  %v1435 = vpop.permute.xlu0 %1434
  %1436 = vrot.lane.b32.xlu0 %v1196, 32
  %v1437 = vpop.permute.xlu0 %1436
  %1438 = vrot.lane.b32.xlu0 %v1199, 32
  %v1439 = vpop.permute.xlu0 %1438
  %1440 = vrot.lane.b32.xlu0 %v1202, 32
  %v1441 = vpop.permute.xlu0 %1440
  %1442 = vrot.lane.b32.xlu0 %v1205, 32
  %v1443 = vpop.permute.xlu0 %1442
  %1444 = vrot.lane.b32.xlu0 %v1208, 32
  %v1445 = vpop.permute.xlu0 %1444
  %1446 = vrot.lane.b32.xlu0 %v1211, 32
  %v1447 = vpop.permute.xlu0 %1446
  %1448 = vrot.lane.b32.xlu0 %v1214, 32
  %v1449 = vpop.permute.xlu0 %1448
  %1450 = vrot.lane.b32.xlu0 %v1416, 32
  %v1451 = vpop.permute.xlu0 %1450
  %1452 = vrot.lane.b32.xlu0 %v1217, 32
  %v1453 = vpop.permute.xlu0 %1452
  %1454 = vrot.lane.b32.xlu0 %v1220, 32
  %v1455 = vpop.permute.xlu0 %1454
  %1456 = vrot.lane.b32.xlu0 %v1223, 32
  %v1457 = vpop.permute.xlu0 %1456
  %1458 = vrot.lane.b32.xlu0 %v1226, 32
  %v1459 = vpop.permute.xlu0 %1458
  %1460 = vrot.lane.b32.xlu0 %v1229, 32
  %v1461 = vpop.permute.xlu0 %1460
  %1462 = vrot.lane.b32.xlu0 %v1232, 32
  %v1463 = vpop.permute.xlu0 %1462
  %1464 = vrot.lane.b32.xlu0 %v1235, 32
  %v1465 = vpop.permute.xlu0 %1464
  %1466 = vrot.lane.b32.xlu0 %v1238, 32
  %v1467 = vpop.permute.xlu0 %1466
  %1468 = vrot.lane.b32.xlu0 %v1241, 32
  %v1469 = vpop.permute.xlu0 %1468
  %1470 = vrot.lane.b32.xlu0 %v1244, 32
  %v1471 = vpop.permute.xlu0 %1470
  %1472 = vrot.lane.b32.xlu0 %v1247, 32
  %v1473 = vpop.permute.xlu0 %1472
  %1474 = vrot.lane.b32.xlu0 %v1250, 32
  %v1475 = vpop.permute.xlu0 %1474
  %1476 = vrot.lane.b32.xlu0 %v1253, 32
  %v1477 = vpop.permute.xlu0 %1476
  %1478 = vrot.lane.b32.xlu0 %v1256, 32
  %v1479 = vpop.permute.xlu0 %1478
  %1480 = vrot.lane.b32.xlu0 %v1259, 32
  %v1481 = vpop.permute.xlu0 %1480
  %1482 = vrot.lane.b32.xlu0 %v1419, 32
  %v1483 = vpop.permute.xlu0 %1482
  %1484 = vrot.lane.b32.xlu0 %v605, 64
  %v1485 = vpop.permute.xlu0 %1484
  %1486 = vrot.lane.b32.xlu0 %v606, 64
  %v1487 = vpop.permute.xlu0 %1486
  %1488 = vrot.lane.b32.xlu0 %v607, 64
  %v1489 = vpop.permute.xlu0 %1488
  %1490 = vrot.lane.b32.xlu0 %v608, 64
  %v1491 = vpop.permute.xlu0 %1490
  %1492 = vrot.lane.b32.xlu0 %v609, 64
  %v1493 = vpop.permute.xlu0 %1492
  %1494 = vrot.lane.b32.xlu0 %v610, 64
  %v1495 = vpop.permute.xlu0 %1494
  %1496 = vrot.lane.b32.xlu0 %v611, 64
  %v1497 = vpop.permute.xlu0 %1496
  %1498 = vrot.lane.b32.xlu0 %v612, 64
  %v1499 = vpop.permute.xlu0 %1498
  %1500 = vrot.lane.b32.xlu0 %v613, 64
  %v1501 = vpop.permute.xlu0 %1500
  %1502 = vrot.lane.b32.xlu0 %v614, 64
  %v1503 = vpop.permute.xlu0 %1502
  %1504 = vrot.lane.b32.xlu0 %v615, 64
  %v1505 = vpop.permute.xlu0 %1504
  %1506 = vrot.lane.b32.xlu0 %v616, 64
  %v1507 = vpop.permute.xlu0 %1506
  %1508 = vrot.lane.b32.xlu0 %v617, 64
  %v1509 = vpop.permute.xlu0 %1508
  %1510 = vrot.lane.b32.xlu0 %v618, 64
  %v1511 = vpop.permute.xlu0 %1510
  %1512 = vrot.lane.b32.xlu0 %v619, 64
  %v1513 = vpop.permute.xlu0 %1512
  %1514 = vrot.lane.b32.xlu0 %v603, 64
  %v1515 = vpop.permute.xlu0 %1514
  %1516 = vrot.lane.b32.xlu0 %v621, 64
  %v1517 = vpop.permute.xlu0 %1516
  %1518 = vrot.lane.b32.xlu0 %v622, 64
  %v1519 = vpop.permute.xlu0 %1518
  %1520 = vrot.lane.b32.xlu0 %v623, 64
  %v1521 = vpop.permute.xlu0 %1520
  %1522 = vrot.lane.b32.xlu0 %v624, 64
  %v1523 = vpop.permute.xlu0 %1522
  %1524 = vrot.lane.b32.xlu0 %v625, 64
  %v1525 = vpop.permute.xlu0 %1524
  %1526 = vrot.lane.b32.xlu0 %v626, 64
  %v1527 = vpop.permute.xlu0 %1526
  %1528 = vrot.lane.b32.xlu0 %v627, 64
  %v1529 = vpop.permute.xlu0 %1528
  %1530 = vrot.lane.b32.xlu0 %v628, 64
  %v1531 = vpop.permute.xlu0 %1530
  %1532 = vrot.lane.b32.xlu0 %v629, 64
  %v1533 = vpop.permute.xlu0 %1532
  %1534 = vrot.lane.b32.xlu0 %v630, 64
  %v1535 = vpop.permute.xlu0 %1534
  %1536 = vrot.lane.b32.xlu0 %v631, 64
  %v1537 = vpop.permute.xlu0 %1536
  %1538 = vrot.lane.b32.xlu0 %v632, 64
  %v1539 = vpop.permute.xlu0 %1538
  %1540 = vrot.lane.b32.xlu0 %v633, 64
  %v1541 = vpop.permute.xlu0 %1540
  %1542 = vrot.lane.b32.xlu0 %v634, 64
  %v1543 = vpop.permute.xlu0 %1542
  %1544 = vrot.lane.b32.xlu0 %v635, 64
  %v1545 = vpop.permute.xlu0 %1544
  %1546 = vrot.lane.b32.xlu0 %v705, 96
  %v1547 = vpop.permute.xlu0 %1546
  %1548 = vrot.lane.b32.xlu0 %v717, 96
  %v1549 = vpop.permute.xlu0 %1548
  %1550 = vrot.lane.b32.xlu0 %v729, 96
  %v1551 = vpop.permute.xlu0 %1550
  %1552 = vrot.lane.b32.xlu0 %v741, 96
  %v1553 = vpop.permute.xlu0 %1552
  %1554 = vrot.lane.b32.xlu0 %v753, 96
  %v1555 = vpop.permute.xlu0 %1554
  %1556 = vrot.lane.b32.xlu0 %v765, 96
  %v1557 = vpop.permute.xlu0 %1556
  %1558 = vrot.lane.b32.xlu0 %v777, 96
  %v1559 = vpop.permute.xlu0 %1558
  %1560 = vrot.lane.b32.xlu0 %v789, 96
  %v1561 = vpop.permute.xlu0 %1560
  %1562 = vrot.lane.b32.xlu0 %v801, 96
  %v1563 = vpop.permute.xlu0 %1562
  %1564 = vrot.lane.b32.xlu0 %v813, 96
  %v1565 = vpop.permute.xlu0 %1564
  %1566 = vrot.lane.b32.xlu0 %v825, 96
  %v1567 = vpop.permute.xlu0 %1566
  %1568 = vrot.lane.b32.xlu0 %v837, 96
  %v1569 = vpop.permute.xlu0 %1568
  %1570 = vrot.lane.b32.xlu0 %v849, 96
  %v1571 = vpop.permute.xlu0 %1570
  %1572 = vrot.lane.b32.xlu0 %v861, 96
  %v1573 = vpop.permute.xlu0 %1572
  %1574 = vrot.lane.b32.xlu0 %v1399, 96
  %v1575 = vpop.permute.xlu0 %1574
  %1576 = vrot.lane.b32.xlu0 %v681, 96
  %v1577 = vpop.permute.xlu0 %1576
  %1578 = vrot.lane.b32.xlu0 %v885, 96
  %v1579 = vpop.permute.xlu0 %1578
  %1580 = vrot.lane.b32.xlu0 %v897, 96
  %v1581 = vpop.permute.xlu0 %1580
  %1582 = vrot.lane.b32.xlu0 %v909, 96
  %v1583 = vpop.permute.xlu0 %1582
  %1584 = vrot.lane.b32.xlu0 %v921, 96
  %v1585 = vpop.permute.xlu0 %1584
  %1586 = vrot.lane.b32.xlu0 %v933, 96
  %v1587 = vpop.permute.xlu0 %1586
  %1588 = vrot.lane.b32.xlu0 %v945, 96
  %v1589 = vpop.permute.xlu0 %1588
  %1590 = vrot.lane.b32.xlu0 %v957, 96
  %v1591 = vpop.permute.xlu0 %1590
  %1592 = vrot.lane.b32.xlu0 %v969, 96
  %v1593 = vpop.permute.xlu0 %1592
  %1594 = vrot.lane.b32.xlu0 %v981, 96
  %v1595 = vpop.permute.xlu0 %1594
  %1596 = vrot.lane.b32.xlu0 %v993, 96
  %v1597 = vpop.permute.xlu0 %1596
  %1598 = vrot.lane.b32.xlu0 %v1005, 96
  %v1599 = vpop.permute.xlu0 %1598
  %1600 = vrot.lane.b32.xlu0 %v1017, 96
  %v1601 = vpop.permute.xlu0 %1600
  %1602 = vrot.lane.b32.xlu0 %v1029, 96
  %v1603 = vpop.permute.xlu0 %1602
  %1604 = vrot.lane.b32.xlu0 %v1041, 96
  %v1605 = vpop.permute.xlu0 %1604
  %1606 = vrot.lane.b32.xlu0 %v1411, 96
  %v1607 = vpop.permute.xlu0 %1606
  %vm1608 = vcmask 261120
  %v1610 = vsel %vm1608, %v603, %v1043
  %v1612 = vsel %vm1608, %v604, %v1045
  %v1614 = vsel %vm1608, %v605, %v1047
  %v1616 = vsel %vm1608, %v606, %v1049
  %v1618 = vsel %vm1608, %v607, %v1051
  %v1620 = vsel %vm1608, %v608, %v1053
  %v1622 = vsel %vm1608, %v609, %v1055
  %v1624 = vsel %vm1608, %v610, %v1057
  %v1626 = vsel %vm1608, %v611, %v1059
  %v1628 = vsel %vm1608, %v612, %v1061
  %v1630 = vsel %vm1608, %v613, %v1063
  %v1632 = vsel %vm1608, %v614, %v1065
  %v1634 = vsel %vm1608, %v615, %v1067
  %v1636 = vsel %vm1608, %v616, %v1069
  %v1638 = vsel %vm1608, %v617, %v1071
  %v1640 = vsel %vm1608, %v618, %v1073
  %v1642 = vsel %vm1608, %v620, %v1075
  %v1644 = vsel %vm1608, %v621, %v1077
  %v1646 = vsel %vm1608, %v622, %v1079
  %v1648 = vsel %vm1608, %v623, %v1081
  %v1650 = vsel %vm1608, %v624, %v1083
  %v1652 = vsel %vm1608, %v625, %v1085
  %v1654 = vsel %vm1608, %v626, %v1087
  %v1656 = vsel %vm1608, %v627, %v1089
  %v1658 = vsel %vm1608, %v628, %v1091
  %v1660 = vsel %vm1608, %v629, %v1093
  %v1662 = vsel %vm1608, %v630, %v1095
  %v1664 = vsel %vm1608, %v631, %v1097
  %v1666 = vsel %vm1608, %v632, %v1099
  %v1668 = vsel %vm1608, %v633, %v1101
  %v1670 = vsel %vm1608, %v634, %v1103
  %vm1671 = vcmask 523264
  %v1673 = vsel %vm1671, %v1610, %v1261
  %v1675 = vsel %vm1671, %v1612, %v1263
  %v1677 = vsel %vm1671, %v1614, %v1265
  %v1679 = vsel %vm1671, %v1616, %v1267
  %v1681 = vsel %vm1671, %v1618, %v1269
  %v1683 = vsel %vm1671, %v1620, %v1271
  %v1685 = vsel %vm1671, %v1622, %v1273
  %v1687 = vsel %vm1671, %v1624, %v1275
  %v1689 = vsel %vm1671, %v1626, %v1277
  %v1691 = vsel %vm1671, %v1628, %v1279
  %v1693 = vsel %vm1671, %v1630, %v1281
  %v1695 = vsel %vm1671, %v1632, %v1283
  %v1697 = vsel %vm1671, %v1634, %v1285
  %v1699 = vsel %vm1671, %v1636, %v1287
  %v1701 = vsel %vm1671, %v1638, %v1289
  %v1703 = vsel %vm1671, %v1640, %v1291
  %v1705 = vsel %vm1671, %v1642, %v1293
  %v1707 = vsel %vm1671, %v1644, %v1295
  %v1709 = vsel %vm1671, %v1646, %v1297
  %v1711 = vsel %vm1671, %v1648, %v1299
  %v1713 = vsel %vm1671, %v1650, %v1301
  %v1715 = vsel %vm1671, %v1652, %v1303
  %v1717 = vsel %vm1671, %v1654, %v1305
  %v1719 = vsel %vm1671, %v1656, %v1307
  %v1721 = vsel %vm1671, %v1658, %v1309
  %v1723 = vsel %vm1671, %v1660, %v1311
  %v1725 = vsel %vm1671, %v1662, %v1313
  %v1727 = vsel %vm1671, %v1664, %v1315
  %v1729 = vsel %vm1671, %v1666, %v1317
  %v1731 = vsel %vm1671, %v1668, %v1319
  %v1733 = vsel %vm1671, %v1670, %v1321
  %vm1734 = vcmask 785408
  %v1736 = vsel %vm1734, %v1673, %v1325
  %v1739 = vsel %vm1734, %v1675, %v1327
  %v1742 = vsel %vm1734, %v1677, %v1329
  %v1745 = vsel %vm1734, %v1679, %v1331
  %v1748 = vsel %vm1734, %v1681, %v1333
  %v1751 = vsel %vm1734, %v1683, %v1335
  %v1754 = vsel %vm1734, %v1685, %v1337
  %v1757 = vsel %vm1734, %v1687, %v1339
  %v1760 = vsel %vm1734, %v1689, %v1341
  %v1763 = vsel %vm1734, %v1691, %v1343
  %v1766 = vsel %vm1734, %v1693, %v1345
  %v1769 = vsel %vm1734, %v1695, %v1347
  %v1772 = vsel %vm1734, %v1697, %v1349
  %v1775 = vsel %vm1734, %v1699, %v1351
  %v1778 = vsel %vm1734, %v1701, %v1353
  %v1781 = vsel %vm1734, %v1703, %v1355
  %v1784 = vsel %vm1734, %v1673, %v1357
  %v1787 = vsel %vm1734, %v1705, %v1359
  %v1790 = vsel %vm1734, %v1707, %v1361
  %v1793 = vsel %vm1734, %v1709, %v1363
  %v1796 = vsel %vm1734, %v1711, %v1365
  %v1799 = vsel %vm1734, %v1713, %v1367
  %v1802 = vsel %vm1734, %v1715, %v1369
  %v1805 = vsel %vm1734, %v1717, %v1371
  %v1808 = vsel %vm1734, %v1719, %v1373
  %v1811 = vsel %vm1734, %v1721, %v1375
  %v1814 = vsel %vm1734, %v1723, %v1377
  %v1817 = vsel %vm1734, %v1725, %v1379
  %v1820 = vsel %vm1734, %v1727, %v1381
  %v1823 = vsel %vm1734, %v1729, %v1383
  %v1826 = vsel %vm1734, %v1731, %v1385
  %v1829 = vsel %vm1734, %v1733, %v1387
  %v1833 = vsel %vm1608, %v693, %v1421
  %v1836 = vsel %vm1608, %v705, %v1423
  %v1839 = vsel %vm1608, %v717, %v1425
  %v1842 = vsel %vm1608, %v729, %v1427
  %v1845 = vsel %vm1608, %v741, %v1429
  %v1848 = vsel %vm1608, %v753, %v1431
  %v1851 = vsel %vm1608, %v765, %v1433
  %v1854 = vsel %vm1608, %v777, %v1435
  %v1857 = vsel %vm1608, %v789, %v1437
  %v1860 = vsel %vm1608, %v801, %v1439
  %v1863 = vsel %vm1608, %v813, %v1441
  %v1866 = vsel %vm1608, %v825, %v1443
  %v1869 = vsel %vm1608, %v837, %v1445
  %v1872 = vsel %vm1608, %v849, %v1447
  %v1875 = vsel %vm1608, %v861, %v1449
  %v1878 = vsel %vm1608, %v1399, %v1451
  %v1881 = vsel %vm1608, %v873, %v1453
  %v1884 = vsel %vm1608, %v885, %v1455
  %v1887 = vsel %vm1608, %v897, %v1457
  %v1890 = vsel %vm1608, %v909, %v1459
  %v1893 = vsel %vm1608, %v921, %v1461
  %v1896 = vsel %vm1608, %v933, %v1463
  %v1899 = vsel %vm1608, %v945, %v1465
  %v1902 = vsel %vm1608, %v957, %v1467
  %v1905 = vsel %vm1608, %v969, %v1469
  %v1908 = vsel %vm1608, %v981, %v1471
  %v1911 = vsel %vm1608, %v993, %v1473
  %v1914 = vsel %vm1608, %v1005, %v1475
  %v1917 = vsel %vm1608, %v1017, %v1477
  %v1920 = vsel %vm1608, %v1029, %v1479
  %v1923 = vsel %vm1608, %v1041, %v1481
  %v1926 = vsel %vm1608, %v1411, %v1483
  %v1928 = vsel %vm1671, %v1833, %v1485
  %v1930 = vsel %vm1671, %v1836, %v1487
  %v1932 = vsel %vm1671, %v1839, %v1489
  %v1934 = vsel %vm1671, %v1842, %v1491
  %v1936 = vsel %vm1671, %v1845, %v1493
  %v1938 = vsel %vm1671, %v1848, %v1495
  %v1940 = vsel %vm1671, %v1851, %v1497
  %v1942 = vsel %vm1671, %v1854, %v1499
  %v1944 = vsel %vm1671, %v1857, %v1501
  %v1946 = vsel %vm1671, %v1860, %v1503
  %v1948 = vsel %vm1671, %v1863, %v1505
  %v1950 = vsel %vm1671, %v1866, %v1507
  %v1952 = vsel %vm1671, %v1869, %v1509
  %v1954 = vsel %vm1671, %v1872, %v1511
  %v1956 = vsel %vm1671, %v1875, %v1513
  %v1958 = vsel %vm1671, %v1878, %v1515
  %v1960 = vsel %vm1671, %v1881, %v1517
  %v1962 = vsel %vm1671, %v1884, %v1519
  %v1964 = vsel %vm1671, %v1887, %v1521
  %v1966 = vsel %vm1671, %v1890, %v1523
  %v1968 = vsel %vm1671, %v1893, %v1525
  %v1970 = vsel %vm1671, %v1896, %v1527
  %v1972 = vsel %vm1671, %v1899, %v1529
  %v1974 = vsel %vm1671, %v1902, %v1531
  %v1976 = vsel %vm1671, %v1905, %v1533
  %v1978 = vsel %vm1671, %v1908, %v1535
  %v1980 = vsel %vm1671, %v1911, %v1537
  %v1982 = vsel %vm1671, %v1914, %v1539
  %v1984 = vsel %vm1671, %v1917, %v1541
  %v1986 = vsel %vm1671, %v1920, %v1543
  %v1988 = vsel %vm1671, %v1923, %v1545
  %v1989 = vsel %vm1671, %v1926, %v1515
  %v1991 = vsel %vm1734, %v1928, %v1547
  %v1994 = vsel %vm1734, %v1930, %v1549
  %v1997 = vsel %vm1734, %v1932, %v1551
  %v2000 = vsel %vm1734, %v1934, %v1553
  %v2003 = vsel %vm1734, %v1936, %v1555
  %v2006 = vsel %vm1734, %v1938, %v1557
  %v2009 = vsel %vm1734, %v1940, %v1559
  %v2012 = vsel %vm1734, %v1942, %v1561
  %v2015 = vsel %vm1734, %v1944, %v1563
  %v2018 = vsel %vm1734, %v1946, %v1565
  %v2021 = vsel %vm1734, %v1948, %v1567
  %v2024 = vsel %vm1734, %v1950, %v1569
  %v2027 = vsel %vm1734, %v1952, %v1571
  %v2030 = vsel %vm1734, %v1954, %v1573
  %v2033 = vsel %vm1734, %v1956, %v1575
  %v2036 = vsel %vm1734, %v1958, %v1577
  %v2039 = vsel %vm1734, %v1960, %v1579
  %v2042 = vsel %vm1734, %v1962, %v1581
  %v2045 = vsel %vm1734, %v1964, %v1583
  %v2048 = vsel %vm1734, %v1966, %v1585
  %v2051 = vsel %vm1734, %v1968, %v1587
  %v2054 = vsel %vm1734, %v1970, %v1589
  %v2057 = vsel %vm1734, %v1972, %v1591
  %v2060 = vsel %vm1734, %v1974, %v1593
  %v2063 = vsel %vm1734, %v1976, %v1595
  %v2066 = vsel %vm1734, %v1978, %v1597
  %v2069 = vsel %vm1734, %v1980, %v1599
  %v2072 = vsel %vm1734, %v1982, %v1601
  %v2075 = vsel %vm1734, %v1984, %v1603
  %v2078 = vsel %vm1734, %v1986, %v1605
  %v2081 = vsel %vm1734, %v1988, %v1607
  %v2083 = vsel %vm1734, %v1989, %v1577
  %v2085 = vld [vmem:[%s1] sm:$0xf]
  %v2086 = vld [vmem:[%s1 + $0x4] sm:$0xf]
  %v2087 = vld [vmem:[%s1 + $0x8] sm:$0xf]
  %v2088 = vld [vmem:[%s1 + $0xc] sm:$0xf]
  %v2089 = vld [vmem:[%s1 + $0x10] sm:$0xf]
  %v2090 = vld [vmem:[%s1 + $0x14] sm:$0xf]
  %v2091 = vld [vmem:[%s1 + $0x18] sm:$0xf]
  %v2092 = vld [vmem:[%s1 + $0x1c] sm:$0xf]
  %v2093 = vld [vmem:[%s1 + $0x20] sm:$0xf]
  %v2094 = vld [vmem:[%s1 + $0x24] sm:$0xf]
  %v2095 = vld [vmem:[%s1 + $0x28] sm:$0xf]
  %v2096 = vld [vmem:[%s1 + $0x2c] sm:$0xf]
  %v2097 = vld [vmem:[%s1 + $0x30] sm:$0xf]
  %v2098 = vld [vmem:[%s1 + $0x34] sm:$0xf]
  %v2099 = vld [vmem:[%s1 + $0x38] sm:$0xf]
  %v2100 = vld [vmem:[%s1 + $0x3c] sm:$0xf]
  %v2101 = vld [vmem:[%s1 + $0x40] sm:$0xf]
  %v2102 = vld [vmem:[%s1 + $0x44] sm:$0xf]
  %v2103 = vld [vmem:[%s1 + $0x48] sm:$0xf]
  %v2104 = vld [vmem:[%s1 + $0x4c] sm:$0xf]
  %v2105 = vld [vmem:[%s1 + $0x50] sm:$0xf]
  %v2106 = vld [vmem:[%s1 + $0x54] sm:$0xf]
  %v2107 = vld [vmem:[%s1 + $0x58] sm:$0xf]
  %v2108 = vld [vmem:[%s1 + $0x5c] sm:$0xf]
  %v2109 = vld [vmem:[%s1 + $0x60] sm:$0xf]
  %v2110 = vld [vmem:[%s1 + $0x64] sm:$0xf]
  %v2111 = vld [vmem:[%s1 + $0x68] sm:$0xf]
  %v2112 = vld [vmem:[%s1 + $0x6c] sm:$0xf]
  %v2113 = vld [vmem:[%s1 + $0x70] sm:$0xf]
  %v2114 = vld [vmem:[%s1 + $0x74] sm:$0xf]
  %v2115 = vld [vmem:[%s1 + $0x78] sm:$0xf]
  %v2116 = vld [vmem:[%s1 + $0x7c] sm:$0xf]
  %v2117 = vld [vmem:[%s1 + $0x80] sm:$0xf]
  %v2118 = vld [vmem:[%s1 + $0x84] sm:$0xf]
  %v2119 = vld [vmem:[%s1 + $0x88] sm:$0xf]
  %v2120 = vld [vmem:[%s1 + $0x8c] sm:$0xf]
  %v2121 = vld [vmem:[%s2] sm:$0x1]
  %v2123 = vperm.slane %v2121, 0
  %v2161 = vunpack.c.l.b16 %v2085
  %v2162 = vunpack.c.l.b16 %v2086
  %v2163 = vunpack.c.l.b16 %v2087
  %v2164 = vunpack.c.l.b16 %v2088
  %v2165 = vunpack.c.l.b16 %v2089
  %v2166 = vunpack.c.l.b16 %v2090
  %v2167 = vunpack.c.l.b16 %v2091
  %v2168 = vunpack.c.l.b16 %v2092
  %v2169 = vunpack.c.l.b16 %v2093
  %v2170 = vunpack.c.l.b16 %v2094
  %v2171 = vunpack.c.l.b16 %v2095
  %v2172 = vunpack.c.l.b16 %v2096
  %v2173 = vunpack.c.l.b16 %v2097
  %v2174 = vunpack.c.l.b16 %v2098
  %v2175 = vunpack.c.l.b16 %v2099
  %v2176 = vunpack.c.l.b16 %v2100
  %v2177 = vunpack.c.l.b16 %v2101
  %v2178 = vunpack.c.l.b16 %v2102
  %v2179 = vunpack.c.l.b16 %v2103
  %v2180 = vunpack.c.l.b16 %v2104
  %v2181 = vunpack.c.l.b16 %v2105
  %v2182 = vunpack.c.l.b16 %v2106
  %v2183 = vunpack.c.l.b16 %v2107
  %v2184 = vunpack.c.l.b16 %v2108
  %v2185 = vunpack.c.l.b16 %v2109
  %v2186 = vunpack.c.l.b16 %v2110
  %v2187 = vunpack.c.l.b16 %v2111
  %v2188 = vunpack.c.l.b16 %v2112
  %v2189 = vunpack.c.l.b16 %v2113
  %v2190 = vunpack.c.l.b16 %v2114
  %v2191 = vunpack.c.l.b16 %v2115
  %v2192 = vunpack.c.l.b16 %v2116
  %v2193 = vunpack.c.l.b16 %v2117
  %v2194 = vunpack.c.l.b16 %v2118
  %v2195 = vunpack.c.l.b16 %v2119
  %v2196 = vunpack.c.l.b16 %v2120
  %v2197 = vpack.c.b16 %v2162, %v2161
  %v2198 = vpack.c.b16 %v2164, %v2163
  %v2199 = vpack.c.b16 %v2166, %v2165
  %v2200 = vpack.c.b16 %v2168, %v2167
  %v2201 = vpack.c.b16 %v2170, %v2169
  %v2202 = vpack.c.b16 %v2172, %v2171
  %v2203 = vpack.c.b16 %v2174, %v2173
  %v2204 = vpack.c.b16 %v2176, %v2175
  %v2205 = vpack.c.b16 %v2178, %v2177
  %v2206 = vpack.c.b16 %v2180, %v2179
  %v2207 = vpack.c.b16 %v2182, %v2181
  %v2208 = vpack.c.b16 %v2184, %v2183
  %v2209 = vpack.c.b16 %v2186, %v2185
  %v2210 = vpack.c.b16 %v2188, %v2187
  %v2211 = vpack.c.b16 %v2190, %v2189
  %v2212 = vpack.c.b16 %v2192, %v2191
  %v2213 = vpack.c.b16 %v2194, %v2193
  %v2214 = vpack.c.b16 %v2196, %v2195
  %v2234 = vsel %vm1608, %v1175, 0
  %v2237 = vsel %vm1608, %v1178, 0
  %v2240 = vsel %vm1608, %v1181, 0
  %v2243 = vsel %vm1608, %v1184, 0
  %v2246 = vsel %vm1608, %v1187, 0
  %v2249 = vsel %vm1608, %v1190, 0
  %v2252 = vsel %vm1608, %v1193, 0
  %v2255 = vsel %vm1608, %v1196, 0
  %v2258 = vsel %vm1608, %v1199, 0
  %v2261 = vsel %vm1608, %v1202, 0
  %v2264 = vsel %vm1608, %v1205, 0
  %v2267 = vsel %vm1608, %v1208, 0
  %v2270 = vsel %vm1608, %v1211, 0
  %v2273 = vsel %vm1608, %v1214, 0
  %v2276 = vsel %vm1608, %v1416, 0
  %v2279 = vsel %vm1608, %v1169, 0
  %v2282 = vsel %vm1608, %v1220, 0
  %v2285 = vsel %vm1608, %v1223, 0
  %v2288 = vsel %vm1608, %v1226, 0
  %v2291 = vsel %vm1608, %v1229, 0
  %v2294 = vsel %vm1608, %v1232, 0
  %v2297 = vsel %vm1608, %v1235, 0
  %v2300 = vsel %vm1608, %v1238, 0
  %v2303 = vsel %vm1608, %v1241, 0
  %v2306 = vsel %vm1608, %v1244, 0
  %v2309 = vsel %vm1608, %v1247, 0
  %v2312 = vsel %vm1608, %v1250, 0
  %v2315 = vsel %vm1608, %v1253, 0
  %v2318 = vsel %vm1608, %v1256, 0
  %v2321 = vsel %vm1608, %v1259, 0
  %v2324 = vsel %vm1608, %v1419, 0
  %2326 = vmatpush.bf16.msra.mxu0 %v2204
  %2327 = vmatpush.bf16.msra.mxu0 %v2203
  %2328 = vmatpush.bf16.msra.mxu0 %v2202
  %2329 = vmatpush.bf16.msra.mxu0 %v2201
  %2330 = vmatpush.bf16.msra.mxu0 %v2200
  %2331 = vmatpush.bf16.msra.mxu0 %v2199
  %2332 = vmatpush.bf16.msra.mxu0 %v2198
  %2333 = vmatpush.bf16.msra.mxu0 %v2197
  %2334 = vmatmul.bf16.gmra.mxu0 %v1736
  %v2335 = vpop.f32.mrf.mxu0
  %v2336 = vadd.f32 %v2123, %v2335
  %v2337 = vpop.f32.mrf.mxu0
  %v2338 = vadd.f32 %v2123, %v2337
  %2339 = vmatmul.bf16.gmra.mxu0 %v1739
  %v2340 = vpop.f32.mrf.mxu0
  %v2341 = vadd.f32 %v2123, %v2340
  %v2342 = vpop.f32.mrf.mxu0
  %v2343 = vadd.f32 %v2123, %v2342
  %2344 = vmatmul.bf16.gmra.mxu0 %v1742
  %v2345 = vpop.f32.mrf.mxu0
  %v2346 = vadd.f32 %v2123, %v2345
  %v2347 = vpop.f32.mrf.mxu0
  %v2348 = vadd.f32 %v2123, %v2347
  %2349 = vmatmul.bf16.gmra.mxu0 %v1745
  %v2350 = vpop.f32.mrf.mxu0
  %v2351 = vadd.f32 %v2123, %v2350
  %v2352 = vpop.f32.mrf.mxu0
  %v2353 = vadd.f32 %v2123, %v2352
  %2354 = vmatmul.bf16.gmra.mxu0 %v1748
  %v2355 = vpop.f32.mrf.mxu0
  %v2356 = vadd.f32 %v2123, %v2355
  %v2357 = vpop.f32.mrf.mxu0
  %v2358 = vadd.f32 %v2123, %v2357
  %2359 = vmatmul.bf16.gmra.mxu0 %v1751
  %v2360 = vpop.f32.mrf.mxu0
  %v2361 = vadd.f32 %v2123, %v2360
  %v2362 = vpop.f32.mrf.mxu0
  %v2363 = vadd.f32 %v2123, %v2362
  %2364 = vmatmul.bf16.gmra.mxu0 %v1754
  %v2365 = vpop.f32.mrf.mxu0
  %v2366 = vadd.f32 %v2123, %v2365
  %v2367 = vpop.f32.mrf.mxu0
  %v2368 = vadd.f32 %v2123, %v2367
  %2369 = vmatmul.bf16.gmra.mxu0 %v1757
  %v2370 = vpop.f32.mrf.mxu0
  %v2371 = vadd.f32 %v2123, %v2370
  %v2372 = vpop.f32.mrf.mxu0
  %v2373 = vadd.f32 %v2123, %v2372
  %2374 = vmatmul.bf16.gmra.mxu0 %v1760
  %v2375 = vpop.f32.mrf.mxu0
  %v2376 = vadd.f32 %v2123, %v2375
  %v2377 = vpop.f32.mrf.mxu0
  %v2378 = vadd.f32 %v2123, %v2377
  %2379 = vmatmul.bf16.gmra.mxu0 %v1763
  %v2380 = vpop.f32.mrf.mxu0
  %v2381 = vadd.f32 %v2123, %v2380
  %v2382 = vpop.f32.mrf.mxu0
  %v2383 = vadd.f32 %v2123, %v2382
  %2384 = vmatmul.bf16.gmra.mxu0 %v1766
  %v2385 = vpop.f32.mrf.mxu0
  %v2386 = vadd.f32 %v2123, %v2385
  %v2387 = vpop.f32.mrf.mxu0
  %v2388 = vadd.f32 %v2123, %v2387
  %2389 = vmatmul.bf16.gmra.mxu0 %v1769
  %v2390 = vpop.f32.mrf.mxu0
  %v2391 = vadd.f32 %v2123, %v2390
  %v2392 = vpop.f32.mrf.mxu0
  %v2393 = vadd.f32 %v2123, %v2392
  %2394 = vmatmul.bf16.gmra.mxu0 %v1772
  %v2395 = vpop.f32.mrf.mxu0
  %v2396 = vadd.f32 %v2123, %v2395
  %v2397 = vpop.f32.mrf.mxu0
  %v2398 = vadd.f32 %v2123, %v2397
  %2399 = vmatmul.bf16.gmra.mxu0 %v1775
  %v2400 = vpop.f32.mrf.mxu0
  %v2401 = vadd.f32 %v2123, %v2400
  %v2402 = vpop.f32.mrf.mxu0
  %v2403 = vadd.f32 %v2123, %v2402
  %2404 = vmatmul.bf16.gmra.mxu0 %v1778
  %v2405 = vpop.f32.mrf.mxu0
  %v2406 = vadd.f32 %v2123, %v2405
  %v2407 = vpop.f32.mrf.mxu0
  %v2408 = vadd.f32 %v2123, %v2407
  %2409 = vmatmul.bf16.gmra.mxu0 %v1781
  %v2410 = vpop.f32.mrf.mxu0
  %v2411 = vadd.f32 %v2123, %v2410
  %v2412 = vpop.f32.mrf.mxu0
  %v2413 = vadd.f32 %v2123, %v2412
  %2414 = vmatmul.bf16.gmra.mxu0 %v1784
  %v2415 = vpop.f32.mrf.mxu0
  %v2416 = vadd.f32 %v2123, %v2415
  %v2417 = vpop.f32.mrf.mxu0
  %v2418 = vadd.f32 %v2123, %v2417
  %2419 = vmatmul.bf16.gmra.mxu0 %v1787
  %v2420 = vpop.f32.mrf.mxu0
  %v2421 = vadd.f32 %v2123, %v2420
  %v2422 = vpop.f32.mrf.mxu0
  %v2423 = vadd.f32 %v2123, %v2422
  %2424 = vmatmul.bf16.gmra.mxu0 %v1790
  %v2425 = vpop.f32.mrf.mxu0
  %v2426 = vadd.f32 %v2123, %v2425
  %v2427 = vpop.f32.mrf.mxu0
  %v2428 = vadd.f32 %v2123, %v2427
  %2429 = vmatmul.bf16.gmra.mxu0 %v1793
  %v2430 = vpop.f32.mrf.mxu0
  %v2431 = vadd.f32 %v2123, %v2430
  %v2432 = vpop.f32.mrf.mxu0
  %v2433 = vadd.f32 %v2123, %v2432
  %2434 = vmatmul.bf16.gmra.mxu0 %v1796
  %v2435 = vpop.f32.mrf.mxu0
  %v2436 = vadd.f32 %v2123, %v2435
  %v2437 = vpop.f32.mrf.mxu0
  %v2438 = vadd.f32 %v2123, %v2437
  %2439 = vmatmul.bf16.gmra.mxu0 %v1799
  %v2440 = vpop.f32.mrf.mxu0
  %v2441 = vadd.f32 %v2123, %v2440
  %v2442 = vpop.f32.mrf.mxu0
  %v2443 = vadd.f32 %v2123, %v2442
  %2444 = vmatmul.bf16.gmra.mxu0 %v1802
  %v2445 = vpop.f32.mrf.mxu0
  %v2446 = vadd.f32 %v2123, %v2445
  %v2447 = vpop.f32.mrf.mxu0
  %v2448 = vadd.f32 %v2123, %v2447
  %2449 = vmatmul.bf16.gmra.mxu0 %v1805
  %v2450 = vpop.f32.mrf.mxu0
  %v2451 = vadd.f32 %v2123, %v2450
  %v2452 = vpop.f32.mrf.mxu0
  %v2453 = vadd.f32 %v2123, %v2452
  %2454 = vmatmul.bf16.gmra.mxu0 %v1808
  %v2455 = vpop.f32.mrf.mxu0
  %v2456 = vadd.f32 %v2123, %v2455
  %v2457 = vpop.f32.mrf.mxu0
  %v2458 = vadd.f32 %v2123, %v2457
  %2459 = vmatmul.bf16.gmra.mxu0 %v1811
  %v2460 = vpop.f32.mrf.mxu0
  %v2461 = vadd.f32 %v2123, %v2460
  %v2462 = vpop.f32.mrf.mxu0
  %v2463 = vadd.f32 %v2123, %v2462
  %2464 = vmatmul.bf16.gmra.mxu0 %v1814
  %v2465 = vpop.f32.mrf.mxu0
  %v2466 = vadd.f32 %v2123, %v2465
  %v2467 = vpop.f32.mrf.mxu0
  %v2468 = vadd.f32 %v2123, %v2467
  %2469 = vmatmul.bf16.gmra.mxu0 %v1817
  %v2470 = vpop.f32.mrf.mxu0
  %v2471 = vadd.f32 %v2123, %v2470
  %v2472 = vpop.f32.mrf.mxu0
  %v2473 = vadd.f32 %v2123, %v2472
  %2474 = vmatmul.bf16.gmra.mxu0 %v1820
  %v2475 = vpop.f32.mrf.mxu0
  %v2476 = vadd.f32 %v2123, %v2475
  %v2477 = vpop.f32.mrf.mxu0
  %v2478 = vadd.f32 %v2123, %v2477
  %2479 = vmatmul.bf16.gmra.mxu0 %v1823
  %v2480 = vpop.f32.mrf.mxu0
  %v2481 = vadd.f32 %v2123, %v2480
  %v2482 = vpop.f32.mrf.mxu0
  %v2483 = vadd.f32 %v2123, %v2482
  %2484 = vmatmul.bf16.gmra.mxu0 %v1826
  %v2485 = vpop.f32.mrf.mxu0
  %v2486 = vadd.f32 %v2123, %v2485
  %v2487 = vpop.f32.mrf.mxu0
  %v2488 = vadd.f32 %v2123, %v2487
  %2489 = vmatmul.bf16.gmra.mxu0 %v1829
  %v2490 = vpop.f32.mrf.mxu0
  %v2491 = vadd.f32 %v2123, %v2490
  %v2492 = vpop.f32.mrf.mxu0
  %v2493 = vadd.f32 %v2123, %v2492
  %2494 = vdwg.mxu0
  %2495 = vmatpush.bf16.msra.mxu0 %v2212
  %2496 = vmatpush.bf16.msra.mxu0 %v2211
  %2497 = vmatpush.bf16.msra.mxu0 %v2210
  %2498 = vmatpush.bf16.msra.mxu0 %v2209
  %2499 = vmatpush.bf16.msra.mxu0 %v2208
  %2500 = vmatpush.bf16.msra.mxu0 %v2207
  %2501 = vmatpush.bf16.msra.mxu0 %v2206
  %2502 = vmatpush.bf16.msra.mxu0 %v2205
  %2503 = vmatmul.bf16.gmra.mxu0 %v1991
  %v2504 = vpop.f32.mrf.mxu0
  %v2505 = vadd.f32 %v2336, %v2504
  %v2506 = vpop.f32.mrf.mxu0
  %v2507 = vadd.f32 %v2338, %v2506
  %2508 = vmatmul.bf16.gmra.mxu0 %v1994
  %v2509 = vpop.f32.mrf.mxu0
  %v2510 = vadd.f32 %v2341, %v2509
  %v2511 = vpop.f32.mrf.mxu0
  %v2512 = vadd.f32 %v2343, %v2511
  %2513 = vmatmul.bf16.gmra.mxu0 %v1997
  %v2514 = vpop.f32.mrf.mxu0
  %v2515 = vadd.f32 %v2346, %v2514
  %v2516 = vpop.f32.mrf.mxu0
  %v2517 = vadd.f32 %v2348, %v2516
  %2518 = vmatmul.bf16.gmra.mxu0 %v2000
  %v2519 = vpop.f32.mrf.mxu0
  %v2520 = vadd.f32 %v2351, %v2519
  %v2521 = vpop.f32.mrf.mxu0
  %v2522 = vadd.f32 %v2353, %v2521
  %2523 = vmatmul.bf16.gmra.mxu0 %v2003
  %v2524 = vpop.f32.mrf.mxu0
  %v2525 = vadd.f32 %v2356, %v2524
  %v2526 = vpop.f32.mrf.mxu0
  %v2527 = vadd.f32 %v2358, %v2526
  %2528 = vmatmul.bf16.gmra.mxu0 %v2006
  %v2529 = vpop.f32.mrf.mxu0
  %v2530 = vadd.f32 %v2361, %v2529
  %v2531 = vpop.f32.mrf.mxu0
  %v2532 = vadd.f32 %v2363, %v2531
  %2533 = vmatmul.bf16.gmra.mxu0 %v2009
  %v2534 = vpop.f32.mrf.mxu0
  %v2535 = vadd.f32 %v2366, %v2534
  %v2536 = vpop.f32.mrf.mxu0
  %v2537 = vadd.f32 %v2368, %v2536
  %2538 = vmatmul.bf16.gmra.mxu0 %v2012
  %v2539 = vpop.f32.mrf.mxu0
  %v2540 = vadd.f32 %v2371, %v2539
  %v2541 = vpop.f32.mrf.mxu0
  %v2542 = vadd.f32 %v2373, %v2541
  %2543 = vmatmul.bf16.gmra.mxu0 %v2015
  %v2544 = vpop.f32.mrf.mxu0
  %v2545 = vadd.f32 %v2376, %v2544
  %v2546 = vpop.f32.mrf.mxu0
  %v2547 = vadd.f32 %v2378, %v2546
  %2548 = vmatmul.bf16.gmra.mxu0 %v2018
  %v2549 = vpop.f32.mrf.mxu0
  %v2550 = vadd.f32 %v2381, %v2549
  %v2551 = vpop.f32.mrf.mxu0
  %v2552 = vadd.f32 %v2383, %v2551
  %2553 = vmatmul.bf16.gmra.mxu0 %v2021
  %v2554 = vpop.f32.mrf.mxu0
  %v2555 = vadd.f32 %v2386, %v2554
  %v2556 = vpop.f32.mrf.mxu0
  %v2557 = vadd.f32 %v2388, %v2556
  %2558 = vmatmul.bf16.gmra.mxu0 %v2024
  %v2559 = vpop.f32.mrf.mxu0
  %v2560 = vadd.f32 %v2391, %v2559
  %v2561 = vpop.f32.mrf.mxu0
  %v2562 = vadd.f32 %v2393, %v2561
  %2563 = vmatmul.bf16.gmra.mxu0 %v2027
  %v2564 = vpop.f32.mrf.mxu0
  %v2565 = vadd.f32 %v2396, %v2564
  %v2566 = vpop.f32.mrf.mxu0
  %v2567 = vadd.f32 %v2398, %v2566
  %2568 = vmatmul.bf16.gmra.mxu0 %v2030
  %v2569 = vpop.f32.mrf.mxu0
  %v2570 = vadd.f32 %v2401, %v2569
  %v2571 = vpop.f32.mrf.mxu0
  %v2572 = vadd.f32 %v2403, %v2571
  %2573 = vmatmul.bf16.gmra.mxu0 %v2033
  %v2574 = vpop.f32.mrf.mxu0
  %v2575 = vadd.f32 %v2406, %v2574
  %v2576 = vpop.f32.mrf.mxu0
  %v2577 = vadd.f32 %v2408, %v2576
  %2578 = vmatmul.bf16.gmra.mxu0 %v2036
  %v2579 = vpop.f32.mrf.mxu0
  %v2580 = vadd.f32 %v2411, %v2579
  %v2581 = vpop.f32.mrf.mxu0
  %v2582 = vadd.f32 %v2413, %v2581
  %2583 = vmatmul.bf16.gmra.mxu0 %v2039
  %v2584 = vpop.f32.mrf.mxu0
  %v2585 = vadd.f32 %v2416, %v2584
  %v2586 = vpop.f32.mrf.mxu0
  %v2587 = vadd.f32 %v2418, %v2586
  %2588 = vmatmul.bf16.gmra.mxu0 %v2042
  %v2589 = vpop.f32.mrf.mxu0
  %v2590 = vadd.f32 %v2421, %v2589
  %v2591 = vpop.f32.mrf.mxu0
  %v2592 = vadd.f32 %v2423, %v2591
  %2593 = vmatmul.bf16.gmra.mxu0 %v2045
  %v2594 = vpop.f32.mrf.mxu0
  %v2595 = vadd.f32 %v2426, %v2594
  %v2596 = vpop.f32.mrf.mxu0
  %v2597 = vadd.f32 %v2428, %v2596
  %2598 = vmatmul.bf16.gmra.mxu0 %v2048
  %v2599 = vpop.f32.mrf.mxu0
  %v2600 = vadd.f32 %v2431, %v2599
  %v2601 = vpop.f32.mrf.mxu0
  %v2602 = vadd.f32 %v2433, %v2601
  %2603 = vmatmul.bf16.gmra.mxu0 %v2051
  %v2604 = vpop.f32.mrf.mxu0
  %v2605 = vadd.f32 %v2436, %v2604
  %v2606 = vpop.f32.mrf.mxu0
  %v2607 = vadd.f32 %v2438, %v2606
  %2608 = vmatmul.bf16.gmra.mxu0 %v2054
  %v2609 = vpop.f32.mrf.mxu0
  %v2610 = vadd.f32 %v2441, %v2609
  %v2611 = vpop.f32.mrf.mxu0
  %v2612 = vadd.f32 %v2443, %v2611
  %2613 = vmatmul.bf16.gmra.mxu0 %v2057
  %v2614 = vpop.f32.mrf.mxu0
  %v2615 = vadd.f32 %v2446, %v2614
  %v2616 = vpop.f32.mrf.mxu0
  %v2617 = vadd.f32 %v2448, %v2616
  %2618 = vmatmul.bf16.gmra.mxu0 %v2060
  %v2619 = vpop.f32.mrf.mxu0
  %v2620 = vadd.f32 %v2451, %v2619
  %v2621 = vpop.f32.mrf.mxu0
  %v2622 = vadd.f32 %v2453, %v2621
  %2623 = vmatmul.bf16.gmra.mxu0 %v2063
  %v2624 = vpop.f32.mrf.mxu0
  %v2625 = vadd.f32 %v2456, %v2624
  %v2626 = vpop.f32.mrf.mxu0
  %v2627 = vadd.f32 %v2458, %v2626
  %2628 = vmatmul.bf16.gmra.mxu0 %v2066
  %v2629 = vpop.f32.mrf.mxu0
  %v2630 = vadd.f32 %v2461, %v2629
  %v2631 = vpop.f32.mrf.mxu0
  %v2632 = vadd.f32 %v2463, %v2631
  %2633 = vmatmul.bf16.gmra.mxu0 %v2069
  %v2634 = vpop.f32.mrf.mxu0
  %v2635 = vadd.f32 %v2466, %v2634
  %v2636 = vpop.f32.mrf.mxu0
  %v2637 = vadd.f32 %v2468, %v2636
  %2638 = vmatmul.bf16.gmra.mxu0 %v2072
  %v2639 = vpop.f32.mrf.mxu0
  %v2640 = vadd.f32 %v2471, %v2639
  %v2641 = vpop.f32.mrf.mxu0
  %v2642 = vadd.f32 %v2473, %v2641
  %2643 = vmatmul.bf16.gmra.mxu0 %v2075
  %v2644 = vpop.f32.mrf.mxu0
  %v2645 = vadd.f32 %v2476, %v2644
  %v2646 = vpop.f32.mrf.mxu0
  %v2647 = vadd.f32 %v2478, %v2646
  %2648 = vmatmul.bf16.gmra.mxu0 %v2078
  %v2649 = vpop.f32.mrf.mxu0
  %v2650 = vadd.f32 %v2481, %v2649
  %v2651 = vpop.f32.mrf.mxu0
  %v2652 = vadd.f32 %v2483, %v2651
  %2653 = vmatmul.bf16.gmra.mxu0 %v2081
  %v2654 = vpop.f32.mrf.mxu0
  %v2655 = vadd.f32 %v2486, %v2654
  %v2656 = vpop.f32.mrf.mxu0
  %v2657 = vadd.f32 %v2488, %v2656
  %2658 = vmatmul.bf16.gmra.mxu0 %v2083
  %v2659 = vpop.f32.mrf.mxu0
  %v2660 = vadd.f32 %v2491, %v2659
  %v2661 = vpop.f32.mrf.mxu0
  %v2662 = vadd.f32 %v2493, %v2661
  %2663 = vdwg.mxu0
  %2664 = vmatpush.bf16.msra.mxu0 0
  %2665 = vmatpush.bf16.msra.mxu0 0
  %2666 = vmatpush.bf16.msra.mxu0 0
  %2667 = vmatpush.bf16.msra.mxu0 0
  %2668 = vmatpush.bf16.msra.mxu0 0
  %2669 = vmatpush.bf16.msra.mxu0 0
  %2670 = vmatpush.bf16.msra.mxu0 %v2214
  %2671 = vmatpush.bf16.msra.mxu0 %v2213
  %2672 = vmatmul.bf16.gmra.mxu0 %v2234
  %v2673 = vpop.f32.mrf.mxu0
  %v2674 = vadd.f32 %v2505, %v2673
  %v2675 = vpop.f32.mrf.mxu0
  %v2676 = vadd.f32 %v2507, %v2675
  %2677 = vmatmul.bf16.gmra.mxu0 %v2237
  %v2678 = vpop.f32.mrf.mxu0
  %v2679 = vadd.f32 %v2510, %v2678
  %v2680 = vpop.f32.mrf.mxu0
  %v2681 = vadd.f32 %v2512, %v2680
  %2682 = vmatmul.bf16.gmra.mxu0 %v2240
  %v2683 = vpop.f32.mrf.mxu0
  %v2684 = vadd.f32 %v2515, %v2683
  %v2685 = vpop.f32.mrf.mxu0
  %v2686 = vadd.f32 %v2517, %v2685
  %2687 = vmatmul.bf16.gmra.mxu0 %v2243
  %v2688 = vpop.f32.mrf.mxu0
  %v2689 = vadd.f32 %v2520, %v2688
  %v2690 = vpop.f32.mrf.mxu0
  %v2691 = vadd.f32 %v2522, %v2690
  %2692 = vmatmul.bf16.gmra.mxu0 %v2246
  %v2693 = vpop.f32.mrf.mxu0
  %v2694 = vadd.f32 %v2525, %v2693
  %v2695 = vpop.f32.mrf.mxu0
  %v2696 = vadd.f32 %v2527, %v2695
  %2697 = vmatmul.bf16.gmra.mxu0 %v2249
  %v2698 = vpop.f32.mrf.mxu0
  %v2699 = vadd.f32 %v2530, %v2698
  %v2700 = vpop.f32.mrf.mxu0
  %v2701 = vadd.f32 %v2532, %v2700
  %2702 = vmatmul.bf16.gmra.mxu0 %v2252
  %v2703 = vpop.f32.mrf.mxu0
  %v2704 = vadd.f32 %v2535, %v2703
  %v2705 = vpop.f32.mrf.mxu0
  %v2706 = vadd.f32 %v2537, %v2705
  %2707 = vmatmul.bf16.gmra.mxu0 %v2255
  %v2708 = vpop.f32.mrf.mxu0
  %v2709 = vadd.f32 %v2540, %v2708
  %v2710 = vpop.f32.mrf.mxu0
  %v2711 = vadd.f32 %v2542, %v2710
  %2712 = vmatmul.bf16.gmra.mxu0 %v2258
  %v2713 = vpop.f32.mrf.mxu0
  %v2714 = vadd.f32 %v2545, %v2713
  %v2715 = vpop.f32.mrf.mxu0
  %v2716 = vadd.f32 %v2547, %v2715
  %2717 = vmatmul.bf16.gmra.mxu0 %v2261
  %v2718 = vpop.f32.mrf.mxu0
  %v2719 = vadd.f32 %v2550, %v2718
  %v2720 = vpop.f32.mrf.mxu0
  %v2721 = vadd.f32 %v2552, %v2720
  %2722 = vmatmul.bf16.gmra.mxu0 %v2264
  %v2723 = vpop.f32.mrf.mxu0
  %v2724 = vadd.f32 %v2555, %v2723
  %v2725 = vpop.f32.mrf.mxu0
  %v2726 = vadd.f32 %v2557, %v2725
  %2727 = vmatmul.bf16.gmra.mxu0 %v2267
  %v2728 = vpop.f32.mrf.mxu0
  %v2729 = vadd.f32 %v2560, %v2728
  %v2730 = vpop.f32.mrf.mxu0
  %v2731 = vadd.f32 %v2562, %v2730
  %2732 = vmatmul.bf16.gmra.mxu0 %v2270
  %v2733 = vpop.f32.mrf.mxu0
  %v2734 = vadd.f32 %v2565, %v2733
  %v2735 = vpop.f32.mrf.mxu0
  %v2736 = vadd.f32 %v2567, %v2735
  %2737 = vmatmul.bf16.gmra.mxu0 %v2273
  %v2738 = vpop.f32.mrf.mxu0
  %v2739 = vadd.f32 %v2570, %v2738
  %v2740 = vpop.f32.mrf.mxu0
  %v2741 = vadd.f32 %v2572, %v2740
  %2742 = vmatmul.bf16.gmra.mxu0 %v2276
  %v2743 = vpop.f32.mrf.mxu0
  %v2744 = vadd.f32 %v2575, %v2743
  %v2745 = vpop.f32.mrf.mxu0
  %v2746 = vadd.f32 %v2577, %v2745
  %2747 = vmatmul.bf16.gmra.mxu0 %v2279
  %v2748 = vpop.f32.mrf.mxu0
  %v2749 = vadd.f32 %v2580, %v2748
  %v2750 = vpop.f32.mrf.mxu0
  %v2751 = vadd.f32 %v2582, %v2750
  %2752 = vmatmul.bf16.gmra.mxu0 %v2282
  %v2753 = vpop.f32.mrf.mxu0
  %v2754 = vadd.f32 %v2585, %v2753
  %v2755 = vpop.f32.mrf.mxu0
  %v2756 = vadd.f32 %v2587, %v2755
  %2757 = vmatmul.bf16.gmra.mxu0 %v2285
  %v2758 = vpop.f32.mrf.mxu0
  %v2759 = vadd.f32 %v2590, %v2758
  %v2760 = vpop.f32.mrf.mxu0
  %v2761 = vadd.f32 %v2592, %v2760
  %2762 = vmatmul.bf16.gmra.mxu0 %v2288
  %v2763 = vpop.f32.mrf.mxu0
  %v2764 = vadd.f32 %v2595, %v2763
  %v2765 = vpop.f32.mrf.mxu0
  %v2766 = vadd.f32 %v2597, %v2765
  %2767 = vmatmul.bf16.gmra.mxu0 %v2291
  %v2768 = vpop.f32.mrf.mxu0
  %v2769 = vadd.f32 %v2600, %v2768
  %v2770 = vpop.f32.mrf.mxu0
  %v2771 = vadd.f32 %v2602, %v2770
  %2772 = vmatmul.bf16.gmra.mxu0 %v2294
  %v2773 = vpop.f32.mrf.mxu0
  %v2774 = vadd.f32 %v2605, %v2773
  %v2775 = vpop.f32.mrf.mxu0
  %v2776 = vadd.f32 %v2607, %v2775
  %2777 = vmatmul.bf16.gmra.mxu0 %v2297
  %v2778 = vpop.f32.mrf.mxu0
  %v2779 = vadd.f32 %v2610, %v2778
  %v2780 = vpop.f32.mrf.mxu0
  %v2781 = vadd.f32 %v2612, %v2780
  %2782 = vmatmul.bf16.gmra.mxu0 %v2300
  %v2783 = vpop.f32.mrf.mxu0
  %v2784 = vadd.f32 %v2615, %v2783
  %v2785 = vpop.f32.mrf.mxu0
  %v2786 = vadd.f32 %v2617, %v2785
  %2787 = vmatmul.bf16.gmra.mxu0 %v2303
  %v2788 = vpop.f32.mrf.mxu0
  %v2789 = vadd.f32 %v2620, %v2788
  %v2790 = vpop.f32.mrf.mxu0
  %v2791 = vadd.f32 %v2622, %v2790
  %2792 = vmatmul.bf16.gmra.mxu0 %v2306
  %v2793 = vpop.f32.mrf.mxu0
  %v2794 = vadd.f32 %v2625, %v2793
  %v2795 = vpop.f32.mrf.mxu0
  %v2796 = vadd.f32 %v2627, %v2795
  %2797 = vmatmul.bf16.gmra.mxu0 %v2309
  %v2798 = vpop.f32.mrf.mxu0
  %v2799 = vadd.f32 %v2630, %v2798
  %v2800 = vpop.f32.mrf.mxu0
  %v2801 = vadd.f32 %v2632, %v2800
  %2802 = vmatmul.bf16.gmra.mxu0 %v2312
  %v2803 = vpop.f32.mrf.mxu0
  %v2804 = vadd.f32 %v2635, %v2803
  %v2805 = vpop.f32.mrf.mxu0
  %v2806 = vadd.f32 %v2637, %v2805
  %2807 = vmatmul.bf16.gmra.mxu0 %v2315
  %v2808 = vpop.f32.mrf.mxu0
  %v2809 = vadd.f32 %v2640, %v2808
  %v2810 = vpop.f32.mrf.mxu0
  %v2811 = vadd.f32 %v2642, %v2810
  %2812 = vmatmul.bf16.gmra.mxu0 %v2318
  %v2813 = vpop.f32.mrf.mxu0
  %v2814 = vadd.f32 %v2645, %v2813
  %v2815 = vpop.f32.mrf.mxu0
  %v2816 = vadd.f32 %v2647, %v2815
  %2817 = vmatmul.bf16.gmra.mxu0 %v2321
  %v2818 = vpop.f32.mrf.mxu0
  %v2819 = vadd.f32 %v2650, %v2818
  %v2820 = vpop.f32.mrf.mxu0
  %v2821 = vadd.f32 %v2652, %v2820
  %2822 = vmatmul.bf16.gmra.mxu0 %v2324
  %v2823 = vpop.f32.mrf.mxu0
  %v2824 = vadd.f32 %v2655, %v2823
  %v2825 = vpop.f32.mrf.mxu0
  %v2826 = vadd.f32 %v2657, %v2825
  %2827 = vmatmul.bf16.gmra.mxu0 %v2279
  %v2828 = vpop.f32.mrf.mxu0
  %v2829 = vadd.f32 %v2660, %v2828
  %v2830 = vpop.f32.mrf.mxu0
  %v2831 = vadd.f32 %v2662, %v2830
  %2832 = vdwg.mxu0
  %v2833 = vmax.f32 %v2674, 0.0
  %v2834 = vmax.f32 %v2676, 0.0
  %v2835 = vmax.f32 %v2679, 0.0
  %v2836 = vmax.f32 %v2681, 0.0
  %v2837 = vmax.f32 %v2684, 0.0
  %v2838 = vmax.f32 %v2686, 0.0
  %v2839 = vmax.f32 %v2689, 0.0
  %v2840 = vmax.f32 %v2691, 0.0
  %v2841 = vmax.f32 %v2694, 0.0
  %v2842 = vmax.f32 %v2696, 0.0
  %v2843 = vmax.f32 %v2699, 0.0
  %v2844 = vmax.f32 %v2701, 0.0
  %v2845 = vmax.f32 %v2704, 0.0
  %v2846 = vmax.f32 %v2706, 0.0
  %v2847 = vmax.f32 %v2709, 0.0
  %v2848 = vmax.f32 %v2711, 0.0
  %v2849 = vmax.f32 %v2714, 0.0
  %v2850 = vmax.f32 %v2716, 0.0
  %v2851 = vmax.f32 %v2719, 0.0
  %v2852 = vmax.f32 %v2721, 0.0
  %v2853 = vmax.f32 %v2724, 0.0
  %v2854 = vmax.f32 %v2726, 0.0
  %v2855 = vmax.f32 %v2729, 0.0
  %v2856 = vmax.f32 %v2731, 0.0
  %v2857 = vmax.f32 %v2734, 0.0
  %v2858 = vmax.f32 %v2736, 0.0
  %v2859 = vmax.f32 %v2739, 0.0
  %v2860 = vmax.f32 %v2741, 0.0
  %v2861 = vmax.f32 %v2744, 0.0
  %v2862 = vmax.f32 %v2746, 0.0
  %v2863 = vmax.f32 %v2749, 0.0
  %v2864 = vmax.f32 %v2751, 0.0
  %v2865 = vmax.f32 %v2754, 0.0
  %v2866 = vmax.f32 %v2756, 0.0
  %v2867 = vmax.f32 %v2759, 0.0
  %v2868 = vmax.f32 %v2761, 0.0
  %v2869 = vmax.f32 %v2764, 0.0
  %v2870 = vmax.f32 %v2766, 0.0
  %v2871 = vmax.f32 %v2769, 0.0
  %v2872 = vmax.f32 %v2771, 0.0
  %v2873 = vmax.f32 %v2774, 0.0
  %v2874 = vmax.f32 %v2776, 0.0
  %v2875 = vmax.f32 %v2779, 0.0
  %v2876 = vmax.f32 %v2781, 0.0
  %v2877 = vmax.f32 %v2784, 0.0
  %v2878 = vmax.f32 %v2786, 0.0
  %v2879 = vmax.f32 %v2789, 0.0
  %v2880 = vmax.f32 %v2791, 0.0
  %v2881 = vmax.f32 %v2794, 0.0
  %v2882 = vmax.f32 %v2796, 0.0
  %v2883 = vmax.f32 %v2799, 0.0
  %v2884 = vmax.f32 %v2801, 0.0
  %v2885 = vmax.f32 %v2804, 0.0
  %v2886 = vmax.f32 %v2806, 0.0
  %v2887 = vmax.f32 %v2809, 0.0
  %v2888 = vmax.f32 %v2811, 0.0
  %v2889 = vmax.f32 %v2814, 0.0
  %v2890 = vmax.f32 %v2816, 0.0
  %v2891 = vmax.f32 %v2819, 0.0
  %v2892 = vmax.f32 %v2821, 0.0
  %v2893 = vmax.f32 %v2824, 0.0
  %v2894 = vmax.f32 %v2826, 0.0
  %v2895 = vmax.f32 %v2829, 0.0
  %v2896 = vmax.f32 %v2831, 0.0
  %2897 = vst.msk [vmem:[%s3] sm:$0xff] %vm1608, %v2833
  %2898 = vst.msk [vmem:[%s3 + $0x8] sm:$0xff] %vm1608, %v2834
  %2899 = vst.msk [vmem:[%s3 + $0x10] sm:$0xff] %vm1608, %v2835
  %2900 = vst.msk [vmem:[%s3 + $0x18] sm:$0xff] %vm1608, %v2836
  %2901 = vst.msk [vmem:[%s3 + $0x20] sm:$0xff] %vm1608, %v2837
  %2902 = vst.msk [vmem:[%s3 + $0x28] sm:$0xff] %vm1608, %v2838
  %2903 = vst.msk [vmem:[%s3 + $0x30] sm:$0xff] %vm1608, %v2839
  %2904 = vst.msk [vmem:[%s3 + $0x38] sm:$0xff] %vm1608, %v2840
  %2905 = vst.msk [vmem:[%s3 + $0x40] sm:$0xff] %vm1608, %v2841
  %2906 = vst.msk [vmem:[%s3 + $0x48] sm:$0xff] %vm1608, %v2842
  %2907 = vst.msk [vmem:[%s3 + $0x50] sm:$0xff] %vm1608, %v2843
  %2908 = vst.msk [vmem:[%s3 + $0x58] sm:$0xff] %vm1608, %v2844
  %2909 = vst.msk [vmem:[%s3 + $0x60] sm:$0xff] %vm1608, %v2845
  %2910 = vst.msk [vmem:[%s3 + $0x68] sm:$0xff] %vm1608, %v2846
  %2911 = vst.msk [vmem:[%s3 + $0x70] sm:$0xff] %vm1608, %v2847
  %2912 = vst.msk [vmem:[%s3 + $0x78] sm:$0xff] %vm1608, %v2848
  %2913 = vst.msk [vmem:[%s3 + $0x80] sm:$0xff] %vm1608, %v2849
  %2914 = vst.msk [vmem:[%s3 + $0x88] sm:$0xff] %vm1608, %v2850
  %2915 = vst.msk [vmem:[%s3 + $0x90] sm:$0xff] %vm1608, %v2851
  %2916 = vst.msk [vmem:[%s3 + $0x98] sm:$0xff] %vm1608, %v2852
  %2917 = vst.msk [vmem:[%s3 + $0xa0] sm:$0xff] %vm1608, %v2853
  %2918 = vst.msk [vmem:[%s3 + $0xa8] sm:$0xff] %vm1608, %v2854
  %2919 = vst.msk [vmem:[%s3 + $0xb0] sm:$0xff] %vm1608, %v2855
  %2920 = vst.msk [vmem:[%s3 + $0xb8] sm:$0xff] %vm1608, %v2856
  %2921 = vst.msk [vmem:[%s3 + $0xc0] sm:$0xff] %vm1608, %v2857
  %2922 = vst.msk [vmem:[%s3 + $0xc8] sm:$0xff] %vm1608, %v2858
  %2923 = vst.msk [vmem:[%s3 + $0xd0] sm:$0xff] %vm1608, %v2859
  %2924 = vst.msk [vmem:[%s3 + $0xd8] sm:$0xff] %vm1608, %v2860
  %2925 = vst.msk [vmem:[%s3 + $0xe0] sm:$0xff] %vm1608, %v2861
  %2926 = vst.msk [vmem:[%s3 + $0xe8] sm:$0xff] %vm1608, %v2862
  %2927 = vst.msk [vmem:[%s3 + $0xf0] sm:$0xff] %vm1608, %v2863
  %2928 = vst.msk [vmem:[%s3 + $0xf8] sm:$0xff] %vm1608, %v2864
  %2929 = vst.msk [vmem:[%s3 + $0x100] sm:$0xff] %vm1608, %v2865
  %2930 = vst.msk [vmem:[%s3 + $0x108] sm:$0xff] %vm1608, %v2866
  %2931 = vst.msk [vmem:[%s3 + $0x110] sm:$0xff] %vm1608, %v2867
  %2932 = vst.msk [vmem:[%s3 + $0x118] sm:$0xff] %vm1608, %v2868
  %2933 = vst.msk [vmem:[%s3 + $0x120] sm:$0xff] %vm1608, %v2869
  %2934 = vst.msk [vmem:[%s3 + $0x128] sm:$0xff] %vm1608, %v2870
  %2935 = vst.msk [vmem:[%s3 + $0x130] sm:$0xff] %vm1608, %v2871
  %2936 = vst.msk [vmem:[%s3 + $0x138] sm:$0xff] %vm1608, %v2872
  %2937 = vst.msk [vmem:[%s3 + $0x140] sm:$0xff] %vm1608, %v2873
  %2938 = vst.msk [vmem:[%s3 + $0x148] sm:$0xff] %vm1608, %v2874
  %2939 = vst.msk [vmem:[%s3 + $0x150] sm:$0xff] %vm1608, %v2875
  %2940 = vst.msk [vmem:[%s3 + $0x158] sm:$0xff] %vm1608, %v2876
  %2941 = vst.msk [vmem:[%s3 + $0x160] sm:$0xff] %vm1608, %v2877
  %2942 = vst.msk [vmem:[%s3 + $0x168] sm:$0xff] %vm1608, %v2878
  %2943 = vst.msk [vmem:[%s3 + $0x170] sm:$0xff] %vm1608, %v2879
  %2944 = vst.msk [vmem:[%s3 + $0x178] sm:$0xff] %vm1608, %v2880
  %2945 = vst.msk [vmem:[%s3 + $0x180] sm:$0xff] %vm1608, %v2881
  %2946 = vst.msk [vmem:[%s3 + $0x188] sm:$0xff] %vm1608, %v2882
  %2947 = vst.msk [vmem:[%s3 + $0x190] sm:$0xff] %vm1608, %v2883
  %2948 = vst.msk [vmem:[%s3 + $0x198] sm:$0xff] %vm1608, %v2884
  %2949 = vst.msk [vmem:[%s3 + $0x1a0] sm:$0xff] %vm1608, %v2885
  %2950 = vst.msk [vmem:[%s3 + $0x1a8] sm:$0xff] %vm1608, %v2886
  %2951 = vst.msk [vmem:[%s3 + $0x1b0] sm:$0xff] %vm1608, %v2887
  %2952 = vst.msk [vmem:[%s3 + $0x1b8] sm:$0xff] %vm1608, %v2888
  %2953 = vst.msk [vmem:[%s3 + $0x1c0] sm:$0xff] %vm1608, %v2889
  %2954 = vst.msk [vmem:[%s3 + $0x1c8] sm:$0xff] %vm1608, %v2890
  %2955 = vst.msk [vmem:[%s3 + $0x1d0] sm:$0xff] %vm1608, %v2891
  %2956 = vst.msk [vmem:[%s3 + $0x1d8] sm:$0xff] %vm1608, %v2892
  %2957 = vst.msk [vmem:[%s3 + $0x1e0] sm:$0xff] %vm1608, %v2893
  %2958 = vst.msk [vmem:[%s3 + $0x1e8] sm:$0xff] %vm1608, %v2894
  %2959 = vst.msk [vmem:[%s3 + $0x1f0] sm:$0xff] %vm1608, %v2895
  %2960 = vst.msk [vmem:[%s3 + $0x1f8] sm:$0xff] %vm1608, %v2896
  // Predicated region
  $region14: #{forward.7} parent=0 // pred_check
    _
  $region15: #{forward.7} parent=0 // pred_check_branch
    %2962 = sbr.rel (0) target = $region17
  $region16: #{forward.7} parent=0 // pred_region
    _
  $region17: #{forward.7} parent=0 // pred_fallthru
    _
  // Predicated region
  $region18: #{forward.7} parent=0 // pred_check
    _
  $region19: #{forward.7} parent=0 // pred_check_branch
    %2964 = sbr.rel (0) target = $region21
  $region20: #{forward.7} parent=0 // pred_region
    _
  $region21: #{forward.7} parent=0 // pred_fallthru
    _

// kernel: forward.9
$region0: #{forward.9}
  #allocation0 [shape = 'u32[]', space=smem, size = 0x4, offset = 0x4, fixed_abs, tag = 'smem constant byte address 0x4 - core index']
  #allocation1 [shape = 'u32[72,128]{1,0:T(1,128)}', space=vmem, size = 0x9000, scoped, tag = 'internal scratch']
  %s0 = inlined_call_operand.vmem [shape: f32[2,8,8,64], index: 0, kind: input, shape index: {}]
  %s1 = inlined_call_operand.vmem [shape: bf16[576,64], index: 1, kind: input, shape index: {}]
  %s2 = inlined_call_operand.vmem [shape: f32[1,64], index: 2, kind: input, shape index: {}]
  %s3 = inlined_call_operand.vmem [shape: f32[2,8,8,64], index: 3, kind: output, shape index: {}]
  %s4 = sld [smem:[#allocation0]]
  $region22: #{forward.9} parent=0
    _
  %s6 = ssub.s32 1, %s4
  %s7 = scalar_select 0, %s6, %s4
  // Predicated region
  $region2: #{forward.9} parent=0 // pred_check
    _
  $region3: #{forward.9} parent=0 // pred_check_branch
    %9 = sbr.rel (0) target = $region5
  $region4: #{forward.9} parent=0 // pred_region
    _
  $region5: #{forward.9} parent=0 // pred_fallthru
    _
  // Predicated region
  $region6: #{forward.9} parent=0 // pred_check
    _
  $region7: #{forward.9} parent=0 // pred_check_branch
    %11 = sbr.rel (0) target = $region9
  $region8: #{forward.9} parent=0 // pred_region
    _
  $region9: #{forward.9} parent=0 // pred_fallthru
    _
  // Predicated region
  $region10: #{forward.9} parent=0 // pred_check
    _
  $region11: #{forward.9} parent=0 // pred_check_branch
    %13 = sbr.rel (0) target = $region13
  $region12: #{forward.9} parent=0 // pred_region
    _
  $region13: #{forward.9} parent=0 // pred_fallthru
    _
  %v15 = vld [vmem:[%s0] sm:$0xff]
  %v16 = vld [vmem:[%s0 + $0x8] sm:$0xff]
  %v17 = vld [vmem:[%s0 + $0x10] sm:$0xff]
  %v18 = vld [vmem:[%s0 + $0x18] sm:$0xff]
  %v19 = vld [vmem:[%s0 + $0x20] sm:$0xff]
  %v20 = vld [vmem:[%s0 + $0x28] sm:$0xff]
  %v21 = vld [vmem:[%s0 + $0x30] sm:$0xff]
  %v22 = vld [vmem:[%s0 + $0x38] sm:$0xff]
  %v23 = vld [vmem:[%s0 + $0x40] sm:$0xff]
  %v24 = vld [vmem:[%s0 + $0x48] sm:$0xff]
  %v25 = vld [vmem:[%s0 + $0x50] sm:$0xff]
  %v26 = vld [vmem:[%s0 + $0x58] sm:$0xff]
  %v27 = vld [vmem:[%s0 + $0x60] sm:$0xff]
  %v28 = vld [vmem:[%s0 + $0x68] sm:$0xff]
  %v29 = vld [vmem:[%s0 + $0x70] sm:$0xff]
  %v30 = vld [vmem:[%s0 + $0x78] sm:$0xff]
  %v31 = vpack.c.bf16 %v15, %v15
  %v32 = vpack.c.bf16 %v16, %v16
  %v33 = vpack.c.bf16 %v17, %v17
  %v34 = vpack.c.bf16 %v18, %v18
  %v35 = vpack.c.bf16 %v19, %v19
  %v36 = vpack.c.bf16 %v20, %v20
  %v37 = vpack.c.bf16 %v21, %v21
  %v38 = vpack.c.bf16 %v22, %v22
  %v39 = vpack.c.bf16 %v23, %v23
  %v40 = vpack.c.bf16 %v24, %v24
  %v41 = vpack.c.bf16 %v25, %v25
  %v42 = vpack.c.bf16 %v26, %v26
  %v43 = vpack.c.bf16 %v27, %v27
  %v44 = vpack.c.bf16 %v28, %v28
  %v45 = vpack.c.bf16 %v29, %v29
  %v46 = vpack.c.bf16 %v30, %v30
  %v48 = vshrl.u32 0, 16
  %v50 = vrot.slane %v48, 7
  %v51 = vshll.u32 0, 16
  %v53 = vor.u32 %v50, %v51
  %v55 = vshrl.u32 %v31, 16
  %v57 = vrot.slane %v55, 7
  %v58 = vshll.u32 %v31, 16
  %v60 = vor.u32 %v57, %v58
  %v62 = vshrl.u32 %v32, 16
  %v64 = vrot.slane %v62, 7
  %v65 = vshll.u32 %v32, 16
  %v67 = vor.u32 %v64, %v65
  %v69 = vshrl.u32 %v33, 16
  %v71 = vrot.slane %v69, 7
  %v72 = vshll.u32 %v33, 16
  %v74 = vor.u32 %v71, %v72
  %v76 = vshrl.u32 %v34, 16
  %v78 = vrot.slane %v76, 7
  %v79 = vshll.u32 %v34, 16
  %v81 = vor.u32 %v78, %v79
  %v83 = vshrl.u32 %v35, 16
  %v85 = vrot.slane %v83, 7
  %v86 = vshll.u32 %v35, 16
  %v88 = vor.u32 %v85, %v86
  %v90 = vshrl.u32 %v36, 16
  %v92 = vrot.slane %v90, 7
  %v93 = vshll.u32 %v36, 16
  %v95 = vor.u32 %v92, %v93
  %v97 = vshrl.u32 %v37, 16
  %v99 = vrot.slane %v97, 7
  %v100 = vshll.u32 %v37, 16
  %v102 = vor.u32 %v99, %v100
  %v104 = vshrl.u32 %v38, 16
  %v106 = vrot.slane %v104, 7
  %v107 = vshll.u32 %v38, 16
  %v109 = vor.u32 %v106, %v107
  %v111 = vshrl.u32 %v39, 16
  %v113 = vrot.slane %v111, 7
  %v114 = vshll.u32 %v39, 16
  %v116 = vor.u32 %v113, %v114
  %v118 = vshrl.u32 %v40, 16
  %v120 = vrot.slane %v118, 7
  %v121 = vshll.u32 %v40, 16
  %v123 = vor.u32 %v120, %v121
  %v125 = vshrl.u32 %v41, 16
  %v127 = vrot.slane %v125, 7
  %v128 = vshll.u32 %v41, 16
  %v130 = vor.u32 %v127, %v128
  %v132 = vshrl.u32 %v42, 16
  %v134 = vrot.slane %v132, 7
  %v135 = vshll.u32 %v42, 16
  %v137 = vor.u32 %v134, %v135
  %v139 = vshrl.u32 %v43, 16
  %v141 = vrot.slane %v139, 7
  %v142 = vshll.u32 %v43, 16
  %v144 = vor.u32 %v141, %v142
  %v146 = vshrl.u32 %v44, 16
  %v148 = vrot.slane %v146, 7
  %v149 = vshll.u32 %v44, 16
  %v151 = vor.u32 %v148, %v149
  %v153 = vshrl.u32 %v45, 16
  %v155 = vrot.slane %v153, 7
  %v156 = vshll.u32 %v45, 16
  %v158 = vor.u32 %v155, %v156
  %v160 = vshrl.u32 %v46, 16
  %v162 = vrot.slane %v160, 7
  %v163 = vshll.u32 %v46, 16
  %v165 = vor.u32 %v162, %v163
  %vm183 = vcmask 1040384
  %vm184 = vsmask.f32 256
  %vm185 = vmand %vm183, %vm184
  %v186 = vsel %vm185, 0, %v53
  %v187 = vsel %vm185, 0, %v60
  %v188 = vsel %vm185, 0, %v67
  %v189 = vsel %vm185, 0, %v74
  %v190 = vsel %vm185, 0, %v81
  %v191 = vsel %vm185, 0, %v88
  %v192 = vsel %vm185, 0, %v95
  %v193 = vsel %vm185, 0, %v102
  %v194 = vsel %vm185, 0, %v109
  %v195 = vsel %vm185, 0, %v116
  %v196 = vsel %vm185, 0, %v123
  %v197 = vsel %vm185, 0, %v130
  %v198 = vsel %vm185, 0, %v137
  %v199 = vsel %vm185, 0, %v144
  %v200 = vsel %vm185, 0, %v151
  %v201 = vsel %vm185, 0, %v158
  %v202 = vsel %vm185, 0, %v165
  %vm203 = vcmask 1044480
  %vm204 = vsmask.f32 4352
  %vm205 = vmand %vm203, %vm204
  %v206 = vsel %vm205, %v186, 0
  %v207 = vsel %vm205, %v187, 0
  %v208 = vsel %vm205, %v188, 0
  %v209 = vsel %vm205, %v189, 0
  %v210 = vsel %vm205, %v190, 0
  %v211 = vsel %vm205, %v191, 0
  %v212 = vsel %vm205, %v192, 0
  %v213 = vsel %vm205, %v193, 0
  %v214 = vsel %vm205, %v194, 0
  %v215 = vsel %vm205, %v195, 0
  %v216 = vsel %vm205, %v196, 0
  %v217 = vsel %vm205, %v197, 0
  %v218 = vsel %vm205, %v198, 0
  %v219 = vsel %vm205, %v199, 0
  %v220 = vsel %vm205, %v200, 0
  %v221 = vsel %vm205, %v201, 0
  %v222 = vsel %vm205, %v202, 0
  %v224 = vshrl.u32 %v206, 16
  %v226 = vshll.u32 %v206, 16
  %v228 = vrot.slane %v226, 1
  %v229 = vor.u32 %v224, %v228
  %v231 = vshrl.u32 %v207, 16
  %v233 = vshll.u32 %v207, 16
  %v235 = vrot.slane %v233, 1
  %v236 = vor.u32 %v231, %v235
  %v238 = vshrl.u32 %v208, 16
  %v240 = vshll.u32 %v208, 16
  %v242 = vrot.slane %v240, 1
  %v243 = vor.u32 %v238, %v242
  %v245 = vshrl.u32 %v209, 16
  %v247 = vshll.u32 %v209, 16
  %v249 = vrot.slane %v247, 1
  %v250 = vor.u32 %v245, %v249
  %v252 = vshrl.u32 %v210, 16
  %v254 = vshll.u32 %v210, 16
  %v256 = vrot.slane %v254, 1
  %v257 = vor.u32 %v252, %v256
  %v259 = vshrl.u32 %v211, 16
  %v261 = vshll.u32 %v211, 16
  %v263 = vrot.slane %v261, 1
  %v264 = vor.u32 %v259, %v263
  %v266 = vshrl.u32 %v212, 16
  %v268 = vshll.u32 %v212, 16
  %v270 = vrot.slane %v268, 1
  %v271 = vor.u32 %v266, %v270
  %v273 = vshrl.u32 %v213, 16
  %v275 = vshll.u32 %v213, 16
  %v277 = vrot.slane %v275, 1
  %v278 = vor.u32 %v273, %v277
  %v280 = vshrl.u32 %v215, 16
  %v282 = vshll.u32 %v215, 16
  %v284 = vrot.slane %v282, 1
  %v285 = vor.u32 %v280, %v284
  %v287 = vshrl.u32 %v216, 16
  %v289 = vshll.u32 %v216, 16
  %v291 = vrot.slane %v289, 1
  %v292 = vor.u32 %v287, %v291
  %v294 = vshrl.u32 %v217, 16
  %v296 = vshll.u32 %v217, 16
  %v298 = vrot.slane %v296, 1
  %v299 = vor.u32 %v294, %v298
  %v301 = vshrl.u32 %v218, 16
  %v303 = vshll.u32 %v218, 16
  %v305 = vrot.slane %v303, 1
  %v306 = vor.u32 %v301, %v305
  %v308 = vshrl.u32 %v219, 16
  %v310 = vshll.u32 %v219, 16
  %v312 = vrot.slane %v310, 1
  %v313 = vor.u32 %v308, %v312
  %v315 = vshrl.u32 %v220, 16
  %v317 = vshll.u32 %v220, 16
  %v319 = vrot.slane %v317, 1
  %v320 = vor.u32 %v315, %v319
  %v322 = vshrl.u32 %v221, 16
  %v324 = vshll.u32 %v221, 16
  %v326 = vrot.slane %v324, 1
  %v327 = vor.u32 %v322, %v326
  %328 = vrot.lane.b32.xlu0 %v229, 64
  %v329 = vpop.permute.xlu0 %328
  %330 = vrot.lane.b32.xlu0 %v236, 64
  %v331 = vpop.permute.xlu0 %330
  %332 = vrot.lane.b32.xlu0 %v243, 64
  %v333 = vpop.permute.xlu0 %332
  %334 = vrot.lane.b32.xlu0 %v250, 64
  %v335 = vpop.permute.xlu0 %334
  %336 = vrot.lane.b32.xlu0 %v257, 64
  %v337 = vpop.permute.xlu0 %336
  %338 = vrot.lane.b32.xlu0 %v264, 64
  %v339 = vpop.permute.xlu0 %338
  %340 = vrot.lane.b32.xlu0 %v271, 64
  %v341 = vpop.permute.xlu0 %340
  %342 = vrot.lane.b32.xlu0 %v278, 64
  %v343 = vpop.permute.xlu0 %342
  %344 = vrot.lane.b32.xlu0 %v285, 64
  %v345 = vpop.permute.xlu0 %344
  %346 = vrot.lane.b32.xlu0 %v292, 64
  %v347 = vpop.permute.xlu0 %346
  %348 = vrot.lane.b32.xlu0 %v299, 64
  %v349 = vpop.permute.xlu0 %348
  %350 = vrot.lane.b32.xlu0 %v306, 64
  %v351 = vpop.permute.xlu0 %350
  %352 = vrot.lane.b32.xlu0 %v313, 64
  %v353 = vpop.permute.xlu0 %352
  %354 = vrot.lane.b32.xlu0 %v320, 64
  %v355 = vpop.permute.xlu0 %354
  %356 = vrot.lane.b32.xlu0 %v327, 64
  %v357 = vpop.permute.xlu0 %356
  %v373 = vrot.slane %v206, 1
  %v374 = vrot.slane %v207, 1
  %v375 = vrot.slane %v208, 1
  %v376 = vrot.slane %v209, 1
  %v377 = vrot.slane %v210, 1
  %v378 = vrot.slane %v211, 1
  %v379 = vrot.slane %v212, 1
  %v380 = vrot.slane %v213, 1
  %v381 = vrot.slane %v215, 1
  %v382 = vrot.slane %v216, 1
  %v383 = vrot.slane %v217, 1
  %v384 = vrot.slane %v218, 1
  %v385 = vrot.slane %v219, 1
  %v386 = vrot.slane %v220, 1
  %v387 = vrot.slane %v221, 1
  %390 = vrot.lane.b32.xlu0 %v207, 64
  %v391 = vpop.permute.xlu0 %390
  %392 = vrot.lane.b32.xlu0 %v208, 64
  %v393 = vpop.permute.xlu0 %392
  %394 = vrot.lane.b32.xlu0 %v209, 64
  %v395 = vpop.permute.xlu0 %394
  %396 = vrot.lane.b32.xlu0 %v210, 64
  %v397 = vpop.permute.xlu0 %396
  %398 = vrot.lane.b32.xlu0 %v211, 64
  %v399 = vpop.permute.xlu0 %398
  %400 = vrot.lane.b32.xlu0 %v212, 64
  %v401 = vpop.permute.xlu0 %400
  %402 = vrot.lane.b32.xlu0 %v213, 64
  %v403 = vpop.permute.xlu0 %402
  %404 = vrot.lane.b32.xlu0 %v214, 64
  %v405 = vpop.permute.xlu0 %404
  %406 = vrot.lane.b32.xlu0 %v215, 64
  %v407 = vpop.permute.xlu0 %406
  %408 = vrot.lane.b32.xlu0 %v216, 64
  %v409 = vpop.permute.xlu0 %408
  %410 = vrot.lane.b32.xlu0 %v217, 64
  %v411 = vpop.permute.xlu0 %410
  %412 = vrot.lane.b32.xlu0 %v218, 64
  %v413 = vpop.permute.xlu0 %412
  %414 = vrot.lane.b32.xlu0 %v219, 64
  %v415 = vpop.permute.xlu0 %414
  %416 = vrot.lane.b32.xlu0 %v220, 64
  %v417 = vpop.permute.xlu0 %416
  %418 = vrot.lane.b32.xlu0 %v221, 64
  %v419 = vpop.permute.xlu0 %418
  %420 = vrot.lane.b32.xlu0 %v222, 64
  %v421 = vpop.permute.xlu0 %420
  %v423 = vshrl.u32 %v214, 16
  %v425 = vshll.u32 %v214, 16
  %v427 = vrot.slane %v425, 1
  %v428 = vor.u32 %v423, %v427
  %v430 = vshrl.u32 %v222, 16
  %v432 = vshll.u32 %v222, 16
  %v434 = vrot.slane %v432, 1
  %v435 = vor.u32 %v430, %v434
  %v436 = vrot.slane %v214, 1
  %v437 = vrot.slane %v222, 1
  %438 = vrot.lane.b32.xlu0 %v374, 64
  %v439 = vpop.permute.xlu0 %438
  %440 = vrot.lane.b32.xlu0 %v375, 64
  %v441 = vpop.permute.xlu0 %440
  %442 = vrot.lane.b32.xlu0 %v376, 64
  %v443 = vpop.permute.xlu0 %442
  %444 = vrot.lane.b32.xlu0 %v377, 64
  %v445 = vpop.permute.xlu0 %444
  %446 = vrot.lane.b32.xlu0 %v378, 64
  %v447 = vpop.permute.xlu0 %446
  %448 = vrot.lane.b32.xlu0 %v379, 64
  %v449 = vpop.permute.xlu0 %448
  %450 = vrot.lane.b32.xlu0 %v380, 64
  %v451 = vpop.permute.xlu0 %450
  %452 = vrot.lane.b32.xlu0 %v436, 64
  %v453 = vpop.permute.xlu0 %452
  %454 = vrot.lane.b32.xlu0 %v381, 64
  %v455 = vpop.permute.xlu0 %454
  %456 = vrot.lane.b32.xlu0 %v382, 64
  %v457 = vpop.permute.xlu0 %456
  %458 = vrot.lane.b32.xlu0 %v383, 64
  %v459 = vpop.permute.xlu0 %458
  %460 = vrot.lane.b32.xlu0 %v384, 64
  %v461 = vpop.permute.xlu0 %460
  %462 = vrot.lane.b32.xlu0 %v385, 64
  %v463 = vpop.permute.xlu0 %462
  %464 = vrot.lane.b32.xlu0 %v386, 64
  %v465 = vpop.permute.xlu0 %464
  %466 = vrot.lane.b32.xlu0 %v387, 64
  %v467 = vpop.permute.xlu0 %466
  %468 = vrot.lane.b32.xlu0 %v437, 64
  %v469 = vpop.permute.xlu0 %468
  %470 = vrot.lane.b32.xlu0 %v428, 64
  %v471 = vpop.permute.xlu0 %470
  %472 = vrot.lane.b32.xlu0 %v435, 64
  %v473 = vpop.permute.xlu0 %472
  %vm474 = vcmask 523264
  %v476 = vsel %vm474, %v206, %v329
  %v478 = vsel %vm474, %v207, %v331
  %v480 = vsel %vm474, %v208, %v333
  %v482 = vsel %vm474, %v209, %v335
  %v484 = vsel %vm474, %v210, %v337
  %v486 = vsel %vm474, %v211, %v339
  %v488 = vsel %vm474, %v212, %v341
  %v490 = vsel %vm474, %v213, %v343
  %v492 = vsel %vm474, %v215, %v345
  %v494 = vsel %vm474, %v216, %v347
  %v496 = vsel %vm474, %v217, %v349
  %v498 = vsel %vm474, %v218, %v351
  %v500 = vsel %vm474, %v219, %v353
  %v502 = vsel %vm474, %v220, %v355
  %v504 = vsel %vm474, %v221, %v357
  %v507 = vsel %vm474, %v373, %v391
  %v510 = vsel %vm474, %v374, %v393
  %v513 = vsel %vm474, %v375, %v395
  %v516 = vsel %vm474, %v376, %v397
  %v519 = vsel %vm474, %v377, %v399
  %v522 = vsel %vm474, %v378, %v401
  %v525 = vsel %vm474, %v379, %v403
  %v528 = vsel %vm474, %v380, %v405
  %v530 = vsel %vm474, %v373, %v407
  %v533 = vsel %vm474, %v381, %v409
  %v536 = vsel %vm474, %v382, %v411
  %v539 = vsel %vm474, %v383, %v413
  %v542 = vsel %vm474, %v384, %v415
  %v545 = vsel %vm474, %v385, %v417
  %v548 = vsel %vm474, %v386, %v419
  %v551 = vsel %vm474, %v387, %v421
  %v554 = vsel %vm474, %v236, %v439
  %v557 = vsel %vm474, %v243, %v441
  %v560 = vsel %vm474, %v250, %v443
  %v563 = vsel %vm474, %v257, %v445
  %v566 = vsel %vm474, %v264, %v447
  %v569 = vsel %vm474, %v271, %v449
  %v572 = vsel %vm474, %v278, %v451
  %v575 = vsel %vm474, %v428, %v453
  %v578 = vsel %vm474, %v285, %v455
  %v581 = vsel %vm474, %v292, %v457
  %v584 = vsel %vm474, %v299, %v459
  %v587 = vsel %vm474, %v306, %v461
  %v590 = vsel %vm474, %v313, %v463
  %v593 = vsel %vm474, %v320, %v465
  %v596 = vsel %vm474, %v327, %v467
  %v599 = vsel %vm474, %v435, %v469
  %v601 = vsel %vm474, %v214, %v471
  %v603 = vsel %vm474, %v222, %v473
  %v653 = vunpack.c.l.b16 %v476
  %v654 = vunpack.c.l.b16 %v507
  %v655 = vunpack.c.l.b16 %v554
  %v656 = vunpack.c.l.b16 %v480
  %v657 = vunpack.c.l.b16 %v375
  %v658 = vunpack.c.l.b16 %v478
  %v659 = vunpack.c.l.b16 %v510
  %v660 = vunpack.c.l.b16 %v557
  %v661 = vunpack.c.l.b16 %v482
  %v662 = vunpack.c.l.b16 %v376
  %v663 = vunpack.c.l.b16 %v513
  %v664 = vunpack.c.l.b16 %v560
  %v665 = vunpack.c.l.b16 %v484
  %v666 = vunpack.c.l.b16 %v377
  %v667 = vunpack.c.l.b16 %v516
  %v668 = vunpack.c.l.b16 %v563
  %v669 = vunpack.c.l.b16 %v486
  %v670 = vunpack.c.l.b16 %v378
  %v671 = vunpack.c.l.b16 %v519
  %v672 = vunpack.c.l.b16 %v566
  %v673 = vunpack.c.l.b16 %v488
  %v674 = vunpack.c.l.b16 %v379
  %v675 = vunpack.c.l.b16 %v522
  %v676 = vunpack.c.l.b16 %v569
  %v677 = vunpack.c.l.b16 %v490
  %v678 = vunpack.c.l.b16 %v380
  %v679 = vunpack.c.l.b16 %v525
  %v680 = vunpack.c.l.b16 %v572
  %v681 = vunpack.c.l.b16 %v601
  %v682 = vunpack.c.l.b16 %v436
  %v683 = vunpack.c.l.b16 %v528
  %v684 = vunpack.c.l.b16 %v575
  %v685 = vunpack.c.l.b16 %v373
  %v686 = vunpack.c.l.b16 %v530
  %v687 = vunpack.c.l.b16 %v578
  %v688 = vunpack.c.l.b16 %v494
  %v689 = vunpack.c.l.b16 %v382
  %v690 = vunpack.c.l.b16 %v492
  %v691 = vunpack.c.l.b16 %v533
  %v692 = vunpack.c.l.b16 %v581
  %v693 = vunpack.c.l.b16 %v496
  %v694 = vunpack.c.l.b16 %v383
  %v695 = vunpack.c.l.b16 %v536
  %v696 = vunpack.c.l.b16 %v584
  %v697 = vunpack.c.l.b16 %v498
  %v698 = vunpack.c.l.b16 %v384
  %v699 = vunpack.c.l.b16 %v539
  %v700 = vunpack.c.l.b16 %v587
  %v701 = vunpack.c.l.b16 %v500
  %v702 = vunpack.c.l.b16 %v385
  %v703 = vunpack.c.l.b16 %v542
  %v704 = vunpack.c.l.b16 %v590
  %v705 = vunpack.c.l.b16 %v502
  %v706 = vunpack.c.l.b16 %v386
  %v707 = vunpack.c.l.b16 %v545
  %v708 = vunpack.c.l.b16 %v593
  %v709 = vunpack.c.l.b16 %v504
  %v710 = vunpack.c.l.b16 %v387
  %v711 = vunpack.c.l.b16 %v548
  %v712 = vunpack.c.l.b16 %v596
  %v713 = vunpack.c.l.b16 %v603
  %v714 = vunpack.c.l.b16 %v437
  %v715 = vunpack.c.l.b16 %v551
  %v716 = vunpack.c.l.b16 %v599
  %v717 = vld [vmem:[%s1] sm:$0xf]
  %v718 = vld [vmem:[%s1 + $0x4] sm:$0xf]
  %v719 = vld [vmem:[%s1 + $0x8] sm:$0xf]
  %v720 = vld [vmem:[%s1 + $0xc] sm:$0xf]
  %v721 = vld [vmem:[%s1 + $0x10] sm:$0xf]
  %v722 = vld [vmem:[%s1 + $0x14] sm:$0xf]
  %v723 = vld [vmem:[%s1 + $0x18] sm:$0xf]
  %v724 = vld [vmem:[%s1 + $0x1c] sm:$0xf]
  %v725 = vld [vmem:[%s1 + $0x20] sm:$0xf]
  %v726 = vld [vmem:[%s1 + $0x24] sm:$0xf]
  %v727 = vld [vmem:[%s1 + $0x28] sm:$0xf]
  %v728 = vld [vmem:[%s1 + $0x2c] sm:$0xf]
  %v729 = vld [vmem:[%s1 + $0x30] sm:$0xf]
  %v730 = vld [vmem:[%s1 + $0x34] sm:$0xf]
  %v731 = vld [vmem:[%s1 + $0x38] sm:$0xf]
  %v732 = vld [vmem:[%s1 + $0x3c] sm:$0xf]
  %v733 = vld [vmem:[%s1 + $0x40] sm:$0xf]
  %v734 = vld [vmem:[%s1 + $0x44] sm:$0xf]
  %v735 = vld [vmem:[%s1 + $0x48] sm:$0xf]
  %v736 = vld [vmem:[%s1 + $0x4c] sm:$0xf]
  %v737 = vld [vmem:[%s1 + $0x50] sm:$0xf]
  %v738 = vld [vmem:[%s1 + $0x54] sm:$0xf]
  %v739 = vld [vmem:[%s1 + $0x58] sm:$0xf]
  %v740 = vld [vmem:[%s1 + $0x5c] sm:$0xf]
  %v741 = vld [vmem:[%s1 + $0x60] sm:$0xf]
  %v742 = vld [vmem:[%s1 + $0x64] sm:$0xf]
  %v743 = vld [vmem:[%s1 + $0x68] sm:$0xf]
  %v744 = vld [vmem:[%s1 + $0x6c] sm:$0xf]
  %v745 = vld [vmem:[%s1 + $0x70] sm:$0xf]
  %v746 = vld [vmem:[%s1 + $0x74] sm:$0xf]
  %v747 = vld [vmem:[%s1 + $0x78] sm:$0xf]
  %v748 = vld [vmem:[%s1 + $0x7c] sm:$0xf]
  %v749 = vld [vmem:[%s1 + $0x80] sm:$0xf]
  %v750 = vld [vmem:[%s1 + $0x84] sm:$0xf]
  %v751 = vld [vmem:[%s1 + $0x88] sm:$0xf]
  %v752 = vld [vmem:[%s1 + $0x8c] sm:$0xf]
  %v753 = vld [vmem:[%s1 + $0x90] sm:$0xf]
  %v754 = vld [vmem:[%s1 + $0x94] sm:$0xf]
  %v755 = vld [vmem:[%s1 + $0x98] sm:$0xf]
  %v756 = vld [vmem:[%s1 + $0x9c] sm:$0xf]
  %v757 = vld [vmem:[%s1 + $0xa0] sm:$0xf]
  %v758 = vld [vmem:[%s1 + $0xa4] sm:$0xf]
  %v759 = vld [vmem:[%s1 + $0xa8] sm:$0xf]
  %v760 = vld [vmem:[%s1 + $0xac] sm:$0xf]
  %v761 = vld [vmem:[%s1 + $0xb0] sm:$0xf]
  %v762 = vld [vmem:[%s1 + $0xb4] sm:$0xf]
  %v763 = vld [vmem:[%s1 + $0xb8] sm:$0xf]
  %v764 = vld [vmem:[%s1 + $0xbc] sm:$0xf]
  %v765 = vld [vmem:[%s1 + $0xc0] sm:$0xf]
  %v766 = vld [vmem:[%s1 + $0xc4] sm:$0xf]
  %v767 = vld [vmem:[%s1 + $0xc8] sm:$0xf]
  %v768 = vld [vmem:[%s1 + $0xcc] sm:$0xf]
  %v769 = vld [vmem:[%s1 + $0xd0] sm:$0xf]
  %v770 = vld [vmem:[%s1 + $0xd4] sm:$0xf]
  %v771 = vld [vmem:[%s1 + $0xd8] sm:$0xf]
  %v772 = vld [vmem:[%s1 + $0xdc] sm:$0xf]
  %v773 = vld [vmem:[%s1 + $0xe0] sm:$0xf]
  %v774 = vld [vmem:[%s1 + $0xe4] sm:$0xf]
  %v775 = vld [vmem:[%s1 + $0xe8] sm:$0xf]
  %v776 = vld [vmem:[%s1 + $0xec] sm:$0xf]
  %v777 = vld [vmem:[%s1 + $0xf0] sm:$0xf]
  %v778 = vld [vmem:[%s1 + $0xf4] sm:$0xf]
  %v779 = vld [vmem:[%s1 + $0xf8] sm:$0xf]
  %v780 = vld [vmem:[%s1 + $0xfc] sm:$0xf]
  %v781 = vld [vmem:[%s1 + $0x100] sm:$0xf]
  %v782 = vld [vmem:[%s1 + $0x104] sm:$0xf]
  %v783 = vld [vmem:[%s1 + $0x108] sm:$0xf]
  %v784 = vld [vmem:[%s1 + $0x10c] sm:$0xf]
  %v785 = vld [vmem:[%s1 + $0x110] sm:$0xf]
  %v786 = vld [vmem:[%s1 + $0x114] sm:$0xf]
  %v787 = vld [vmem:[%s1 + $0x118] sm:$0xf]
  %v788 = vld [vmem:[%s1 + $0x11c] sm:$0xf]
  %v789 = vld [vmem:[%s2] sm:$0x1]
  %v791 = vperm.slane %v789, 0
  %v793 = vpack.c.b16 %v658, %v653
  %v794 = vpack.c.b16 %v659, %v654
  %v795 = vpack.c.b16 %v660, %v655
  %v796 = vpack.c.b16 %v661, %v656
  %v797 = vpack.c.b16 %v662, %v657
  %v798 = vpack.c.b16 %v667, %v663
  %v799 = vpack.c.b16 %v668, %v664
  %v800 = vpack.c.b16 %v669, %v665
  %v801 = vpack.c.b16 %v670, %v666
  %v802 = vpack.c.b16 %v675, %v671
  %v803 = vpack.c.b16 %v676, %v672
  %v804 = vpack.c.b16 %v677, %v673
  %v805 = vpack.c.b16 %v678, %v674
  %v806 = vpack.c.b16 %v683, %v679
  %v807 = vpack.c.b16 %v684, %v680
  %v808 = vpack.c.b16 %v653, %v681
  %v809 = vpack.c.b16 %v685, %v682
  %v810 = vpack.c.b16 %v690, %v653
  %v811 = vpack.c.b16 %v691, %v686
  %v812 = vpack.c.b16 %v692, %v687
  %v813 = vpack.c.b16 %v693, %v688
  %v814 = vpack.c.b16 %v694, %v689
  %v815 = vpack.c.b16 %v699, %v695
  %v816 = vpack.c.b16 %v700, %v696
  %v817 = vpack.c.b16 %v701, %v697
  %v818 = vpack.c.b16 %v702, %v698
  %v819 = vpack.c.b16 %v707, %v703
  %v820 = vpack.c.b16 %v708, %v704
  %v821 = vpack.c.b16 %v709, %v705
  %v822 = vpack.c.b16 %v710, %v706
  %v823 = vpack.c.b16 %v715, %v711
  %v824 = vpack.c.b16 %v716, %v712
  %v825 = vpack.c.b16 %v653, %v713
  %v826 = vpack.c.b16 %v685, %v714
  %v925 = vunpack.c.l.b16 %v717
  %v926 = vunpack.c.l.b16 %v718
  %v927 = vunpack.c.l.b16 %v719
  %v928 = vunpack.c.l.b16 %v720
  %v929 = vunpack.c.l.b16 %v721
  %v930 = vunpack.c.l.b16 %v722
  %v931 = vunpack.c.l.b16 %v723
  %v932 = vunpack.c.l.b16 %v724
  %v933 = vunpack.c.l.b16 %v725
  %v934 = vunpack.c.l.b16 %v726
  %v935 = vunpack.c.l.b16 %v727
  %v936 = vunpack.c.l.b16 %v728
  %v937 = vunpack.c.l.b16 %v729
  %v938 = vunpack.c.l.b16 %v730
  %v939 = vunpack.c.l.b16 %v731
  %v940 = vunpack.c.l.b16 %v732
  %v941 = vunpack.c.l.b16 %v733
  %v942 = vunpack.c.l.b16 %v734
  %v943 = vunpack.c.l.b16 %v735
  %v944 = vunpack.c.l.b16 %v736
  %v945 = vunpack.c.l.b16 %v737
  %v946 = vunpack.c.l.b16 %v738
  %v947 = vunpack.c.l.b16 %v739
  %v948 = vunpack.c.l.b16 %v740
  %v949 = vunpack.c.l.b16 %v741
  %v950 = vunpack.c.l.b16 %v742
  %v951 = vunpack.c.l.b16 %v743
  %v952 = vunpack.c.l.b16 %v744
  %v953 = vunpack.c.l.b16 %v745
  %v954 = vunpack.c.l.b16 %v746
  %v955 = vunpack.c.l.b16 %v747
  %v956 = vunpack.c.l.b16 %v748
  %v957 = vunpack.c.l.b16 %v749
  %v958 = vunpack.c.l.b16 %v750
  %v959 = vunpack.c.l.b16 %v751
  %v960 = vunpack.c.l.b16 %v752
  %v961 = vunpack.c.l.b16 %v753
  %v962 = vunpack.c.l.b16 %v754
  %v963 = vunpack.c.l.b16 %v755
  %v964 = vunpack.c.l.b16 %v756
  %v965 = vunpack.c.l.b16 %v757
  %v966 = vunpack.c.l.b16 %v758
  %v967 = vunpack.c.l.b16 %v759
  %v968 = vunpack.c.l.b16 %v760
  %v969 = vunpack.c.l.b16 %v761
  %v970 = vunpack.c.l.b16 %v762
  %v971 = vunpack.c.l.b16 %v763
  %v972 = vunpack.c.l.b16 %v764
  %v973 = vunpack.c.l.b16 %v765
  %v974 = vunpack.c.l.b16 %v766
  %v975 = vunpack.c.l.b16 %v767
  %v976 = vunpack.c.l.b16 %v768
  %v977 = vunpack.c.l.b16 %v769
  %v978 = vunpack.c.l.b16 %v770
  %v979 = vunpack.c.l.b16 %v771
  %v980 = vunpack.c.l.b16 %v772
  %v981 = vunpack.c.l.b16 %v773
  %v982 = vunpack.c.l.b16 %v774
  %v983 = vunpack.c.l.b16 %v775
  %v984 = vunpack.c.l.b16 %v776
  %v985 = vunpack.c.l.b16 %v777
  %v986 = vunpack.c.l.b16 %v778
  %v987 = vunpack.c.l.b16 %v779
  %v988 = vunpack.c.l.b16 %v780
  %v989 = vunpack.c.l.b16 %v781
  %v990 = vunpack.c.l.b16 %v782
  %v991 = vunpack.c.l.b16 %v783
  %v992 = vunpack.c.l.b16 %v784
  %v993 = vunpack.c.l.b16 %v785
  %v994 = vunpack.c.l.b16 %v786
  %v995 = vunpack.c.l.b16 %v787
  %v996 = vunpack.c.l.b16 %v788
  %v997 = vpack.c.b16 %v926, %v925
  %v998 = vpack.c.b16 %v928, %v927
  %v999 = vpack.c.b16 %v930, %v929
  %v1000 = vpack.c.b16 %v932, %v931
  %v1001 = vpack.c.b16 %v934, %v933
  %v1002 = vpack.c.b16 %v936, %v935
  %v1003 = vpack.c.b16 %v938, %v937
  %v1004 = vpack.c.b16 %v940, %v939
  %v1005 = vpack.c.b16 %v942, %v941
  %v1006 = vpack.c.b16 %v944, %v943
  %v1007 = vpack.c.b16 %v946, %v945
  %v1008 = vpack.c.b16 %v948, %v947
  %v1009 = vpack.c.b16 %v950, %v949
  %v1010 = vpack.c.b16 %v952, %v951
  %v1011 = vpack.c.b16 %v954, %v953
  %v1012 = vpack.c.b16 %v956, %v955
  %v1013 = vpack.c.b16 %v958, %v957
  %v1014 = vpack.c.b16 %v960, %v959
  %v1015 = vpack.c.b16 %v962, %v961
  %v1016 = vpack.c.b16 %v964, %v963
  %v1017 = vpack.c.b16 %v966, %v965
  %v1018 = vpack.c.b16 %v968, %v967
  %v1019 = vpack.c.b16 %v970, %v969
  %v1020 = vpack.c.b16 %v972, %v971
  %v1021 = vpack.c.b16 %v974, %v973
  %v1022 = vpack.c.b16 %v976, %v975
  %v1023 = vpack.c.b16 %v978, %v977
  %v1024 = vpack.c.b16 %v980, %v979
  %v1025 = vpack.c.b16 %v982, %v981
  %v1026 = vpack.c.b16 %v984, %v983
  %v1027 = vpack.c.b16 %v986, %v985
  %v1028 = vpack.c.b16 %v988, %v987
  %v1029 = vpack.c.b16 %v990, %v989
  %v1030 = vpack.c.b16 %v992, %v991
  %v1031 = vpack.c.b16 %v994, %v993
  %v1032 = vpack.c.b16 %v996, %v995
  %v1070 = vsel %vm474, %v797, 0
  %v1073 = vsel %vm474, %v801, 0
  %v1076 = vsel %vm474, %v805, 0
  %v1079 = vsel %vm474, %v809, 0
  %v1082 = vsel %vm474, %v814, 0
  %v1085 = vsel %vm474, %v818, 0
  %v1088 = vsel %vm474, %v822, 0
  %v1091 = vsel %vm474, %v826, 0
  %1093 = vmatpush.bf16.msra.mxu0 %v1004
  %1094 = vmatpush.bf16.msra.mxu0 %v1003
  %1095 = vmatpush.bf16.msra.mxu0 %v1002
  %1096 = vmatpush.bf16.msra.mxu0 %v1001
  %1097 = vmatpush.bf16.msra.mxu0 %v1000
  %1098 = vmatpush.bf16.msra.mxu0 %v999
  %1099 = vmatpush.bf16.msra.mxu0 %v998
  %1100 = vmatpush.bf16.msra.mxu0 %v997
  %1101 = vmatmul.bf16.gmra.mxu0 %v793
  %v1102 = vpop.f32.mrf.mxu0
  %v1103 = vadd.f32 %v791, %v1102
  %v1104 = vpop.f32.mrf.mxu0
  %v1105 = vadd.f32 %v791, %v1104
  %1106 = vmatmul.bf16.gmra.mxu0 %v796
  %v1107 = vpop.f32.mrf.mxu0
  %v1108 = vadd.f32 %v791, %v1107
  %v1109 = vpop.f32.mrf.mxu0
  %v1110 = vadd.f32 %v791, %v1109
  %1111 = vmatmul.bf16.gmra.mxu0 %v800
  %v1112 = vpop.f32.mrf.mxu0
  %v1113 = vadd.f32 %v791, %v1112
  %v1114 = vpop.f32.mrf.mxu0
  %v1115 = vadd.f32 %v791, %v1114
  %1116 = vmatmul.bf16.gmra.mxu0 %v804
  %v1117 = vpop.f32.mrf.mxu0
  %v1118 = vadd.f32 %v791, %v1117
  %v1119 = vpop.f32.mrf.mxu0
  %v1120 = vadd.f32 %v791, %v1119
  %1121 = vmatmul.bf16.gmra.mxu0 %v810
  %v1122 = vpop.f32.mrf.mxu0
  %v1123 = vadd.f32 %v791, %v1122
  %v1124 = vpop.f32.mrf.mxu0
  %v1125 = vadd.f32 %v791, %v1124
  %1126 = vmatmul.bf16.gmra.mxu0 %v813
  %v1127 = vpop.f32.mrf.mxu0
  %v1128 = vadd.f32 %v791, %v1127
  %v1129 = vpop.f32.mrf.mxu0
  %v1130 = vadd.f32 %v791, %v1129
  %1131 = vmatmul.bf16.gmra.mxu0 %v817
  %v1132 = vpop.f32.mrf.mxu0
  %v1133 = vadd.f32 %v791, %v1132
  %v1134 = vpop.f32.mrf.mxu0
  %v1135 = vadd.f32 %v791, %v1134
  %1136 = vmatmul.bf16.gmra.mxu0 %v821
  %v1137 = vpop.f32.mrf.mxu0
  %v1138 = vadd.f32 %v791, %v1137
  %v1139 = vpop.f32.mrf.mxu0
  %v1140 = vadd.f32 %v791, %v1139
  %1141 = vdwg.mxu0
  %1142 = vmatpush.bf16.msra.mxu0 %v1012
  %1143 = vmatpush.bf16.msra.mxu0 %v1011
  %1144 = vmatpush.bf16.msra.mxu0 %v1010
  %1145 = vmatpush.bf16.msra.mxu0 %v1009
  %1146 = vmatpush.bf16.msra.mxu0 %v1008
  %1147 = vmatpush.bf16.msra.mxu0 %v1007
  %1148 = vmatpush.bf16.msra.mxu0 %v1006
  %1149 = vmatpush.bf16.msra.mxu0 %v1005
  %1150 = vmatmul.bf16.gmra.mxu0 %v794
  %v1151 = vpop.f32.mrf.mxu0
  %v1152 = vadd.f32 %v1103, %v1151
  %v1153 = vpop.f32.mrf.mxu0
  %v1154 = vadd.f32 %v1105, %v1153
  %1155 = vmatmul.bf16.gmra.mxu0 %v798
  %v1156 = vpop.f32.mrf.mxu0
  %v1157 = vadd.f32 %v1108, %v1156
  %v1158 = vpop.f32.mrf.mxu0
  %v1159 = vadd.f32 %v1110, %v1158
  %1160 = vmatmul.bf16.gmra.mxu0 %v802
  %v1161 = vpop.f32.mrf.mxu0
  %v1162 = vadd.f32 %v1113, %v1161
  %v1163 = vpop.f32.mrf.mxu0
  %v1164 = vadd.f32 %v1115, %v1163
  %1165 = vmatmul.bf16.gmra.mxu0 %v806
  %v1166 = vpop.f32.mrf.mxu0
  %v1167 = vadd.f32 %v1118, %v1166
  %v1168 = vpop.f32.mrf.mxu0
  %v1169 = vadd.f32 %v1120, %v1168
  %1170 = vmatmul.bf16.gmra.mxu0 %v811
  %v1171 = vpop.f32.mrf.mxu0
  %v1172 = vadd.f32 %v1123, %v1171
  %v1173 = vpop.f32.mrf.mxu0
  %v1174 = vadd.f32 %v1125, %v1173
  %1175 = vmatmul.bf16.gmra.mxu0 %v815
  %v1176 = vpop.f32.mrf.mxu0
  %v1177 = vadd.f32 %v1128, %v1176
  %v1178 = vpop.f32.mrf.mxu0
  %v1179 = vadd.f32 %v1130, %v1178
  %1180 = vmatmul.bf16.gmra.mxu0 %v819
  %v1181 = vpop.f32.mrf.mxu0
  %v1182 = vadd.f32 %v1133, %v1181
  %v1183 = vpop.f32.mrf.mxu0
  %v1184 = vadd.f32 %v1135, %v1183
  %1185 = vmatmul.bf16.gmra.mxu0 %v823
  %v1186 = vpop.f32.mrf.mxu0
  %v1187 = vadd.f32 %v1138, %v1186
  %v1188 = vpop.f32.mrf.mxu0
  %v1189 = vadd.f32 %v1140, %v1188
  %1190 = vdwg.mxu0
  %1191 = vmatpush.bf16.msra.mxu0 %v1020
  %1192 = vmatpush.bf16.msra.mxu0 %v1019
  %1193 = vmatpush.bf16.msra.mxu0 %v1018
  %1194 = vmatpush.bf16.msra.mxu0 %v1017
  %1195 = vmatpush.bf16.msra.mxu0 %v1016
  %1196 = vmatpush.bf16.msra.mxu0 %v1015
  %1197 = vmatpush.bf16.msra.mxu0 %v1014
  %1198 = vmatpush.bf16.msra.mxu0 %v1013
  %1199 = vmatmul.bf16.gmra.mxu0 %v795
  %v1200 = vpop.f32.mrf.mxu0
  %v1201 = vadd.f32 %v1152, %v1200
  %v1202 = vpop.f32.mrf.mxu0
  %v1203 = vadd.f32 %v1154, %v1202
  %1204 = vmatmul.bf16.gmra.mxu0 %v799
  %v1205 = vpop.f32.mrf.mxu0
  %v1206 = vadd.f32 %v1157, %v1205
  %v1207 = vpop.f32.mrf.mxu0
  %v1208 = vadd.f32 %v1159, %v1207
  %1209 = vmatmul.bf16.gmra.mxu0 %v803
  %v1210 = vpop.f32.mrf.mxu0
  %v1211 = vadd.f32 %v1162, %v1210
  %v1212 = vpop.f32.mrf.mxu0
  %v1213 = vadd.f32 %v1164, %v1212
  %1214 = vmatmul.bf16.gmra.mxu0 %v807
  %v1215 = vpop.f32.mrf.mxu0
  %v1216 = vadd.f32 %v1167, %v1215
  %v1217 = vpop.f32.mrf.mxu0
  %v1218 = vadd.f32 %v1169, %v1217
  %1219 = vmatmul.bf16.gmra.mxu0 %v812
  %v1220 = vpop.f32.mrf.mxu0
  %v1221 = vadd.f32 %v1172, %v1220
  %v1222 = vpop.f32.mrf.mxu0
  %v1223 = vadd.f32 %v1174, %v1222
  %1224 = vmatmul.bf16.gmra.mxu0 %v816
  %v1225 = vpop.f32.mrf.mxu0
  %v1226 = vadd.f32 %v1177, %v1225
  %v1227 = vpop.f32.mrf.mxu0
  %v1228 = vadd.f32 %v1179, %v1227
  %1229 = vmatmul.bf16.gmra.mxu0 %v820
  %v1230 = vpop.f32.mrf.mxu0
  %v1231 = vadd.f32 %v1182, %v1230
  %v1232 = vpop.f32.mrf.mxu0
  %v1233 = vadd.f32 %v1184, %v1232
  %1234 = vmatmul.bf16.gmra.mxu0 %v824
  %v1235 = vpop.f32.mrf.mxu0
  %v1236 = vadd.f32 %v1187, %v1235
  %v1237 = vpop.f32.mrf.mxu0
  %v1238 = vadd.f32 %v1189, %v1237
  %1239 = vdwg.mxu0
  %1240 = vmatpush.bf16.msra.mxu0 %v1028
  %1241 = vmatpush.bf16.msra.mxu0 %v1027
  %1242 = vmatpush.bf16.msra.mxu0 %v1026
  %1243 = vmatpush.bf16.msra.mxu0 %v1025
  %1244 = vmatpush.bf16.msra.mxu0 %v1024
  %1245 = vmatpush.bf16.msra.mxu0 %v1023
  %1246 = vmatpush.bf16.msra.mxu0 %v1022
  %1247 = vmatpush.bf16.msra.mxu0 %v1021
  %1248 = vmatmul.bf16.gmra.mxu0 %v796
  %v1249 = vpop.f32.mrf.mxu0
  %v1250 = vadd.f32 %v1201, %v1249
  %v1251 = vpop.f32.mrf.mxu0
  %v1252 = vadd.f32 %v1203, %v1251
  %1253 = vmatmul.bf16.gmra.mxu0 %v800
  %v1254 = vpop.f32.mrf.mxu0
  %v1255 = vadd.f32 %v1206, %v1254
  %v1256 = vpop.f32.mrf.mxu0
  %v1257 = vadd.f32 %v1208, %v1256
  %1258 = vmatmul.bf16.gmra.mxu0 %v804
  %v1259 = vpop.f32.mrf.mxu0
  %v1260 = vadd.f32 %v1211, %v1259
  %v1261 = vpop.f32.mrf.mxu0
  %v1262 = vadd.f32 %v1213, %v1261
  %1263 = vmatmul.bf16.gmra.mxu0 %v808
  %v1264 = vpop.f32.mrf.mxu0
  %v1265 = vadd.f32 %v1216, %v1264
  %v1266 = vpop.f32.mrf.mxu0
  %v1267 = vadd.f32 %v1218, %v1266
  %1268 = vmatmul.bf16.gmra.mxu0 %v813
  %v1269 = vpop.f32.mrf.mxu0
  %v1270 = vadd.f32 %v1221, %v1269
  %v1271 = vpop.f32.mrf.mxu0
  %v1272 = vadd.f32 %v1223, %v1271
  %1273 = vmatmul.bf16.gmra.mxu0 %v817
  %v1274 = vpop.f32.mrf.mxu0
  %v1275 = vadd.f32 %v1226, %v1274
  %v1276 = vpop.f32.mrf.mxu0
  %v1277 = vadd.f32 %v1228, %v1276
  %1278 = vmatmul.bf16.gmra.mxu0 %v821
  %v1279 = vpop.f32.mrf.mxu0
  %v1280 = vadd.f32 %v1231, %v1279
  %v1281 = vpop.f32.mrf.mxu0
  %v1282 = vadd.f32 %v1233, %v1281
  %1283 = vmatmul.bf16.gmra.mxu0 %v825
  %v1284 = vpop.f32.mrf.mxu0
  %v1285 = vadd.f32 %v1236, %v1284
  %v1286 = vpop.f32.mrf.mxu0
  %v1287 = vadd.f32 %v1238, %v1286
  %1288 = vdwg.mxu0
  %1289 = vmatpush.bf16.msra.mxu0 0
  %1290 = vmatpush.bf16.msra.mxu0 0
  %1291 = vmatpush.bf16.msra.mxu0 0
  %1292 = vmatpush.bf16.msra.mxu0 0
  %1293 = vmatpush.bf16.msra.mxu0 %v1032
  %1294 = vmatpush.bf16.msra.mxu0 %v1031
  %1295 = vmatpush.bf16.msra.mxu0 %v1030
  %1296 = vmatpush.bf16.msra.mxu0 %v1029
  %1297 = vmatmul.bf16.gmra.mxu0 %v1070
  %v1298 = vpop.f32.mrf.mxu0
  %v1299 = vadd.f32 %v1250, %v1298
  %v1300 = vpop.f32.mrf.mxu0
  %v1301 = vadd.f32 %v1252, %v1300
  %1302 = vmatmul.bf16.gmra.mxu0 %v1073
  %v1303 = vpop.f32.mrf.mxu0
  %v1304 = vadd.f32 %v1255, %v1303
  %v1305 = vpop.f32.mrf.mxu0
  %v1306 = vadd.f32 %v1257, %v1305
  %1307 = vmatmul.bf16.gmra.mxu0 %v1076
  %v1308 = vpop.f32.mrf.mxu0
  %v1309 = vadd.f32 %v1260, %v1308
  %v1310 = vpop.f32.mrf.mxu0
  %v1311 = vadd.f32 %v1262, %v1310
  %1312 = vmatmul.bf16.gmra.mxu0 %v1079
  %v1313 = vpop.f32.mrf.mxu0
  %v1314 = vadd.f32 %v1265, %v1313
  %v1315 = vpop.f32.mrf.mxu0
  %v1316 = vadd.f32 %v1267, %v1315
  %1317 = vmatmul.bf16.gmra.mxu0 %v1082
  %v1318 = vpop.f32.mrf.mxu0
  %v1319 = vadd.f32 %v1270, %v1318
  %v1320 = vpop.f32.mrf.mxu0
  %v1321 = vadd.f32 %v1272, %v1320
  %1322 = vmatmul.bf16.gmra.mxu0 %v1085
  %v1323 = vpop.f32.mrf.mxu0
  %v1324 = vadd.f32 %v1275, %v1323
  %v1325 = vpop.f32.mrf.mxu0
  %v1326 = vadd.f32 %v1277, %v1325
  %1327 = vmatmul.bf16.gmra.mxu0 %v1088
  %v1328 = vpop.f32.mrf.mxu0
  %v1329 = vadd.f32 %v1280, %v1328
  %v1330 = vpop.f32.mrf.mxu0
  %v1331 = vadd.f32 %v1282, %v1330
  %1332 = vmatmul.bf16.gmra.mxu0 %v1091
  %v1333 = vpop.f32.mrf.mxu0
  %v1334 = vadd.f32 %v1285, %v1333
  %v1335 = vpop.f32.mrf.mxu0
  %v1336 = vadd.f32 %v1287, %v1335
  %1337 = vdwg.mxu0
  %v1338 = vmax.f32 %v1299, 0.0
  %v1339 = vmax.f32 %v1301, 0.0
  %v1340 = vmax.f32 %v1304, 0.0
  %v1341 = vmax.f32 %v1306, 0.0
  %v1342 = vmax.f32 %v1309, 0.0
  %v1343 = vmax.f32 %v1311, 0.0
  %v1344 = vmax.f32 %v1314, 0.0
  %v1345 = vmax.f32 %v1316, 0.0
  %v1346 = vmax.f32 %v1319, 0.0
  %v1347 = vmax.f32 %v1321, 0.0
  %v1348 = vmax.f32 %v1324, 0.0
  %v1349 = vmax.f32 %v1326, 0.0
  %v1350 = vmax.f32 %v1329, 0.0
  %v1351 = vmax.f32 %v1331, 0.0
  %v1352 = vmax.f32 %v1334, 0.0
  %v1353 = vmax.f32 %v1336, 0.0
  %1354 = vst.msk [vmem:[%s3] sm:$0xff] %vm474, %v1338
  %1355 = vst.msk [vmem:[%s3 + $0x8] sm:$0xff] %vm474, %v1339
  %1356 = vst.msk [vmem:[%s3 + $0x10] sm:$0xff] %vm474, %v1340
  %1357 = vst.msk [vmem:[%s3 + $0x18] sm:$0xff] %vm474, %v1341
  %1358 = vst.msk [vmem:[%s3 + $0x20] sm:$0xff] %vm474, %v1342
  %1359 = vst.msk [vmem:[%s3 + $0x28] sm:$0xff] %vm474, %v1343
  %1360 = vst.msk [vmem:[%s3 + $0x30] sm:$0xff] %vm474, %v1344
  %1361 = vst.msk [vmem:[%s3 + $0x38] sm:$0xff] %vm474, %v1345
  %1362 = vst.msk [vmem:[%s3 + $0x40] sm:$0xff] %vm474, %v1346
  %1363 = vst.msk [vmem:[%s3 + $0x48] sm:$0xff] %vm474, %v1347
  %1364 = vst.msk [vmem:[%s3 + $0x50] sm:$0xff] %vm474, %v1348
  %1365 = vst.msk [vmem:[%s3 + $0x58] sm:$0xff] %vm474, %v1349
  %1366 = vst.msk [vmem:[%s3 + $0x60] sm:$0xff] %vm474, %v1350
  %1367 = vst.msk [vmem:[%s3 + $0x68] sm:$0xff] %vm474, %v1351
  %1368 = vst.msk [vmem:[%s3 + $0x70] sm:$0xff] %vm474, %v1352
  %1369 = vst.msk [vmem:[%s3 + $0x78] sm:$0xff] %vm474, %v1353
  // Predicated region
  $region14: #{forward.9} parent=0 // pred_check
    _
  $region15: #{forward.9} parent=0 // pred_check_branch
    %1371 = sbr.rel (0) target = $region17
  $region16: #{forward.9} parent=0 // pred_region
    _
  $region17: #{forward.9} parent=0 // pred_fallthru
    _
  // Predicated region
  $region18: #{forward.9} parent=0 // pred_check
    _
  $region19: #{forward.9} parent=0 // pred_check_branch
    %1373 = sbr.rel (0) target = $region21
  $region20: #{forward.9} parent=0 // pred_region
    _
  $region21: #{forward.9} parent=0 // pred_fallthru
    _

// kernel: forward.11
$region0: #{forward.11}
  #allocation0 [shape = 'u32[]', space=smem, size = 0x4, offset = 0x4, fixed_abs, tag = 'smem constant byte address 0x4 - core index']
  #allocation1 [shape = 'u32[72,128]{1,0:T(1,128)}', space=vmem, size = 0x9000, scoped, tag = 'internal scratch']
  %s0 = inlined_call_operand.vmem [shape: f32[2,512], index: 0, kind: input, shape index: {}]
  %s1 = inlined_call_operand.vmem [shape: bf16[512,15], index: 1, kind: input, shape index: {}]
  %s2 = inlined_call_operand.vmem [shape: f32[1,15], index: 2, kind: input, shape index: {}]
  %s3 = inlined_call_operand.vmem [shape: f32[2,15], index: 3, kind: output, shape index: {}]
  %s4 = sld [smem:[#allocation0]]
  $region22: #{forward.11} parent=0
    _
  %s6 = ssub.s32 1, %s4
  %s7 = scalar_select 0, %s6, %s4
  // Predicated region
  $region2: #{forward.11} parent=0 // pred_check
    _
  $region3: #{forward.11} parent=0 // pred_check_branch
    %9 = sbr.rel (0) target = $region5
  $region4: #{forward.11} parent=0 // pred_region
    _
  $region5: #{forward.11} parent=0 // pred_fallthru
    _
  // Predicated region
  $region6: #{forward.11} parent=0 // pred_check
    _
  $region7: #{forward.11} parent=0 // pred_check_branch
    %11 = sbr.rel (0) target = $region9
  $region8: #{forward.11} parent=0 // pred_region
    _
  $region9: #{forward.11} parent=0 // pred_fallthru
    _
  // Predicated region
  $region10: #{forward.11} parent=0 // pred_check
    _
  $region11: #{forward.11} parent=0 // pred_check_branch
    %13 = sbr.rel (0) target = $region13
  $region12: #{forward.11} parent=0 // pred_region
    _
  $region13: #{forward.11} parent=0 // pred_fallthru
    _
  %v14 = vld [vmem:[%s0] sm:$0xff]
  %16 = vst [vmem:[#allocation1] ss:$4 sm:$0xff] %v14
  %v17 = vld.sshfl [vmem:[#allocation1] sm:$0xff pattern:$0x73625140]
  %v18 = vld.sshfl [vmem:[#allocation1 + $0x8] sm:$0xff pattern:$0x73625140]
  %v19 = vld.sshfl [vmem:[#allocation1 + $0x10] sm:$0xff pattern:$0x73625140]
  %v20 = vld.sshfl [vmem:[#allocation1 + $0x18] sm:$0xff pattern:$0x73625140]
  %v25 = vpack.c.bf16 %v17, %v17
  %v26 = vpack.c.bf16 %v18, %v18
  %v27 = vpack.c.bf16 %v19, %v19
  %v28 = vpack.c.bf16 %v20, %v20
  %v29 = vld [vmem:[%s1] sm:$0xf]
  %v30 = vld [vmem:[%s1 + $0x4] sm:$0xf]
  %v31 = vld [vmem:[%s1 + $0x8] sm:$0xf]
  %v32 = vld [vmem:[%s1 + $0xc] sm:$0xf]
  %v33 = vld [vmem:[%s1 + $0x10] sm:$0xf]
  %v34 = vld [vmem:[%s1 + $0x14] sm:$0xf]
  %v35 = vld [vmem:[%s1 + $0x18] sm:$0xf]
  %v36 = vld [vmem:[%s1 + $0x1c] sm:$0xf]
  %v37 = vld [vmem:[%s1 + $0x20] sm:$0xf]
  %v38 = vld [vmem:[%s1 + $0x24] sm:$0xf]
  %v39 = vld [vmem:[%s1 + $0x28] sm:$0xf]
  %v40 = vld [vmem:[%s1 + $0x2c] sm:$0xf]
  %v41 = vld [vmem:[%s1 + $0x30] sm:$0xf]
  %v42 = vld [vmem:[%s1 + $0x34] sm:$0xf]
  %v43 = vld [vmem:[%s1 + $0x38] sm:$0xf]
  %v44 = vld [vmem:[%s1 + $0x3c] sm:$0xf]
  %v45 = vld [vmem:[%s1 + $0x40] sm:$0xf]
  %v46 = vld [vmem:[%s1 + $0x44] sm:$0xf]
  %v47 = vld [vmem:[%s1 + $0x48] sm:$0xf]
  %v48 = vld [vmem:[%s1 + $0x4c] sm:$0xf]
  %v49 = vld [vmem:[%s1 + $0x50] sm:$0xf]
  %v50 = vld [vmem:[%s1 + $0x54] sm:$0xf]
  %v51 = vld [vmem:[%s1 + $0x58] sm:$0xf]
  %v52 = vld [vmem:[%s1 + $0x5c] sm:$0xf]
  %v53 = vld [vmem:[%s1 + $0x60] sm:$0xf]
  %v54 = vld [vmem:[%s1 + $0x64] sm:$0xf]
  %v55 = vld [vmem:[%s1 + $0x68] sm:$0xf]
  %v56 = vld [vmem:[%s1 + $0x6c] sm:$0xf]
  %v57 = vld [vmem:[%s1 + $0x70] sm:$0xf]
  %v58 = vld [vmem:[%s1 + $0x74] sm:$0xf]
  %v59 = vld [vmem:[%s1 + $0x78] sm:$0xf]
  %v60 = vld [vmem:[%s1 + $0x7c] sm:$0xf]
  %v61 = vld [vmem:[%s1 + $0x80] sm:$0xf]
  %v62 = vld [vmem:[%s1 + $0x84] sm:$0xf]
  %v63 = vld [vmem:[%s1 + $0x88] sm:$0xf]
  %v64 = vld [vmem:[%s1 + $0x8c] sm:$0xf]
  %v65 = vld [vmem:[%s1 + $0x90] sm:$0xf]
  %v66 = vld [vmem:[%s1 + $0x94] sm:$0xf]
  %v67 = vld [vmem:[%s1 + $0x98] sm:$0xf]
  %v68 = vld [vmem:[%s1 + $0x9c] sm:$0xf]
  %v69 = vld [vmem:[%s1 + $0xa0] sm:$0xf]
  %v70 = vld [vmem:[%s1 + $0xa4] sm:$0xf]
  %v71 = vld [vmem:[%s1 + $0xa8] sm:$0xf]
  %v72 = vld [vmem:[%s1 + $0xac] sm:$0xf]
  %v73 = vld [vmem:[%s1 + $0xb0] sm:$0xf]
  %v74 = vld [vmem:[%s1 + $0xb4] sm:$0xf]
  %v75 = vld [vmem:[%s1 + $0xb8] sm:$0xf]
  %v76 = vld [vmem:[%s1 + $0xbc] sm:$0xf]
  %v77 = vld [vmem:[%s1 + $0xc0] sm:$0xf]
  %v78 = vld [vmem:[%s1 + $0xc4] sm:$0xf]
  %v79 = vld [vmem:[%s1 + $0xc8] sm:$0xf]
  %v80 = vld [vmem:[%s1 + $0xcc] sm:$0xf]
  %v81 = vld [vmem:[%s1 + $0xd0] sm:$0xf]
  %v82 = vld [vmem:[%s1 + $0xd4] sm:$0xf]
  %v83 = vld [vmem:[%s1 + $0xd8] sm:$0xf]
  %v84 = vld [vmem:[%s1 + $0xdc] sm:$0xf]
  %v85 = vld [vmem:[%s1 + $0xe0] sm:$0xf]
  %v86 = vld [vmem:[%s1 + $0xe4] sm:$0xf]
  %v87 = vld [vmem:[%s1 + $0xe8] sm:$0xf]
  %v88 = vld [vmem:[%s1 + $0xec] sm:$0xf]
  %v89 = vld [vmem:[%s1 + $0xf0] sm:$0xf]
  %v90 = vld [vmem:[%s1 + $0xf4] sm:$0xf]
  %v91 = vld [vmem:[%s1 + $0xf8] sm:$0xf]
  %v92 = vld [vmem:[%s1 + $0xfc] sm:$0xf]
  %v93 = vld [vmem:[%s2] sm:$0x1]
  %v95 = vperm.slane %v93, 0
  %v161 = vunpack.c.l.b16 %v29
  %v162 = vunpack.c.l.b16 %v30
  %v163 = vunpack.c.l.b16 %v31
  %v164 = vunpack.c.l.b16 %v32
  %v165 = vunpack.c.l.b16 %v33
  %v166 = vunpack.c.l.b16 %v34
  %v167 = vunpack.c.l.b16 %v35
  %v168 = vunpack.c.l.b16 %v36
  %v169 = vunpack.c.l.b16 %v37
  %v170 = vunpack.c.l.b16 %v38
  %v171 = vunpack.c.l.b16 %v39
  %v172 = vunpack.c.l.b16 %v40
  %v173 = vunpack.c.l.b16 %v41
  %v174 = vunpack.c.l.b16 %v42
  %v175 = vunpack.c.l.b16 %v43
  %v176 = vunpack.c.l.b16 %v44
  %v177 = vunpack.c.l.b16 %v45
  %v178 = vunpack.c.l.b16 %v46
  %v179 = vunpack.c.l.b16 %v47
  %v180 = vunpack.c.l.b16 %v48
  %v181 = vunpack.c.l.b16 %v49
  %v182 = vunpack.c.l.b16 %v50
  %v183 = vunpack.c.l.b16 %v51
  %v184 = vunpack.c.l.b16 %v52
  %v185 = vunpack.c.l.b16 %v53
  %v186 = vunpack.c.l.b16 %v54
  %v187 = vunpack.c.l.b16 %v55
  %v188 = vunpack.c.l.b16 %v56
  %v189 = vunpack.c.l.b16 %v57
  %v190 = vunpack.c.l.b16 %v58
  %v191 = vunpack.c.l.b16 %v59
  %v192 = vunpack.c.l.b16 %v60
  %v193 = vunpack.c.l.b16 %v61
  %v194 = vunpack.c.l.b16 %v62
  %v195 = vunpack.c.l.b16 %v63
  %v196 = vunpack.c.l.b16 %v64
  %v197 = vunpack.c.l.b16 %v65
  %v198 = vunpack.c.l.b16 %v66
  %v199 = vunpack.c.l.b16 %v67
  %v200 = vunpack.c.l.b16 %v68
  %v201 = vunpack.c.l.b16 %v69
  %v202 = vunpack.c.l.b16 %v70
  %v203 = vunpack.c.l.b16 %v71
  %v204 = vunpack.c.l.b16 %v72
  %v205 = vunpack.c.l.b16 %v73
  %v206 = vunpack.c.l.b16 %v74
  %v207 = vunpack.c.l.b16 %v75
  %v208 = vunpack.c.l.b16 %v76
  %v209 = vunpack.c.l.b16 %v77
  %v210 = vunpack.c.l.b16 %v78
  %v211 = vunpack.c.l.b16 %v79
  %v212 = vunpack.c.l.b16 %v80
  %v213 = vunpack.c.l.b16 %v81
  %v214 = vunpack.c.l.b16 %v82
  %v215 = vunpack.c.l.b16 %v83
  %v216 = vunpack.c.l.b16 %v84
  %v217 = vunpack.c.l.b16 %v85
  %v218 = vunpack.c.l.b16 %v86
  %v219 = vunpack.c.l.b16 %v87
  %v220 = vunpack.c.l.b16 %v88
  %v221 = vunpack.c.l.b16 %v89
  %v222 = vunpack.c.l.b16 %v90
  %v223 = vunpack.c.l.b16 %v91
  %v224 = vunpack.c.l.b16 %v92
  %v225 = vpack.c.b16 %v162, %v161
  %v226 = vpack.c.b16 %v164, %v163
  %v227 = vpack.c.b16 %v166, %v165
  %v228 = vpack.c.b16 %v168, %v167
  %v229 = vpack.c.b16 %v170, %v169
  %v230 = vpack.c.b16 %v172, %v171
  %v231 = vpack.c.b16 %v174, %v173
  %v232 = vpack.c.b16 %v176, %v175
  %v233 = vpack.c.b16 %v178, %v177
  %v234 = vpack.c.b16 %v180, %v179
  %v235 = vpack.c.b16 %v182, %v181
  %v236 = vpack.c.b16 %v184, %v183
  %v237 = vpack.c.b16 %v186, %v185
  %v238 = vpack.c.b16 %v188, %v187
  %v239 = vpack.c.b16 %v190, %v189
  %v240 = vpack.c.b16 %v192, %v191
  %v241 = vpack.c.b16 %v194, %v193
  %v242 = vpack.c.b16 %v196, %v195
  %v243 = vpack.c.b16 %v198, %v197
  %v244 = vpack.c.b16 %v200, %v199
  %v245 = vpack.c.b16 %v202, %v201
  %v246 = vpack.c.b16 %v204, %v203
  %v247 = vpack.c.b16 %v206, %v205
  %v248 = vpack.c.b16 %v208, %v207
  %v249 = vpack.c.b16 %v210, %v209
  %v250 = vpack.c.b16 %v212, %v211
  %v251 = vpack.c.b16 %v214, %v213
  %v252 = vpack.c.b16 %v216, %v215
  %v253 = vpack.c.b16 %v218, %v217
  %v254 = vpack.c.b16 %v220, %v219
  %v255 = vpack.c.b16 %v222, %v221
  %v256 = vpack.c.b16 %v224, %v223
  %289 = vmatpush.bf16.msra.mxu0 %v232
  %290 = vmatpush.bf16.msra.mxu0 %v231
  %291 = vmatpush.bf16.msra.mxu0 %v230
  %292 = vmatpush.bf16.msra.mxu0 %v229
  %293 = vmatpush.bf16.msra.mxu0 %v228
  %294 = vmatpush.bf16.msra.mxu0 %v227
  %295 = vmatpush.bf16.msra.mxu0 %v226
  %296 = vmatpush.bf16.msra.mxu0 %v225
  %297 = vmatmul.bf16.gmra.mxu0 %v25
  %v298 = vpop.f32.mrf.mxu0
  %v299 = vadd.f32 %v95, %v298
  %v300 = vpop.f32.mrf.mxu0
  %301 = vdwg.mxu0
  %302 = vmatpush.bf16.msra.mxu0 %v240
  %303 = vmatpush.bf16.msra.mxu0 %v239
  %304 = vmatpush.bf16.msra.mxu0 %v238
  %305 = vmatpush.bf16.msra.mxu0 %v237
  %306 = vmatpush.bf16.msra.mxu0 %v236
  %307 = vmatpush.bf16.msra.mxu0 %v235
  %308 = vmatpush.bf16.msra.mxu0 %v234
  %309 = vmatpush.bf16.msra.mxu0 %v233
  %310 = vmatmul.bf16.gmra.mxu0 %v26
  %v311 = vpop.f32.mrf.mxu0
  %v312 = vadd.f32 %v299, %v311
  %v313 = vpop.f32.mrf.mxu0
  %314 = vdwg.mxu0
  %315 = vmatpush.bf16.msra.mxu0 %v248
  %316 = vmatpush.bf16.msra.mxu0 %v247
  %317 = vmatpush.bf16.msra.mxu0 %v246
  %318 = vmatpush.bf16.msra.mxu0 %v245
  %319 = vmatpush.bf16.msra.mxu0 %v244
  %320 = vmatpush.bf16.msra.mxu0 %v243
  %321 = vmatpush.bf16.msra.mxu0 %v242
  %322 = vmatpush.bf16.msra.mxu0 %v241
  %323 = vmatmul.bf16.gmra.mxu0 %v27
  %v324 = vpop.f32.mrf.mxu0
  %v325 = vadd.f32 %v312, %v324
  %v326 = vpop.f32.mrf.mxu0
  %327 = vdwg.mxu0
  %328 = vmatpush.bf16.msra.mxu0 %v256
  %329 = vmatpush.bf16.msra.mxu0 %v255
  %330 = vmatpush.bf16.msra.mxu0 %v254
  %331 = vmatpush.bf16.msra.mxu0 %v253
  %332 = vmatpush.bf16.msra.mxu0 %v252
  %333 = vmatpush.bf16.msra.mxu0 %v251
  %334 = vmatpush.bf16.msra.mxu0 %v250
  %335 = vmatpush.bf16.msra.mxu0 %v249
  %336 = vmatmul.bf16.gmra.mxu0 %v28
  %v337 = vpop.f32.mrf.mxu0
  %v338 = vadd.f32 %v325, %v337
  %v339 = vpop.f32.mrf.mxu0
  %340 = vdwg.mxu0
  %vm341 = vcmask 115712
  %342 = vst.msk [vmem:[%s3] sm:$0x3] %vm341, %v338
  // Predicated region
  $region14: #{forward.11} parent=0 // pred_check
    _
  $region15: #{forward.11} parent=0 // pred_check_branch
    %344 = sbr.rel (0) target = $region17
  $region16: #{forward.11} parent=0 // pred_region
    _
  $region17: #{forward.11} parent=0 // pred_fallthru
    _
  // Predicated region
  $region18: #{forward.11} parent=0 // pred_check
    _
  $region19: #{forward.11} parent=0 // pred_check_branch
    %346 = sbr.rel (0) target = $region21
  $region20: #{forward.11} parent=0 // pred_region
    _
  $region21: #{forward.11} parent=0 // pred_fallthru
    _

// kernel: forward.10
$region0: #{forward.10}
  #allocation0 [shape = 'u32[]', space=smem, size = 0x4, offset = 0x4, fixed_abs, tag = 'smem constant byte address 0x4 - core index']
  #allocation1 [shape = 'u32[72,128]{1,0:T(1,128)}', space=vmem, size = 0x9000, scoped, tag = 'internal scratch']
  %s0 = inlined_call_operand.vmem [shape: f32[2,1024], index: 0, kind: input, shape index: {}]
  %s1 = inlined_call_operand.hbm [shape: bf16[1024,512], index: 1, kind: input, shape index: {}]
  %s2 = inlined_call_operand.vmem [shape: f32[1,512], index: 2, kind: input, shape index: {}]
  %s3 = inlined_call_operand.vmem [shape: f32[2,512], index: 3, kind: output, shape index: {}]
  %s4 = sld [smem:[#allocation0]]
  $region26: #{forward.10} parent=0
    _
  %s6 = ssub.s32 1, %s4
  %s7 = scalar_select 0, %s6, %s4
  $region1: #{forward.10} parent=0
    #allocation2 [shape = 'u8[1048576]{0}', space=vmem, size = 0x100000, scoped, tag = 'input window, operand 1, single buffered']
    #allocation3 [shape = 's32[1]{0}', space=sflag, size = 0x4, scoped, tag = 'scoped memory for forward.10']
    %8 = vsyncpa [#allocation3], 0
    // Predicated region
    $region2: #{forward.10} parent=1 // pred_check
      _
    $region3: #{forward.10} parent=1 // pred_check_branch
      %10 = sbr.rel (0) target = $region5
    $region4: #{forward.10} parent=1 // pred_region
      _
    $region5: #{forward.10} parent=1 // pred_fallthru
      _
    // Predicated region
    $region6: #{forward.10} parent=1 // pred_check
      _
    $region7: #{forward.10} parent=1 // pred_check_branch
      %12 = sbr.rel (0) target = $region9
    $region8: #{forward.10} parent=1 // pred_region
      %14 = vsyncadd [#allocation3], 0
      %s15 = sshll.u32 %s1, 4
      %s16 = int_to_ptr.hbm [resolvable:$true] %s15
      %s17 = sshll.u32 [#allocation2], 4
      %s18 = int_to_ptr.vmem [resolvable:$true] %s17
      %23 = dma.hbm_to_vmem [thread:$0]  %s16, 32768, %s18, [#allocation3], 256, 256, 16
    $region9: #{forward.10} parent=1 // pred_fallthru
      _
    // Predicated region
    $region10: #{forward.10} parent=1 // pred_check
      _
    $region11: #{forward.10} parent=1 // pred_check_branch
      %25 = sbr.rel (0) target = $region13
    $region12: #{forward.10} parent=1 // pred_region
      _
    $region13: #{forward.10} parent=1 // pred_fallthru
      _
    // Predicated region
    $region14: #{forward.10} parent=1 // pred_check
      _
    $region15: #{forward.10} parent=1 // pred_check_branch
      %27 = sbr.rel (0) target = $region17
    $region16: #{forward.10} parent=1 // pred_region
      %29 = dma.done [#allocation3], 32768
    $region17: #{forward.10} parent=1 // pred_fallthru
      _
    %v30 = vld [vmem:[%s0] sm:$0xff]
    %v31 = vld [vmem:[%s0 + $0x8] sm:$0xff]
    %34 = vst [vmem:[#allocation1] ss:$4 sm:$0xff] %v30
    %s35 = scalar_lea.vmem [#allocation1], 32
    %36 = vst [vmem:[%s35] ss:$4 sm:$0xff] %v31
    %v37 = vld.sshfl [vmem:[#allocation1] sm:$0xff pattern:$0x73625140]
    %v38 = vld.sshfl [vmem:[#allocation1 + $0x8] sm:$0xff pattern:$0x73625140]
    %v39 = vld.sshfl [vmem:[#allocation1 + $0x10] sm:$0xff pattern:$0x73625140]
    %v40 = vld.sshfl [vmem:[#allocation1 + $0x18] sm:$0xff pattern:$0x73625140]
    %v41 = vld.sshfl [vmem:[#allocation1 + $0x20] sm:$0xff pattern:$0x73625140]
    %v42 = vld.sshfl [vmem:[#allocation1 + $0x28] sm:$0xff pattern:$0x73625140]
    %v43 = vld.sshfl [vmem:[#allocation1 + $0x30] sm:$0xff pattern:$0x73625140]
    %v44 = vld.sshfl [vmem:[#allocation1 + $0x38] sm:$0xff pattern:$0x73625140]
    %v53 = vpack.c.bf16 %v37, %v37
    %v54 = vpack.c.bf16 %v38, %v38
    %v55 = vpack.c.bf16 %v39, %v39
    %v56 = vpack.c.bf16 %v40, %v40
    %v57 = vpack.c.bf16 %v41, %v41
    %v58 = vpack.c.bf16 %v42, %v42
    %v59 = vpack.c.bf16 %v43, %v43
    %v60 = vpack.c.bf16 %v44, %v44
    %v61 = vld [vmem:[#allocation2] sm:$0xff]
    %v62 = vld [vmem:[#allocation2 + $0x8] sm:$0xff]
    %v63 = vld [vmem:[#allocation2 + $0x10] sm:$0xff]
    %v64 = vld [vmem:[#allocation2 + $0x18] sm:$0xff]
    %v65 = vld [vmem:[#allocation2 + $0x20] sm:$0xff]
    %v66 = vld [vmem:[#allocation2 + $0x28] sm:$0xff]
    %v67 = vld [vmem:[#allocation2 + $0x30] sm:$0xff]
    %v68 = vld [vmem:[#allocation2 + $0x38] sm:$0xff]
    %v69 = vld [vmem:[#allocation2 + $0x40] sm:$0xff]
    %v70 = vld [vmem:[#allocation2 + $0x48] sm:$0xff]
    %v71 = vld [vmem:[#allocation2 + $0x50] sm:$0xff]
    %v72 = vld [vmem:[#allocation2 + $0x58] sm:$0xff]
    %v73 = vld [vmem:[#allocation2 + $0x60] sm:$0xff]
    %v74 = vld [vmem:[#allocation2 + $0x68] sm:$0xff]
    %v75 = vld [vmem:[#allocation2 + $0x70] sm:$0xff]
    %v76 = vld [vmem:[#allocation2 + $0x78] sm:$0xff]
    %v77 = vld [vmem:[#allocation2 + $0x80] sm:$0xff]
    %v78 = vld [vmem:[#allocation2 + $0x88] sm:$0xff]
    %v79 = vld [vmem:[#allocation2 + $0x90] sm:$0xff]
    %v80 = vld [vmem:[#allocation2 + $0x98] sm:$0xff]
    %v81 = vld [vmem:[#allocation2 + $0xa0] sm:$0xff]
    %v82 = vld [vmem:[#allocation2 + $0xa8] sm:$0xff]
    %v83 = vld [vmem:[#allocation2 + $0xb0] sm:$0xff]
    %v84 = vld [vmem:[#allocation2 + $0xb8] sm:$0xff]
    %v85 = vld [vmem:[#allocation2 + $0xc0] sm:$0xff]
    %v86 = vld [vmem:[#allocation2 + $0xc8] sm:$0xff]
    %v87 = vld [vmem:[#allocation2 + $0xd0] sm:$0xff]
    %v88 = vld [vmem:[#allocation2 + $0xd8] sm:$0xff]
    %v89 = vld [vmem:[#allocation2 + $0xe0] sm:$0xff]
    %v90 = vld [vmem:[#allocation2 + $0xe8] sm:$0xff]
    %v91 = vld [vmem:[#allocation2 + $0xf0] sm:$0xff]
    %v92 = vld [vmem:[#allocation2 + $0xf8] sm:$0xff]
    %v93 = vld [vmem:[#allocation2 + $0x100] sm:$0xff]
    %v94 = vld [vmem:[#allocation2 + $0x108] sm:$0xff]
    %v95 = vld [vmem:[#allocation2 + $0x110] sm:$0xff]
    %v96 = vld [vmem:[#allocation2 + $0x118] sm:$0xff]
    %v97 = vld [vmem:[#allocation2 + $0x120] sm:$0xff]
    %v98 = vld [vmem:[#allocation2 + $0x128] sm:$0xff]
    %v99 = vld [vmem:[#allocation2 + $0x130] sm:$0xff]
    %v100 = vld [vmem:[#allocation2 + $0x138] sm:$0xff]
    %v101 = vld [vmem:[#allocation2 + $0x140] sm:$0xff]
    %v102 = vld [vmem:[#allocation2 + $0x148] sm:$0xff]
    %v103 = vld [vmem:[#allocation2 + $0x150] sm:$0xff]
    %v104 = vld [vmem:[#allocation2 + $0x158] sm:$0xff]
    %v105 = vld [vmem:[#allocation2 + $0x160] sm:$0xff]
    %v106 = vld [vmem:[#allocation2 + $0x168] sm:$0xff]
    %v107 = vld [vmem:[#allocation2 + $0x170] sm:$0xff]
    %v108 = vld [vmem:[#allocation2 + $0x178] sm:$0xff]
    %v109 = vld [vmem:[#allocation2 + $0x180] sm:$0xff]
    %v110 = vld [vmem:[#allocation2 + $0x188] sm:$0xff]
    %v111 = vld [vmem:[#allocation2 + $0x190] sm:$0xff]
    %v112 = vld [vmem:[#allocation2 + $0x198] sm:$0xff]
    %v113 = vld [vmem:[#allocation2 + $0x1a0] sm:$0xff]
    %v114 = vld [vmem:[#allocation2 + $0x1a8] sm:$0xff]
    %v115 = vld [vmem:[#allocation2 + $0x1b0] sm:$0xff]
    %v116 = vld [vmem:[#allocation2 + $0x1b8] sm:$0xff]
    %v117 = vld [vmem:[#allocation2 + $0x1c0] sm:$0xff]
    %v118 = vld [vmem:[#allocation2 + $0x1c8] sm:$0xff]
    %v119 = vld [vmem:[#allocation2 + $0x1d0] sm:$0xff]
    %v120 = vld [vmem:[#allocation2 + $0x1d8] sm:$0xff]
    %v121 = vld [vmem:[#allocation2 + $0x1e0] sm:$0xff]
    %v122 = vld [vmem:[#allocation2 + $0x1e8] sm:$0xff]
    %v123 = vld [vmem:[#allocation2 + $0x1f0] sm:$0xff]
    %v124 = vld [vmem:[#allocation2 + $0x1f8] sm:$0xff]
    %v125 = vld [vmem:[#allocation2 + $0x200] sm:$0xff]
    %v126 = vld [vmem:[#allocation2 + $0x208] sm:$0xff]
    %v127 = vld [vmem:[#allocation2 + $0x210] sm:$0xff]
    %v128 = vld [vmem:[#allocation2 + $0x218] sm:$0xff]
    %v129 = vld [vmem:[#allocation2 + $0x220] sm:$0xff]
    %v130 = vld [vmem:[#allocation2 + $0x228] sm:$0xff]
    %v131 = vld [vmem:[#allocation2 + $0x230] sm:$0xff]
    %v132 = vld [vmem:[#allocation2 + $0x238] sm:$0xff]
    %v133 = vld [vmem:[#allocation2 + $0x240] sm:$0xff]
    %v134 = vld [vmem:[#allocation2 + $0x248] sm:$0xff]
    %v135 = vld [vmem:[#allocation2 + $0x250] sm:$0xff]
    %v136 = vld [vmem:[#allocation2 + $0x258] sm:$0xff]
    %v137 = vld [vmem:[#allocation2 + $0x260] sm:$0xff]
    %v138 = vld [vmem:[#allocation2 + $0x268] sm:$0xff]
    %v139 = vld [vmem:[#allocation2 + $0x270] sm:$0xff]
    %v140 = vld [vmem:[#allocation2 + $0x278] sm:$0xff]
    %v141 = vld [vmem:[#allocation2 + $0x280] sm:$0xff]
    %v142 = vld [vmem:[#allocation2 + $0x288] sm:$0xff]
    %v143 = vld [vmem:[#allocation2 + $0x290] sm:$0xff]
    %v144 = vld [vmem:[#allocation2 + $0x298] sm:$0xff]
    %v145 = vld [vmem:[#allocation2 + $0x2a0] sm:$0xff]
    %v146 = vld [vmem:[#allocation2 + $0x2a8] sm:$0xff]
    %v147 = vld [vmem:[#allocation2 + $0x2b0] sm:$0xff]
    %v148 = vld [vmem:[#allocation2 + $0x2b8] sm:$0xff]
    %v149 = vld [vmem:[#allocation2 + $0x2c0] sm:$0xff]
    %v150 = vld [vmem:[#allocation2 + $0x2c8] sm:$0xff]
    %v151 = vld [vmem:[#allocation2 + $0x2d0] sm:$0xff]
    %v152 = vld [vmem:[#allocation2 + $0x2d8] sm:$0xff]
    %v153 = vld [vmem:[#allocation2 + $0x2e0] sm:$0xff]
    %v154 = vld [vmem:[#allocation2 + $0x2e8] sm:$0xff]
    %v155 = vld [vmem:[#allocation2 + $0x2f0] sm:$0xff]
    %v156 = vld [vmem:[#allocation2 + $0x2f8] sm:$0xff]
    %v157 = vld [vmem:[#allocation2 + $0x300] sm:$0xff]
    %v158 = vld [vmem:[#allocation2 + $0x308] sm:$0xff]
    %v159 = vld [vmem:[#allocation2 + $0x310] sm:$0xff]
    %v160 = vld [vmem:[#allocation2 + $0x318] sm:$0xff]
    %v161 = vld [vmem:[#allocation2 + $0x320] sm:$0xff]
    %v162 = vld [vmem:[#allocation2 + $0x328] sm:$0xff]
    %v163 = vld [vmem:[#allocation2 + $0x330] sm:$0xff]
    %v164 = vld [vmem:[#allocation2 + $0x338] sm:$0xff]
    %v165 = vld [vmem:[#allocation2 + $0x340] sm:$0xff]
    %v166 = vld [vmem:[#allocation2 + $0x348] sm:$0xff]
    %v167 = vld [vmem:[#allocation2 + $0x350] sm:$0xff]
    %v168 = vld [vmem:[#allocation2 + $0x358] sm:$0xff]
    %v169 = vld [vmem:[#allocation2 + $0x360] sm:$0xff]
    %v170 = vld [vmem:[#allocation2 + $0x368] sm:$0xff]
    %v171 = vld [vmem:[#allocation2 + $0x370] sm:$0xff]
    %v172 = vld [vmem:[#allocation2 + $0x378] sm:$0xff]
    %v173 = vld [vmem:[#allocation2 + $0x380] sm:$0xff]
    %v174 = vld [vmem:[#allocation2 + $0x388] sm:$0xff]
    %v175 = vld [vmem:[#allocation2 + $0x390] sm:$0xff]
    %v176 = vld [vmem:[#allocation2 + $0x398] sm:$0xff]
    %v177 = vld [vmem:[#allocation2 + $0x3a0] sm:$0xff]
    %v178 = vld [vmem:[#allocation2 + $0x3a8] sm:$0xff]
    %v179 = vld [vmem:[#allocation2 + $0x3b0] sm:$0xff]
    %v180 = vld [vmem:[#allocation2 + $0x3b8] sm:$0xff]
    %v181 = vld [vmem:[#allocation2 + $0x3c0] sm:$0xff]
    %v182 = vld [vmem:[#allocation2 + $0x3c8] sm:$0xff]
    %v183 = vld [vmem:[#allocation2 + $0x3d0] sm:$0xff]
    %v184 = vld [vmem:[#allocation2 + $0x3d8] sm:$0xff]
    %v185 = vld [vmem:[#allocation2 + $0x3e0] sm:$0xff]
    %v186 = vld [vmem:[#allocation2 + $0x3e8] sm:$0xff]
    %v187 = vld [vmem:[#allocation2 + $0x3f0] sm:$0xff]
    %v188 = vld [vmem:[#allocation2 + $0x3f8] sm:$0xff]
    %v189 = vld [vmem:[#allocation2 + $0x400] sm:$0xff]
    %v190 = vld [vmem:[#allocation2 + $0x408] sm:$0xff]
    %v191 = vld [vmem:[#allocation2 + $0x410] sm:$0xff]
    %v192 = vld [vmem:[#allocation2 + $0x418] sm:$0xff]
    %v193 = vld [vmem:[#allocation2 + $0x420] sm:$0xff]
    %v194 = vld [vmem:[#allocation2 + $0x428] sm:$0xff]
    %v195 = vld [vmem:[#allocation2 + $0x430] sm:$0xff]
    %v196 = vld [vmem:[#allocation2 + $0x438] sm:$0xff]
    %v197 = vld [vmem:[#allocation2 + $0x440] sm:$0xff]
    %v198 = vld [vmem:[#allocation2 + $0x448] sm:$0xff]
    %v199 = vld [vmem:[#allocation2 + $0x450] sm:$0xff]
    %v200 = vld [vmem:[#allocation2 + $0x458] sm:$0xff]
    %v201 = vld [vmem:[#allocation2 + $0x460] sm:$0xff]
    %v202 = vld [vmem:[#allocation2 + $0x468] sm:$0xff]
    %v203 = vld [vmem:[#allocation2 + $0x470] sm:$0xff]
    %v204 = vld [vmem:[#allocation2 + $0x478] sm:$0xff]
    %v205 = vld [vmem:[#allocation2 + $0x480] sm:$0xff]
    %v206 = vld [vmem:[#allocation2 + $0x488] sm:$0xff]
    %v207 = vld [vmem:[#allocation2 + $0x490] sm:$0xff]
    %v208 = vld [vmem:[#allocation2 + $0x498] sm:$0xff]
    %v209 = vld [vmem:[#allocation2 + $0x4a0] sm:$0xff]
    %v210 = vld [vmem:[#allocation2 + $0x4a8] sm:$0xff]
    %v211 = vld [vmem:[#allocation2 + $0x4b0] sm:$0xff]
    %v212 = vld [vmem:[#allocation2 + $0x4b8] sm:$0xff]
    %v213 = vld [vmem:[#allocation2 + $0x4c0] sm:$0xff]
    %v214 = vld [vmem:[#allocation2 + $0x4c8] sm:$0xff]
    %v215 = vld [vmem:[#allocation2 + $0x4d0] sm:$0xff]
    %v216 = vld [vmem:[#allocation2 + $0x4d8] sm:$0xff]
    %v217 = vld [vmem:[#allocation2 + $0x4e0] sm:$0xff]
    %v218 = vld [vmem:[#allocation2 + $0x4e8] sm:$0xff]
    %v219 = vld [vmem:[#allocation2 + $0x4f0] sm:$0xff]
    %v220 = vld [vmem:[#allocation2 + $0x4f8] sm:$0xff]
    %v221 = vld [vmem:[#allocation2 + $0x500] sm:$0xff]
    %v222 = vld [vmem:[#allocation2 + $0x508] sm:$0xff]
    %v223 = vld [vmem:[#allocation2 + $0x510] sm:$0xff]
    %v224 = vld [vmem:[#allocation2 + $0x518] sm:$0xff]
    %v225 = vld [vmem:[#allocation2 + $0x520] sm:$0xff]
    %v226 = vld [vmem:[#allocation2 + $0x528] sm:$0xff]
    %v227 = vld [vmem:[#allocation2 + $0x530] sm:$0xff]
    %v228 = vld [vmem:[#allocation2 + $0x538] sm:$0xff]
    %v229 = vld [vmem:[#allocation2 + $0x540] sm:$0xff]
    %v230 = vld [vmem:[#allocation2 + $0x548] sm:$0xff]
    %v231 = vld [vmem:[#allocation2 + $0x550] sm:$0xff]
    %v232 = vld [vmem:[#allocation2 + $0x558] sm:$0xff]
    %v233 = vld [vmem:[#allocation2 + $0x560] sm:$0xff]
    %v234 = vld [vmem:[#allocation2 + $0x568] sm:$0xff]
    %v235 = vld [vmem:[#allocation2 + $0x570] sm:$0xff]
    %v236 = vld [vmem:[#allocation2 + $0x578] sm:$0xff]
    %v237 = vld [vmem:[#allocation2 + $0x580] sm:$0xff]
    %v238 = vld [vmem:[#allocation2 + $0x588] sm:$0xff]
    %v239 = vld [vmem:[#allocation2 + $0x590] sm:$0xff]
    %v240 = vld [vmem:[#allocation2 + $0x598] sm:$0xff]
    %v241 = vld [vmem:[#allocation2 + $0x5a0] sm:$0xff]
    %v242 = vld [vmem:[#allocation2 + $0x5a8] sm:$0xff]
    %v243 = vld [vmem:[#allocation2 + $0x5b0] sm:$0xff]
    %v244 = vld [vmem:[#allocation2 + $0x5b8] sm:$0xff]
    %v245 = vld [vmem:[#allocation2 + $0x5c0] sm:$0xff]
    %v246 = vld [vmem:[#allocation2 + $0x5c8] sm:$0xff]
    %v247 = vld [vmem:[#allocation2 + $0x5d0] sm:$0xff]
    %v248 = vld [vmem:[#allocation2 + $0x5d8] sm:$0xff]
    %v249 = vld [vmem:[#allocation2 + $0x5e0] sm:$0xff]
    %v250 = vld [vmem:[#allocation2 + $0x5e8] sm:$0xff]
    %v251 = vld [vmem:[#allocation2 + $0x5f0] sm:$0xff]
    %v252 = vld [vmem:[#allocation2 + $0x5f8] sm:$0xff]
    %v253 = vld [vmem:[#allocation2 + $0x600] sm:$0xff]
    %v254 = vld [vmem:[#allocation2 + $0x608] sm:$0xff]
    %v255 = vld [vmem:[#allocation2 + $0x610] sm:$0xff]
    %v256 = vld [vmem:[#allocation2 + $0x618] sm:$0xff]
    %v257 = vld [vmem:[#allocation2 + $0x620] sm:$0xff]
    %v258 = vld [vmem:[#allocation2 + $0x628] sm:$0xff]
    %v259 = vld [vmem:[#allocation2 + $0x630] sm:$0xff]
    %v260 = vld [vmem:[#allocation2 + $0x638] sm:$0xff]
    %v261 = vld [vmem:[#allocation2 + $0x640] sm:$0xff]
    %v262 = vld [vmem:[#allocation2 + $0x648] sm:$0xff]
    %v263 = vld [vmem:[#allocation2 + $0x650] sm:$0xff]
    %v264 = vld [vmem:[#allocation2 + $0x658] sm:$0xff]
    %v265 = vld [vmem:[#allocation2 + $0x660] sm:$0xff]
    %v266 = vld [vmem:[#allocation2 + $0x668] sm:$0xff]
    %v267 = vld [vmem:[#allocation2 + $0x670] sm:$0xff]
    %v268 = vld [vmem:[#allocation2 + $0x678] sm:$0xff]
    %v269 = vld [vmem:[#allocation2 + $0x680] sm:$0xff]
    %v270 = vld [vmem:[#allocation2 + $0x688] sm:$0xff]
    %v271 = vld [vmem:[#allocation2 + $0x690] sm:$0xff]
    %v272 = vld [vmem:[#allocation2 + $0x698] sm:$0xff]
    %v273 = vld [vmem:[#allocation2 + $0x6a0] sm:$0xff]
    %v274 = vld [vmem:[#allocation2 + $0x6a8] sm:$0xff]
    %v275 = vld [vmem:[#allocation2 + $0x6b0] sm:$0xff]
    %v276 = vld [vmem:[#allocation2 + $0x6b8] sm:$0xff]
    %v277 = vld [vmem:[#allocation2 + $0x6c0] sm:$0xff]
    %v278 = vld [vmem:[#allocation2 + $0x6c8] sm:$0xff]
    %v279 = vld [vmem:[#allocation2 + $0x6d0] sm:$0xff]
    %v280 = vld [vmem:[#allocation2 + $0x6d8] sm:$0xff]
    %v281 = vld [vmem:[#allocation2 + $0x6e0] sm:$0xff]
    %v282 = vld [vmem:[#allocation2 + $0x6e8] sm:$0xff]
    %v283 = vld [vmem:[#allocation2 + $0x6f0] sm:$0xff]
    %v284 = vld [vmem:[#allocation2 + $0x6f8] sm:$0xff]
    %v285 = vld [vmem:[#allocation2 + $0x700] sm:$0xff]
    %v286 = vld [vmem:[#allocation2 + $0x708] sm:$0xff]
    %v287 = vld [vmem:[#allocation2 + $0x710] sm:$0xff]
    %v288 = vld [vmem:[#allocation2 + $0x718] sm:$0xff]
    %v289 = vld [vmem:[#allocation2 + $0x720] sm:$0xff]
    %v290 = vld [vmem:[#allocation2 + $0x728] sm:$0xff]
    %v291 = vld [vmem:[#allocation2 + $0x730] sm:$0xff]
    %v292 = vld [vmem:[#allocation2 + $0x738] sm:$0xff]
    %v293 = vld [vmem:[#allocation2 + $0x740] sm:$0xff]
    %v294 = vld [vmem:[#allocation2 + $0x748] sm:$0xff]
    %v295 = vld [vmem:[#allocation2 + $0x750] sm:$0xff]
    %v296 = vld [vmem:[#allocation2 + $0x758] sm:$0xff]
    %v297 = vld [vmem:[#allocation2 + $0x760] sm:$0xff]
    %v298 = vld [vmem:[#allocation2 + $0x768] sm:$0xff]
    %v299 = vld [vmem:[#allocation2 + $0x770] sm:$0xff]
    %v300 = vld [vmem:[#allocation2 + $0x778] sm:$0xff]
    %v301 = vld [vmem:[#allocation2 + $0x780] sm:$0xff]
    %v302 = vld [vmem:[#allocation2 + $0x788] sm:$0xff]
    %v303 = vld [vmem:[#allocation2 + $0x790] sm:$0xff]
    %v304 = vld [vmem:[#allocation2 + $0x798] sm:$0xff]
    %v305 = vld [vmem:[#allocation2 + $0x7a0] sm:$0xff]
    %v306 = vld [vmem:[#allocation2 + $0x7a8] sm:$0xff]
    %v307 = vld [vmem:[#allocation2 + $0x7b0] sm:$0xff]
    %v308 = vld [vmem:[#allocation2 + $0x7b8] sm:$0xff]
    %v309 = vld [vmem:[#allocation2 + $0x7c0] sm:$0xff]
    %v310 = vld [vmem:[#allocation2 + $0x7c8] sm:$0xff]
    %v311 = vld [vmem:[#allocation2 + $0x7d0] sm:$0xff]
    %v312 = vld [vmem:[#allocation2 + $0x7d8] sm:$0xff]
    %v313 = vld [vmem:[#allocation2 + $0x7e0] sm:$0xff]
    %v314 = vld [vmem:[#allocation2 + $0x7e8] sm:$0xff]
    %v315 = vld [vmem:[#allocation2 + $0x7f0] sm:$0xff]
    %v316 = vld [vmem:[#allocation2 + $0x7f8] sm:$0xff]
    %v317 = vld [vmem:[%s2] sm:$0xf]
    %v319 = vperm.slane %v317, 0
    %v320 = vperm.slane %v317, 1
    %v321 = vperm.slane %v317, 2
    %v322 = vperm.slane %v317, 3
    %v583 = vunpack.c.l.b16 %v61
    %v584 = vunpack.c.h.b16 %v61
    %v585 = vunpack.c.l.b16 %v62
    %v586 = vunpack.c.h.b16 %v62
    %v587 = vunpack.c.l.b16 %v63
    %v588 = vunpack.c.h.b16 %v63
    %v589 = vunpack.c.l.b16 %v64
    %v590 = vunpack.c.h.b16 %v64
    %v591 = vunpack.c.l.b16 %v65
    %v592 = vunpack.c.h.b16 %v65
    %v593 = vunpack.c.l.b16 %v66
    %v594 = vunpack.c.h.b16 %v66
    %v595 = vunpack.c.l.b16 %v67
    %v596 = vunpack.c.h.b16 %v67
    %v597 = vunpack.c.l.b16 %v68
    %v598 = vunpack.c.h.b16 %v68
    %v599 = vunpack.c.l.b16 %v69
    %v600 = vunpack.c.h.b16 %v69
    %v601 = vunpack.c.l.b16 %v70
    %v602 = vunpack.c.h.b16 %v70
    %v603 = vunpack.c.l.b16 %v71
    %v604 = vunpack.c.h.b16 %v71
    %v605 = vunpack.c.l.b16 %v72
    %v606 = vunpack.c.h.b16 %v72
    %v607 = vunpack.c.l.b16 %v73
    %v608 = vunpack.c.h.b16 %v73
    %v609 = vunpack.c.l.b16 %v74
    %v610 = vunpack.c.h.b16 %v74
    %v611 = vunpack.c.l.b16 %v75
    %v612 = vunpack.c.h.b16 %v75
    %v613 = vunpack.c.l.b16 %v76
    %v614 = vunpack.c.h.b16 %v76
    %v615 = vunpack.c.l.b16 %v77
    %v616 = vunpack.c.h.b16 %v77
    %v617 = vunpack.c.l.b16 %v78
    %v618 = vunpack.c.h.b16 %v78
    %v619 = vunpack.c.l.b16 %v79
    %v620 = vunpack.c.h.b16 %v79
    %v621 = vunpack.c.l.b16 %v80
    %v622 = vunpack.c.h.b16 %v80
    %v623 = vunpack.c.l.b16 %v81
    %v624 = vunpack.c.h.b16 %v81
    %v625 = vunpack.c.l.b16 %v82
    %v626 = vunpack.c.h.b16 %v82
    %v627 = vunpack.c.l.b16 %v83
    %v628 = vunpack.c.h.b16 %v83
    %v629 = vunpack.c.l.b16 %v84
    %v630 = vunpack.c.h.b16 %v84
    %v631 = vunpack.c.l.b16 %v85
    %v632 = vunpack.c.h.b16 %v85
    %v633 = vunpack.c.l.b16 %v86
    %v634 = vunpack.c.h.b16 %v86
    %v635 = vunpack.c.l.b16 %v87
    %v636 = vunpack.c.h.b16 %v87
    %v637 = vunpack.c.l.b16 %v88
    %v638 = vunpack.c.h.b16 %v88
    %v639 = vunpack.c.l.b16 %v89
    %v640 = vunpack.c.h.b16 %v89
    %v641 = vunpack.c.l.b16 %v90
    %v642 = vunpack.c.h.b16 %v90
    %v643 = vunpack.c.l.b16 %v91
    %v644 = vunpack.c.h.b16 %v91
    %v645 = vunpack.c.l.b16 %v92
    %v646 = vunpack.c.h.b16 %v92
    %v647 = vunpack.c.l.b16 %v93
    %v648 = vunpack.c.h.b16 %v93
    %v649 = vunpack.c.l.b16 %v94
    %v650 = vunpack.c.h.b16 %v94
    %v651 = vunpack.c.l.b16 %v95
    %v652 = vunpack.c.h.b16 %v95
    %v653 = vunpack.c.l.b16 %v96
    %v654 = vunpack.c.h.b16 %v96
    %v655 = vunpack.c.l.b16 %v97
    %v656 = vunpack.c.h.b16 %v97
    %v657 = vunpack.c.l.b16 %v98
    %v658 = vunpack.c.h.b16 %v98
    %v659 = vunpack.c.l.b16 %v99
    %v660 = vunpack.c.h.b16 %v99
    %v661 = vunpack.c.l.b16 %v100
    %v662 = vunpack.c.h.b16 %v100
    %v663 = vunpack.c.l.b16 %v101
    %v664 = vunpack.c.h.b16 %v101
    %v665 = vunpack.c.l.b16 %v102
    %v666 = vunpack.c.h.b16 %v102
    %v667 = vunpack.c.l.b16 %v103
    %v668 = vunpack.c.h.b16 %v103
    %v669 = vunpack.c.l.b16 %v104
    %v670 = vunpack.c.h.b16 %v104
    %v671 = vunpack.c.l.b16 %v105
    %v672 = vunpack.c.h.b16 %v105
    %v673 = vunpack.c.l.b16 %v106
    %v674 = vunpack.c.h.b16 %v106
    %v675 = vunpack.c.l.b16 %v107
    %v676 = vunpack.c.h.b16 %v107
    %v677 = vunpack.c.l.b16 %v108
    %v678 = vunpack.c.h.b16 %v108
    %v679 = vunpack.c.l.b16 %v109
    %v680 = vunpack.c.h.b16 %v109
    %v681 = vunpack.c.l.b16 %v110
    %v682 = vunpack.c.h.b16 %v110
    %v683 = vunpack.c.l.b16 %v111
    %v684 = vunpack.c.h.b16 %v111
    %v685 = vunpack.c.l.b16 %v112
    %v686 = vunpack.c.h.b16 %v112
    %v687 = vunpack.c.l.b16 %v113
    %v688 = vunpack.c.h.b16 %v113
    %v689 = vunpack.c.l.b16 %v114
    %v690 = vunpack.c.h.b16 %v114
    %v691 = vunpack.c.l.b16 %v115
    %v692 = vunpack.c.h.b16 %v115
    %v693 = vunpack.c.l.b16 %v116
    %v694 = vunpack.c.h.b16 %v116
    %v695 = vunpack.c.l.b16 %v117
    %v696 = vunpack.c.h.b16 %v117
    %v697 = vunpack.c.l.b16 %v118
    %v698 = vunpack.c.h.b16 %v118
    %v699 = vunpack.c.l.b16 %v119
    %v700 = vunpack.c.h.b16 %v119
    %v701 = vunpack.c.l.b16 %v120
    %v702 = vunpack.c.h.b16 %v120
    %v703 = vunpack.c.l.b16 %v121
    %v704 = vunpack.c.h.b16 %v121
    %v705 = vunpack.c.l.b16 %v122
    %v706 = vunpack.c.h.b16 %v122
    %v707 = vunpack.c.l.b16 %v123
    %v708 = vunpack.c.h.b16 %v123
    %v709 = vunpack.c.l.b16 %v124
    %v710 = vunpack.c.h.b16 %v124
    %v711 = vunpack.c.l.b16 %v125
    %v712 = vunpack.c.h.b16 %v125
    %v713 = vunpack.c.l.b16 %v126
    %v714 = vunpack.c.h.b16 %v126
    %v715 = vunpack.c.l.b16 %v127
    %v716 = vunpack.c.h.b16 %v127
    %v717 = vunpack.c.l.b16 %v128
    %v718 = vunpack.c.h.b16 %v128
    %v719 = vunpack.c.l.b16 %v129
    %v720 = vunpack.c.h.b16 %v129
    %v721 = vunpack.c.l.b16 %v130
    %v722 = vunpack.c.h.b16 %v130
    %v723 = vunpack.c.l.b16 %v131
    %v724 = vunpack.c.h.b16 %v131
    %v725 = vunpack.c.l.b16 %v132
    %v726 = vunpack.c.h.b16 %v132
    %v727 = vunpack.c.l.b16 %v133
    %v728 = vunpack.c.h.b16 %v133
    %v729 = vunpack.c.l.b16 %v134
    %v730 = vunpack.c.h.b16 %v134
    %v731 = vunpack.c.l.b16 %v135
    %v732 = vunpack.c.h.b16 %v135
    %v733 = vunpack.c.l.b16 %v136
    %v734 = vunpack.c.h.b16 %v136
    %v735 = vunpack.c.l.b16 %v137
    %v736 = vunpack.c.h.b16 %v137
    %v737 = vunpack.c.l.b16 %v138
    %v738 = vunpack.c.h.b16 %v138
    %v739 = vunpack.c.l.b16 %v139
    %v740 = vunpack.c.h.b16 %v139
    %v741 = vunpack.c.l.b16 %v140
    %v742 = vunpack.c.h.b16 %v140
    %v743 = vunpack.c.l.b16 %v141
    %v744 = vunpack.c.h.b16 %v141
    %v745 = vunpack.c.l.b16 %v142
    %v746 = vunpack.c.h.b16 %v142
    %v747 = vunpack.c.l.b16 %v143
    %v748 = vunpack.c.h.b16 %v143
    %v749 = vunpack.c.l.b16 %v144
    %v750 = vunpack.c.h.b16 %v144
    %v751 = vunpack.c.l.b16 %v145
    %v752 = vunpack.c.h.b16 %v145
    %v753 = vunpack.c.l.b16 %v146
    %v754 = vunpack.c.h.b16 %v146
    %v755 = vunpack.c.l.b16 %v147
    %v756 = vunpack.c.h.b16 %v147
    %v757 = vunpack.c.l.b16 %v148
    %v758 = vunpack.c.h.b16 %v148
    %v759 = vunpack.c.l.b16 %v149
    %v760 = vunpack.c.h.b16 %v149
    %v761 = vunpack.c.l.b16 %v150
    %v762 = vunpack.c.h.b16 %v150
    %v763 = vunpack.c.l.b16 %v151
    %v764 = vunpack.c.h.b16 %v151
    %v765 = vunpack.c.l.b16 %v152
    %v766 = vunpack.c.h.b16 %v152
    %v767 = vunpack.c.l.b16 %v153
    %v768 = vunpack.c.h.b16 %v153
    %v769 = vunpack.c.l.b16 %v154
    %v770 = vunpack.c.h.b16 %v154
    %v771 = vunpack.c.l.b16 %v155
    %v772 = vunpack.c.h.b16 %v155
    %v773 = vunpack.c.l.b16 %v156
    %v774 = vunpack.c.h.b16 %v156
    %v775 = vunpack.c.l.b16 %v157
    %v776 = vunpack.c.h.b16 %v157
    %v777 = vunpack.c.l.b16 %v158
    %v778 = vunpack.c.h.b16 %v158
    %v779 = vunpack.c.l.b16 %v159
    %v780 = vunpack.c.h.b16 %v159
    %v781 = vunpack.c.l.b16 %v160
    %v782 = vunpack.c.h.b16 %v160
    %v783 = vunpack.c.l.b16 %v161
    %v784 = vunpack.c.h.b16 %v161
    %v785 = vunpack.c.l.b16 %v162
    %v786 = vunpack.c.h.b16 %v162
    %v787 = vunpack.c.l.b16 %v163
    %v788 = vunpack.c.h.b16 %v163
    %v789 = vunpack.c.l.b16 %v164
    %v790 = vunpack.c.h.b16 %v164
    %v791 = vunpack.c.l.b16 %v165
    %v792 = vunpack.c.h.b16 %v165
    %v793 = vunpack.c.l.b16 %v166
    %v794 = vunpack.c.h.b16 %v166
    %v795 = vunpack.c.l.b16 %v167
    %v796 = vunpack.c.h.b16 %v167
    %v797 = vunpack.c.l.b16 %v168
    %v798 = vunpack.c.h.b16 %v168
    %v799 = vunpack.c.l.b16 %v169
    %v800 = vunpack.c.h.b16 %v169
    %v801 = vunpack.c.l.b16 %v170
    %v802 = vunpack.c.h.b16 %v170
    %v803 = vunpack.c.l.b16 %v171
    %v804 = vunpack.c.h.b16 %v171
    %v805 = vunpack.c.l.b16 %v172
    %v806 = vunpack.c.h.b16 %v172
    %v807 = vunpack.c.l.b16 %v173
    %v808 = vunpack.c.h.b16 %v173
    %v809 = vunpack.c.l.b16 %v174
    %v810 = vunpack.c.h.b16 %v174
    %v811 = vunpack.c.l.b16 %v175
    %v812 = vunpack.c.h.b16 %v175
    %v813 = vunpack.c.l.b16 %v176
    %v814 = vunpack.c.h.b16 %v176
    %v815 = vunpack.c.l.b16 %v177
    %v816 = vunpack.c.h.b16 %v177
    %v817 = vunpack.c.l.b16 %v178
    %v818 = vunpack.c.h.b16 %v178
    %v819 = vunpack.c.l.b16 %v179
    %v820 = vunpack.c.h.b16 %v179
    %v821 = vunpack.c.l.b16 %v180
    %v822 = vunpack.c.h.b16 %v180
    %v823 = vunpack.c.l.b16 %v181
    %v824 = vunpack.c.h.b16 %v181
    %v825 = vunpack.c.l.b16 %v182
    %v826 = vunpack.c.h.b16 %v182
    %v827 = vunpack.c.l.b16 %v183
    %v828 = vunpack.c.h.b16 %v183
    %v829 = vunpack.c.l.b16 %v184
    %v830 = vunpack.c.h.b16 %v184
    %v831 = vunpack.c.l.b16 %v185
    %v832 = vunpack.c.h.b16 %v185
    %v833 = vunpack.c.l.b16 %v186
    %v834 = vunpack.c.h.b16 %v186
    %v835 = vunpack.c.l.b16 %v187
    %v836 = vunpack.c.h.b16 %v187
    %v837 = vunpack.c.l.b16 %v188
    %v838 = vunpack.c.h.b16 %v188
    %v839 = vunpack.c.l.b16 %v189
    %v840 = vunpack.c.h.b16 %v189
    %v841 = vunpack.c.l.b16 %v190
    %v842 = vunpack.c.h.b16 %v190
    %v843 = vunpack.c.l.b16 %v191
    %v844 = vunpack.c.h.b16 %v191
    %v845 = vunpack.c.l.b16 %v192
    %v846 = vunpack.c.h.b16 %v192
    %v847 = vunpack.c.l.b16 %v193
    %v848 = vunpack.c.h.b16 %v193
    %v849 = vunpack.c.l.b16 %v194
    %v850 = vunpack.c.h.b16 %v194
    %v851 = vunpack.c.l.b16 %v195
    %v852 = vunpack.c.h.b16 %v195
    %v853 = vunpack.c.l.b16 %v196
    %v854 = vunpack.c.h.b16 %v196
    %v855 = vunpack.c.l.b16 %v197
    %v856 = vunpack.c.h.b16 %v197
    %v857 = vunpack.c.l.b16 %v198
    %v858 = vunpack.c.h.b16 %v198
    %v859 = vunpack.c.l.b16 %v199
    %v860 = vunpack.c.h.b16 %v199
    %v861 = vunpack.c.l.b16 %v200
    %v862 = vunpack.c.h.b16 %v200
    %v863 = vunpack.c.l.b16 %v201
    %v864 = vunpack.c.h.b16 %v201
    %v865 = vunpack.c.l.b16 %v202
    %v866 = vunpack.c.h.b16 %v202
    %v867 = vunpack.c.l.b16 %v203
    %v868 = vunpack.c.h.b16 %v203
    %v869 = vunpack.c.l.b16 %v204
    %v870 = vunpack.c.h.b16 %v204
    %v871 = vunpack.c.l.b16 %v205
    %v872 = vunpack.c.h.b16 %v205
    %v873 = vunpack.c.l.b16 %v206
    %v874 = vunpack.c.h.b16 %v206
    %v875 = vunpack.c.l.b16 %v207
    %v876 = vunpack.c.h.b16 %v207
    %v877 = vunpack.c.l.b16 %v208
    %v878 = vunpack.c.h.b16 %v208
    %v879 = vunpack.c.l.b16 %v209
    %v880 = vunpack.c.h.b16 %v209
    %v881 = vunpack.c.l.b16 %v210
    %v882 = vunpack.c.h.b16 %v210
    %v883 = vunpack.c.l.b16 %v211
    %v884 = vunpack.c.h.b16 %v211
    %v885 = vunpack.c.l.b16 %v212
    %v886 = vunpack.c.h.b16 %v212
    %v887 = vunpack.c.l.b16 %v213
    %v888 = vunpack.c.h.b16 %v213
    %v889 = vunpack.c.l.b16 %v214
    %v890 = vunpack.c.h.b16 %v214
    %v891 = vunpack.c.l.b16 %v215
    %v892 = vunpack.c.h.b16 %v215
    %v893 = vunpack.c.l.b16 %v216
    %v894 = vunpack.c.h.b16 %v216
    %v895 = vunpack.c.l.b16 %v217
    %v896 = vunpack.c.h.b16 %v217
    %v897 = vunpack.c.l.b16 %v218
    %v898 = vunpack.c.h.b16 %v218
    %v899 = vunpack.c.l.b16 %v219
    %v900 = vunpack.c.h.b16 %v219
    %v901 = vunpack.c.l.b16 %v220
    %v902 = vunpack.c.h.b16 %v220
    %v903 = vunpack.c.l.b16 %v221
    %v904 = vunpack.c.h.b16 %v221
    %v905 = vunpack.c.l.b16 %v222
    %v906 = vunpack.c.h.b16 %v222
    %v907 = vunpack.c.l.b16 %v223
    %v908 = vunpack.c.h.b16 %v223
    %v909 = vunpack.c.l.b16 %v224
    %v910 = vunpack.c.h.b16 %v224
    %v911 = vunpack.c.l.b16 %v225
    %v912 = vunpack.c.h.b16 %v225
    %v913 = vunpack.c.l.b16 %v226
    %v914 = vunpack.c.h.b16 %v226
    %v915 = vunpack.c.l.b16 %v227
    %v916 = vunpack.c.h.b16 %v227
    %v917 = vunpack.c.l.b16 %v228
    %v918 = vunpack.c.h.b16 %v228
    %v919 = vunpack.c.l.b16 %v229
    %v920 = vunpack.c.h.b16 %v229
    %v921 = vunpack.c.l.b16 %v230
    %v922 = vunpack.c.h.b16 %v230
    %v923 = vunpack.c.l.b16 %v231
    %v924 = vunpack.c.h.b16 %v231
    %v925 = vunpack.c.l.b16 %v232
    %v926 = vunpack.c.h.b16 %v232
    %v927 = vunpack.c.l.b16 %v233
    %v928 = vunpack.c.h.b16 %v233
    %v929 = vunpack.c.l.b16 %v234
    %v930 = vunpack.c.h.b16 %v234
    %v931 = vunpack.c.l.b16 %v235
    %v932 = vunpack.c.h.b16 %v235
    %v933 = vunpack.c.l.b16 %v236
    %v934 = vunpack.c.h.b16 %v236
    %v935 = vunpack.c.l.b16 %v237
    %v936 = vunpack.c.h.b16 %v237
    %v937 = vunpack.c.l.b16 %v238
    %v938 = vunpack.c.h.b16 %v238
    %v939 = vunpack.c.l.b16 %v239
    %v940 = vunpack.c.h.b16 %v239
    %v941 = vunpack.c.l.b16 %v240
    %v942 = vunpack.c.h.b16 %v240
    %v943 = vunpack.c.l.b16 %v241
    %v944 = vunpack.c.h.b16 %v241
    %v945 = vunpack.c.l.b16 %v242
    %v946 = vunpack.c.h.b16 %v242
    %v947 = vunpack.c.l.b16 %v243
    %v948 = vunpack.c.h.b16 %v243
    %v949 = vunpack.c.l.b16 %v244
    %v950 = vunpack.c.h.b16 %v244
    %v951 = vunpack.c.l.b16 %v245
    %v952 = vunpack.c.h.b16 %v245
    %v953 = vunpack.c.l.b16 %v246
    %v954 = vunpack.c.h.b16 %v246
    %v955 = vunpack.c.l.b16 %v247
    %v956 = vunpack.c.h.b16 %v247
    %v957 = vunpack.c.l.b16 %v248
    %v958 = vunpack.c.h.b16 %v248
    %v959 = vunpack.c.l.b16 %v249
    %v960 = vunpack.c.h.b16 %v249
    %v961 = vunpack.c.l.b16 %v250
    %v962 = vunpack.c.h.b16 %v250
    %v963 = vunpack.c.l.b16 %v251
    %v964 = vunpack.c.h.b16 %v251
    %v965 = vunpack.c.l.b16 %v252
    %v966 = vunpack.c.h.b16 %v252
    %v967 = vunpack.c.l.b16 %v253
    %v968 = vunpack.c.h.b16 %v253
    %v969 = vunpack.c.l.b16 %v254
    %v970 = vunpack.c.h.b16 %v254
    %v971 = vunpack.c.l.b16 %v255
    %v972 = vunpack.c.h.b16 %v255
    %v973 = vunpack.c.l.b16 %v256
    %v974 = vunpack.c.h.b16 %v256
    %v975 = vunpack.c.l.b16 %v257
    %v976 = vunpack.c.h.b16 %v257
    %v977 = vunpack.c.l.b16 %v258
    %v978 = vunpack.c.h.b16 %v258
    %v979 = vunpack.c.l.b16 %v259
    %v980 = vunpack.c.h.b16 %v259
    %v981 = vunpack.c.l.b16 %v260
    %v982 = vunpack.c.h.b16 %v260
    %v983 = vunpack.c.l.b16 %v261
    %v984 = vunpack.c.h.b16 %v261
    %v985 = vunpack.c.l.b16 %v262
    %v986 = vunpack.c.h.b16 %v262
    %v987 = vunpack.c.l.b16 %v263
    %v988 = vunpack.c.h.b16 %v263
    %v989 = vunpack.c.l.b16 %v264
    %v990 = vunpack.c.h.b16 %v264
    %v991 = vunpack.c.l.b16 %v265
    %v992 = vunpack.c.h.b16 %v265
    %v993 = vunpack.c.l.b16 %v266
    %v994 = vunpack.c.h.b16 %v266
    %v995 = vunpack.c.l.b16 %v267
    %v996 = vunpack.c.h.b16 %v267
    %v997 = vunpack.c.l.b16 %v268
    %v998 = vunpack.c.h.b16 %v268
    %v999 = vunpack.c.l.b16 %v269
    %v1000 = vunpack.c.h.b16 %v269
    %v1001 = vunpack.c.l.b16 %v270
    %v1002 = vunpack.c.h.b16 %v270
    %v1003 = vunpack.c.l.b16 %v271
    %v1004 = vunpack.c.h.b16 %v271
    %v1005 = vunpack.c.l.b16 %v272
    %v1006 = vunpack.c.h.b16 %v272
    %v1007 = vunpack.c.l.b16 %v273
    %v1008 = vunpack.c.h.b16 %v273
    %v1009 = vunpack.c.l.b16 %v274
    %v1010 = vunpack.c.h.b16 %v274
    %v1011 = vunpack.c.l.b16 %v275
    %v1012 = vunpack.c.h.b16 %v275
    %v1013 = vunpack.c.l.b16 %v276
    %v1014 = vunpack.c.h.b16 %v276
    %v1015 = vunpack.c.l.b16 %v277
    %v1016 = vunpack.c.h.b16 %v277
    %v1017 = vunpack.c.l.b16 %v278
    %v1018 = vunpack.c.h.b16 %v278
    %v1019 = vunpack.c.l.b16 %v279
    %v1020 = vunpack.c.h.b16 %v279
    %v1021 = vunpack.c.l.b16 %v280
    %v1022 = vunpack.c.h.b16 %v280
    %v1023 = vunpack.c.l.b16 %v281
    %v1024 = vunpack.c.h.b16 %v281
    %v1025 = vunpack.c.l.b16 %v282
    %v1026 = vunpack.c.h.b16 %v282
    %v1027 = vunpack.c.l.b16 %v283
    %v1028 = vunpack.c.h.b16 %v283
    %v1029 = vunpack.c.l.b16 %v284
    %v1030 = vunpack.c.h.b16 %v284
    %v1031 = vunpack.c.l.b16 %v285
    %v1032 = vunpack.c.h.b16 %v285
    %v1033 = vunpack.c.l.b16 %v286
    %v1034 = vunpack.c.h.b16 %v286
    %v1035 = vunpack.c.l.b16 %v287
    %v1036 = vunpack.c.h.b16 %v287
    %v1037 = vunpack.c.l.b16 %v288
    %v1038 = vunpack.c.h.b16 %v288
    %v1039 = vunpack.c.l.b16 %v289
    %v1040 = vunpack.c.h.b16 %v289
    %v1041 = vunpack.c.l.b16 %v290
    %v1042 = vunpack.c.h.b16 %v290
    %v1043 = vunpack.c.l.b16 %v291
    %v1044 = vunpack.c.h.b16 %v291
    %v1045 = vunpack.c.l.b16 %v292
    %v1046 = vunpack.c.h.b16 %v292
    %v1047 = vunpack.c.l.b16 %v293
    %v1048 = vunpack.c.h.b16 %v293
    %v1049 = vunpack.c.l.b16 %v294
    %v1050 = vunpack.c.h.b16 %v294
    %v1051 = vunpack.c.l.b16 %v295
    %v1052 = vunpack.c.h.b16 %v295
    %v1053 = vunpack.c.l.b16 %v296
    %v1054 = vunpack.c.h.b16 %v296
    %v1055 = vunpack.c.l.b16 %v297
    %v1056 = vunpack.c.h.b16 %v297
    %v1057 = vunpack.c.l.b16 %v298
    %v1058 = vunpack.c.h.b16 %v298
    %v1059 = vunpack.c.l.b16 %v299
    %v1060 = vunpack.c.h.b16 %v299
    %v1061 = vunpack.c.l.b16 %v300
    %v1062 = vunpack.c.h.b16 %v300
    %v1063 = vunpack.c.l.b16 %v301
    %v1064 = vunpack.c.h.b16 %v301
    %v1065 = vunpack.c.l.b16 %v302
    %v1066 = vunpack.c.h.b16 %v302
    %v1067 = vunpack.c.l.b16 %v303
    %v1068 = vunpack.c.h.b16 %v303
    %v1069 = vunpack.c.l.b16 %v304
    %v1070 = vunpack.c.h.b16 %v304
    %v1071 = vunpack.c.l.b16 %v305
    %v1072 = vunpack.c.h.b16 %v305
    %v1073 = vunpack.c.l.b16 %v306
    %v1074 = vunpack.c.h.b16 %v306
    %v1075 = vunpack.c.l.b16 %v307
    %v1076 = vunpack.c.h.b16 %v307
    %v1077 = vunpack.c.l.b16 %v308
    %v1078 = vunpack.c.h.b16 %v308
    %v1079 = vunpack.c.l.b16 %v309
    %v1080 = vunpack.c.h.b16 %v309
    %v1081 = vunpack.c.l.b16 %v310
    %v1082 = vunpack.c.h.b16 %v310
    %v1083 = vunpack.c.l.b16 %v311
    %v1084 = vunpack.c.h.b16 %v311
    %v1085 = vunpack.c.l.b16 %v312
    %v1086 = vunpack.c.h.b16 %v312
    %v1087 = vunpack.c.l.b16 %v313
    %v1088 = vunpack.c.h.b16 %v313
    %v1089 = vunpack.c.l.b16 %v314
    %v1090 = vunpack.c.h.b16 %v314
    %v1091 = vunpack.c.l.b16 %v315
    %v1092 = vunpack.c.h.b16 %v315
    %v1093 = vunpack.c.l.b16 %v316
    %v1094 = vunpack.c.h.b16 %v316
    %v1095 = vpack.c.b16 %v587, %v583
    %v1096 = vpack.c.b16 %v588, %v584
    %v1097 = vpack.c.b16 %v589, %v585
    %v1098 = vpack.c.b16 %v590, %v586
    %v1099 = vpack.c.b16 %v595, %v591
    %v1100 = vpack.c.b16 %v596, %v592
    %v1101 = vpack.c.b16 %v597, %v593
    %v1102 = vpack.c.b16 %v598, %v594
    %v1103 = vpack.c.b16 %v603, %v599
    %v1104 = vpack.c.b16 %v604, %v600
    %v1105 = vpack.c.b16 %v605, %v601
    %v1106 = vpack.c.b16 %v606, %v602
    %v1107 = vpack.c.b16 %v611, %v607
    %v1108 = vpack.c.b16 %v612, %v608
    %v1109 = vpack.c.b16 %v613, %v609
    %v1110 = vpack.c.b16 %v614, %v610
    %v1111 = vpack.c.b16 %v619, %v615
    %v1112 = vpack.c.b16 %v620, %v616
    %v1113 = vpack.c.b16 %v621, %v617
    %v1114 = vpack.c.b16 %v622, %v618
    %v1115 = vpack.c.b16 %v627, %v623
    %v1116 = vpack.c.b16 %v628, %v624
    %v1117 = vpack.c.b16 %v629, %v625
    %v1118 = vpack.c.b16 %v630, %v626
    %v1119 = vpack.c.b16 %v635, %v631
    %v1120 = vpack.c.b16 %v636, %v632
    %v1121 = vpack.c.b16 %v637, %v633
    %v1122 = vpack.c.b16 %v638, %v634
    %v1123 = vpack.c.b16 %v643, %v639
    %v1124 = vpack.c.b16 %v644, %v640
    %v1125 = vpack.c.b16 %v645, %v641
    %v1126 = vpack.c.b16 %v646, %v642
    %v1127 = vpack.c.b16 %v651, %v647
    %v1128 = vpack.c.b16 %v652, %v648
    %v1129 = vpack.c.b16 %v653, %v649
    %v1130 = vpack.c.b16 %v654, %v650
    %v1131 = vpack.c.b16 %v659, %v655
    %v1132 = vpack.c.b16 %v660, %v656
    %v1133 = vpack.c.b16 %v661, %v657
    %v1134 = vpack.c.b16 %v662, %v658
    %v1135 = vpack.c.b16 %v667, %v663
    %v1136 = vpack.c.b16 %v668, %v664
    %v1137 = vpack.c.b16 %v669, %v665
    %v1138 = vpack.c.b16 %v670, %v666
    %v1139 = vpack.c.b16 %v675, %v671
    %v1140 = vpack.c.b16 %v676, %v672
    %v1141 = vpack.c.b16 %v677, %v673
    %v1142 = vpack.c.b16 %v678, %v674
    %v1143 = vpack.c.b16 %v683, %v679
    %v1144 = vpack.c.b16 %v684, %v680
    %v1145 = vpack.c.b16 %v685, %v681
    %v1146 = vpack.c.b16 %v686, %v682
    %v1147 = vpack.c.b16 %v691, %v687
    %v1148 = vpack.c.b16 %v692, %v688
    %v1149 = vpack.c.b16 %v693, %v689
    %v1150 = vpack.c.b16 %v694, %v690
    %v1151 = vpack.c.b16 %v699, %v695
    %v1152 = vpack.c.b16 %v700, %v696
    %v1153 = vpack.c.b16 %v701, %v697
    %v1154 = vpack.c.b16 %v702, %v698
    %v1155 = vpack.c.b16 %v707, %v703
    %v1156 = vpack.c.b16 %v708, %v704
    %v1157 = vpack.c.b16 %v709, %v705
    %v1158 = vpack.c.b16 %v710, %v706
    %v1159 = vpack.c.b16 %v715, %v711
    %v1160 = vpack.c.b16 %v716, %v712
    %v1161 = vpack.c.b16 %v717, %v713
    %v1162 = vpack.c.b16 %v718, %v714
    %v1163 = vpack.c.b16 %v723, %v719
    %v1164 = vpack.c.b16 %v724, %v720
    %v1165 = vpack.c.b16 %v725, %v721
    %v1166 = vpack.c.b16 %v726, %v722
    %v1167 = vpack.c.b16 %v731, %v727
    %v1168 = vpack.c.b16 %v732, %v728
    %v1169 = vpack.c.b16 %v733, %v729
    %v1170 = vpack.c.b16 %v734, %v730
    %v1171 = vpack.c.b16 %v739, %v735
    %v1172 = vpack.c.b16 %v740, %v736
    %v1173 = vpack.c.b16 %v741, %v737
    %v1174 = vpack.c.b16 %v742, %v738
    %v1175 = vpack.c.b16 %v747, %v743
    %v1176 = vpack.c.b16 %v748, %v744
    %v1177 = vpack.c.b16 %v749, %v745
    %v1178 = vpack.c.b16 %v750, %v746
    %v1179 = vpack.c.b16 %v755, %v751
    %v1180 = vpack.c.b16 %v756, %v752
    %v1181 = vpack.c.b16 %v757, %v753
    %v1182 = vpack.c.b16 %v758, %v754
    %v1183 = vpack.c.b16 %v763, %v759
    %v1184 = vpack.c.b16 %v764, %v760
    %v1185 = vpack.c.b16 %v765, %v761
    %v1186 = vpack.c.b16 %v766, %v762
    %v1187 = vpack.c.b16 %v771, %v767
    %v1188 = vpack.c.b16 %v772, %v768
    %v1189 = vpack.c.b16 %v773, %v769
    %v1190 = vpack.c.b16 %v774, %v770
    %v1191 = vpack.c.b16 %v779, %v775
    %v1192 = vpack.c.b16 %v780, %v776
    %v1193 = vpack.c.b16 %v781, %v777
    %v1194 = vpack.c.b16 %v782, %v778
    %v1195 = vpack.c.b16 %v787, %v783
    %v1196 = vpack.c.b16 %v788, %v784
    %v1197 = vpack.c.b16 %v789, %v785
    %v1198 = vpack.c.b16 %v790, %v786
    %v1199 = vpack.c.b16 %v795, %v791
    %v1200 = vpack.c.b16 %v796, %v792
    %v1201 = vpack.c.b16 %v797, %v793
    %v1202 = vpack.c.b16 %v798, %v794
    %v1203 = vpack.c.b16 %v803, %v799
    %v1204 = vpack.c.b16 %v804, %v800
    %v1205 = vpack.c.b16 %v805, %v801
    %v1206 = vpack.c.b16 %v806, %v802
    %v1207 = vpack.c.b16 %v811, %v807
    %v1208 = vpack.c.b16 %v812, %v808
    %v1209 = vpack.c.b16 %v813, %v809
    %v1210 = vpack.c.b16 %v814, %v810
    %v1211 = vpack.c.b16 %v819, %v815
    %v1212 = vpack.c.b16 %v820, %v816
    %v1213 = vpack.c.b16 %v821, %v817
    %v1214 = vpack.c.b16 %v822, %v818
    %v1215 = vpack.c.b16 %v827, %v823
    %v1216 = vpack.c.b16 %v828, %v824
    %v1217 = vpack.c.b16 %v829, %v825
    %v1218 = vpack.c.b16 %v830, %v826
    %v1219 = vpack.c.b16 %v835, %v831
    %v1220 = vpack.c.b16 %v836, %v832
    %v1221 = vpack.c.b16 %v837, %v833
    %v1222 = vpack.c.b16 %v838, %v834
    %v1223 = vpack.c.b16 %v843, %v839
    %v1224 = vpack.c.b16 %v844, %v840
    %v1225 = vpack.c.b16 %v845, %v841
    %v1226 = vpack.c.b16 %v846, %v842
    %v1227 = vpack.c.b16 %v851, %v847
    %v1228 = vpack.c.b16 %v852, %v848
    %v1229 = vpack.c.b16 %v853, %v849
    %v1230 = vpack.c.b16 %v854, %v850
    %v1231 = vpack.c.b16 %v859, %v855
    %v1232 = vpack.c.b16 %v860, %v856
    %v1233 = vpack.c.b16 %v861, %v857
    %v1234 = vpack.c.b16 %v862, %v858
    %v1235 = vpack.c.b16 %v867, %v863
    %v1236 = vpack.c.b16 %v868, %v864
    %v1237 = vpack.c.b16 %v869, %v865
    %v1238 = vpack.c.b16 %v870, %v866
    %v1239 = vpack.c.b16 %v875, %v871
    %v1240 = vpack.c.b16 %v876, %v872
    %v1241 = vpack.c.b16 %v877, %v873
    %v1242 = vpack.c.b16 %v878, %v874
    %v1243 = vpack.c.b16 %v883, %v879
    %v1244 = vpack.c.b16 %v884, %v880
    %v1245 = vpack.c.b16 %v885, %v881
    %v1246 = vpack.c.b16 %v886, %v882
    %v1247 = vpack.c.b16 %v891, %v887
    %v1248 = vpack.c.b16 %v892, %v888
    %v1249 = vpack.c.b16 %v893, %v889
    %v1250 = vpack.c.b16 %v894, %v890
    %v1251 = vpack.c.b16 %v899, %v895
    %v1252 = vpack.c.b16 %v900, %v896
    %v1253 = vpack.c.b16 %v901, %v897
    %v1254 = vpack.c.b16 %v902, %v898
    %v1255 = vpack.c.b16 %v907, %v903
    %v1256 = vpack.c.b16 %v908, %v904
    %v1257 = vpack.c.b16 %v909, %v905
    %v1258 = vpack.c.b16 %v910, %v906
    %v1259 = vpack.c.b16 %v915, %v911
    %v1260 = vpack.c.b16 %v916, %v912
    %v1261 = vpack.c.b16 %v917, %v913
    %v1262 = vpack.c.b16 %v918, %v914
    %v1263 = vpack.c.b16 %v923, %v919
    %v1264 = vpack.c.b16 %v924, %v920
    %v1265 = vpack.c.b16 %v925, %v921
    %v1266 = vpack.c.b16 %v926, %v922
    %v1267 = vpack.c.b16 %v931, %v927
    %v1268 = vpack.c.b16 %v932, %v928
    %v1269 = vpack.c.b16 %v933, %v929
    %v1270 = vpack.c.b16 %v934, %v930
    %v1271 = vpack.c.b16 %v939, %v935
    %v1272 = vpack.c.b16 %v940, %v936
    %v1273 = vpack.c.b16 %v941, %v937
    %v1274 = vpack.c.b16 %v942, %v938
    %v1275 = vpack.c.b16 %v947, %v943
    %v1276 = vpack.c.b16 %v948, %v944
    %v1277 = vpack.c.b16 %v949, %v945
    %v1278 = vpack.c.b16 %v950, %v946
    %v1279 = vpack.c.b16 %v955, %v951
    %v1280 = vpack.c.b16 %v956, %v952
    %v1281 = vpack.c.b16 %v957, %v953
    %v1282 = vpack.c.b16 %v958, %v954
    %v1283 = vpack.c.b16 %v963, %v959
    %v1284 = vpack.c.b16 %v964, %v960
    %v1285 = vpack.c.b16 %v965, %v961
    %v1286 = vpack.c.b16 %v966, %v962
    %v1287 = vpack.c.b16 %v971, %v967
    %v1288 = vpack.c.b16 %v972, %v968
    %v1289 = vpack.c.b16 %v973, %v969
    %v1290 = vpack.c.b16 %v974, %v970
    %v1291 = vpack.c.b16 %v979, %v975
    %v1292 = vpack.c.b16 %v980, %v976
    %v1293 = vpack.c.b16 %v981, %v977
    %v1294 = vpack.c.b16 %v982, %v978
    %v1295 = vpack.c.b16 %v987, %v983
    %v1296 = vpack.c.b16 %v988, %v984
    %v1297 = vpack.c.b16 %v989, %v985
    %v1298 = vpack.c.b16 %v990, %v986
    %v1299 = vpack.c.b16 %v995, %v991
    %v1300 = vpack.c.b16 %v996, %v992
    %v1301 = vpack.c.b16 %v997, %v993
    %v1302 = vpack.c.b16 %v998, %v994
    %v1303 = vpack.c.b16 %v1003, %v999
    %v1304 = vpack.c.b16 %v1004, %v1000
    %v1305 = vpack.c.b16 %v1005, %v1001
    %v1306 = vpack.c.b16 %v1006, %v1002
    %v1307 = vpack.c.b16 %v1011, %v1007
    %v1308 = vpack.c.b16 %v1012, %v1008
    %v1309 = vpack.c.b16 %v1013, %v1009
    %v1310 = vpack.c.b16 %v1014, %v1010
    %v1311 = vpack.c.b16 %v1019, %v1015
    %v1312 = vpack.c.b16 %v1020, %v1016
    %v1313 = vpack.c.b16 %v1021, %v1017
    %v1314 = vpack.c.b16 %v1022, %v1018
    %v1315 = vpack.c.b16 %v1027, %v1023
    %v1316 = vpack.c.b16 %v1028, %v1024
    %v1317 = vpack.c.b16 %v1029, %v1025
    %v1318 = vpack.c.b16 %v1030, %v1026
    %v1319 = vpack.c.b16 %v1035, %v1031
    %v1320 = vpack.c.b16 %v1036, %v1032
    %v1321 = vpack.c.b16 %v1037, %v1033
    %v1322 = vpack.c.b16 %v1038, %v1034
    %v1323 = vpack.c.b16 %v1043, %v1039
    %v1324 = vpack.c.b16 %v1044, %v1040
    %v1325 = vpack.c.b16 %v1045, %v1041
    %v1326 = vpack.c.b16 %v1046, %v1042
    %v1327 = vpack.c.b16 %v1051, %v1047
    %v1328 = vpack.c.b16 %v1052, %v1048
    %v1329 = vpack.c.b16 %v1053, %v1049
    %v1330 = vpack.c.b16 %v1054, %v1050
    %v1331 = vpack.c.b16 %v1059, %v1055
    %v1332 = vpack.c.b16 %v1060, %v1056
    %v1333 = vpack.c.b16 %v1061, %v1057
    %v1334 = vpack.c.b16 %v1062, %v1058
    %v1335 = vpack.c.b16 %v1067, %v1063
    %v1336 = vpack.c.b16 %v1068, %v1064
    %v1337 = vpack.c.b16 %v1069, %v1065
    %v1338 = vpack.c.b16 %v1070, %v1066
    %v1339 = vpack.c.b16 %v1075, %v1071
    %v1340 = vpack.c.b16 %v1076, %v1072
    %v1341 = vpack.c.b16 %v1077, %v1073
    %v1342 = vpack.c.b16 %v1078, %v1074
    %v1343 = vpack.c.b16 %v1083, %v1079
    %v1344 = vpack.c.b16 %v1084, %v1080
    %v1345 = vpack.c.b16 %v1085, %v1081
    %v1346 = vpack.c.b16 %v1086, %v1082
    %v1347 = vpack.c.b16 %v1091, %v1087
    %v1348 = vpack.c.b16 %v1092, %v1088
    %v1349 = vpack.c.b16 %v1093, %v1089
    %v1350 = vpack.c.b16 %v1094, %v1090
    %1607 = vmatpush.bf16.msra.mxu0 %v1123
    %1608 = vmatpush.bf16.msra.mxu0 %v1119
    %1609 = vmatpush.bf16.msra.mxu0 %v1115
    %1610 = vmatpush.bf16.msra.mxu0 %v1111
    %1611 = vmatpush.bf16.msra.mxu0 %v1107
    %1612 = vmatpush.bf16.msra.mxu0 %v1103
    %1613 = vmatpush.bf16.msra.mxu0 %v1099
    %1614 = vmatpush.bf16.msra.mxu0 %v1095
    %1615 = vmatmul.bf16.gmra.mxu0 %v53
    %v1616 = vpop.f32.mrf.mxu0
    %v1617 = vadd.f32 %v319, %v1616
    %v1618 = vpop.f32.mrf.mxu0
    %1619 = vdwg.mxu0
    %1620 = vmatpush.bf16.msra.mxu0 %v1155
    %1621 = vmatpush.bf16.msra.mxu0 %v1151
    %1622 = vmatpush.bf16.msra.mxu0 %v1147
    %1623 = vmatpush.bf16.msra.mxu0 %v1143
    %1624 = vmatpush.bf16.msra.mxu0 %v1139
    %1625 = vmatpush.bf16.msra.mxu0 %v1135
    %1626 = vmatpush.bf16.msra.mxu0 %v1131
    %1627 = vmatpush.bf16.msra.mxu0 %v1127
    %1628 = vmatmul.bf16.gmra.mxu0 %v54
    %v1629 = vpop.f32.mrf.mxu0
    %v1630 = vadd.f32 %v1617, %v1629
    %v1631 = vpop.f32.mrf.mxu0
    %1632 = vdwg.mxu0
    %1633 = vmatpush.bf16.msra.mxu0 %v1187
    %1634 = vmatpush.bf16.msra.mxu0 %v1183
    %1635 = vmatpush.bf16.msra.mxu0 %v1179
    %1636 = vmatpush.bf16.msra.mxu0 %v1175
    %1637 = vmatpush.bf16.msra.mxu0 %v1171
    %1638 = vmatpush.bf16.msra.mxu0 %v1167
    %1639 = vmatpush.bf16.msra.mxu0 %v1163
    %1640 = vmatpush.bf16.msra.mxu0 %v1159
    %1641 = vmatmul.bf16.gmra.mxu0 %v55
    %v1642 = vpop.f32.mrf.mxu0
    %v1643 = vadd.f32 %v1630, %v1642
    %v1644 = vpop.f32.mrf.mxu0
    %1645 = vdwg.mxu0
    %1646 = vmatpush.bf16.msra.mxu0 %v1219
    %1647 = vmatpush.bf16.msra.mxu0 %v1215
    %1648 = vmatpush.bf16.msra.mxu0 %v1211
    %1649 = vmatpush.bf16.msra.mxu0 %v1207
    %1650 = vmatpush.bf16.msra.mxu0 %v1203
    %1651 = vmatpush.bf16.msra.mxu0 %v1199
    %1652 = vmatpush.bf16.msra.mxu0 %v1195
    %1653 = vmatpush.bf16.msra.mxu0 %v1191
    %1654 = vmatmul.bf16.gmra.mxu0 %v56
    %v1655 = vpop.f32.mrf.mxu0
    %v1656 = vadd.f32 %v1643, %v1655
    %v1657 = vpop.f32.mrf.mxu0
    %1658 = vdwg.mxu0
    %1659 = vmatpush.bf16.msra.mxu0 %v1251
    %1660 = vmatpush.bf16.msra.mxu0 %v1247
    %1661 = vmatpush.bf16.msra.mxu0 %v1243
    %1662 = vmatpush.bf16.msra.mxu0 %v1239
    %1663 = vmatpush.bf16.msra.mxu0 %v1235
    %1664 = vmatpush.bf16.msra.mxu0 %v1231
    %1665 = vmatpush.bf16.msra.mxu0 %v1227
    %1666 = vmatpush.bf16.msra.mxu0 %v1223
    %1667 = vmatmul.bf16.gmra.mxu0 %v57
    %v1668 = vpop.f32.mrf.mxu0
    %v1669 = vadd.f32 %v1656, %v1668
    %v1670 = vpop.f32.mrf.mxu0
    %1671 = vdwg.mxu0
    %1672 = vmatpush.bf16.msra.mxu0 %v1283
    %1673 = vmatpush.bf16.msra.mxu0 %v1279
    %1674 = vmatpush.bf16.msra.mxu0 %v1275
    %1675 = vmatpush.bf16.msra.mxu0 %v1271
    %1676 = vmatpush.bf16.msra.mxu0 %v1267
    %1677 = vmatpush.bf16.msra.mxu0 %v1263
    %1678 = vmatpush.bf16.msra.mxu0 %v1259
    %1679 = vmatpush.bf16.msra.mxu0 %v1255
    %1680 = vmatmul.bf16.gmra.mxu0 %v58
    %v1681 = vpop.f32.mrf.mxu0
    %v1682 = vadd.f32 %v1669, %v1681
    %v1683 = vpop.f32.mrf.mxu0
    %1684 = vdwg.mxu0
    %1685 = vmatpush.bf16.msra.mxu0 %v1315
    %1686 = vmatpush.bf16.msra.mxu0 %v1311
    %1687 = vmatpush.bf16.msra.mxu0 %v1307
    %1688 = vmatpush.bf16.msra.mxu0 %v1303
    %1689 = vmatpush.bf16.msra.mxu0 %v1299
    %1690 = vmatpush.bf16.msra.mxu0 %v1295
    %1691 = vmatpush.bf16.msra.mxu0 %v1291
    %1692 = vmatpush.bf16.msra.mxu0 %v1287
    %1693 = vmatmul.bf16.gmra.mxu0 %v59
    %v1694 = vpop.f32.mrf.mxu0
    %v1695 = vadd.f32 %v1682, %v1694
    %v1696 = vpop.f32.mrf.mxu0
    %1697 = vdwg.mxu0
    %1698 = vmatpush.bf16.msra.mxu0 %v1347
    %1699 = vmatpush.bf16.msra.mxu0 %v1343
    %1700 = vmatpush.bf16.msra.mxu0 %v1339
    %1701 = vmatpush.bf16.msra.mxu0 %v1335
    %1702 = vmatpush.bf16.msra.mxu0 %v1331
    %1703 = vmatpush.bf16.msra.mxu0 %v1327
    %1704 = vmatpush.bf16.msra.mxu0 %v1323
    %1705 = vmatpush.bf16.msra.mxu0 %v1319
    %1706 = vmatmul.bf16.gmra.mxu0 %v60
    %v1707 = vpop.f32.mrf.mxu0
    %v1708 = vadd.f32 %v1695, %v1707
    %v1709 = vpop.f32.mrf.mxu0
    %1710 = vdwg.mxu0
    %1711 = vmatpush.bf16.msra.mxu0 %v1124
    %1712 = vmatpush.bf16.msra.mxu0 %v1120
    %1713 = vmatpush.bf16.msra.mxu0 %v1116
    %1714 = vmatpush.bf16.msra.mxu0 %v1112
    %1715 = vmatpush.bf16.msra.mxu0 %v1108
    %1716 = vmatpush.bf16.msra.mxu0 %v1104
    %1717 = vmatpush.bf16.msra.mxu0 %v1100
    %1718 = vmatpush.bf16.msra.mxu0 %v1096
    %1719 = vmatmul.bf16.gmra.mxu0 %v53
    %v1720 = vpop.f32.mrf.mxu0
    %v1721 = vadd.f32 %v320, %v1720
    %v1722 = vpop.f32.mrf.mxu0
    %1723 = vdwg.mxu0
    %1724 = vmatpush.bf16.msra.mxu0 %v1156
    %1725 = vmatpush.bf16.msra.mxu0 %v1152
    %1726 = vmatpush.bf16.msra.mxu0 %v1148
    %1727 = vmatpush.bf16.msra.mxu0 %v1144
    %1728 = vmatpush.bf16.msra.mxu0 %v1140
    %1729 = vmatpush.bf16.msra.mxu0 %v1136
    %1730 = vmatpush.bf16.msra.mxu0 %v1132
    %1731 = vmatpush.bf16.msra.mxu0 %v1128
    %1732 = vmatmul.bf16.gmra.mxu0 %v54
    %v1733 = vpop.f32.mrf.mxu0
    %v1734 = vadd.f32 %v1721, %v1733
    %v1735 = vpop.f32.mrf.mxu0
    %1736 = vdwg.mxu0
    %1737 = vmatpush.bf16.msra.mxu0 %v1188
    %1738 = vmatpush.bf16.msra.mxu0 %v1184
    %1739 = vmatpush.bf16.msra.mxu0 %v1180
    %1740 = vmatpush.bf16.msra.mxu0 %v1176
    %1741 = vmatpush.bf16.msra.mxu0 %v1172
    %1742 = vmatpush.bf16.msra.mxu0 %v1168
    %1743 = vmatpush.bf16.msra.mxu0 %v1164
    %1744 = vmatpush.bf16.msra.mxu0 %v1160
    %1745 = vmatmul.bf16.gmra.mxu0 %v55
    %v1746 = vpop.f32.mrf.mxu0
    %v1747 = vadd.f32 %v1734, %v1746
    %v1748 = vpop.f32.mrf.mxu0
    %1749 = vdwg.mxu0
    %1750 = vmatpush.bf16.msra.mxu0 %v1220
    %1751 = vmatpush.bf16.msra.mxu0 %v1216
    %1752 = vmatpush.bf16.msra.mxu0 %v1212
    %1753 = vmatpush.bf16.msra.mxu0 %v1208
    %1754 = vmatpush.bf16.msra.mxu0 %v1204
    %1755 = vmatpush.bf16.msra.mxu0 %v1200
    %1756 = vmatpush.bf16.msra.mxu0 %v1196
    %1757 = vmatpush.bf16.msra.mxu0 %v1192
    %1758 = vmatmul.bf16.gmra.mxu0 %v56
    %v1759 = vpop.f32.mrf.mxu0
    %v1760 = vadd.f32 %v1747, %v1759
    %v1761 = vpop.f32.mrf.mxu0
    %1762 = vdwg.mxu0
    %1763 = vmatpush.bf16.msra.mxu0 %v1252
    %1764 = vmatpush.bf16.msra.mxu0 %v1248
    %1765 = vmatpush.bf16.msra.mxu0 %v1244
    %1766 = vmatpush.bf16.msra.mxu0 %v1240
    %1767 = vmatpush.bf16.msra.mxu0 %v1236
    %1768 = vmatpush.bf16.msra.mxu0 %v1232
    %1769 = vmatpush.bf16.msra.mxu0 %v1228
    %1770 = vmatpush.bf16.msra.mxu0 %v1224
    %1771 = vmatmul.bf16.gmra.mxu0 %v57
    %v1772 = vpop.f32.mrf.mxu0
    %v1773 = vadd.f32 %v1760, %v1772
    %v1774 = vpop.f32.mrf.mxu0
    %1775 = vdwg.mxu0
    %1776 = vmatpush.bf16.msra.mxu0 %v1284
    %1777 = vmatpush.bf16.msra.mxu0 %v1280
    %1778 = vmatpush.bf16.msra.mxu0 %v1276
    %1779 = vmatpush.bf16.msra.mxu0 %v1272
    %1780 = vmatpush.bf16.msra.mxu0 %v1268
    %1781 = vmatpush.bf16.msra.mxu0 %v1264
    %1782 = vmatpush.bf16.msra.mxu0 %v1260
    %1783 = vmatpush.bf16.msra.mxu0 %v1256
    %1784 = vmatmul.bf16.gmra.mxu0 %v58
    %v1785 = vpop.f32.mrf.mxu0
    %v1786 = vadd.f32 %v1773, %v1785
    %v1787 = vpop.f32.mrf.mxu0
    %1788 = vdwg.mxu0
    %1789 = vmatpush.bf16.msra.mxu0 %v1316
    %1790 = vmatpush.bf16.msra.mxu0 %v1312
    %1791 = vmatpush.bf16.msra.mxu0 %v1308
    %1792 = vmatpush.bf16.msra.mxu0 %v1304
    %1793 = vmatpush.bf16.msra.mxu0 %v1300
    %1794 = vmatpush.bf16.msra.mxu0 %v1296
    %1795 = vmatpush.bf16.msra.mxu0 %v1292
    %1796 = vmatpush.bf16.msra.mxu0 %v1288
    %1797 = vmatmul.bf16.gmra.mxu0 %v59
    %v1798 = vpop.f32.mrf.mxu0
    %v1799 = vadd.f32 %v1786, %v1798
    %v1800 = vpop.f32.mrf.mxu0
    %1801 = vdwg.mxu0
    %1802 = vmatpush.bf16.msra.mxu0 %v1348
    %1803 = vmatpush.bf16.msra.mxu0 %v1344
    %1804 = vmatpush.bf16.msra.mxu0 %v1340
    %1805 = vmatpush.bf16.msra.mxu0 %v1336
    %1806 = vmatpush.bf16.msra.mxu0 %v1332
    %1807 = vmatpush.bf16.msra.mxu0 %v1328
    %1808 = vmatpush.bf16.msra.mxu0 %v1324
    %1809 = vmatpush.bf16.msra.mxu0 %v1320
    %1810 = vmatmul.bf16.gmra.mxu0 %v60
    %v1811 = vpop.f32.mrf.mxu0
    %v1812 = vadd.f32 %v1799, %v1811
    %v1813 = vpop.f32.mrf.mxu0
    %1814 = vdwg.mxu0
    %1815 = vmatpush.bf16.msra.mxu0 %v1125
    %1816 = vmatpush.bf16.msra.mxu0 %v1121
    %1817 = vmatpush.bf16.msra.mxu0 %v1117
    %1818 = vmatpush.bf16.msra.mxu0 %v1113
    %1819 = vmatpush.bf16.msra.mxu0 %v1109
    %1820 = vmatpush.bf16.msra.mxu0 %v1105
    %1821 = vmatpush.bf16.msra.mxu0 %v1101
    %1822 = vmatpush.bf16.msra.mxu0 %v1097
    %1823 = vmatmul.bf16.gmra.mxu0 %v53
    %v1824 = vpop.f32.mrf.mxu0
    %v1825 = vadd.f32 %v321, %v1824
    %v1826 = vpop.f32.mrf.mxu0
    %1827 = vdwg.mxu0
    %1828 = vmatpush.bf16.msra.mxu0 %v1157
    %1829 = vmatpush.bf16.msra.mxu0 %v1153
    %1830 = vmatpush.bf16.msra.mxu0 %v1149
    %1831 = vmatpush.bf16.msra.mxu0 %v1145
    %1832 = vmatpush.bf16.msra.mxu0 %v1141
    %1833 = vmatpush.bf16.msra.mxu0 %v1137
    %1834 = vmatpush.bf16.msra.mxu0 %v1133
    %1835 = vmatpush.bf16.msra.mxu0 %v1129
    %1836 = vmatmul.bf16.gmra.mxu0 %v54
    %v1837 = vpop.f32.mrf.mxu0
    %v1838 = vadd.f32 %v1825, %v1837
    %v1839 = vpop.f32.mrf.mxu0
    %1840 = vdwg.mxu0
    %1841 = vmatpush.bf16.msra.mxu0 %v1189
    %1842 = vmatpush.bf16.msra.mxu0 %v1185
    %1843 = vmatpush.bf16.msra.mxu0 %v1181
    %1844 = vmatpush.bf16.msra.mxu0 %v1177
    %1845 = vmatpush.bf16.msra.mxu0 %v1173
    %1846 = vmatpush.bf16.msra.mxu0 %v1169
    %1847 = vmatpush.bf16.msra.mxu0 %v1165
    %1848 = vmatpush.bf16.msra.mxu0 %v1161
    %1849 = vmatmul.bf16.gmra.mxu0 %v55
    %v1850 = vpop.f32.mrf.mxu0
    %v1851 = vadd.f32 %v1838, %v1850
    %v1852 = vpop.f32.mrf.mxu0
    %1853 = vdwg.mxu0
    %1854 = vmatpush.bf16.msra.mxu0 %v1221
    %1855 = vmatpush.bf16.msra.mxu0 %v1217
    %1856 = vmatpush.bf16.msra.mxu0 %v1213
    %1857 = vmatpush.bf16.msra.mxu0 %v1209
    %1858 = vmatpush.bf16.msra.mxu0 %v1205
    %1859 = vmatpush.bf16.msra.mxu0 %v1201
    %1860 = vmatpush.bf16.msra.mxu0 %v1197
    %1861 = vmatpush.bf16.msra.mxu0 %v1193
    %1862 = vmatmul.bf16.gmra.mxu0 %v56
    %v1863 = vpop.f32.mrf.mxu0
    %v1864 = vadd.f32 %v1851, %v1863
    %v1865 = vpop.f32.mrf.mxu0
    %1866 = vdwg.mxu0
    %1867 = vmatpush.bf16.msra.mxu0 %v1253
    %1868 = vmatpush.bf16.msra.mxu0 %v1249
    %1869 = vmatpush.bf16.msra.mxu0 %v1245
    %1870 = vmatpush.bf16.msra.mxu0 %v1241
    %1871 = vmatpush.bf16.msra.mxu0 %v1237
    %1872 = vmatpush.bf16.msra.mxu0 %v1233
    %1873 = vmatpush.bf16.msra.mxu0 %v1229
    %1874 = vmatpush.bf16.msra.mxu0 %v1225
    %1875 = vmatmul.bf16.gmra.mxu0 %v57
    %v1876 = vpop.f32.mrf.mxu0
    %v1877 = vadd.f32 %v1864, %v1876
    %v1878 = vpop.f32.mrf.mxu0
    %1879 = vdwg.mxu0
    %1880 = vmatpush.bf16.msra.mxu0 %v1285
    %1881 = vmatpush.bf16.msra.mxu0 %v1281
    %1882 = vmatpush.bf16.msra.mxu0 %v1277
    %1883 = vmatpush.bf16.msra.mxu0 %v1273
    %1884 = vmatpush.bf16.msra.mxu0 %v1269
    %1885 = vmatpush.bf16.msra.mxu0 %v1265
    %1886 = vmatpush.bf16.msra.mxu0 %v1261
    %1887 = vmatpush.bf16.msra.mxu0 %v1257
    %1888 = vmatmul.bf16.gmra.mxu0 %v58
    %v1889 = vpop.f32.mrf.mxu0
    %v1890 = vadd.f32 %v1877, %v1889
    %v1891 = vpop.f32.mrf.mxu0
    %1892 = vdwg.mxu0
    %1893 = vmatpush.bf16.msra.mxu0 %v1317
    %1894 = vmatpush.bf16.msra.mxu0 %v1313
    %1895 = vmatpush.bf16.msra.mxu0 %v1309
    %1896 = vmatpush.bf16.msra.mxu0 %v1305
    %1897 = vmatpush.bf16.msra.mxu0 %v1301
    %1898 = vmatpush.bf16.msra.mxu0 %v1297
    %1899 = vmatpush.bf16.msra.mxu0 %v1293
    %1900 = vmatpush.bf16.msra.mxu0 %v1289
    %1901 = vmatmul.bf16.gmra.mxu0 %v59
    %v1902 = vpop.f32.mrf.mxu0
    %v1903 = vadd.f32 %v1890, %v1902
    %v1904 = vpop.f32.mrf.mxu0
    %1905 = vdwg.mxu0
    %1906 = vmatpush.bf16.msra.mxu0 %v1349
    %1907 = vmatpush.bf16.msra.mxu0 %v1345
    %1908 = vmatpush.bf16.msra.mxu0 %v1341
    %1909 = vmatpush.bf16.msra.mxu0 %v1337
    %1910 = vmatpush.bf16.msra.mxu0 %v1333
    %1911 = vmatpush.bf16.msra.mxu0 %v1329
    %1912 = vmatpush.bf16.msra.mxu0 %v1325
    %1913 = vmatpush.bf16.msra.mxu0 %v1321
    %1914 = vmatmul.bf16.gmra.mxu0 %v60
    %v1915 = vpop.f32.mrf.mxu0
    %v1916 = vadd.f32 %v1903, %v1915
    %v1917 = vpop.f32.mrf.mxu0
    %1918 = vdwg.mxu0
    %1919 = vmatpush.bf16.msra.mxu0 %v1126
    %1920 = vmatpush.bf16.msra.mxu0 %v1122
    %1921 = vmatpush.bf16.msra.mxu0 %v1118
    %1922 = vmatpush.bf16.msra.mxu0 %v1114
    %1923 = vmatpush.bf16.msra.mxu0 %v1110
    %1924 = vmatpush.bf16.msra.mxu0 %v1106
    %1925 = vmatpush.bf16.msra.mxu0 %v1102
    %1926 = vmatpush.bf16.msra.mxu0 %v1098
    %1927 = vmatmul.bf16.gmra.mxu0 %v53
    %v1928 = vpop.f32.mrf.mxu0
    %v1929 = vadd.f32 %v322, %v1928
    %v1930 = vpop.f32.mrf.mxu0
    %1931 = vdwg.mxu0
    %1932 = vmatpush.bf16.msra.mxu0 %v1158
    %1933 = vmatpush.bf16.msra.mxu0 %v1154
    %1934 = vmatpush.bf16.msra.mxu0 %v1150
    %1935 = vmatpush.bf16.msra.mxu0 %v1146
    %1936 = vmatpush.bf16.msra.mxu0 %v1142
    %1937 = vmatpush.bf16.msra.mxu0 %v1138
    %1938 = vmatpush.bf16.msra.mxu0 %v1134
    %1939 = vmatpush.bf16.msra.mxu0 %v1130
    %1940 = vmatmul.bf16.gmra.mxu0 %v54
    %v1941 = vpop.f32.mrf.mxu0
    %v1942 = vadd.f32 %v1929, %v1941
    %v1943 = vpop.f32.mrf.mxu0
    %1944 = vdwg.mxu0
    %1945 = vmatpush.bf16.msra.mxu0 %v1190
    %1946 = vmatpush.bf16.msra.mxu0 %v1186
    %1947 = vmatpush.bf16.msra.mxu0 %v1182
    %1948 = vmatpush.bf16.msra.mxu0 %v1178
    %1949 = vmatpush.bf16.msra.mxu0 %v1174
    %1950 = vmatpush.bf16.msra.mxu0 %v1170
    %1951 = vmatpush.bf16.msra.mxu0 %v1166
    %1952 = vmatpush.bf16.msra.mxu0 %v1162
    %1953 = vmatmul.bf16.gmra.mxu0 %v55
    %v1954 = vpop.f32.mrf.mxu0
    %v1955 = vadd.f32 %v1942, %v1954
    %v1956 = vpop.f32.mrf.mxu0
    %1957 = vdwg.mxu0
    %1958 = vmatpush.bf16.msra.mxu0 %v1222
    %1959 = vmatpush.bf16.msra.mxu0 %v1218
    %1960 = vmatpush.bf16.msra.mxu0 %v1214
    %1961 = vmatpush.bf16.msra.mxu0 %v1210
    %1962 = vmatpush.bf16.msra.mxu0 %v1206
    %1963 = vmatpush.bf16.msra.mxu0 %v1202
    %1964 = vmatpush.bf16.msra.mxu0 %v1198
    %1965 = vmatpush.bf16.msra.mxu0 %v1194
    %1966 = vmatmul.bf16.gmra.mxu0 %v56
    %v1967 = vpop.f32.mrf.mxu0
    %v1968 = vadd.f32 %v1955, %v1967
    %v1969 = vpop.f32.mrf.mxu0
    %1970 = vdwg.mxu0
    %1971 = vmatpush.bf16.msra.mxu0 %v1254
    %1972 = vmatpush.bf16.msra.mxu0 %v1250
    %1973 = vmatpush.bf16.msra.mxu0 %v1246
    %1974 = vmatpush.bf16.msra.mxu0 %v1242
    %1975 = vmatpush.bf16.msra.mxu0 %v1238
    %1976 = vmatpush.bf16.msra.mxu0 %v1234
    %1977 = vmatpush.bf16.msra.mxu0 %v1230
    %1978 = vmatpush.bf16.msra.mxu0 %v1226
    %1979 = vmatmul.bf16.gmra.mxu0 %v57
    %v1980 = vpop.f32.mrf.mxu0
    %v1981 = vadd.f32 %v1968, %v1980
    %v1982 = vpop.f32.mrf.mxu0
    %1983 = vdwg.mxu0
    %1984 = vmatpush.bf16.msra.mxu0 %v1286
    %1985 = vmatpush.bf16.msra.mxu0 %v1282
    %1986 = vmatpush.bf16.msra.mxu0 %v1278
    %1987 = vmatpush.bf16.msra.mxu0 %v1274
    %1988 = vmatpush.bf16.msra.mxu0 %v1270
    %1989 = vmatpush.bf16.msra.mxu0 %v1266
    %1990 = vmatpush.bf16.msra.mxu0 %v1262
    %1991 = vmatpush.bf16.msra.mxu0 %v1258
    %1992 = vmatmul.bf16.gmra.mxu0 %v58
    %v1993 = vpop.f32.mrf.mxu0
    %v1994 = vadd.f32 %v1981, %v1993
    %v1995 = vpop.f32.mrf.mxu0
    %1996 = vdwg.mxu0
    %1997 = vmatpush.bf16.msra.mxu0 %v1318
    %1998 = vmatpush.bf16.msra.mxu0 %v1314
    %1999 = vmatpush.bf16.msra.mxu0 %v1310
    %2000 = vmatpush.bf16.msra.mxu0 %v1306
    %2001 = vmatpush.bf16.msra.mxu0 %v1302
    %2002 = vmatpush.bf16.msra.mxu0 %v1298
    %2003 = vmatpush.bf16.msra.mxu0 %v1294
    %2004 = vmatpush.bf16.msra.mxu0 %v1290
    %2005 = vmatmul.bf16.gmra.mxu0 %v59
    %v2006 = vpop.f32.mrf.mxu0
    %v2007 = vadd.f32 %v1994, %v2006
    %v2008 = vpop.f32.mrf.mxu0
    %2009 = vdwg.mxu0
    %2010 = vmatpush.bf16.msra.mxu0 %v1350
    %2011 = vmatpush.bf16.msra.mxu0 %v1346
    %2012 = vmatpush.bf16.msra.mxu0 %v1342
    %2013 = vmatpush.bf16.msra.mxu0 %v1338
    %2014 = vmatpush.bf16.msra.mxu0 %v1334
    %2015 = vmatpush.bf16.msra.mxu0 %v1330
    %2016 = vmatpush.bf16.msra.mxu0 %v1326
    %2017 = vmatpush.bf16.msra.mxu0 %v1322
    %2018 = vmatmul.bf16.gmra.mxu0 %v60
    %v2019 = vpop.f32.mrf.mxu0
    %v2020 = vadd.f32 %v2007, %v2019
    %v2021 = vpop.f32.mrf.mxu0
    %2022 = vdwg.mxu0
    %v2023 = vmax.f32 %v1708, 0.0
    %v2024 = vmax.f32 %v1812, 0.0
    %v2025 = vmax.f32 %v1916, 0.0
    %v2026 = vmax.f32 %v2020, 0.0
    %v2031 = vrot.slane %v2024, 6
    %v2032 = vrot.slane %v2025, 4
    %v2033 = vrot.slane %v2026, 2
    %vm2034 = vcmask 1041408
    %v2035 = vsel %vm2034, %v2023, %v2031
    %vm2036 = vcmask 1045508
    %v2037 = vsel %vm2036, %v2032, %v2033
    %vm2038 = vcmask 1043456
    %v2039 = vsel %vm2038, %v2035, %v2037
    %2041 = vst [vmem:[%s3] sm:$0xff] %v2039
    // Predicated region
    $region18: #{forward.10} parent=1 // pred_check
      _
    $region19: #{forward.10} parent=1 // pred_check_branch
      %2043 = sbr.rel (0) target = $region21
    $region20: #{forward.10} parent=1 // pred_region
      _
    $region21: #{forward.10} parent=1 // pred_fallthru
      _
    // Predicated region
    $region22: #{forward.10} parent=1 // pred_check
      _
    $region23: #{forward.10} parent=1 // pred_check_branch
      %2045 = sbr.rel (0) target = $region25
    $region24: #{forward.10} parent=1 // pred_region
      _
    $region25: #{forward.10} parent=1 // pred_fallthru
      _
    %2046 = vsyncpa [#allocation3], 1

</llo_original>
